<compile_context>
chip_gen: v7x
topology: tpu7x:2x2x1
jax: 0.10.0
libtpu: 0.0.40
codegen_flags: <defaults>
</compile_context>

<pallas_src>
import functools

import jax
import jax.numpy as jnp
from jax import lax
from jax.experimental import pallas as pl
from jax.experimental.pallas import tpu as pltpu

BN_EPS = 1e-3


def _silu(y):
    # sigmoid via the EUP reciprocal (approx=True) -> frees the VPU divide.
    return y * pl.reciprocal(1.0 + jnp.exp(-y), approx=True)


def _choose_tile_m(M, target=2048):
    """Row tile for the 1x1-conv matmuls: multiple of 8, divides M, and leaves
    at least 2 grid steps so the DMA pipeline / second TensorCore have work."""
    if M % 8 != 0:
        # TODO(synk): pad M to a multiple of 8 for odd spatial sizes instead of
        # falling back to a single (possibly VMEM-exceeding) block.
        return M
    tm = min(target, M)
    if tm == M and M >= 16:
        tm = M // 2
    tm = max(8, (tm // 8) * 8)
    while M % tm:
        tm -= 8
    return tm


# ----------------------------- Pallas kernels ------------------------------

def _cv1_kernel(x_ref, w_ref, b_ref, y_ref):
    # x_ref: (TM, C1) bf16, w_ref: (C1, 2c) bf16 (BN scale folded),
    # b_ref: (1, 2c) f32, y_ref: (TM, 2c) bf16 -- one lane-dense store.
    y = jnp.dot(x_ref[...], w_ref[...], preferred_element_type=jnp.float32)
    y_ref[...] = _silu(y + b_ref[...]).astype(y_ref.dtype)


def _bottleneck_kernel(x_ref, w1_ref, b1_ref, w2_ref, b2_ref, o_ref, pad_ref,
                       *, H, W, C, residual):
    # x_ref  : (1, H, W, C) bf16 (UNPADDED input block)
    # w*_ref : (9*C, C) bf16 folded 3x3 weights, b*_ref: (1, C) f32
    # o_ref  : (1, H, W, C)
    # pad_ref: (H+2, W+2, C) bf16 VMEM scratch -- holds the zero-padded
    #          activation for both convs (halo built in VMEM, no XLA pad).
    x = x_ref[...][0]                                  # (H, W, C) bf16

    row_zeros = jnp.zeros((1, W + 2, C), jnp.bfloat16)
    col_zeros = jnp.zeros((H, 1, C), jnp.bfloat16)

    # Zero top/bottom halo rows once per block; the middle rows (incl. the
    # left/right zero columns) are fully rewritten below, so the ring stays a
    # valid zero padding for BOTH convs with no full-tensor select.
    pad_ref[0:1, :, :] = row_zeros
    pad_ref[H + 1:H + 2, :, :] = row_zeros

    def conv3x3(w_ref, b_ref):
        xp = pad_ref[...]                              # (H+2, W+2, C)
        if C >= 128:
            # Per-tap accumulation: avoids the (H*W, 9C) im2col buffer
            # (dominant VMEM consumer on v7x); per-tap K=C >= 128 keeps the
            # MXU full.
            acc = jnp.zeros((H * W, C), jnp.float32)
            t = 0
            for dy in range(3):
                for dx in range(3):
                    tap = xp[dy:dy + H, dx:dx + W, :].reshape(H * W, C)
                    acc = acc + jnp.dot(tap, w_ref[t * C:(t + 1) * C, :],
                                        preferred_element_type=jnp.float32)
                    t += 1
        else:
            # Deep-K im2col (one K=9C matmul) when channels are narrow.
            cols = [xp[dy:dy + H, dx:dx + W, :].reshape(H * W, C)
                    for dy in range(3) for dx in range(3)]
            acc = jnp.dot(jnp.concatenate(cols, axis=-1), w_ref[...],
                          preferred_element_type=jnp.float32)
        return _silu(acc + b_ref[...])

    # ---- conv1 + BN + SiLU (computed on the HxW interior only)
    pad_ref[1:H + 1, :, :] = jnp.concatenate([col_zeros, x, col_zeros], axis=1)
    h = conv3x3(w1_ref, b1_ref).astype(jnp.bfloat16)   # (H*W, C)

    # ---- conv2 + BN + SiLU (conv1 output re-padded in the same scratch)
    pad_ref[1:H + 1, :, :] = jnp.concatenate(
        [col_zeros, h.reshape(H, W, C), col_zeros], axis=1)
    y = conv3x3(w2_ref, b2_ref)

    if residual:                                       # shortcut (c1 == c2)
        y = y + x.reshape(H * W, C).astype(jnp.float32)

    o_ref[...] = y.reshape(1, H, W, C).astype(o_ref.dtype)


def _cv2_multi_kernel(*refs, n_chunks):
    # refs = (x_0..x_{k-1}, w_0..w_{k-1}, b, o):
    #   x_k: (TM, c_k) bf16 chunks, w_k: (c_k, Cout) bf16, b: (1, Cout) f32.
    xs = refs[:n_chunks]
    ws = refs[n_chunks:2 * n_chunks]
    b_ref = refs[2 * n_chunks]
    o_ref = refs[2 * n_chunks + 1]
    acc = jnp.zeros(o_ref.shape, jnp.float32)
    for xr, wr in zip(xs, ws):                         # accumulate, no concat
        acc = acc + jnp.dot(xr[...], wr[...], preferred_element_type=jnp.float32)
    o_ref[...] = _silu(acc + b_ref[...]).astype(o_ref.dtype)


# ------------------------------ wrappers ------------------------------------

def cv1_pointwise(x_nhwc, p):
    """1x1 conv + folded BN + SiLU; one lane-dense (N,H,W,2c) bf16 output."""
    N, H, W, C1 = x_nhwc.shape
    Cout = p["wf"].shape[1]
    M = N * H * W
    tm = _choose_tile_m(M)
    x2 = x_nhwc.reshape(M, C1)
    y = pl.pallas_call(
        _cv1_kernel,
        out_shape=jax.ShapeDtypeStruct((M, Cout), jnp.bfloat16),
        grid=(M // tm,),
        in_specs=[
            pl.BlockSpec((tm, C1), lambda i: (i, 0)),
            pl.BlockSpec((C1, Cout), lambda i: (0, 0)),
            pl.BlockSpec((1, Cout), lambda i: (0, 0)),
        ],
        out_specs=pl.BlockSpec((tm, Cout), lambda i: (i, 0)),
        compiler_params=pltpu.CompilerParams(
            dimension_semantics=("parallel",)),
    )(x2, p["wf"], p["bf"])
    return y.reshape(N, H, W, Cout)


def fused_bottleneck(x_nhwc, bparams, residual):
    """Two fused 3x3 convs (+BN+SiLU each, optional residual), one kernel.

    The input is UNPADDED; the 1-pixel zero halo for both convs is built in a
    VMEM scratch inside the kernel (no jnp.pad / extra HBM copy)."""
    N, H, W, C = x_nhwc.shape
    kern = functools.partial(_bottleneck_kernel, H=H, W=W, C=C,
                             residual=residual)
    return pl.pallas_call(
        kern,
        out_shape=jax.ShapeDtypeStruct((N, H, W, C), jnp.bfloat16),
        grid=(N,),
        in_specs=[
            pl.BlockSpec((1, H, W, C), lambda b: (b, 0, 0, 0)),
            pl.BlockSpec((9 * C, C), lambda b: (0, 0)),
            pl.BlockSpec((1, C), lambda b: (0, 0)),
            pl.BlockSpec((9 * C, C), lambda b: (0, 0)),
            pl.BlockSpec((1, C), lambda b: (0, 0)),
        ],
        out_specs=pl.BlockSpec((1, H, W, C), lambda b: (b, 0, 0, 0)),
        scratch_shapes=[pltpu.VMEM((H + 2, W + 2, C), jnp.bfloat16)],
        compiler_params=pltpu.CompilerParams(
            dimension_semantics=("parallel",),
            # Safe on all generations (<= physical VMEM everywhere); at
            # production shapes v5e/v6e can raise this toward ~100 MiB.
            vmem_limit_bytes=64 << 20),
    )(x_nhwc, bparams["cv1"]["wf"], bparams["cv1"]["bf"],
      bparams["cv2"]["wf"], bparams["cv2"]["bf"])


def cv2_pointwise(chunks_nhwc, p):
    """Final 1x1 conv + BN + SiLU over feature chunks without concatenating.

    chunks_nhwc[0] is the full 2c-wide cv1 output (chunks y0|y1); the rest are
    the c-wide bottleneck outputs, matching the torch.cat channel order."""
    N, H, W, _ = chunks_nhwc[0].shape
    c2 = p["wf"].shape[1]
    M = N * H * W
    tm = _choose_tile_m(M)
    widths = [y.shape[-1] for y in chunks_nhwc]
    xs2 = [y.reshape(M, w) for y, w in zip(chunks_nhwc, widths)]
    w_chunks, off = [], 0
    for w in widths:
        w_chunks.append(p["wf"][off:off + w, :])
        off += w
    n_chunks = len(chunks_nhwc)
    kern = functools.partial(_cv2_multi_kernel, n_chunks=n_chunks)
    in_specs = ([pl.BlockSpec((tm, w), lambda i: (i, 0)) for w in widths]
                + [pl.BlockSpec((w, c2), lambda i: (0, 0)) for w in widths]
                + [pl.BlockSpec((1, c2), lambda i: (0, 0))])
    out = pl.pallas_call(
        kern,
        out_shape=jax.ShapeDtypeStruct((M, c2), jnp.bfloat16),   # bf16 writeback
        grid=(M // tm,),
        in_specs=in_specs,
        out_specs=pl.BlockSpec((tm, c2), lambda i: (i, 0)),
        compiler_params=pltpu.CompilerParams(
            dimension_semantics=("parallel",)),
    )(*xs2, *w_chunks, p["bf"])
    return out.reshape(N, H, W, c2)


# -------------------------- parameter construction --------------------------

def conv_bn_params(key, cin, cout, k):
    kw, kg, kb, km, kv = jax.random.split(key, 5)
    w = 0.1 * jax.random.normal(kw, (k, k, cin, cout), jnp.float32)
    gamma = 1.0 + 0.1 * jax.random.normal(kg, (cout,), jnp.float32)
    beta = 0.1 * jax.random.normal(kb, (cout,), jnp.float32)
    mean = 0.1 * jax.random.normal(km, (cout,), jnp.float32)
    var = 1.0 + 0.1 * jax.random.uniform(kv, (cout,), jnp.float32)
    scale = gamma / jnp.sqrt(var + BN_EPS)            # BN folded (eval mode)
    bias = beta - mean * scale
    # Pallas-path parameters: BN scale folded into the weights, bf16 MXU inputs.
    if k == 1:
        wf = (w[0, 0] * scale[None, :]).astype(jnp.bfloat16)              # (cin, cout)
    else:
        wf = (w * scale).reshape(k * k * cin, cout).astype(jnp.bfloat16)  # (9*cin, cout)
    bf = bias.reshape(1, cout).astype(jnp.float32)
    return dict(w=w, gamma=gamma, beta=beta, mean=mean, var=var,
                scale=scale, bias=bias, wf=wf, bf=bf)


def init_c2f_params(key, c1, c2, n, e=0.5):
    c = int(c2 * e)
    keys = jax.random.split(key, 2 + 2 * n)
    params = dict(
        cv1=conv_bn_params(keys[0], c1, 2 * c, 1),
        cv2=conv_bn_params(keys[1], (2 + n) * c, c2, 1),
        bottleneck=[
            dict(cv1=conv_bn_params(keys[2 + 2 * i], c, c, 3),
                 cv2=conv_bn_params(keys[3 + 2 * i], c, c, 3))
            for i in range(n)
        ],
    )
    return params, c


# ------------------------------ C2f forward ---------------------------------

def c2f_forward_pallas(x_nchw, params, n, shortcut=False):
    x = jnp.transpose(x_nchw, (0, 2, 3, 1)).astype(jnp.bfloat16)   # NCHW -> NHWC
    c = params["cv1"]["wf"].shape[1] // 2
    y01 = cv1_pointwise(x, params["cv1"])            # (N,H,W,2c) = chunks y0|y1
    chunks = [y01]                                   # cv2 consumes it 2c-wide
    # Single cheap XLA slice for the first bottleneck's half (torch.chunk[1]).
    # (When c is a multiple of 128 this could instead be a channel-offset
    #  BlockSpec on the bottleneck input.)
    y_prev = y01[..., c:]
    for i in range(n):
        y_prev = fused_bottleneck(y_prev, params["bottleneck"][i],
                                  residual=shortcut)
        chunks.append(y_prev)
    out = cv2_pointwise(chunks, params["cv2"])       # concat-free cv2, bf16
    return jnp.transpose(out, (0, 3, 1, 2)).astype(jnp.float32)    # NHWC -> NCHW


# ------------------------------ pure-JAX reference ---------------------------

def _ref_conv_bn_silu(x, p, pad):
    y = lax.conv_general_dilated(
        x, p["w"], (1, 1), [(pad, pad), (pad, pad)],
        dimension_numbers=("NHWC", "HWIO", "NHWC"),
        precision=lax.Precision.HIGHEST)
    y = (y - p["mean"]) / jnp.sqrt(p["var"] + BN_EPS) * p["gamma"] + p["beta"]
    return y * jax.nn.sigmoid(y)


def c2f_forward_ref(x_nchw, params, n, shortcut=False):
    x = jnp.transpose(x_nchw, (0, 2, 3, 1))
    y = _ref_conv_bn_silu(x, params["cv1"], 0)
    c = y.shape[-1] // 2
    ys = [y[..., :c], y[..., c:]]
    for i in range(n):
        b = params["bottleneck"][i]
        h = _ref_conv_bn_silu(ys[-1], b["cv1"], 1)
        h = _ref_conv_bn_silu(h, b["cv2"], 1)
        if shortcut:
            h = ys[-1] + h
        ys.append(h)
    z = jnp.concatenate(ys, axis=-1)
    out = _ref_conv_bn_silu(z, params["cv2"], 0)
    return jnp.transpose(out, (0, 3, 1, 2))


# ----------------------------------- main ------------------------------------

if __name__ == "__main__":
    c1, c2, n = 8, 8, 2          # C2f(c1=8, c2=8, n=2, shortcut=False, e=0.5)
    N, H, W = 2, 16, 16

    key = jax.random.PRNGKey(0)
    kp, kx = jax.random.split(key)
    params, c_hidden = init_c2f_params(kp, c1, c2, n, e=0.5)
    x = jax.random.normal(kx, (N, c1, H, W), jnp.float32)   # PyTorch NCHW input

    fwd = jax.jit(functools.partial(c2f_forward_pallas, n=n, shortcut=False))
    out = jax.block_until_ready(fwd(x, params))

    ref = c2f_forward_ref(x, params, n, shortcut=False)
    assert out.shape == (N, c2, H, W), out.shape
    assert bool(jnp.all(jnp.isfinite(out)))
    assert jnp.allclose(out, ref, atol=5e-2, rtol=5e-2), (
        float(jnp.max(jnp.abs(out - ref))))

    print("KERNEL_OK")
</pallas_src>

<mosaic_0001>
module attributes {stable_mosaic.version = 11 : i64} {
  func.func @_bottleneck_kernel(%arg0: i32, %arg1: memref<1x16x16x4xbf16, #tpu.memory_space<vmem>>, %arg2: memref<36x4xbf16, #tpu.memory_space<vmem>>, %arg3: memref<1x4xf32, #tpu.memory_space<vmem>>, %arg4: memref<36x4xbf16, #tpu.memory_space<vmem>>, %arg5: memref<1x4xf32, #tpu.memory_space<vmem>>, %arg6: memref<1x16x16x4xbf16, #tpu.memory_space<vmem>>, %arg7: memref<18x18x4xbf16, #tpu.memory_space<vmem>>) attributes {dimension_semantics = [#tpu.dimension_semantics<parallel>], iteration_bounds = array<i64: 2>, scalar_prefetch = 0 : i64, scratch_operands = 1 : i64, tpu.core_type = #tpu.core_type<tc>, window_params = [{transform_indices = @transform_0, window_bounds = array<i64: 1, 16, 16, 4>}, {pipeline_mode = #tpu.pipeline_mode<synchronous>, transform_indices = @transform_1, window_bounds = array<i64: 36, 4>}, {pipeline_mode = #tpu.pipeline_mode<synchronous>, transform_indices = @transform_2, window_bounds = array<i64: 1, 4>}, {pipeline_mode = #tpu.pipeline_mode<synchronous>, transform_indices = @transform_3, window_bounds = array<i64: 36, 4>}, {pipeline_mode = #tpu.pipeline_mode<synchronous>, transform_indices = @transform_4, window_bounds = array<i64: 1, 4>}, {transform_indices = @transform_5, window_bounds = array<i64: 1, 16, 16, 4>}]} {
    %c0 = arith.constant 0 : index
    %c0_0 = arith.constant 0 : index
    %c0_1 = arith.constant 0 : index
    %c0_2 = arith.constant 0 : index
    %0 = vector.load %arg1[%c0, %c0_0, %c0_1, %c0_2] : memref<1x16x16x4xbf16, #tpu.memory_space<vmem>>, vector<1x16x16x4xbf16>
    %1 = vector.shape_cast %0 : vector<1x16x16x4xbf16> to vector<16x16x4xbf16>
    %cst = arith.constant 0.000000e+00 : bf16
    %2 = vector.broadcast %cst : bf16 to vector<1x18x4xbf16>
    %cst_3 = arith.constant 0.000000e+00 : bf16
    %3 = vector.broadcast %cst_3 : bf16 to vector<16x1x4xbf16>
    %c0_4 = arith.constant 0 : index
    %c0_5 = arith.constant 0 : index
    %c0_6 = arith.constant 0 : index
    %4 = vector.load %arg7[%c0_4, %c0_5, %c0_6] : memref<18x18x4xbf16, #tpu.memory_space<vmem>>, vector<1x18x4xbf16>
    tpu.vector_store %arg7[%c0_4, %c0_5, %c0_6], %2 {strides = array<i32>} : memref<18x18x4xbf16, #tpu.memory_space<vmem>>, vector<1x18x4xbf16>,
    %c17 = arith.constant 17 : index
    %c0_7 = arith.constant 0 : index
    %c0_8 = arith.constant 0 : index
    %5 = vector.load %arg7[%c17, %c0_7, %c0_8] : memref<18x18x4xbf16, #tpu.memory_space<vmem>>, vector<1x18x4xbf16>
    tpu.vector_store %arg7[%c17, %c0_7, %c0_8], %2 {strides = array<i32>} : memref<18x18x4xbf16, #tpu.memory_space<vmem>>, vector<1x18x4xbf16>,
    %6 = tpu.concatenate %3, %1, %3 in 1 : vector<16x1x4xbf16>, vector<16x16x4xbf16>, vector<16x1x4xbf16> -> vector<16x18x4xbf16>
    %c1 = arith.constant 1 : index
    %c0_9 = arith.constant 0 : index
    %c0_10 = arith.constant 0 : index
    %7 = vector.load %arg7[%c1, %c0_9, %c0_10] : memref<18x18x4xbf16, #tpu.memory_space<vmem>>, vector<16x18x4xbf16>
    tpu.vector_store %arg7[%c1, %c0_9, %c0_10], %6 {strides = array<i32>} : memref<18x18x4xbf16, #tpu.memory_space<vmem>>, vector<16x18x4xbf16>,
    %c0_11 = arith.constant 0 : index
    %c0_12 = arith.constant 0 : index
    %c0_13 = arith.constant 0 : index
    %8 = vector.load %arg7[%c0_11, %c0_12, %c0_13] : memref<18x18x4xbf16, #tpu.memory_space<vmem>>, vector<18x18x4xbf16>
    %9 = vector.extract_strided_slice %8 {offsets = [0, 0, 0], sizes = [16, 16, 4], strides = [1, 1, 1]} : vector<18x18x4xbf16> to vector<16x16x4xbf16>
    %10 = vector.shape_cast %9 : vector<16x16x4xbf16> to vector<256x4xbf16>
    %11 = vector.extract_strided_slice %8 {offsets = [0, 1, 0], sizes = [16, 16, 4], strides = [1, 1, 1]} : vector<18x18x4xbf16> to vector<16x16x4xbf16>
    %12 = vector.shape_cast %11 : vector<16x16x4xbf16> to vector<256x4xbf16>
    %13 = vector.extract_strided_slice %8 {offsets = [0, 2, 0], sizes = [16, 16, 4], strides = [1, 1, 1]} : vector<18x18x4xbf16> to vector<16x16x4xbf16>
    %14 = vector.shape_cast %13 : vector<16x16x4xbf16> to vector<256x4xbf16>
    %15 = vector.extract_strided_slice %8 {offsets = [1, 0, 0], sizes = [16, 16, 4], strides = [1, 1, 1]} : vector<18x18x4xbf16> to vector<16x16x4xbf16>
    %16 = vector.shape_cast %15 : vector<16x16x4xbf16> to vector<256x4xbf16>
    %17 = vector.extract_strided_slice %8 {offsets = [1, 1, 0], sizes = [16, 16, 4], strides = [1, 1, 1]} : vector<18x18x4xbf16> to vector<16x16x4xbf16>
    %18 = vector.shape_cast %17 : vector<16x16x4xbf16> to vector<256x4xbf16>
    %19 = vector.extract_strided_slice %8 {offsets = [1, 2, 0], sizes = [16, 16, 4], strides = [1, 1, 1]} : vector<18x18x4xbf16> to vector<16x16x4xbf16>
    %20 = vector.shape_cast %19 : vector<16x16x4xbf16> to vector<256x4xbf16>
    %21 = vector.extract_strided_slice %8 {offsets = [2, 0, 0], sizes = [16, 16, 4], strides = [1, 1, 1]} : vector<18x18x4xbf16> to vector<16x16x4xbf16>
    %22 = vector.shape_cast %21 : vector<16x16x4xbf16> to vector<256x4xbf16>
    %23 = vector.extract_strided_slice %8 {offsets = [2, 1, 0], sizes = [16, 16, 4], strides = [1, 1, 1]} : vector<18x18x4xbf16> to vector<16x16x4xbf16>
    %24 = vector.shape_cast %23 : vector<16x16x4xbf16> to vector<256x4xbf16>
    %25 = vector.extract_strided_slice %8 {offsets = [2, 2, 0], sizes = [16, 16, 4], strides = [1, 1, 1]} : vector<18x18x4xbf16> to vector<16x16x4xbf16>
    %26 = vector.shape_cast %25 : vector<16x16x4xbf16> to vector<256x4xbf16>
    %27 = tpu.concatenate %10, %12, %14, %16, %18, %20, %22, %24, %26 in 1 : vector<256x4xbf16>, vector<256x4xbf16>, vector<256x4xbf16>, vector<256x4xbf16>, vector<256x4xbf16>, vector<256x4xbf16>, vector<256x4xbf16>, vector<256x4xbf16>, vector<256x4xbf16> -> vector<256x36xbf16>
    %c0_14 = arith.constant 0 : index
    %c0_15 = arith.constant 0 : index
    %28 = vector.load %arg2[%c0_14, %c0_15] : memref<36x4xbf16, #tpu.memory_space<vmem>>, vector<36x4xbf16>
    %cst_16 = arith.constant dense<0.000000e+00> : vector<256x4xf32>
    %29 = tpu.matmul %27, %28, %cst_16 {dimension_numbers = #tpu.dot_dimension_numbers<[1], [0], [0], [1], [0, 0, 1, 1], [], []>} : vector<256x36xbf16>, vector<36x4xbf16>, vector<256x4xf32> -> vector<256x4xf32>
    %c0_17 = arith.constant 0 : index
    %c0_18 = arith.constant 0 : index
    %30 = vector.load %arg3[%c0_17, %c0_18] : memref<1x4xf32, #tpu.memory_space<vmem>>, vector<1x4xf32>
    %31 = vector.broadcast %30 : vector<1x4xf32> to vector<256x4xf32>
    %32 = arith.addf %29, %31 : vector<256x4xf32>
    %cst_19 = arith.constant 0.000000e+00 : f32
    %33 = vector.broadcast %cst_19 : f32 to vector<256x4xf32>
    %34 = arith.subf %33, %32 : vector<256x4xf32>
    %35 = math.exp %34 : vector<256x4xf32>
    %cst_20 = arith.constant 1.000000e+00 : f32
    %36 = vector.broadcast %cst_20 : f32 to vector<256x4xf32>
    %37 = arith.addf %36, %35 : vector<256x4xf32>
    %38 = tpu.reciprocal %37 {approx = true} : vector<256x4xf32> -> vector<256x4xf32>
    %39 = arith.mulf %32, %38 : vector<256x4xf32>
    %40 = arith.truncf %39 : vector<256x4xf32> to vector<256x4xbf16>
    %41 = vector.shape_cast %40 : vector<256x4xbf16> to vector<16x16x4xbf16>
    %42 = tpu.concatenate %3, %41, %3 in 1 : vector<16x1x4xbf16>, vector<16x16x4xbf16>, vector<16x1x4xbf16> -> vector<16x18x4xbf16>
    %c1_21 = arith.constant 1 : index
    %c0_22 = arith.constant 0 : index
    %c0_23 = arith.constant 0 : index
    %43 = vector.load %arg7[%c1_21, %c0_22, %c0_23] : memref<18x18x4xbf16, #tpu.memory_space<vmem>>, vector<16x18x4xbf16>
    tpu.vector_store %arg7[%c1_21, %c0_22, %c0_23], %42 {strides = array<i32>} : memref<18x18x4xbf16, #tpu.memory_space<vmem>>, vector<16x18x4xbf16>,
    %c0_24 = arith.constant 0 : index
    %c0_25 = arith.constant 0 : index
    %c0_26 = arith.constant 0 : index
    %44 = vector.load %arg7[%c0_24, %c0_25, %c0_26] : memref<18x18x4xbf16, #tpu.memory_space<vmem>>, vector<18x18x4xbf16>
    %45 = vector.extract_strided_slice %44 {offsets = [0, 0, 0], sizes = [16, 16, 4], strides = [1, 1, 1]} : vector<18x18x4xbf16> to vector<16x16x4xbf16>
    %46 = vector.shape_cast %45 : vector<16x16x4xbf16> to vector<256x4xbf16>
    %47 = vector.extract_strided_slice %44 {offsets = [0, 1, 0], sizes = [16, 16, 4], strides = [1, 1, 1]} : vector<18x18x4xbf16> to vector<16x16x4xbf16>
    %48 = vector.shape_cast %47 : vector<16x16x4xbf16> to vector<256x4xbf16>
    %49 = vector.extract_strided_slice %44 {offsets = [0, 2, 0], sizes = [16, 16, 4], strides = [1, 1, 1]} : vector<18x18x4xbf16> to vector<16x16x4xbf16>
    %50 = vector.shape_cast %49 : vector<16x16x4xbf16> to vector<256x4xbf16>
    %51 = vector.extract_strided_slice %44 {offsets = [1, 0, 0], sizes = [16, 16, 4], strides = [1, 1, 1]} : vector<18x18x4xbf16> to vector<16x16x4xbf16>
    %52 = vector.shape_cast %51 : vector<16x16x4xbf16> to vector<256x4xbf16>
    %53 = vector.extract_strided_slice %44 {offsets = [1, 1, 0], sizes = [16, 16, 4], strides = [1, 1, 1]} : vector<18x18x4xbf16> to vector<16x16x4xbf16>
    %54 = vector.shape_cast %53 : vector<16x16x4xbf16> to vector<256x4xbf16>
    %55 = vector.extract_strided_slice %44 {offsets = [1, 2, 0], sizes = [16, 16, 4], strides = [1, 1, 1]} : vector<18x18x4xbf16> to vector<16x16x4xbf16>
    %56 = vector.shape_cast %55 : vector<16x16x4xbf16> to vector<256x4xbf16>
    %57 = vector.extract_strided_slice %44 {offsets = [2, 0, 0], sizes = [16, 16, 4], strides = [1, 1, 1]} : vector<18x18x4xbf16> to vector<16x16x4xbf16>
    %58 = vector.shape_cast %57 : vector<16x16x4xbf16> to vector<256x4xbf16>
    %59 = vector.extract_strided_slice %44 {offsets = [2, 1, 0], sizes = [16, 16, 4], strides = [1, 1, 1]} : vector<18x18x4xbf16> to vector<16x16x4xbf16>
    %60 = vector.shape_cast %59 : vector<16x16x4xbf16> to vector<256x4xbf16>
    %61 = vector.extract_strided_slice %44 {offsets = [2, 2, 0], sizes = [16, 16, 4], strides = [1, 1, 1]} : vector<18x18x4xbf16> to vector<16x16x4xbf16>
    %62 = vector.shape_cast %61 : vector<16x16x4xbf16> to vector<256x4xbf16>
    %63 = tpu.concatenate %46, %48, %50, %52, %54, %56, %58, %60, %62 in 1 : vector<256x4xbf16>, vector<256x4xbf16>, vector<256x4xbf16>, vector<256x4xbf16>, vector<256x4xbf16>, vector<256x4xbf16>, vector<256x4xbf16>, vector<256x4xbf16>, vector<256x4xbf16> -> vector<256x36xbf16>
    %c0_27 = arith.constant 0 : index
    %c0_28 = arith.constant 0 : index
    %64 = vector.load %arg4[%c0_27, %c0_28] : memref<36x4xbf16, #tpu.memory_space<vmem>>, vector<36x4xbf16>
    %cst_29 = arith.constant dense<0.000000e+00> : vector<256x4xf32>
    %65 = tpu.matmul %63, %64, %cst_29 {dimension_numbers = #tpu.dot_dimension_numbers<[1], [0], [0], [1], [0, 0, 1, 1], [], []>} : vector<256x36xbf16>, vector<36x4xbf16>, vector<256x4xf32> -> vector<256x4xf32>
    %c0_30 = arith.constant 0 : index
    %c0_31 = arith.constant 0 : index
    %66 = vector.load %arg5[%c0_30, %c0_31] : memref<1x4xf32, #tpu.memory_space<vmem>>, vector<1x4xf32>
    %67 = vector.broadcast %66 : vector<1x4xf32> to vector<256x4xf32>
    %68 = arith.addf %65, %67 : vector<256x4xf32>
    %cst_32 = arith.constant 0.000000e+00 : f32
    %69 = vector.broadcast %cst_32 : f32 to vector<256x4xf32>
    %70 = arith.subf %69, %68 : vector<256x4xf32>
    %71 = math.exp %70 : vector<256x4xf32>
    %cst_33 = arith.constant 1.000000e+00 : f32
    %72 = vector.broadcast %cst_33 : f32 to vector<256x4xf32>
    %73 = arith.addf %72, %71 : vector<256x4xf32>
    %74 = tpu.reciprocal %73 {approx = true} : vector<256x4xf32> -> vector<256x4xf32>
    %75 = arith.mulf %68, %74 : vector<256x4xf32>
    %76 = vector.shape_cast %75 : vector<256x4xf32> to vector<1x16x16x4xf32>
    %77 = arith.truncf %76 : vector<1x16x16x4xf32> to vector<1x16x16x4xbf16>
    %c0_34 = arith.constant 0 : index
    %c0_35 = arith.constant 0 : index
    %c0_36 = arith.constant 0 : index
    %c0_37 = arith.constant 0 : index
    %78 = vector.load %arg6[%c0_34, %c0_35, %c0_36, %c0_37] : memref<1x16x16x4xbf16, #tpu.memory_space<vmem>>, vector<1x16x16x4xbf16>
    tpu.vector_store %arg6[%c0_34, %c0_35, %c0_36, %c0_37], %77 {strides = array<i32>} : memref<1x16x16x4xbf16, #tpu.memory_space<vmem>>, vector<1x16x16x4xbf16>,
    return
  }
  func.func @transform_0(%arg0: i32) -> (i32, i32, i32, i32) {
    %c0_i32 = arith.constant 0 : i32
    %c0_i32_0 = arith.constant 0 : i32
    %c0_i32_1 = arith.constant 0 : i32
    %c0_i32_2 = arith.constant 0 : i32
    return %arg0, %c0_i32, %c0_i32_0, %c0_i32_1 : i32, i32, i32, i32
  }
  func.func @transform_1(%arg0: i32) -> (i32, i32) {
    %c0_i32 = arith.constant 0 : i32
    %c0_i32_0 = arith.constant 0 : i32
    %c0_i32_1 = arith.constant 0 : i32
    return %c0_i32, %c0_i32_0 : i32, i32
  }
  func.func @transform_2(%arg0: i32) -> (i32, i32) {
    %c0_i32 = arith.constant 0 : i32
    %c0_i32_0 = arith.constant 0 : i32
    %c0_i32_1 = arith.constant 0 : i32
    return %c0_i32, %c0_i32_0 : i32, i32
  }
  func.func @transform_3(%arg0: i32) -> (i32, i32) {
    %c0_i32 = arith.constant 0 : i32
    %c0_i32_0 = arith.constant 0 : i32
    %c0_i32_1 = arith.constant 0 : i32
    return %c0_i32, %c0_i32_0 : i32, i32
  }
  func.func @transform_4(%arg0: i32) -> (i32, i32) {
    %c0_i32 = arith.constant 0 : i32
    %c0_i32_0 = arith.constant 0 : i32
    %c0_i32_1 = arith.constant 0 : i32
    return %c0_i32, %c0_i32_0 : i32, i32
  }
  func.func @transform_5(%arg0: i32) -> (i32, i32, i32, i32) {
    %c0_i32 = arith.constant 0 : i32
    %c0_i32_0 = arith.constant 0 : i32
    %c0_i32_1 = arith.constant 0 : i32
    %c0_i32_2 = arith.constant 0 : i32
    return %arg0, %c0_i32, %c0_i32_0, %c0_i32_1 : i32, i32, i32, i32
  }
}

module attributes {stable_mosaic.version = 11 : i64} {
  func.func @_cv1_kernel(%arg0: i32, %arg1: memref<256x8xbf16, #tpu.memory_space<vmem>>, %arg2: memref<8x8xbf16, #tpu.memory_space<vmem>>, %arg3: memref<1x8xf32, #tpu.memory_space<vmem>>, %arg4: memref<256x8xbf16, #tpu.memory_space<vmem>>) attributes {dimension_semantics = [#tpu.dimension_semantics<parallel>], iteration_bounds = array<i64: 2>, scalar_prefetch = 0 : i64, scratch_operands = 0 : i64, tpu.core_type = #tpu.core_type<tc>, window_params = [{transform_indices = @transform_0, window_bounds = array<i64: 256, 8>}, {pipeline_mode = #tpu.pipeline_mode<synchronous>, transform_indices = @transform_1, window_bounds = array<i64: 8, 8>}, {pipeline_mode = #tpu.pipeline_mode<synchronous>, transform_indices = @transform_2, window_bounds = array<i64: 1, 8>}, {transform_indices = @transform_3, window_bounds = array<i64: 256, 8>}]} {
    %c0 = arith.constant 0 : index
    %c0_0 = arith.constant 0 : index
    %0 = vector.load %arg1[%c0, %c0_0] : memref<256x8xbf16, #tpu.memory_space<vmem>>, vector<256x8xbf16>
    %c0_1 = arith.constant 0 : index
    %c0_2 = arith.constant 0 : index
    %1 = vector.load %arg2[%c0_1, %c0_2] : memref<8x8xbf16, #tpu.memory_space<vmem>>, vector<8x8xbf16>
    %cst = arith.constant dense<0.000000e+00> : vector<256x8xf32>
    %2 = tpu.matmul %0, %1, %cst {dimension_numbers = #tpu.dot_dimension_numbers<[1], [0], [0], [1], [0, 0, 1, 1], [], []>} : vector<256x8xbf16>, vector<8x8xbf16>, vector<256x8xf32> -> vector<256x8xf32>
    %c0_3 = arith.constant 0 : index
    %c0_4 = arith.constant 0 : index
    %3 = vector.load %arg3[%c0_3, %c0_4] : memref<1x8xf32, #tpu.memory_space<vmem>>, vector<1x8xf32>
    %4 = vector.broadcast %3 : vector<1x8xf32> to vector<256x8xf32>
    %5 = arith.addf %2, %4 : vector<256x8xf32>
    %cst_5 = arith.constant 0.000000e+00 : f32
    %6 = vector.broadcast %cst_5 : f32 to vector<256x8xf32>
    %7 = arith.subf %6, %5 : vector<256x8xf32>
    %8 = math.exp %7 : vector<256x8xf32>
    %cst_6 = arith.constant 1.000000e+00 : f32
    %9 = vector.broadcast %cst_6 : f32 to vector<256x8xf32>
    %10 = arith.addf %9, %8 : vector<256x8xf32>
    %11 = tpu.reciprocal %10 {approx = true} : vector<256x8xf32> -> vector<256x8xf32>
    %12 = arith.mulf %5, %11 : vector<256x8xf32>
    %13 = arith.truncf %12 : vector<256x8xf32> to vector<256x8xbf16>
    %c0_7 = arith.constant 0 : index
    %c0_8 = arith.constant 0 : index
    %14 = vector.load %arg4[%c0_7, %c0_8] : memref<256x8xbf16, #tpu.memory_space<vmem>>, vector<256x8xbf16>
    tpu.vector_store %arg4[%c0_7, %c0_8], %13 {strides = array<i32>} : memref<256x8xbf16, #tpu.memory_space<vmem>>, vector<256x8xbf16>,
    return
  }
  func.func @transform_0(%arg0: i32) -> (i32, i32) {
    %c0_i32 = arith.constant 0 : i32
    %c0_i32_0 = arith.constant 0 : i32
    return %arg0, %c0_i32 : i32, i32
  }
  func.func @transform_1(%arg0: i32) -> (i32, i32) {
    %c0_i32 = arith.constant 0 : i32
    %c0_i32_0 = arith.constant 0 : i32
    %c0_i32_1 = arith.constant 0 : i32
    return %c0_i32, %c0_i32_0 : i32, i32
  }
  func.func @transform_2(%arg0: i32) -> (i32, i32) {
    %c0_i32 = arith.constant 0 : i32
    %c0_i32_0 = arith.constant 0 : i32
    %c0_i32_1 = arith.constant 0 : i32
    return %c0_i32, %c0_i32_0 : i32, i32
  }
  func.func @transform_3(%arg0: i32) -> (i32, i32) {
    %c0_i32 = arith.constant 0 : i32
    %c0_i32_0 = arith.constant 0 : i32
    return %arg0, %c0_i32 : i32, i32
  }
}

module attributes {stable_mosaic.version = 11 : i64} {
  func.func @_cv2_multi_kernel(%arg0: i32, %arg1: memref<256x8xbf16, #tpu.memory_space<vmem>>, %arg2: memref<256x4xbf16, #tpu.memory_space<vmem>>, %arg3: memref<256x4xbf16, #tpu.memory_space<vmem>>, %arg4: memref<8x8xbf16, #tpu.memory_space<vmem>>, %arg5: memref<4x8xbf16, #tpu.memory_space<vmem>>, %arg6: memref<4x8xbf16, #tpu.memory_space<vmem>>, %arg7: memref<1x8xf32, #tpu.memory_space<vmem>>, %arg8: memref<256x8xbf16, #tpu.memory_space<vmem>>) attributes {dimension_semantics = [#tpu.dimension_semantics<parallel>], iteration_bounds = array<i64: 2>, scalar_prefetch = 0 : i64, scratch_operands = 0 : i64, tpu.core_type = #tpu.core_type<tc>, window_params = [{transform_indices = @transform_0, window_bounds = array<i64: 256, 8>}, {transform_indices = @transform_1, window_bounds = array<i64: 256, 4>}, {transform_indices = @transform_2, window_bounds = array<i64: 256, 4>}, {pipeline_mode = #tpu.pipeline_mode<synchronous>, transform_indices = @transform_3, window_bounds = array<i64: 8, 8>}, {pipeline_mode = #tpu.pipeline_mode<synchronous>, transform_indices = @transform_4, window_bounds = array<i64: 4, 8>}, {pipeline_mode = #tpu.pipeline_mode<synchronous>, transform_indices = @transform_5, window_bounds = array<i64: 4, 8>}, {pipeline_mode = #tpu.pipeline_mode<synchronous>, transform_indices = @transform_6, window_bounds = array<i64: 1, 8>}, {transform_indices = @transform_7, window_bounds = array<i64: 256, 8>}]} {
    %cst = arith.constant 0.000000e+00 : f32
    %0 = vector.broadcast %cst : f32 to vector<256x8xf32>
    %c0 = arith.constant 0 : index
    %c0_0 = arith.constant 0 : index
    %1 = vector.load %arg1[%c0, %c0_0] : memref<256x8xbf16, #tpu.memory_space<vmem>>, vector<256x8xbf16>
    %c0_1 = arith.constant 0 : index
    %c0_2 = arith.constant 0 : index
    %2 = vector.load %arg4[%c0_1, %c0_2] : memref<8x8xbf16, #tpu.memory_space<vmem>>, vector<8x8xbf16>
    %cst_3 = arith.constant dense<0.000000e+00> : vector<256x8xf32>
    %3 = tpu.matmul %1, %2, %cst_3 {dimension_numbers = #tpu.dot_dimension_numbers<[1], [0], [0], [1], [0, 0, 1, 1], [], []>} : vector<256x8xbf16>, vector<8x8xbf16>, vector<256x8xf32> -> vector<256x8xf32>
    %4 = arith.addf %0, %3 : vector<256x8xf32>
    %c0_4 = arith.constant 0 : index
    %c0_5 = arith.constant 0 : index
    %5 = vector.load %arg2[%c0_4, %c0_5] : memref<256x4xbf16, #tpu.memory_space<vmem>>, vector<256x4xbf16>
    %c0_6 = arith.constant 0 : index
    %c0_7 = arith.constant 0 : index
    %6 = vector.load %arg5[%c0_6, %c0_7] : memref<4x8xbf16, #tpu.memory_space<vmem>>, vector<4x8xbf16>
    %cst_8 = arith.constant dense<0.000000e+00> : vector<256x8xf32>
    %7 = tpu.matmul %5, %6, %cst_8 {dimension_numbers = #tpu.dot_dimension_numbers<[1], [0], [0], [1], [0, 0, 1, 1], [], []>} : vector<256x4xbf16>, vector<4x8xbf16>, vector<256x8xf32> -> vector<256x8xf32>
    %8 = arith.addf %4, %7 : vector<256x8xf32>
    %c0_9 = arith.constant 0 : index
    %c0_10 = arith.constant 0 : index
    %9 = vector.load %arg3[%c0_9, %c0_10] : memref<256x4xbf16, #tpu.memory_space<vmem>>, vector<256x4xbf16>
    %c0_11 = arith.constant 0 : index
    %c0_12 = arith.constant 0 : index
    %10 = vector.load %arg6[%c0_11, %c0_12] : memref<4x8xbf16, #tpu.memory_space<vmem>>, vector<4x8xbf16>
    %cst_13 = arith.constant dense<0.000000e+00> : vector<256x8xf32>
    %11 = tpu.matmul %9, %10, %cst_13 {dimension_numbers = #tpu.dot_dimension_numbers<[1], [0], [0], [1], [0, 0, 1, 1], [], []>} : vector<256x4xbf16>, vector<4x8xbf16>, vector<256x8xf32> -> vector<256x8xf32>
    %12 = arith.addf %8, %11 : vector<256x8xf32>
    %c0_14 = arith.constant 0 : index
    %c0_15 = arith.constant 0 : index
    %13 = vector.load %arg7[%c0_14, %c0_15] : memref<1x8xf32, #tpu.memory_space<vmem>>, vector<1x8xf32>
    %14 = vector.broadcast %13 : vector<1x8xf32> to vector<256x8xf32>
    %15 = arith.addf %12, %14 : vector<256x8xf32>
    %cst_16 = arith.constant 0.000000e+00 : f32
    %16 = vector.broadcast %cst_16 : f32 to vector<256x8xf32>
    %17 = arith.subf %16, %15 : vector<256x8xf32>
    %18 = math.exp %17 : vector<256x8xf32>
    %cst_17 = arith.constant 1.000000e+00 : f32
    %19 = vector.broadcast %cst_17 : f32 to vector<256x8xf32>
    %20 = arith.addf %19, %18 : vector<256x8xf32>
    %21 = tpu.reciprocal %20 {approx = true} : vector<256x8xf32> -> vector<256x8xf32>
    %22 = arith.mulf %15, %21 : vector<256x8xf32>
    %23 = arith.truncf %22 : vector<256x8xf32> to vector<256x8xbf16>
    %c0_18 = arith.constant 0 : index
    %c0_19 = arith.constant 0 : index
    %24 = vector.load %arg8[%c0_18, %c0_19] : memref<256x8xbf16, #tpu.memory_space<vmem>>, vector<256x8xbf16>
    tpu.vector_store %arg8[%c0_18, %c0_19], %23 {strides = array<i32>} : memref<256x8xbf16, #tpu.memory_space<vmem>>, vector<256x8xbf16>,
    return
  }
  func.func @transform_0(%arg0: i32) -> (i32, i32) {
    %c0_i32 = arith.constant 0 : i32
    %c0_i32_0 = arith.constant 0 : i32
    return %arg0, %c0_i32 : i32, i32
  }
  func.func @transform_1(%arg0: i32) -> (i32, i32) {
    %c0_i32 = arith.constant 0 : i32
    %c0_i32_0 = arith.constant 0 : i32
    return %arg0, %c0_i32 : i32, i32
  }
  func.func @transform_2(%arg0: i32) -> (i32, i32) {
    %c0_i32 = arith.constant 0 : i32
    %c0_i32_0 = arith.constant 0 : i32
    return %arg0, %c0_i32 : i32, i32
  }
  func.func @transform_3(%arg0: i32) -> (i32, i32) {
    %c0_i32 = arith.constant 0 : i32
    %c0_i32_0 = arith.constant 0 : i32
    %c0_i32_1 = arith.constant 0 : i32
    return %c0_i32, %c0_i32_0 : i32, i32
  }
  func.func @transform_4(%arg0: i32) -> (i32, i32) {
    %c0_i32 = arith.constant 0 : i32
    %c0_i32_0 = arith.constant 0 : i32
    %c0_i32_1 = arith.constant 0 : i32
    return %c0_i32, %c0_i32_0 : i32, i32
  }
  func.func @transform_5(%arg0: i32) -> (i32, i32) {
    %c0_i32 = arith.constant 0 : i32
    %c0_i32_0 = arith.constant 0 : i32
    %c0_i32_1 = arith.constant 0 : i32
    return %c0_i32, %c0_i32_0 : i32, i32
  }
  func.func @transform_6(%arg0: i32) -> (i32, i32) {
    %c0_i32 = arith.constant 0 : i32
    %c0_i32_0 = arith.constant 0 : i32
    %c0_i32_1 = arith.constant 0 : i32
    return %c0_i32, %c0_i32_0 : i32, i32
  }
  func.func @transform_7(%arg0: i32) -> (i32, i32) {
    %c0_i32 = arith.constant 0 : i32
    %c0_i32_0 = arith.constant 0 : i32
    return %arg0, %c0_i32 : i32, i32
  }
}

</mosaic_0001>

<llo_original>
// kernel: c2f_forward_pallas.4
$region0: #{c2f_forward_pallas.4}
  #allocation0 [shape = 'u32[]', space=smem, size = 0x4, offset = 0x4, fixed_abs, tag = 'smem constant byte address 0x4 - core index']
  #allocation1 [shape = 'u32[144,128]{1,0:T(1,128)}', space=vmem, size = 0x12000, scoped, tag = 'internal scratch']
  %s0 = inlined_call_operand.vmem [shape: bf16[512,8], index: 0, kind: input, shape index: {}]
  %s1 = inlined_call_operand.vmem [shape: bf16[8,8], index: 1, kind: input, shape index: {}]
  %s2 = inlined_call_operand.vmem [shape: f32[1,8], index: 2, kind: input, shape index: {}]
  %s3 = inlined_call_operand.vmem [shape: bf16[512,8], index: 3, kind: output, shape index: {}]
  %s4 = sld [smem:[#allocation0]]
  $region45: #{c2f_forward_pallas.4} parent=0
    _
  %s6 = ssub.s32 1, %s4
  %s7 = scalar_select 0, %s6, %s4
  loop: start=0, step=1, limit=4
  $region2: #{c2f_forward_pallas.4} parent=0 // loop_pre_header
    _
  $region3: #{c2f_forward_pallas.4} parent=0 // loop_header
    %s9 = sphi 0, %s13
    %p10 = scmp.ge.s32.totalorder %s9, 4
    %s19 = sphi 0, %s21
    %s22 = sphi 0, %s19
    %s23 = sphi 0, %s22
    %s39 = sphi 0, %s23
    %s43 = sphi 0, %s43
    %s45 = sphi 0, %s43
    %s46 = sphi 0, %s45
    %s60 = sphi 0, %s46
    %s64 = sphi 0, %s64
    %s66 = sphi 0, %s64
    %s67 = sphi 0, %s66
    %s81 = sphi 0, %s67
    %s87 = sphi 0, %s89
    %s90 = sphi 0, %s87
    %s91 = sphi 0, %s90
    %s107 = sphi 0, %s91
  $region4: #{c2f_forward_pallas.4} parent=0 // loop_header_branch
    %12 = sbr.rel (%p10) target = $region8
  $region5: #{c2f_forward_pallas.4} parent=0 // loop_body
    %s14 = ssub.s32 %s9, 1
    %s15 = ssub.s32 %s9, 2
    %s16 = sadd.s32 %s9, 1
    %s17 = ssub.s32 %s9, %s16
    %p18 = scmp.eq.s32.totalorder %s17, 0
    %s20 = sadd.s32 %s19, 1
    %s21 = scalar_select %p18, %s19, %s20
    %p24 = pneg %p18
    %p25 = scmp.eq.s32.totalorder %s9, 1
    %p26 = por %p24, %p25
    %p27 = scmp.ne.s32.totalorder %s19, %s22
    %p28 = scmp.eq.s32.totalorder %s9, 0
    %p29 = por %p27, %p28
    %p30 = scmp.ne.s32.totalorder %s19, %s22
    %p31 = scmp.eq.s32.totalorder %s14, 1
    %p32 = por %p30, %p31
    %p33 = scmp.ne.s32.totalorder %s22, %s23
    %p34 = scmp.eq.s32.totalorder %s14, 0
    %p35 = por %p33, %p34
    %p36 = scmp.ne.s32.totalorder %s22, %s23
    %p37 = scmp.eq.s32.totalorder %s15, 1
    %p38 = por %p36, %p37
    %p40 = scmp.ne.s32.totalorder %s23, %s39
    %p41 = scmp.eq.s32.totalorder %s15, 0
    %p42 = por %p40, %p41
    %s44 = sadd.s32 %s43, 1
    %p47 = scmp.eq.s32.totalorder %s9, 1
    %p48 = scmp.ne.s32.totalorder %s43, %s45
    %p49 = scmp.eq.s32.totalorder %s9, 0
    %p50 = por %p48, %p49
    %p51 = scmp.ne.s32.totalorder %s43, %s45
    %p52 = scmp.eq.s32.totalorder %s14, 1
    %p53 = por %p51, %p52
    %p54 = scmp.ne.s32.totalorder %s45, %s46
    %p55 = scmp.eq.s32.totalorder %s14, 0
    %p56 = por %p54, %p55
    %p57 = scmp.ne.s32.totalorder %s45, %s46
    %p58 = scmp.eq.s32.totalorder %s15, 1
    %p59 = por %p57, %p58
    %p61 = scmp.ne.s32.totalorder %s46, %s60
    %p62 = scmp.eq.s32.totalorder %s15, 0
    %p63 = por %p61, %p62
    %s65 = sadd.s32 %s64, 1
    %p68 = scmp.eq.s32.totalorder %s9, 1
    %p69 = scmp.ne.s32.totalorder %s64, %s66
    %p70 = scmp.eq.s32.totalorder %s9, 0
    %p71 = por %p69, %p70
    %p72 = scmp.ne.s32.totalorder %s64, %s66
    %p73 = scmp.eq.s32.totalorder %s14, 1
    %p74 = por %p72, %p73
    %p75 = scmp.ne.s32.totalorder %s66, %s67
    %p76 = scmp.eq.s32.totalorder %s14, 0
    %p77 = por %p75, %p76
    %p78 = scmp.ne.s32.totalorder %s66, %s67
    %p79 = scmp.eq.s32.totalorder %s15, 1
    %p80 = por %p78, %p79
    %p82 = scmp.ne.s32.totalorder %s67, %s81
    %p83 = scmp.eq.s32.totalorder %s15, 0
    %p84 = por %p82, %p83
    %s85 = ssub.s32 %s9, %s16
    %p86 = scmp.eq.s32.totalorder %s85, 0
    %s88 = sadd.s32 %s87, 1
    %s89 = scalar_select %p86, %s87, %s88
    %p92 = pneg %p86
    %p93 = scmp.eq.s32.totalorder %s9, 1
    %p94 = por %p92, %p93
    %p95 = scmp.ne.s32.totalorder %s87, %s90
    %p96 = scmp.eq.s32.totalorder %s9, 0
    %p97 = por %p95, %p96
    %p98 = scmp.ne.s32.totalorder %s87, %s90
    %p99 = scmp.eq.s32.totalorder %s14, 1
    %p100 = por %p98, %p99
    %p101 = scmp.ne.s32.totalorder %s90, %s91
    %p102 = scmp.eq.s32.totalorder %s14, 0
    %p103 = por %p101, %p102
    %p104 = scmp.ne.s32.totalorder %s90, %s91
    %p105 = scmp.eq.s32.totalorder %s15, 1
    %p106 = por %p104, %p105
    %p108 = scmp.ne.s32.totalorder %s91, %s107
    %p109 = scmp.eq.s32.totalorder %s15, 0
    %p110 = por %p108, %p109
    %p111 = scmp.le.s32.totalorder 1, %s9
    %p112 = scmp.lt.s32.totalorder %s9, 3
    %p113 = pnand %p111, %p112
    %p114 = pneg %p113
    // Predicated region
    $region9: #{c2f_forward_pallas.4} parent=5 // pred_check
      _
    $region10: #{c2f_forward_pallas.4} parent=5 // pred_check_branch
      %116 = sbr.rel (%p113) target = $region12
    $region11: #{c2f_forward_pallas.4} parent=5 // pred_region
      %s117 = ssub.s32 %s9, 1
      // Predicated region
      $region13: #{c2f_forward_pallas.4} parent=11 // pred_check
        %p118 = pneg %p56
      $region14: #{c2f_forward_pallas.4} parent=11 // pred_check_branch
        %120 = sbr.rel (%p118) target = $region16
      $region15: #{c2f_forward_pallas.4} parent=11 // pred_region
        _
      $region16: #{c2f_forward_pallas.4} parent=11 // pred_fallthru
        _
      // Predicated region
      $region17: #{c2f_forward_pallas.4} parent=11 // pred_check
        %p121 = pneg %p77
      $region18: #{c2f_forward_pallas.4} parent=11 // pred_check_branch
        %123 = sbr.rel (%p121) target = $region20
      $region19: #{c2f_forward_pallas.4} parent=11 // pred_region
        _
      $region20: #{c2f_forward_pallas.4} parent=11 // pred_fallthru
        _
    $region12: #{c2f_forward_pallas.4} parent=5 // pred_fallthru
      _
    %p124 = scmp.lt.s32.totalorder %s9, 2
    // Predicated region
    $region21: #{c2f_forward_pallas.4} parent=5 // pred_check
      %p125 = pneg %p124
    $region22: #{c2f_forward_pallas.4} parent=5 // pred_check_branch
      %127 = sbr.rel (%p125) target = $region24
    $region23: #{c2f_forward_pallas.4} parent=5 // pred_region
      // Predicated region
      $region25: #{c2f_forward_pallas.4} parent=23 // pred_check
        %p128 = pneg %p29
      $region26: #{c2f_forward_pallas.4} parent=23 // pred_check_branch
        %130 = sbr.rel (%p128) target = $region28
      $region27: #{c2f_forward_pallas.4} parent=23 // pred_region
        %s131 = smul.u32 32, %s9
        %p132 = scmp.lt.s32.totalorder %s131, 63
        %s133 = scalar_select %p132, %s131, 63
        %s134 = smul.addr %s133, 4
        %s135 = scalar_lea.vmem %s0, %s134
        %s136 = smul.u32 32, %s9
      $region28: #{c2f_forward_pallas.4} parent=23 // pred_fallthru
        _
    $region24: #{c2f_forward_pallas.4} parent=5 // pred_fallthru
      _
    %p137 = scmp.le.s32.totalorder 1, %s9
    %p138 = scmp.lt.s32.totalorder %s9, 3
    %p139 = pnand %p137, %p138
    %p140 = pneg %p139
    // Predicated region
    $region29: #{c2f_forward_pallas.4} parent=5 // pred_check
      _
    $region30: #{c2f_forward_pallas.4} parent=5 // pred_check_branch
      %142 = sbr.rel (%p139) target = $region32
    $region31: #{c2f_forward_pallas.4} parent=5 // pred_region
      %s143 = ssub.s32 %s9, 1
      %s144 = smul.u32 32, %s14
      %p145 = scmp.lt.s32.totalorder %s144, 63
      %s146 = scalar_select %p145, %s144, 63
      %s147 = smul.addr %s146, 4
      %s148 = scalar_lea.vmem %s0, %s147
      %p149 = pneg %p35
      %p150 = pneg %p32
      %p151 = pneg %p56
      %p152 = pneg %p53
      %p153 = pneg %p77
      %p154 = pneg %p74
      %p155 = pneg %p103
      %p156 = pneg %p100
      %s157 = smul.u32 32, %s14
      %p158 = scmp.lt.s32.totalorder %s157, 63
      %s159 = scalar_select %p158, %s157, 63
      %s160 = smul.addr %s159, 4
      %s161 = scalar_lea.vmem %s3, %s160
      %s162 = smul.u32 32, %s14
      %p163 = scmp.lt.s32.totalorder %s162, 63
      %s164 = scalar_select %p163, %s162, 63
      %s165 = smul.addr %s164, 4
      %s166 = scalar_lea.vmem %s0, %s165
      %s167 = smul.u32 32, %s14
      %s168 = smul.u32 32, %s14
      %p169 = scmp.lt.s32.totalorder %s168, 63
      %s170 = scalar_select %p169, %s168, 63
      %s171 = smul.addr %s170, 4
      %s172 = scalar_lea.vmem %s3, %s171
      %s173 = smul.u32 32, %s14
      %v175 = vld [vmem:[%s166] sm:$0xf]
      %v176 = vld [vmem:[%s166 + $0x4] sm:$0xf]
      %v177 = vld [vmem:[%s166 + $0x8] sm:$0xf]
      %v178 = vld [vmem:[%s166 + $0xc] sm:$0xf]
      %v179 = vld [vmem:[%s166 + $0x10] sm:$0xf]
      %v180 = vld [vmem:[%s166 + $0x14] sm:$0xf]
      %v181 = vld [vmem:[%s166 + $0x18] sm:$0xf]
      %v182 = vld [vmem:[%s166 + $0x1c] sm:$0xf]
      %v183 = vld [vmem:[%s166 + $0x20] sm:$0xf]
      %v184 = vld [vmem:[%s166 + $0x24] sm:$0xf]
      %v185 = vld [vmem:[%s166 + $0x28] sm:$0xf]
      %v186 = vld [vmem:[%s166 + $0x2c] sm:$0xf]
      %v187 = vld [vmem:[%s166 + $0x30] sm:$0xf]
      %v188 = vld [vmem:[%s166 + $0x34] sm:$0xf]
      %v189 = vld [vmem:[%s166 + $0x38] sm:$0xf]
      %v190 = vld [vmem:[%s166 + $0x3c] sm:$0xf]
      %v191 = vld [vmem:[%s166 + $0x40] sm:$0xf]
      %v192 = vld [vmem:[%s166 + $0x44] sm:$0xf]
      %v193 = vld [vmem:[%s166 + $0x48] sm:$0xf]
      %v194 = vld [vmem:[%s166 + $0x4c] sm:$0xf]
      %v195 = vld [vmem:[%s166 + $0x50] sm:$0xf]
      %v196 = vld [vmem:[%s166 + $0x54] sm:$0xf]
      %v197 = vld [vmem:[%s166 + $0x58] sm:$0xf]
      %v198 = vld [vmem:[%s166 + $0x5c] sm:$0xf]
      %v199 = vld [vmem:[%s166 + $0x60] sm:$0xf]
      %v200 = vld [vmem:[%s166 + $0x64] sm:$0xf]
      %v201 = vld [vmem:[%s166 + $0x68] sm:$0xf]
      %v202 = vld [vmem:[%s166 + $0x6c] sm:$0xf]
      %v203 = vld [vmem:[%s166 + $0x70] sm:$0xf]
      %v204 = vld [vmem:[%s166 + $0x74] sm:$0xf]
      %v205 = vld [vmem:[%s166 + $0x78] sm:$0xf]
      %v206 = vld [vmem:[%s166 + $0x7c] sm:$0xf]
      %v207 = vld [vmem:[%s1] sm:$0xf]
      %v208 = vld [vmem:[%s2] sm:$0x1]
      %v210 = vlaneseq
      %v211 = vshrl.u32 %v210, 7
      %v212 = vsub.s32 0, %v211
      %v213 = vrot.slane %v208, %v212
      %v247 = vunpack.c.l.b16 %v175
      %v248 = vunpack.c.l.b16 %v176
      %v249 = vunpack.c.l.b16 %v177
      %v250 = vunpack.c.l.b16 %v178
      %v251 = vunpack.c.l.b16 %v179
      %v252 = vunpack.c.l.b16 %v180
      %v253 = vunpack.c.l.b16 %v181
      %v254 = vunpack.c.l.b16 %v182
      %v255 = vunpack.c.l.b16 %v183
      %v256 = vunpack.c.l.b16 %v184
      %v257 = vunpack.c.l.b16 %v185
      %v258 = vunpack.c.l.b16 %v186
      %v259 = vunpack.c.l.b16 %v187
      %v260 = vunpack.c.l.b16 %v188
      %v261 = vunpack.c.l.b16 %v189
      %v262 = vunpack.c.l.b16 %v190
      %v263 = vunpack.c.l.b16 %v191
      %v264 = vunpack.c.l.b16 %v192
      %v265 = vunpack.c.l.b16 %v193
      %v266 = vunpack.c.l.b16 %v194
      %v267 = vunpack.c.l.b16 %v195
      %v268 = vunpack.c.l.b16 %v196
      %v269 = vunpack.c.l.b16 %v197
      %v270 = vunpack.c.l.b16 %v198
      %v271 = vunpack.c.l.b16 %v199
      %v272 = vunpack.c.l.b16 %v200
      %v273 = vunpack.c.l.b16 %v201
      %v274 = vunpack.c.l.b16 %v202
      %v275 = vunpack.c.l.b16 %v203
      %v276 = vunpack.c.l.b16 %v204
      %v277 = vunpack.c.l.b16 %v205
      %v278 = vunpack.c.l.b16 %v206
      %v279 = vpack.c.b16 %v248, %v247
      %v280 = vpack.c.b16 %v250, %v249
      %v281 = vpack.c.b16 %v252, %v251
      %v282 = vpack.c.b16 %v254, %v253
      %v283 = vpack.c.b16 %v256, %v255
      %v284 = vpack.c.b16 %v258, %v257
      %v285 = vpack.c.b16 %v260, %v259
      %v286 = vpack.c.b16 %v262, %v261
      %v287 = vpack.c.b16 %v264, %v263
      %v288 = vpack.c.b16 %v266, %v265
      %v289 = vpack.c.b16 %v268, %v267
      %v290 = vpack.c.b16 %v270, %v269
      %v291 = vpack.c.b16 %v272, %v271
      %v292 = vpack.c.b16 %v274, %v273
      %v293 = vpack.c.b16 %v276, %v275
      %v294 = vpack.c.b16 %v278, %v277
      %vm295 = vcmask 64512
      %v297 = vsel %vm295, %v279, 0
      %v300 = vsel %vm295, %v280, 0
      %v303 = vsel %vm295, %v281, 0
      %v306 = vsel %vm295, %v282, 0
      %v309 = vsel %vm295, %v283, 0
      %v312 = vsel %vm295, %v284, 0
      %v315 = vsel %vm295, %v285, 0
      %v318 = vsel %vm295, %v286, 0
      %v321 = vsel %vm295, %v287, 0
      %v324 = vsel %vm295, %v288, 0
      %v327 = vsel %vm295, %v289, 0
      %v330 = vsel %vm295, %v290, 0
      %v333 = vsel %vm295, %v291, 0
      %v336 = vsel %vm295, %v292, 0
      %v339 = vsel %vm295, %v293, 0
      %v342 = vsel %vm295, %v294, 0
      %vm344 = vcmask 1043456
      %v346 = vsel %vm344, %v207, 0
      %348 = vmatprep.subr.bf16.mxu0 0
      %349 = vmatpush1.bf16.msra.mxu0 %v346
      %350 = vmatprep.subr.bf16.mxu0 0
      %351 = vmatpush1.bf16.msra.mxu0 0
      %352 = vmatprep.subr.bf16.mxu0 0
      %353 = vmatpush1.bf16.msra.mxu0 0
      %354 = vmatprep.subr.bf16.mxu0 0
      %355 = vmatpush1.bf16.msra.mxu0 0
      %356 = vmatprep.subr.bf16.mxu0 0
      %357 = vmatpush1.bf16.msra.mxu0 0
      %358 = vmatprep.subr.bf16.mxu0 0
      %359 = vmatpush1.bf16.msra.mxu0 0
      %360 = vmatprep.subr.bf16.mxu0 0
      %361 = vmatpush1.bf16.msra.mxu0 0
      %362 = vmatprep.subr.bf16.mxu0 0
      %363 = vmatpush1.bf16.msra.mxu0 0
      %364 = vmatprep.subr.bf16.mxu0 0
      %365 = vmatpush1.bf16.msra.mxu0 0
      %366 = vmatprep.subr.bf16.mxu0 0
      %367 = vmatpush1.bf16.msra.mxu0 0
      %368 = vmatprep.subr.bf16.mxu0 0
      %369 = vmatpush1.bf16.msra.mxu0 0
      %370 = vmatprep.subr.bf16.mxu0 0
      %371 = vmatpush1.bf16.msra.mxu0 0
      %372 = vmatprep.subr.bf16.mxu0 0
      %373 = vmatpush1.bf16.msra.mxu0 0
      %374 = vmatprep.subr.bf16.mxu0 0
      %375 = vmatpush1.bf16.msra.mxu0 0
      %376 = vmatprep.subr.bf16.mxu0 0
      %377 = vmatpush1.bf16.msra.mxu0 0
      %378 = vmatprep.subr.bf16.mxu0 0
      %379 = vmatpush1.bf16.msra.mxu0 0
      %380 = vmatprep.mubr.bf16.mxu0 0
      %381 = vmatmul.mubr.bf16.gmra.mrb[0].mxu0 %v297
      %v382 = vpop.f32.mrb[0].mxu0
      %v383 = vadd.f32 %v213, %v382
      %v384 = vpop.f32.mrb[0].mxu0
      %v385 = vpop.f32.mrb[0].mxu0
      %v386 = vadd.f32 %v213, %v385
      %v387 = vpop.f32.mrb[0].mxu0
      %388 = vmatprep.mubr.bf16.mxu0 0
      %389 = vmatmul.mubr.bf16.gmra.mrb[0].mxu0 %v300
      %v390 = vpop.f32.mrb[0].mxu0
      %v391 = vadd.f32 %v213, %v390
      %v392 = vpop.f32.mrb[0].mxu0
      %v393 = vpop.f32.mrb[0].mxu0
      %v394 = vadd.f32 %v213, %v393
      %v395 = vpop.f32.mrb[0].mxu0
      %396 = vmatprep.mubr.bf16.mxu0 0
      %397 = vmatmul.mubr.bf16.gmra.mrb[0].mxu0 %v303
      %v398 = vpop.f32.mrb[0].mxu0
      %v399 = vadd.f32 %v213, %v398
      %v400 = vpop.f32.mrb[0].mxu0
      %v401 = vpop.f32.mrb[0].mxu0
      %v402 = vadd.f32 %v213, %v401
      %v403 = vpop.f32.mrb[0].mxu0
      %404 = vmatprep.mubr.bf16.mxu0 0
      %405 = vmatmul.mubr.bf16.gmra.mrb[0].mxu0 %v306
      %v406 = vpop.f32.mrb[0].mxu0
      %v407 = vadd.f32 %v213, %v406
      %v408 = vpop.f32.mrb[0].mxu0
      %v409 = vpop.f32.mrb[0].mxu0
      %v410 = vadd.f32 %v213, %v409
      %v411 = vpop.f32.mrb[0].mxu0
      %412 = vmatprep.mubr.bf16.mxu0 0
      %413 = vmatmul.mubr.bf16.gmra.mrb[0].mxu0 %v309
      %v414 = vpop.f32.mrb[0].mxu0
      %v415 = vadd.f32 %v213, %v414
      %v416 = vpop.f32.mrb[0].mxu0
      %v417 = vpop.f32.mrb[0].mxu0
      %v418 = vadd.f32 %v213, %v417
      %v419 = vpop.f32.mrb[0].mxu0
      %420 = vmatprep.mubr.bf16.mxu0 0
      %421 = vmatmul.mubr.bf16.gmra.mrb[0].mxu0 %v312
      %v422 = vpop.f32.mrb[0].mxu0
      %v423 = vadd.f32 %v213, %v422
      %v424 = vpop.f32.mrb[0].mxu0
      %v425 = vpop.f32.mrb[0].mxu0
      %v426 = vadd.f32 %v213, %v425
      %v427 = vpop.f32.mrb[0].mxu0
      %428 = vmatprep.mubr.bf16.mxu0 0
      %429 = vmatmul.mubr.bf16.gmra.mrb[0].mxu0 %v315
      %v430 = vpop.f32.mrb[0].mxu0
      %v431 = vadd.f32 %v213, %v430
      %v432 = vpop.f32.mrb[0].mxu0
      %v433 = vpop.f32.mrb[0].mxu0
      %v434 = vadd.f32 %v213, %v433
      %v435 = vpop.f32.mrb[0].mxu0
      %436 = vmatprep.mubr.bf16.mxu0 0
      %437 = vmatmul.mubr.bf16.gmra.mrb[0].mxu0 %v318
      %v438 = vpop.f32.mrb[0].mxu0
      %v439 = vadd.f32 %v213, %v438
      %v440 = vpop.f32.mrb[0].mxu0
      %v441 = vpop.f32.mrb[0].mxu0
      %v442 = vadd.f32 %v213, %v441
      %v443 = vpop.f32.mrb[0].mxu0
      %444 = vmatprep.mubr.bf16.mxu0 0
      %445 = vmatmul.mubr.bf16.gmra.mrb[0].mxu0 %v321
      %v446 = vpop.f32.mrb[0].mxu0
      %v447 = vadd.f32 %v213, %v446
      %v448 = vpop.f32.mrb[0].mxu0
      %v449 = vpop.f32.mrb[0].mxu0
      %v450 = vadd.f32 %v213, %v449
      %v451 = vpop.f32.mrb[0].mxu0
      %452 = vmatprep.mubr.bf16.mxu0 0
      %453 = vmatmul.mubr.bf16.gmra.mrb[0].mxu0 %v324
      %v454 = vpop.f32.mrb[0].mxu0
      %v455 = vadd.f32 %v213, %v454
      %v456 = vpop.f32.mrb[0].mxu0
      %v457 = vpop.f32.mrb[0].mxu0
      %v458 = vadd.f32 %v213, %v457
      %v459 = vpop.f32.mrb[0].mxu0
      %460 = vmatprep.mubr.bf16.mxu0 0
      %461 = vmatmul.mubr.bf16.gmra.mrb[0].mxu0 %v327
      %v462 = vpop.f32.mrb[0].mxu0
      %v463 = vadd.f32 %v213, %v462
      %v464 = vpop.f32.mrb[0].mxu0
      %v465 = vpop.f32.mrb[0].mxu0
      %v466 = vadd.f32 %v213, %v465
      %v467 = vpop.f32.mrb[0].mxu0
      %468 = vmatprep.mubr.bf16.mxu0 0
      %469 = vmatmul.mubr.bf16.gmra.mrb[0].mxu0 %v330
      %v470 = vpop.f32.mrb[0].mxu0
      %v471 = vadd.f32 %v213, %v470
      %v472 = vpop.f32.mrb[0].mxu0
      %v473 = vpop.f32.mrb[0].mxu0
      %v474 = vadd.f32 %v213, %v473
      %v475 = vpop.f32.mrb[0].mxu0
      %476 = vmatprep.mubr.bf16.mxu0 0
      %477 = vmatmul.mubr.bf16.gmra.mrb[0].mxu0 %v333
      %v478 = vpop.f32.mrb[0].mxu0
      %v479 = vadd.f32 %v213, %v478
      %v480 = vpop.f32.mrb[0].mxu0
      %v481 = vpop.f32.mrb[0].mxu0
      %v482 = vadd.f32 %v213, %v481
      %v483 = vpop.f32.mrb[0].mxu0
      %484 = vmatprep.mubr.bf16.mxu0 0
      %485 = vmatmul.mubr.bf16.gmra.mrb[0].mxu0 %v336
      %v486 = vpop.f32.mrb[0].mxu0
      %v487 = vadd.f32 %v213, %v486
      %v488 = vpop.f32.mrb[0].mxu0
      %v489 = vpop.f32.mrb[0].mxu0
      %v490 = vadd.f32 %v213, %v489
      %v491 = vpop.f32.mrb[0].mxu0
      %492 = vmatprep.mubr.bf16.mxu0 0
      %493 = vmatmul.mubr.bf16.gmra.mrb[0].mxu0 %v339
      %v494 = vpop.f32.mrb[0].mxu0
      %v495 = vadd.f32 %v213, %v494
      %v496 = vpop.f32.mrb[0].mxu0
      %v497 = vpop.f32.mrb[0].mxu0
      %v498 = vadd.f32 %v213, %v497
      %v499 = vpop.f32.mrb[0].mxu0
      %500 = vmatprep.mubr.bf16.mxu0 0
      %501 = vmatmul.mubr.bf16.gmra.mrb[0].mxu0 %v342
      %v502 = vpop.f32.mrb[0].mxu0
      %v503 = vadd.f32 %v213, %v502
      %v504 = vpop.f32.mrb[0].mxu0
      %v505 = vpop.f32.mrb[0].mxu0
      %v506 = vadd.f32 %v213, %v505
      %v507 = vpop.f32.mrb[0].mxu0
      %508 = vdwg.mxu0
      %v509 = vsub.f32 0.0, %v383
      %v510 = vsub.f32 0.0, %v386
      %v511 = vsub.f32 0.0, %v391
      %v512 = vsub.f32 0.0, %v394
      %v513 = vsub.f32 0.0, %v399
      %v514 = vsub.f32 0.0, %v402
      %v515 = vsub.f32 0.0, %v407
      %v516 = vsub.f32 0.0, %v410
      %v517 = vsub.f32 0.0, %v415
      %v518 = vsub.f32 0.0, %v418
      %v519 = vsub.f32 0.0, %v423
      %v520 = vsub.f32 0.0, %v426
      %v521 = vsub.f32 0.0, %v431
      %v522 = vsub.f32 0.0, %v434
      %v523 = vsub.f32 0.0, %v439
      %v524 = vsub.f32 0.0, %v442
      %v525 = vsub.f32 0.0, %v447
      %v526 = vsub.f32 0.0, %v450
      %v527 = vsub.f32 0.0, %v455
      %v528 = vsub.f32 0.0, %v458
      %v529 = vsub.f32 0.0, %v463
      %v530 = vsub.f32 0.0, %v466
      %v531 = vsub.f32 0.0, %v471
      %v532 = vsub.f32 0.0, %v474
      %v533 = vsub.f32 0.0, %v479
      %v534 = vsub.f32 0.0, %v482
      %v535 = vsub.f32 0.0, %v487
      %v536 = vsub.f32 0.0, %v490
      %v537 = vsub.f32 0.0, %v495
      %v538 = vsub.f32 0.0, %v498
      %v539 = vsub.f32 0.0, %v503
      %v540 = vsub.f32 0.0, %v506
      %v541 = vmul.f32 %v509, 1.442695
      %v542 = vpow.pop %v541
      %v543 = vmul.f32 %v510, 1.442695
      %v544 = vpow.pop %v543
      %v545 = vmul.f32 %v511, 1.442695
      %v546 = vpow.pop %v545
      %v547 = vmul.f32 %v512, 1.442695
      %v548 = vpow.pop %v547
      %v549 = vmul.f32 %v513, 1.442695
      %v550 = vpow.pop %v549
      %v551 = vmul.f32 %v514, 1.442695
      %v552 = vpow.pop %v551
      %v553 = vmul.f32 %v515, 1.442695
      %v554 = vpow.pop %v553
      %v555 = vmul.f32 %v516, 1.442695
      %v556 = vpow.pop %v555
      %v557 = vmul.f32 %v517, 1.442695
      %v558 = vpow.pop %v557
      %v559 = vmul.f32 %v518, 1.442695
      %v560 = vpow.pop %v559
      %v561 = vmul.f32 %v519, 1.442695
      %v562 = vpow.pop %v561
      %v563 = vmul.f32 %v520, 1.442695
      %v564 = vpow.pop %v563
      %v565 = vmul.f32 %v521, 1.442695
      %v566 = vpow.pop %v565
      %v567 = vmul.f32 %v522, 1.442695
      %v568 = vpow.pop %v567
      %v569 = vmul.f32 %v523, 1.442695
      %v570 = vpow.pop %v569
      %v571 = vmul.f32 %v524, 1.442695
      %v572 = vpow.pop %v571
      %v573 = vmul.f32 %v525, 1.442695
      %v574 = vpow.pop %v573
      %v575 = vmul.f32 %v526, 1.442695
      %v576 = vpow.pop %v575
      %v577 = vmul.f32 %v527, 1.442695
      %v578 = vpow.pop %v577
      %v579 = vmul.f32 %v528, 1.442695
      %v580 = vpow.pop %v579
      %v581 = vmul.f32 %v529, 1.442695
      %v582 = vpow.pop %v581
      %v583 = vmul.f32 %v530, 1.442695
      %v584 = vpow.pop %v583
      %v585 = vmul.f32 %v531, 1.442695
      %v586 = vpow.pop %v585
      %v587 = vmul.f32 %v532, 1.442695
      %v588 = vpow.pop %v587
      %v589 = vmul.f32 %v533, 1.442695
      %v590 = vpow.pop %v589
      %v591 = vmul.f32 %v534, 1.442695
      %v592 = vpow.pop %v591
      %v593 = vmul.f32 %v535, 1.442695
      %v594 = vpow.pop %v593
      %v595 = vmul.f32 %v536, 1.442695
      %v596 = vpow.pop %v595
      %v597 = vmul.f32 %v537, 1.442695
      %v598 = vpow.pop %v597
      %v599 = vmul.f32 %v538, 1.442695
      %v600 = vpow.pop %v599
      %v601 = vmul.f32 %v539, 1.442695
      %v602 = vpow.pop %v601
      %v603 = vmul.f32 %v540, 1.442695
      %v604 = vpow.pop %v603
      %v605 = vadd.f32 %v542, 1.0
      %v606 = vadd.f32 %v544, 1.0
      %v607 = vadd.f32 %v546, 1.0
      %v608 = vadd.f32 %v548, 1.0
      %v609 = vadd.f32 %v550, 1.0
      %v610 = vadd.f32 %v552, 1.0
      %v611 = vadd.f32 %v554, 1.0
      %v612 = vadd.f32 %v556, 1.0
      %v613 = vadd.f32 %v558, 1.0
      %v614 = vadd.f32 %v560, 1.0
      %v615 = vadd.f32 %v562, 1.0
      %v616 = vadd.f32 %v564, 1.0
      %v617 = vadd.f32 %v566, 1.0
      %v618 = vadd.f32 %v568, 1.0
      %v619 = vadd.f32 %v570, 1.0
      %v620 = vadd.f32 %v572, 1.0
      %v621 = vadd.f32 %v574, 1.0
      %v622 = vadd.f32 %v576, 1.0
      %v623 = vadd.f32 %v578, 1.0
      %v624 = vadd.f32 %v580, 1.0
      %v625 = vadd.f32 %v582, 1.0
      %v626 = vadd.f32 %v584, 1.0
      %v627 = vadd.f32 %v586, 1.0
      %v628 = vadd.f32 %v588, 1.0
      %v629 = vadd.f32 %v590, 1.0
      %v630 = vadd.f32 %v592, 1.0
      %v631 = vadd.f32 %v594, 1.0
      %v632 = vadd.f32 %v596, 1.0
      %v633 = vadd.f32 %v598, 1.0
      %v634 = vadd.f32 %v600, 1.0
      %v635 = vadd.f32 %v602, 1.0
      %v636 = vadd.f32 %v604, 1.0
      %v637 = vrcp.pop %v605
      %v638 = vrcp.pop %v606
      %v639 = vrcp.pop %v607
      %v640 = vrcp.pop %v608
      %v641 = vrcp.pop %v609
      %v642 = vrcp.pop %v610
      %v643 = vrcp.pop %v611
      %v644 = vrcp.pop %v612
      %v645 = vrcp.pop %v613
      %v646 = vrcp.pop %v614
      %v647 = vrcp.pop %v615
      %v648 = vrcp.pop %v616
      %v649 = vrcp.pop %v617
      %v650 = vrcp.pop %v618
      %v651 = vrcp.pop %v619
      %v652 = vrcp.pop %v620
      %v653 = vrcp.pop %v621
      %v654 = vrcp.pop %v622
      %v655 = vrcp.pop %v623
      %v656 = vrcp.pop %v624
      %v657 = vrcp.pop %v625
      %v658 = vrcp.pop %v626
      %v659 = vrcp.pop %v627
      %v660 = vrcp.pop %v628
      %v661 = vrcp.pop %v629
      %v662 = vrcp.pop %v630
      %v663 = vrcp.pop %v631
      %v664 = vrcp.pop %v632
      %v665 = vrcp.pop %v633
      %v666 = vrcp.pop %v634
      %v667 = vrcp.pop %v635
      %v668 = vrcp.pop %v636
      %v669 = vmul.f32 %v383, %v637
      %v670 = vmul.f32 %v386, %v638
      %v671 = vmul.f32 %v391, %v639
      %v672 = vmul.f32 %v394, %v640
      %v673 = vmul.f32 %v399, %v641
      %v674 = vmul.f32 %v402, %v642
      %v675 = vmul.f32 %v407, %v643
      %v676 = vmul.f32 %v410, %v644
      %v677 = vmul.f32 %v415, %v645
      %v678 = vmul.f32 %v418, %v646
      %v679 = vmul.f32 %v423, %v647
      %v680 = vmul.f32 %v426, %v648
      %v681 = vmul.f32 %v431, %v649
      %v682 = vmul.f32 %v434, %v650
      %v683 = vmul.f32 %v439, %v651
      %v684 = vmul.f32 %v442, %v652
      %v685 = vmul.f32 %v447, %v653
      %v686 = vmul.f32 %v450, %v654
      %v687 = vmul.f32 %v455, %v655
      %v688 = vmul.f32 %v458, %v656
      %v689 = vmul.f32 %v463, %v657
      %v690 = vmul.f32 %v466, %v658
      %v691 = vmul.f32 %v471, %v659
      %v692 = vmul.f32 %v474, %v660
      %v693 = vmul.f32 %v479, %v661
      %v694 = vmul.f32 %v482, %v662
      %v695 = vmul.f32 %v487, %v663
      %v696 = vmul.f32 %v490, %v664
      %v697 = vmul.f32 %v495, %v665
      %v698 = vmul.f32 %v498, %v666
      %v699 = vmul.f32 %v503, %v667
      %v700 = vmul.f32 %v506, %v668
      %v701 = vpack.c.bf16 %v670, %v669
      %v702 = vpack.c.bf16 %v672, %v671
      %v703 = vpack.c.bf16 %v674, %v673
      %v704 = vpack.c.bf16 %v676, %v675
      %v705 = vpack.c.bf16 %v678, %v677
      %v706 = vpack.c.bf16 %v680, %v679
      %v707 = vpack.c.bf16 %v682, %v681
      %v708 = vpack.c.bf16 %v684, %v683
      %v709 = vpack.c.bf16 %v686, %v685
      %v710 = vpack.c.bf16 %v688, %v687
      %v711 = vpack.c.bf16 %v690, %v689
      %v712 = vpack.c.bf16 %v692, %v691
      %v713 = vpack.c.bf16 %v694, %v693
      %v714 = vpack.c.bf16 %v696, %v695
      %v715 = vpack.c.bf16 %v698, %v697
      %v716 = vpack.c.bf16 %v700, %v699
      %v733 = vunpack.c.l.b16 %v701
      %v734 = vunpack.c.h.b16 %v701
      %v735 = vunpack.c.l.b16 %v702
      %v736 = vunpack.c.h.b16 %v702
      %v737 = vunpack.c.l.b16 %v703
      %v738 = vunpack.c.h.b16 %v703
      %v739 = vunpack.c.l.b16 %v704
      %v740 = vunpack.c.h.b16 %v704
      %v741 = vunpack.c.l.b16 %v705
      %v742 = vunpack.c.h.b16 %v705
      %v743 = vunpack.c.l.b16 %v706
      %v744 = vunpack.c.h.b16 %v706
      %v745 = vunpack.c.l.b16 %v707
      %v746 = vunpack.c.h.b16 %v707
      %v747 = vunpack.c.l.b16 %v708
      %v748 = vunpack.c.h.b16 %v708
      %v749 = vunpack.c.l.b16 %v709
      %v750 = vunpack.c.h.b16 %v709
      %v751 = vunpack.c.l.b16 %v710
      %v752 = vunpack.c.h.b16 %v710
      %v753 = vunpack.c.l.b16 %v711
      %v754 = vunpack.c.h.b16 %v711
      %v755 = vunpack.c.l.b16 %v712
      %v756 = vunpack.c.h.b16 %v712
      %v757 = vunpack.c.l.b16 %v713
      %v758 = vunpack.c.h.b16 %v713
      %v759 = vunpack.c.l.b16 %v714
      %v760 = vunpack.c.h.b16 %v714
      %v761 = vunpack.c.l.b16 %v715
      %v762 = vunpack.c.h.b16 %v715
      %v763 = vunpack.c.l.b16 %v716
      %v764 = vunpack.c.h.b16 %v716
      %v765 = vpack.c.b16 %v733, %v733
      %v766 = vpack.c.b16 %v734, %v734
      %v767 = vpack.c.b16 %v735, %v735
      %v768 = vpack.c.b16 %v736, %v736
      %v769 = vpack.c.b16 %v737, %v737
      %v770 = vpack.c.b16 %v738, %v738
      %v771 = vpack.c.b16 %v739, %v739
      %v772 = vpack.c.b16 %v740, %v740
      %v773 = vpack.c.b16 %v741, %v741
      %v774 = vpack.c.b16 %v742, %v742
      %v775 = vpack.c.b16 %v743, %v743
      %v776 = vpack.c.b16 %v744, %v744
      %v777 = vpack.c.b16 %v745, %v745
      %v778 = vpack.c.b16 %v746, %v746
      %v779 = vpack.c.b16 %v747, %v747
      %v780 = vpack.c.b16 %v748, %v748
      %v781 = vpack.c.b16 %v749, %v749
      %v782 = vpack.c.b16 %v750, %v750
      %v783 = vpack.c.b16 %v751, %v751
      %v784 = vpack.c.b16 %v752, %v752
      %v785 = vpack.c.b16 %v753, %v753
      %v786 = vpack.c.b16 %v754, %v754
      %v787 = vpack.c.b16 %v755, %v755
      %v788 = vpack.c.b16 %v756, %v756
      %v789 = vpack.c.b16 %v757, %v757
      %v790 = vpack.c.b16 %v758, %v758
      %v791 = vpack.c.b16 %v759, %v759
      %v792 = vpack.c.b16 %v760, %v760
      %v793 = vpack.c.b16 %v761, %v761
      %v794 = vpack.c.b16 %v762, %v762
      %v795 = vpack.c.b16 %v763, %v763
      %v796 = vpack.c.b16 %v764, %v764
      %vm829 = vcmask 60416
      %830 = vst.msk [vmem:[%s172] sm:$0xf] %vm829, %v765
      %831 = vst.msk [vmem:[%s172 + $0x4] sm:$0xf] %vm829, %v766
      %832 = vst.msk [vmem:[%s172 + $0x8] sm:$0xf] %vm829, %v767
      %833 = vst.msk [vmem:[%s172 + $0xc] sm:$0xf] %vm829, %v768
      %834 = vst.msk [vmem:[%s172 + $0x10] sm:$0xf] %vm829, %v769
      %835 = vst.msk [vmem:[%s172 + $0x14] sm:$0xf] %vm829, %v770
      %836 = vst.msk [vmem:[%s172 + $0x18] sm:$0xf] %vm829, %v771
      %837 = vst.msk [vmem:[%s172 + $0x1c] sm:$0xf] %vm829, %v772
      %838 = vst.msk [vmem:[%s172 + $0x20] sm:$0xf] %vm829, %v773
      %839 = vst.msk [vmem:[%s172 + $0x24] sm:$0xf] %vm829, %v774
      %840 = vst.msk [vmem:[%s172 + $0x28] sm:$0xf] %vm829, %v775
      %841 = vst.msk [vmem:[%s172 + $0x2c] sm:$0xf] %vm829, %v776
      %842 = vst.msk [vmem:[%s172 + $0x30] sm:$0xf] %vm829, %v777
      %843 = vst.msk [vmem:[%s172 + $0x34] sm:$0xf] %vm829, %v778
      %844 = vst.msk [vmem:[%s172 + $0x38] sm:$0xf] %vm829, %v779
      %845 = vst.msk [vmem:[%s172 + $0x3c] sm:$0xf] %vm829, %v780
      %846 = vst.msk [vmem:[%s172 + $0x40] sm:$0xf] %vm829, %v781
      %847 = vst.msk [vmem:[%s172 + $0x44] sm:$0xf] %vm829, %v782
      %848 = vst.msk [vmem:[%s172 + $0x48] sm:$0xf] %vm829, %v783
      %849 = vst.msk [vmem:[%s172 + $0x4c] sm:$0xf] %vm829, %v784
      %850 = vst.msk [vmem:[%s172 + $0x50] sm:$0xf] %vm829, %v785
      %851 = vst.msk [vmem:[%s172 + $0x54] sm:$0xf] %vm829, %v786
      %852 = vst.msk [vmem:[%s172 + $0x58] sm:$0xf] %vm829, %v787
      %853 = vst.msk [vmem:[%s172 + $0x5c] sm:$0xf] %vm829, %v788
      %854 = vst.msk [vmem:[%s172 + $0x60] sm:$0xf] %vm829, %v789
      %855 = vst.msk [vmem:[%s172 + $0x64] sm:$0xf] %vm829, %v790
      %856 = vst.msk [vmem:[%s172 + $0x68] sm:$0xf] %vm829, %v791
      %857 = vst.msk [vmem:[%s172 + $0x6c] sm:$0xf] %vm829, %v792
      %858 = vst.msk [vmem:[%s172 + $0x70] sm:$0xf] %vm829, %v793
      %859 = vst.msk [vmem:[%s172 + $0x74] sm:$0xf] %vm829, %v794
      %860 = vst.msk [vmem:[%s172 + $0x78] sm:$0xf] %vm829, %v795
      %861 = vst.msk [vmem:[%s172 + $0x7c] sm:$0xf] %vm829, %v796
      %s862 = smul.u32 32, %s14
      %p863 = scmp.lt.s32.totalorder %s862, 63
      %s864 = scalar_select %p863, %s862, 63
      %s865 = smul.addr %s864, 4
      %s866 = scalar_lea.vmem %s3, %s865
      // Predicated region
      $region33: #{c2f_forward_pallas.4} parent=31 // pred_check
        %p867 = pneg %p100
      $region34: #{c2f_forward_pallas.4} parent=31 // pred_check_branch
        %869 = sbr.rel (%p867) target = $region36
      $region35: #{c2f_forward_pallas.4} parent=31 // pred_region
        %s870 = smul.u32 32, %s14
      $region36: #{c2f_forward_pallas.4} parent=31 // pred_fallthru
        _
    $region32: #{c2f_forward_pallas.4} parent=5 // pred_fallthru
      _
    %p871 = scmp.le.s32.totalorder 2, %s9
    // Predicated region
    $region37: #{c2f_forward_pallas.4} parent=5 // pred_check
      %p872 = pneg %p871
    $region38: #{c2f_forward_pallas.4} parent=5 // pred_check_branch
      %874 = sbr.rel (%p872) target = $region40
    $region39: #{c2f_forward_pallas.4} parent=5 // pred_region
      %s875 = ssub.s32 %s9, 2
      // Predicated region
      $region41: #{c2f_forward_pallas.4} parent=39 // pred_check
        %p876 = pneg %p106
      $region42: #{c2f_forward_pallas.4} parent=39 // pred_check_branch
        %878 = sbr.rel (%p876) target = $region44
      $region43: #{c2f_forward_pallas.4} parent=39 // pred_region
        %s879 = smul.u32 32, %s15
        %p880 = scmp.lt.s32.totalorder %s879, 63
        %s881 = scalar_select %p880, %s879, 63
        %s882 = smul.addr %s881, 4
        %s883 = scalar_lea.vmem %s3, %s882
      $region44: #{c2f_forward_pallas.4} parent=39 // pred_fallthru
        _
    $region40: #{c2f_forward_pallas.4} parent=5 // pred_fallthru
      _
  $region6: #{c2f_forward_pallas.4} parent=0 // loop_footer
    %s13 = sadd.s32 1, %s9
  $region7: #{c2f_forward_pallas.4} parent=0 // loop_footer_branch
    %8 = sbr.rel target = $region3
  $region8: #{c2f_forward_pallas.4} parent=0 // loop_exit
    _

// kernel: c2f_forward_pallas.7
$region0: #{c2f_forward_pallas.7}
  #allocation0 [shape = 'u32[]', space=smem, size = 0x4, offset = 0x4, fixed_abs, tag = 'smem constant byte address 0x4 - core index']
  #allocation1 [shape = 'u32[144,128]{1,0:T(1,128)}', space=vmem, size = 0x12000, scoped, tag = 'internal scratch']
  %s0 = inlined_call_operand.hbm [shape: bf16[512,8], index: 0, kind: input, shape index: {}]
  %s1 = inlined_call_operand.hbm [shape: bf16[512,4], index: 1, kind: input, shape index: {}]
  %s2 = inlined_call_operand.hbm [shape: bf16[512,4], index: 2, kind: input, shape index: {}]
  %s3 = inlined_call_operand.hbm [shape: bf16[8,8], index: 3, kind: input, shape index: {}]
  %s4 = inlined_call_operand.hbm [shape: bf16[4,8], index: 4, kind: input, shape index: {}]
  %s5 = inlined_call_operand.vmem [shape: bf16[4,8], index: 5, kind: input, shape index: {}]
  %s6 = inlined_call_operand.vmem [shape: f32[1,8], index: 6, kind: input, shape index: {}]
  %s7 = inlined_call_operand.vmem [shape: bf16[512,8], index: 7, kind: output, shape index: {}]
  %s8 = sld [smem:[#allocation0]]
  $region81: #{c2f_forward_pallas.7} parent=0
    _
  %s10 = ssub.s32 1, %s8
  %s11 = scalar_select 0, %s10, %s8
  $region1: #{c2f_forward_pallas.7} parent=0
    #allocation2 [shape = 'u8[131072]{0}', space=vmem, size = 0x20000, scoped, tag = 'input window, operand 0']
    #allocation3 [shape = 's32[2]{0}', space=sflag, size = 0x8, scoped, tag = 'scoped memory for c2f_forward_pallas.7']
    #allocation4 [shape = 'u8[131072]{0}', space=vmem, size = 0x20000, scoped, tag = 'input window, operand 1']
    #allocation5 [shape = 's32[2]{0}', space=sflag, size = 0x8, scoped, tag = 'scoped memory for c2f_forward_pallas.7']
    #allocation6 [shape = 'u8[131072]{0}', space=vmem, size = 0x20000, scoped, tag = 'input window, operand 2']
    #allocation7 [shape = 'u8[2048]{0}', space=vmem, size = 0x800, scoped, tag = 'input window, operand 3, single buffered']
    #allocation8 [shape = 's32[1]{0}', space=sflag, size = 0x4, scoped, tag = 'scoped memory for c2f_forward_pallas.7']
    #allocation9 [shape = 'u8[1024]{0}', space=vmem, size = 0x400, scoped, tag = 'input window, operand 4, single buffered']
    %12 = vsyncpa [#allocation3], 0
    %s13 = scalar_lea.sflag [#allocation3], 1
    %14 = vsyncpa %s13, 0
    %15 = vsyncpa [#allocation5], 0
    %s16 = scalar_lea.sflag [#allocation5], 1
    %17 = vsyncpa %s16, 0
    %18 = vsyncpa [#allocation8], 0
    loop: start=0, step=1, limit=4
    $region2: #{c2f_forward_pallas.7} parent=1 // loop_pre_header
      _
    $region3: #{c2f_forward_pallas.7} parent=1 // loop_header
      %s20 = sphi 0, %s24
      %p21 = scmp.ge.s32.totalorder %s20, 4
      %s30 = sphi 0, %s32
      %s33 = sphi 0, %s30
      %s34 = sphi 0, %s33
      %s50 = sphi 0, %s34
      %s56 = sphi 0, %s58
      %s59 = sphi 0, %s56
      %s60 = sphi 0, %s59
      %s76 = sphi 0, %s60
      %s82 = sphi 0, %s84
      %s85 = sphi 0, %s82
      %s86 = sphi 0, %s85
      %s102 = sphi 0, %s86
      %s106 = sphi 0, %s106
      %s108 = sphi 0, %s106
      %s109 = sphi 0, %s108
      %s123 = sphi 0, %s109
      %s127 = sphi 0, %s127
      %s129 = sphi 0, %s127
      %s130 = sphi 0, %s129
      %s144 = sphi 0, %s130
      %s148 = sphi 0, %s148
      %s150 = sphi 0, %s148
      %s151 = sphi 0, %s150
      %s165 = sphi 0, %s151
      %s169 = sphi 0, %s169
      %s171 = sphi 0, %s169
      %s172 = sphi 0, %s171
      %s186 = sphi 0, %s172
      %s192 = sphi 0, %s194
      %s195 = sphi 0, %s192
      %s196 = sphi 0, %s195
      %s212 = sphi 0, %s196
    $region4: #{c2f_forward_pallas.7} parent=1 // loop_header_branch
      %23 = sbr.rel (%p21) target = $region8
    $region5: #{c2f_forward_pallas.7} parent=1 // loop_body
      %s25 = ssub.s32 %s20, 1
      %s26 = ssub.s32 %s20, 2
      %s27 = sadd.s32 %s20, 1
      %s28 = ssub.s32 %s20, %s27
      %p29 = scmp.eq.s32.totalorder %s28, 0
      %s31 = sadd.s32 %s30, 1
      %s32 = scalar_select %p29, %s30, %s31
      %p35 = pneg %p29
      %p36 = scmp.eq.s32.totalorder %s20, 1
      %p37 = por %p35, %p36
      %p38 = scmp.ne.s32.totalorder %s30, %s33
      %p39 = scmp.eq.s32.totalorder %s20, 0
      %p40 = por %p38, %p39
      %p41 = scmp.ne.s32.totalorder %s30, %s33
      %p42 = scmp.eq.s32.totalorder %s25, 1
      %p43 = por %p41, %p42
      %p44 = scmp.ne.s32.totalorder %s33, %s34
      %p45 = scmp.eq.s32.totalorder %s25, 0
      %p46 = por %p44, %p45
      %p47 = scmp.ne.s32.totalorder %s33, %s34
      %p48 = scmp.eq.s32.totalorder %s26, 1
      %p49 = por %p47, %p48
      %p51 = scmp.ne.s32.totalorder %s34, %s50
      %p52 = scmp.eq.s32.totalorder %s26, 0
      %p53 = por %p51, %p52
      %s54 = ssub.s32 %s20, %s27
      %p55 = scmp.eq.s32.totalorder %s54, 0
      %s57 = sadd.s32 %s56, 1
      %s58 = scalar_select %p55, %s56, %s57
      %p61 = pneg %p55
      %p62 = scmp.eq.s32.totalorder %s20, 1
      %p63 = por %p61, %p62
      %p64 = scmp.ne.s32.totalorder %s56, %s59
      %p65 = scmp.eq.s32.totalorder %s20, 0
      %p66 = por %p64, %p65
      %p67 = scmp.ne.s32.totalorder %s56, %s59
      %p68 = scmp.eq.s32.totalorder %s25, 1
      %p69 = por %p67, %p68
      %p70 = scmp.ne.s32.totalorder %s59, %s60
      %p71 = scmp.eq.s32.totalorder %s25, 0
      %p72 = por %p70, %p71
      %p73 = scmp.ne.s32.totalorder %s59, %s60
      %p74 = scmp.eq.s32.totalorder %s26, 1
      %p75 = por %p73, %p74
      %p77 = scmp.ne.s32.totalorder %s60, %s76
      %p78 = scmp.eq.s32.totalorder %s26, 0
      %p79 = por %p77, %p78
      %s80 = ssub.s32 %s20, %s27
      %p81 = scmp.eq.s32.totalorder %s80, 0
      %s83 = sadd.s32 %s82, 1
      %s84 = scalar_select %p81, %s82, %s83
      %p87 = pneg %p81
      %p88 = scmp.eq.s32.totalorder %s20, 1
      %p89 = por %p87, %p88
      %p90 = scmp.ne.s32.totalorder %s82, %s85
      %p91 = scmp.eq.s32.totalorder %s20, 0
      %p92 = por %p90, %p91
      %p93 = scmp.ne.s32.totalorder %s82, %s85
      %p94 = scmp.eq.s32.totalorder %s25, 1
      %p95 = por %p93, %p94
      %p96 = scmp.ne.s32.totalorder %s85, %s86
      %p97 = scmp.eq.s32.totalorder %s25, 0
      %p98 = por %p96, %p97
      %p99 = scmp.ne.s32.totalorder %s85, %s86
      %p100 = scmp.eq.s32.totalorder %s26, 1
      %p101 = por %p99, %p100
      %p103 = scmp.ne.s32.totalorder %s86, %s102
      %p104 = scmp.eq.s32.totalorder %s26, 0
      %p105 = por %p103, %p104
      %s107 = sadd.s32 %s106, 1
      %p110 = scmp.eq.s32.totalorder %s20, 1
      %p111 = scmp.ne.s32.totalorder %s106, %s108
      %p112 = scmp.eq.s32.totalorder %s20, 0
      %p113 = por %p111, %p112
      %p114 = scmp.ne.s32.totalorder %s106, %s108
      %p115 = scmp.eq.s32.totalorder %s25, 1
      %p116 = por %p114, %p115
      %p117 = scmp.ne.s32.totalorder %s108, %s109
      %p118 = scmp.eq.s32.totalorder %s25, 0
      %p119 = por %p117, %p118
      %p120 = scmp.ne.s32.totalorder %s108, %s109
      %p121 = scmp.eq.s32.totalorder %s26, 1
      %p122 = por %p120, %p121
      %p124 = scmp.ne.s32.totalorder %s109, %s123
      %p125 = scmp.eq.s32.totalorder %s26, 0
      %p126 = por %p124, %p125
      %s128 = sadd.s32 %s127, 1
      %p131 = scmp.eq.s32.totalorder %s20, 1
      %p132 = scmp.ne.s32.totalorder %s127, %s129
      %p133 = scmp.eq.s32.totalorder %s20, 0
      %p134 = por %p132, %p133
      %p135 = scmp.ne.s32.totalorder %s127, %s129
      %p136 = scmp.eq.s32.totalorder %s25, 1
      %p137 = por %p135, %p136
      %p138 = scmp.ne.s32.totalorder %s129, %s130
      %p139 = scmp.eq.s32.totalorder %s25, 0
      %p140 = por %p138, %p139
      %p141 = scmp.ne.s32.totalorder %s129, %s130
      %p142 = scmp.eq.s32.totalorder %s26, 1
      %p143 = por %p141, %p142
      %p145 = scmp.ne.s32.totalorder %s130, %s144
      %p146 = scmp.eq.s32.totalorder %s26, 0
      %p147 = por %p145, %p146
      %s149 = sadd.s32 %s148, 1
      %p152 = scmp.eq.s32.totalorder %s20, 1
      %p153 = scmp.ne.s32.totalorder %s148, %s150
      %p154 = scmp.eq.s32.totalorder %s20, 0
      %p155 = por %p153, %p154
      %p156 = scmp.ne.s32.totalorder %s148, %s150
      %p157 = scmp.eq.s32.totalorder %s25, 1
      %p158 = por %p156, %p157
      %p159 = scmp.ne.s32.totalorder %s150, %s151
      %p160 = scmp.eq.s32.totalorder %s25, 0
      %p161 = por %p159, %p160
      %p162 = scmp.ne.s32.totalorder %s150, %s151
      %p163 = scmp.eq.s32.totalorder %s26, 1
      %p164 = por %p162, %p163
      %p166 = scmp.ne.s32.totalorder %s151, %s165
      %p167 = scmp.eq.s32.totalorder %s26, 0
      %p168 = por %p166, %p167
      %s170 = sadd.s32 %s169, 1
      %p173 = scmp.eq.s32.totalorder %s20, 1
      %p174 = scmp.ne.s32.totalorder %s169, %s171
      %p175 = scmp.eq.s32.totalorder %s20, 0
      %p176 = por %p174, %p175
      %p177 = scmp.ne.s32.totalorder %s169, %s171
      %p178 = scmp.eq.s32.totalorder %s25, 1
      %p179 = por %p177, %p178
      %p180 = scmp.ne.s32.totalorder %s171, %s172
      %p181 = scmp.eq.s32.totalorder %s25, 0
      %p182 = por %p180, %p181
      %p183 = scmp.ne.s32.totalorder %s171, %s172
      %p184 = scmp.eq.s32.totalorder %s26, 1
      %p185 = por %p183, %p184
      %p187 = scmp.ne.s32.totalorder %s172, %s186
      %p188 = scmp.eq.s32.totalorder %s26, 0
      %p189 = por %p187, %p188
      %s190 = ssub.s32 %s20, %s27
      %p191 = scmp.eq.s32.totalorder %s190, 0
      %s193 = sadd.s32 %s192, 1
      %s194 = scalar_select %p191, %s192, %s193
      %p197 = pneg %p191
      %p198 = scmp.eq.s32.totalorder %s20, 1
      %p199 = por %p197, %p198
      %p200 = scmp.ne.s32.totalorder %s192, %s195
      %p201 = scmp.eq.s32.totalorder %s20, 0
      %p202 = por %p200, %p201
      %p203 = scmp.ne.s32.totalorder %s192, %s195
      %p204 = scmp.eq.s32.totalorder %s25, 1
      %p205 = por %p203, %p204
      %p206 = scmp.ne.s32.totalorder %s195, %s196
      %p207 = scmp.eq.s32.totalorder %s25, 0
      %p208 = por %p206, %p207
      %p209 = scmp.ne.s32.totalorder %s195, %s196
      %p210 = scmp.eq.s32.totalorder %s26, 1
      %p211 = por %p209, %p210
      %p213 = scmp.ne.s32.totalorder %s196, %s212
      %p214 = scmp.eq.s32.totalorder %s26, 0
      %p215 = por %p213, %p214
      %p216 = scmp.le.s32.totalorder 1, %s20
      %p217 = scmp.lt.s32.totalorder %s20, 3
      %p218 = pnand %p216, %p217
      %p219 = pneg %p218
      // Predicated region
      $region9: #{c2f_forward_pallas.7} parent=5 // pred_check
        _
      $region10: #{c2f_forward_pallas.7} parent=5 // pred_check_branch
        %221 = sbr.rel (%p218) target = $region12
      $region11: #{c2f_forward_pallas.7} parent=5 // pred_region
        %s222 = ssub.s32 %s20, 1
        // Predicated region
        $region13: #{c2f_forward_pallas.7} parent=11 // pred_check
          %p223 = pneg %p119
        $region14: #{c2f_forward_pallas.7} parent=11 // pred_check_branch
          %225 = sbr.rel (%p223) target = $region16
        $region15: #{c2f_forward_pallas.7} parent=11 // pred_region
          %s227 = ssub.s32 64, 64
          %228 = vsyncadd [#allocation8], %s227
          %s230 = sshll.u32 [#allocation7], 4
          %s231 = int_to_ptr.vmem [resolvable:$true] %s230
          %233 = dma.hbm_to_vmem [thread:$0]  %s3, 64, %s231, [#allocation8]
        $region16: #{c2f_forward_pallas.7} parent=11 // pred_fallthru
          _
        // Predicated region
        $region17: #{c2f_forward_pallas.7} parent=11 // pred_check
          %p234 = pneg %p140
        $region18: #{c2f_forward_pallas.7} parent=11 // pred_check_branch
          %236 = sbr.rel (%p234) target = $region20
        $region19: #{c2f_forward_pallas.7} parent=11 // pred_region
          %s238 = ssub.s32 32, 32
          %239 = vsyncadd [#allocation8], %s238
          %s241 = sshll.u32 [#allocation9], 4
          %s242 = int_to_ptr.vmem [resolvable:$true] %s241
          %244 = dma.hbm_to_vmem [thread:$0]  %s4, 32, %s242, [#allocation8]
        $region20: #{c2f_forward_pallas.7} parent=11 // pred_fallthru
          _
        // Predicated region
        $region21: #{c2f_forward_pallas.7} parent=11 // pred_check
          %p245 = pneg %p161
        $region22: #{c2f_forward_pallas.7} parent=11 // pred_check_branch
          %247 = sbr.rel (%p245) target = $region24
        $region23: #{c2f_forward_pallas.7} parent=11 // pred_region
          _
        $region24: #{c2f_forward_pallas.7} parent=11 // pred_fallthru
          _
        // Predicated region
        $region25: #{c2f_forward_pallas.7} parent=11 // pred_check
          %p248 = pneg %p182
        $region26: #{c2f_forward_pallas.7} parent=11 // pred_check_branch
          %250 = sbr.rel (%p248) target = $region28
        $region27: #{c2f_forward_pallas.7} parent=11 // pred_region
          _
        $region28: #{c2f_forward_pallas.7} parent=11 // pred_fallthru
          _
      $region12: #{c2f_forward_pallas.7} parent=5 // pred_fallthru
        _
      %p251 = scmp.lt.s32.totalorder %s20, 2
      // Predicated region
      $region29: #{c2f_forward_pallas.7} parent=5 // pred_check
        %p252 = pneg %p251
      $region30: #{c2f_forward_pallas.7} parent=5 // pred_check_branch
        %254 = sbr.rel (%p252) target = $region32
      $region31: #{c2f_forward_pallas.7} parent=5 // pred_region
        // Predicated region
        $region33: #{c2f_forward_pallas.7} parent=31 // pred_check
          %p255 = pneg %p40
        $region34: #{c2f_forward_pallas.7} parent=31 // pred_check_branch
          %257 = sbr.rel (%p255) target = $region36
        $region35: #{c2f_forward_pallas.7} parent=31 // pred_region
          %s258 = sand.u32 %s30, 1
          %s259 = scalar_lea.sflag [#allocation3], %s258
          %s260 = sand.u32 %s30, 1
          %s261 = smul.addr %s260, 128
          %s262 = scalar_lea.vmem [#allocation2], %s261
          %s263 = smul.u32 32, %s20
          %s265 = ssub.s32 2048, 2048
          %266 = vsyncadd %s259, %s265
          %s267 = smul.addr %s263, 64
          %s268 = scalar_lea.hbm %s0, %s267
          %s269 = sshll.u32 %s262, 4
          %s270 = int_to_ptr.vmem [resolvable:$true] %s269
          %275 = dma.hbm_to_vmem [thread:$0]  %s268, 2048, %s270, %s259, 64, 64, 4
        $region36: #{c2f_forward_pallas.7} parent=31 // pred_fallthru
          _
        // Predicated region
        $region37: #{c2f_forward_pallas.7} parent=31 // pred_check
          %p276 = pneg %p66
        $region38: #{c2f_forward_pallas.7} parent=31 // pred_check_branch
          %278 = sbr.rel (%p276) target = $region40
        $region39: #{c2f_forward_pallas.7} parent=31 // pred_region
          %s279 = sand.u32 %s20, 1
          %s280 = scalar_lea.sflag [#allocation5], %s279
          %s281 = sand.u32 %s56, 1
          %s282 = smul.addr %s281, 128
          %s283 = scalar_lea.vmem [#allocation4], %s282
          %s284 = smul.u32 32, %s20
          %s286 = ssub.s32 2048, 2048
          %287 = vsyncadd %s280, %s286
          %s288 = smul.addr %s284, 64
          %s289 = scalar_lea.hbm %s1, %s288
          %s290 = sshll.u32 %s283, 4
          %s291 = int_to_ptr.vmem [resolvable:$true] %s290
          %296 = dma.hbm_to_vmem [thread:$0]  %s289, 2048, %s291, %s280, 64, 64, 4
        $region40: #{c2f_forward_pallas.7} parent=31 // pred_fallthru
          _
        // Predicated region
        $region41: #{c2f_forward_pallas.7} parent=31 // pred_check
          %p297 = pneg %p92
        $region42: #{c2f_forward_pallas.7} parent=31 // pred_check_branch
          %299 = sbr.rel (%p297) target = $region44
        $region43: #{c2f_forward_pallas.7} parent=31 // pred_region
          %s300 = sand.u32 %s20, 1
          %s301 = scalar_lea.sflag [#allocation5], %s300
          %s302 = sand.u32 %s82, 1
          %s303 = smul.addr %s302, 128
          %s304 = scalar_lea.vmem [#allocation6], %s303
          %s305 = smul.u32 32, %s20
          %s307 = ssub.s32 2048, 2048
          %308 = vsyncadd %s301, %s307
          %s309 = smul.addr %s305, 64
          %s310 = scalar_lea.hbm %s2, %s309
          %s311 = sshll.u32 %s304, 4
          %s312 = int_to_ptr.vmem [resolvable:$true] %s311
          %317 = dma.hbm_to_vmem [thread:$0]  %s310, 2048, %s312, %s301, 64, 64, 4
        $region44: #{c2f_forward_pallas.7} parent=31 // pred_fallthru
          _
      $region32: #{c2f_forward_pallas.7} parent=5 // pred_fallthru
        _
      %p318 = scmp.le.s32.totalorder 1, %s20
      %p319 = scmp.lt.s32.totalorder %s20, 3
      %p320 = pnand %p318, %p319
      %p321 = pneg %p320
      // Predicated region
      $region45: #{c2f_forward_pallas.7} parent=5 // pred_check
        _
      $region46: #{c2f_forward_pallas.7} parent=5 // pred_check_branch
        %323 = sbr.rel (%p320) target = $region48
      $region47: #{c2f_forward_pallas.7} parent=5 // pred_region
        %s324 = ssub.s32 %s20, 1
        %s325 = sand.u32 %s33, 1
        %s326 = scalar_lea.sflag [#allocation3], %s325
        %s327 = sand.u32 %s33, 1
        %s328 = smul.addr %s327, 128
        %s329 = scalar_lea.vmem [#allocation2], %s328
        // Predicated region
        $region49: #{c2f_forward_pallas.7} parent=47 // pred_check
          %p330 = pneg %p46
        $region50: #{c2f_forward_pallas.7} parent=47 // pred_check_branch
          %332 = sbr.rel (%p330) target = $region52
        $region51: #{c2f_forward_pallas.7} parent=47 // pred_region
          %333 = dma.done %s326, 2048
        $region52: #{c2f_forward_pallas.7} parent=47 // pred_fallthru
          _
        %s334 = sand.u32 %s25, 1
        %s335 = scalar_lea.sflag [#allocation5], %s334
        %s336 = sand.u32 %s59, 1
        %s337 = smul.addr %s336, 128
        %s338 = scalar_lea.vmem [#allocation4], %s337
        // Predicated region
        $region53: #{c2f_forward_pallas.7} parent=47 // pred_check
          %p339 = pneg %p72
        $region54: #{c2f_forward_pallas.7} parent=47 // pred_check_branch
          %341 = sbr.rel (%p339) target = $region56
        $region55: #{c2f_forward_pallas.7} parent=47 // pred_region
          %342 = dma.done %s335, 2048
        $region56: #{c2f_forward_pallas.7} parent=47 // pred_fallthru
          _
        %s343 = sand.u32 %s25, 1
        %s344 = scalar_lea.sflag [#allocation5], %s343
        %s345 = sand.u32 %s85, 1
        %s346 = smul.addr %s345, 128
        %s347 = scalar_lea.vmem [#allocation6], %s346
        // Predicated region
        $region57: #{c2f_forward_pallas.7} parent=47 // pred_check
          %p348 = pneg %p98
        $region58: #{c2f_forward_pallas.7} parent=47 // pred_check_branch
          %350 = sbr.rel (%p348) target = $region60
        $region59: #{c2f_forward_pallas.7} parent=47 // pred_region
          %351 = dma.done %s344, 2048
        $region60: #{c2f_forward_pallas.7} parent=47 // pred_fallthru
          _
        // Predicated region
        $region61: #{c2f_forward_pallas.7} parent=47 // pred_check
          %p352 = pneg %p119
        $region62: #{c2f_forward_pallas.7} parent=47 // pred_check_branch
          %354 = sbr.rel (%p352) target = $region64
        $region63: #{c2f_forward_pallas.7} parent=47 // pred_region
          %355 = dma.done [#allocation8], 64
        $region64: #{c2f_forward_pallas.7} parent=47 // pred_fallthru
          _
        // Predicated region
        $region65: #{c2f_forward_pallas.7} parent=47 // pred_check
          %p356 = pneg %p140
        $region66: #{c2f_forward_pallas.7} parent=47 // pred_check_branch
          %358 = sbr.rel (%p356) target = $region68
        $region67: #{c2f_forward_pallas.7} parent=47 // pred_region
          %359 = dma.done [#allocation8], 32
        $region68: #{c2f_forward_pallas.7} parent=47 // pred_fallthru
          _
        %s360 = sand.u32 %s33, 1
        %s361 = scalar_lea.sflag [#allocation3], %s360
        %s362 = sand.u32 %s33, 1
        %s363 = smul.addr %s362, 128
        %s364 = scalar_lea.vmem [#allocation2], %s363
        %p365 = pneg %p46
        %p366 = pneg %p43
        %s367 = sand.u32 %s25, 1
        %s368 = scalar_lea.sflag [#allocation5], %s367
        %s369 = sand.u32 %s59, 1
        %s370 = smul.addr %s369, 128
        %s371 = scalar_lea.vmem [#allocation4], %s370
        %p372 = pneg %p72
        %p373 = pneg %p69
        %s374 = sand.u32 %s25, 1
        %s375 = scalar_lea.sflag [#allocation5], %s374
        %s376 = sand.u32 %s85, 1
        %s377 = smul.addr %s376, 128
        %s378 = scalar_lea.vmem [#allocation6], %s377
        %p379 = pneg %p98
        %p380 = pneg %p95
        %p381 = pneg %p119
        %p382 = pneg %p116
        %p383 = pneg %p140
        %p384 = pneg %p137
        %p385 = pneg %p161
        %p386 = pneg %p158
        %p387 = pneg %p182
        %p388 = pneg %p179
        %p389 = pneg %p208
        %p390 = pneg %p205
        %s391 = smul.u32 32, %s25
        %p392 = scmp.lt.s32.totalorder %s391, 63
        %s393 = scalar_select %p392, %s391, 63
        %s394 = smul.addr %s393, 4
        %s395 = scalar_lea.vmem %s7, %s394
        %s396 = smul.u32 32, %s25
        %s397 = smul.u32 32, %s25
        %s398 = smul.u32 32, %s25
        %s399 = smul.u32 32, %s25
        %p400 = scmp.lt.s32.totalorder %s399, 63
        %s401 = scalar_select %p400, %s399, 63
        %s402 = smul.addr %s401, 4
        %s403 = scalar_lea.vmem %s7, %s402
        %s404 = smul.u32 32, %s25
        %v406 = vld [vmem:[%s329] sm:$0xf]
        %v407 = vld [vmem:[%s329 + $0x4] sm:$0xf]
        %v408 = vld [vmem:[%s329 + $0x8] sm:$0xf]
        %v409 = vld [vmem:[%s329 + $0xc] sm:$0xf]
        %v410 = vld [vmem:[%s329 + $0x10] sm:$0xf]
        %v411 = vld [vmem:[%s329 + $0x14] sm:$0xf]
        %v412 = vld [vmem:[%s329 + $0x18] sm:$0xf]
        %v413 = vld [vmem:[%s329 + $0x1c] sm:$0xf]
        %v414 = vld [vmem:[%s329 + $0x20] sm:$0xf]
        %v415 = vld [vmem:[%s329 + $0x24] sm:$0xf]
        %v416 = vld [vmem:[%s329 + $0x28] sm:$0xf]
        %v417 = vld [vmem:[%s329 + $0x2c] sm:$0xf]
        %v418 = vld [vmem:[%s329 + $0x30] sm:$0xf]
        %v419 = vld [vmem:[%s329 + $0x34] sm:$0xf]
        %v420 = vld [vmem:[%s329 + $0x38] sm:$0xf]
        %v421 = vld [vmem:[%s329 + $0x3c] sm:$0xf]
        %v422 = vld [vmem:[%s329 + $0x40] sm:$0xf]
        %v423 = vld [vmem:[%s329 + $0x44] sm:$0xf]
        %v424 = vld [vmem:[%s329 + $0x48] sm:$0xf]
        %v425 = vld [vmem:[%s329 + $0x4c] sm:$0xf]
        %v426 = vld [vmem:[%s329 + $0x50] sm:$0xf]
        %v427 = vld [vmem:[%s329 + $0x54] sm:$0xf]
        %v428 = vld [vmem:[%s329 + $0x58] sm:$0xf]
        %v429 = vld [vmem:[%s329 + $0x5c] sm:$0xf]
        %v430 = vld [vmem:[%s329 + $0x60] sm:$0xf]
        %v431 = vld [vmem:[%s329 + $0x64] sm:$0xf]
        %v432 = vld [vmem:[%s329 + $0x68] sm:$0xf]
        %v433 = vld [vmem:[%s329 + $0x6c] sm:$0xf]
        %v434 = vld [vmem:[%s329 + $0x70] sm:$0xf]
        %v435 = vld [vmem:[%s329 + $0x74] sm:$0xf]
        %v436 = vld [vmem:[%s329 + $0x78] sm:$0xf]
        %v437 = vld [vmem:[%s329 + $0x7c] sm:$0xf]
        %v438 = vld [vmem:[#allocation7] sm:$0xf]
        %v439 = vld [vmem:[%s338] sm:$0xf]
        %v440 = vld [vmem:[%s338 + $0x4] sm:$0xf]
        %v441 = vld [vmem:[%s338 + $0x8] sm:$0xf]
        %v442 = vld [vmem:[%s338 + $0xc] sm:$0xf]
        %v443 = vld [vmem:[%s338 + $0x10] sm:$0xf]
        %v444 = vld [vmem:[%s338 + $0x14] sm:$0xf]
        %v445 = vld [vmem:[%s338 + $0x18] sm:$0xf]
        %v446 = vld [vmem:[%s338 + $0x1c] sm:$0xf]
        %v447 = vld [vmem:[%s338 + $0x20] sm:$0xf]
        %v448 = vld [vmem:[%s338 + $0x24] sm:$0xf]
        %v449 = vld [vmem:[%s338 + $0x28] sm:$0xf]
        %v450 = vld [vmem:[%s338 + $0x2c] sm:$0xf]
        %v451 = vld [vmem:[%s338 + $0x30] sm:$0xf]
        %v452 = vld [vmem:[%s338 + $0x34] sm:$0xf]
        %v453 = vld [vmem:[%s338 + $0x38] sm:$0xf]
        %v454 = vld [vmem:[%s338 + $0x3c] sm:$0xf]
        %v455 = vld [vmem:[%s338 + $0x40] sm:$0xf]
        %v456 = vld [vmem:[%s338 + $0x44] sm:$0xf]
        %v457 = vld [vmem:[%s338 + $0x48] sm:$0xf]
        %v458 = vld [vmem:[%s338 + $0x4c] sm:$0xf]
        %v459 = vld [vmem:[%s338 + $0x50] sm:$0xf]
        %v460 = vld [vmem:[%s338 + $0x54] sm:$0xf]
        %v461 = vld [vmem:[%s338 + $0x58] sm:$0xf]
        %v462 = vld [vmem:[%s338 + $0x5c] sm:$0xf]
        %v463 = vld [vmem:[%s338 + $0x60] sm:$0xf]
        %v464 = vld [vmem:[%s338 + $0x64] sm:$0xf]
        %v465 = vld [vmem:[%s338 + $0x68] sm:$0xf]
        %v466 = vld [vmem:[%s338 + $0x6c] sm:$0xf]
        %v467 = vld [vmem:[%s338 + $0x70] sm:$0xf]
        %v468 = vld [vmem:[%s338 + $0x74] sm:$0xf]
        %v469 = vld [vmem:[%s338 + $0x78] sm:$0xf]
        %v470 = vld [vmem:[%s338 + $0x7c] sm:$0xf]
        %v471 = vld [vmem:[#allocation9] sm:$0x3]
        %v504 = vunpack.c.l.b16 %v439
        %v505 = vunpack.c.l.b16 %v440
        %v506 = vunpack.c.l.b16 %v441
        %v507 = vunpack.c.l.b16 %v442
        %v508 = vunpack.c.l.b16 %v443
        %v509 = vunpack.c.l.b16 %v444
        %v510 = vunpack.c.l.b16 %v445
        %v511 = vunpack.c.l.b16 %v446
        %v512 = vunpack.c.l.b16 %v447
        %v513 = vunpack.c.l.b16 %v448
        %v514 = vunpack.c.l.b16 %v449
        %v515 = vunpack.c.l.b16 %v450
        %v516 = vunpack.c.l.b16 %v451
        %v517 = vunpack.c.l.b16 %v452
        %v518 = vunpack.c.l.b16 %v453
        %v519 = vunpack.c.l.b16 %v454
        %v520 = vunpack.c.l.b16 %v455
        %v521 = vunpack.c.l.b16 %v456
        %v522 = vunpack.c.l.b16 %v457
        %v523 = vunpack.c.l.b16 %v458
        %v524 = vunpack.c.l.b16 %v459
        %v525 = vunpack.c.l.b16 %v460
        %v526 = vunpack.c.l.b16 %v461
        %v527 = vunpack.c.l.b16 %v462
        %v528 = vunpack.c.l.b16 %v463
        %v529 = vunpack.c.l.b16 %v464
        %v530 = vunpack.c.l.b16 %v465
        %v531 = vunpack.c.l.b16 %v466
        %v532 = vunpack.c.l.b16 %v467
        %v533 = vunpack.c.l.b16 %v468
        %v534 = vunpack.c.l.b16 %v469
        %v535 = vunpack.c.l.b16 %v470
        %v536 = vpack.c.b16 %v505, %v504
        %v537 = vpack.c.b16 %v507, %v506
        %v538 = vpack.c.b16 %v509, %v508
        %v539 = vpack.c.b16 %v511, %v510
        %v540 = vpack.c.b16 %v513, %v512
        %v541 = vpack.c.b16 %v515, %v514
        %v542 = vpack.c.b16 %v517, %v516
        %v543 = vpack.c.b16 %v519, %v518
        %v544 = vpack.c.b16 %v521, %v520
        %v545 = vpack.c.b16 %v523, %v522
        %v546 = vpack.c.b16 %v525, %v524
        %v547 = vpack.c.b16 %v527, %v526
        %v548 = vpack.c.b16 %v529, %v528
        %v549 = vpack.c.b16 %v531, %v530
        %v550 = vpack.c.b16 %v533, %v532
        %v551 = vpack.c.b16 %v535, %v534
        %vm552 = vcmask 31744
        %v554 = vsel %vm552, %v536, 0
        %v557 = vsel %vm552, %v537, 0
        %v560 = vsel %vm552, %v538, 0
        %v563 = vsel %vm552, %v539, 0
        %v566 = vsel %vm552, %v540, 0
        %v569 = vsel %vm552, %v541, 0
        %v572 = vsel %vm552, %v542, 0
        %v575 = vsel %vm552, %v543, 0
        %v578 = vsel %vm552, %v544, 0
        %v581 = vsel %vm552, %v545, 0
        %v584 = vsel %vm552, %v546, 0
        %v587 = vsel %vm552, %v547, 0
        %v590 = vsel %vm552, %v548, 0
        %v593 = vsel %vm552, %v549, 0
        %v596 = vsel %vm552, %v550, 0
        %v599 = vsel %vm552, %v551, 0
        %vm601 = vcmask 1041408
        %v603 = vsel %vm601, %v471, 0
        %605 = vmatprep.subr.bf16.mxu0 0
        %606 = vmatpush1.bf16.msra.mxu0 %v603
        %607 = vmatprep.subr.bf16.mxu0 0
        %608 = vmatpush1.bf16.msra.mxu0 0
        %609 = vmatprep.subr.bf16.mxu0 0
        %610 = vmatpush1.bf16.msra.mxu0 0
        %611 = vmatprep.subr.bf16.mxu0 0
        %612 = vmatpush1.bf16.msra.mxu0 0
        %613 = vmatprep.subr.bf16.mxu0 0
        %614 = vmatpush1.bf16.msra.mxu0 0
        %615 = vmatprep.subr.bf16.mxu0 0
        %616 = vmatpush1.bf16.msra.mxu0 0
        %617 = vmatprep.subr.bf16.mxu0 0
        %618 = vmatpush1.bf16.msra.mxu0 0
        %619 = vmatprep.subr.bf16.mxu0 0
        %620 = vmatpush1.bf16.msra.mxu0 0
        %621 = vmatprep.subr.bf16.mxu0 0
        %622 = vmatpush1.bf16.msra.mxu0 0
        %623 = vmatprep.subr.bf16.mxu0 0
        %624 = vmatpush1.bf16.msra.mxu0 0
        %625 = vmatprep.subr.bf16.mxu0 0
        %626 = vmatpush1.bf16.msra.mxu0 0
        %627 = vmatprep.subr.bf16.mxu0 0
        %628 = vmatpush1.bf16.msra.mxu0 0
        %629 = vmatprep.subr.bf16.mxu0 0
        %630 = vmatpush1.bf16.msra.mxu0 0
        %631 = vmatprep.subr.bf16.mxu0 0
        %632 = vmatpush1.bf16.msra.mxu0 0
        %633 = vmatprep.subr.bf16.mxu0 0
        %634 = vmatpush1.bf16.msra.mxu0 0
        %635 = vmatprep.subr.bf16.mxu0 0
        %636 = vmatpush1.bf16.msra.mxu0 0
        %637 = vmatprep.mubr.bf16.mxu0 0
        %638 = vmatmul.mubr.bf16.gmra.mrb[0].mxu0 %v554
        %v639 = vpop.f32.mrb[0].mxu0
        %v640 = vadd.f32 0.0, %v639
        %v641 = vpop.f32.mrb[0].mxu0
        %v642 = vpop.f32.mrb[0].mxu0
        %v643 = vadd.f32 0.0, %v642
        %v644 = vpop.f32.mrb[0].mxu0
        %645 = vmatprep.mubr.bf16.mxu0 0
        %646 = vmatmul.mubr.bf16.gmra.mrb[0].mxu0 %v557
        %v647 = vpop.f32.mrb[0].mxu0
        %v648 = vadd.f32 0.0, %v647
        %v649 = vpop.f32.mrb[0].mxu0
        %v650 = vpop.f32.mrb[0].mxu0
        %v651 = vadd.f32 0.0, %v650
        %v652 = vpop.f32.mrb[0].mxu0
        %653 = vmatprep.mubr.bf16.mxu0 0
        %654 = vmatmul.mubr.bf16.gmra.mrb[0].mxu0 %v560
        %v655 = vpop.f32.mrb[0].mxu0
        %v656 = vadd.f32 0.0, %v655
        %v657 = vpop.f32.mrb[0].mxu0
        %v658 = vpop.f32.mrb[0].mxu0
        %v659 = vadd.f32 0.0, %v658
        %v660 = vpop.f32.mrb[0].mxu0
        %661 = vmatprep.mubr.bf16.mxu0 0
        %662 = vmatmul.mubr.bf16.gmra.mrb[0].mxu0 %v563
        %v663 = vpop.f32.mrb[0].mxu0
        %v664 = vadd.f32 0.0, %v663
        %v665 = vpop.f32.mrb[0].mxu0
        %v666 = vpop.f32.mrb[0].mxu0
        %v667 = vadd.f32 0.0, %v666
        %v668 = vpop.f32.mrb[0].mxu0
        %669 = vmatprep.mubr.bf16.mxu0 0
        %670 = vmatmul.mubr.bf16.gmra.mrb[0].mxu0 %v566
        %v671 = vpop.f32.mrb[0].mxu0
        %v672 = vadd.f32 0.0, %v671
        %v673 = vpop.f32.mrb[0].mxu0
        %v674 = vpop.f32.mrb[0].mxu0
        %v675 = vadd.f32 0.0, %v674
        %v676 = vpop.f32.mrb[0].mxu0
        %677 = vmatprep.mubr.bf16.mxu0 0
        %678 = vmatmul.mubr.bf16.gmra.mrb[0].mxu0 %v569
        %v679 = vpop.f32.mrb[0].mxu0
        %v680 = vadd.f32 0.0, %v679
        %v681 = vpop.f32.mrb[0].mxu0
        %v682 = vpop.f32.mrb[0].mxu0
        %v683 = vadd.f32 0.0, %v682
        %v684 = vpop.f32.mrb[0].mxu0
        %685 = vmatprep.mubr.bf16.mxu0 0
        %686 = vmatmul.mubr.bf16.gmra.mrb[0].mxu0 %v572
        %v687 = vpop.f32.mrb[0].mxu0
        %v688 = vadd.f32 0.0, %v687
        %v689 = vpop.f32.mrb[0].mxu0
        %v690 = vpop.f32.mrb[0].mxu0
        %v691 = vadd.f32 0.0, %v690
        %v692 = vpop.f32.mrb[0].mxu0
        %693 = vmatprep.mubr.bf16.mxu0 0
        %694 = vmatmul.mubr.bf16.gmra.mrb[0].mxu0 %v575
        %v695 = vpop.f32.mrb[0].mxu0
        %v696 = vadd.f32 0.0, %v695
        %v697 = vpop.f32.mrb[0].mxu0
        %v698 = vpop.f32.mrb[0].mxu0
        %v699 = vadd.f32 0.0, %v698
        %v700 = vpop.f32.mrb[0].mxu0
        %701 = vmatprep.mubr.bf16.mxu0 0
        %702 = vmatmul.mubr.bf16.gmra.mrb[0].mxu0 %v578
        %v703 = vpop.f32.mrb[0].mxu0
        %v704 = vadd.f32 0.0, %v703
        %v705 = vpop.f32.mrb[0].mxu0
        %v706 = vpop.f32.mrb[0].mxu0
        %v707 = vadd.f32 0.0, %v706
        %v708 = vpop.f32.mrb[0].mxu0
        %709 = vmatprep.mubr.bf16.mxu0 0
        %710 = vmatmul.mubr.bf16.gmra.mrb[0].mxu0 %v581
        %v711 = vpop.f32.mrb[0].mxu0
        %v712 = vadd.f32 0.0, %v711
        %v713 = vpop.f32.mrb[0].mxu0
        %v714 = vpop.f32.mrb[0].mxu0
        %v715 = vadd.f32 0.0, %v714
        %v716 = vpop.f32.mrb[0].mxu0
        %717 = vmatprep.mubr.bf16.mxu0 0
        %718 = vmatmul.mubr.bf16.gmra.mrb[0].mxu0 %v584
        %v719 = vpop.f32.mrb[0].mxu0
        %v720 = vadd.f32 0.0, %v719
        %v721 = vpop.f32.mrb[0].mxu0
        %v722 = vpop.f32.mrb[0].mxu0
        %v723 = vadd.f32 0.0, %v722
        %v724 = vpop.f32.mrb[0].mxu0
        %725 = vmatprep.mubr.bf16.mxu0 0
        %726 = vmatmul.mubr.bf16.gmra.mrb[0].mxu0 %v587
        %v727 = vpop.f32.mrb[0].mxu0
        %v728 = vadd.f32 0.0, %v727
        %v729 = vpop.f32.mrb[0].mxu0
        %v730 = vpop.f32.mrb[0].mxu0
        %v731 = vadd.f32 0.0, %v730
        %v732 = vpop.f32.mrb[0].mxu0
        %733 = vmatprep.mubr.bf16.mxu0 0
        %734 = vmatmul.mubr.bf16.gmra.mrb[0].mxu0 %v590
        %v735 = vpop.f32.mrb[0].mxu0
        %v736 = vadd.f32 0.0, %v735
        %v737 = vpop.f32.mrb[0].mxu0
        %v738 = vpop.f32.mrb[0].mxu0
        %v739 = vadd.f32 0.0, %v738
        %v740 = vpop.f32.mrb[0].mxu0
        %741 = vmatprep.mubr.bf16.mxu0 0
        %742 = vmatmul.mubr.bf16.gmra.mrb[0].mxu0 %v593
        %v743 = vpop.f32.mrb[0].mxu0
        %v744 = vadd.f32 0.0, %v743
        %v745 = vpop.f32.mrb[0].mxu0
        %v746 = vpop.f32.mrb[0].mxu0
        %v747 = vadd.f32 0.0, %v746
        %v748 = vpop.f32.mrb[0].mxu0
        %749 = vmatprep.mubr.bf16.mxu0 0
        %750 = vmatmul.mubr.bf16.gmra.mrb[0].mxu0 %v596
        %v751 = vpop.f32.mrb[0].mxu0
        %v752 = vadd.f32 0.0, %v751
        %v753 = vpop.f32.mrb[0].mxu0
        %v754 = vpop.f32.mrb[0].mxu0
        %v755 = vadd.f32 0.0, %v754
        %v756 = vpop.f32.mrb[0].mxu0
        %757 = vmatprep.mubr.bf16.mxu0 0
        %758 = vmatmul.mubr.bf16.gmra.mrb[0].mxu0 %v599
        %v759 = vpop.f32.mrb[0].mxu0
        %v760 = vadd.f32 0.0, %v759
        %v761 = vpop.f32.mrb[0].mxu0
        %v762 = vpop.f32.mrb[0].mxu0
        %v763 = vadd.f32 0.0, %v762
        %v764 = vpop.f32.mrb[0].mxu0
        %765 = vdwg.mxu0
        %v798 = vunpack.c.l.b16 %v406
        %v799 = vunpack.c.l.b16 %v407
        %v800 = vunpack.c.l.b16 %v408
        %v801 = vunpack.c.l.b16 %v409
        %v802 = vunpack.c.l.b16 %v410
        %v803 = vunpack.c.l.b16 %v411
        %v804 = vunpack.c.l.b16 %v412
        %v805 = vunpack.c.l.b16 %v413
        %v806 = vunpack.c.l.b16 %v414
        %v807 = vunpack.c.l.b16 %v415
        %v808 = vunpack.c.l.b16 %v416
        %v809 = vunpack.c.l.b16 %v417
        %v810 = vunpack.c.l.b16 %v418
        %v811 = vunpack.c.l.b16 %v419
        %v812 = vunpack.c.l.b16 %v420
        %v813 = vunpack.c.l.b16 %v421
        %v814 = vunpack.c.l.b16 %v422
        %v815 = vunpack.c.l.b16 %v423
        %v816 = vunpack.c.l.b16 %v424
        %v817 = vunpack.c.l.b16 %v425
        %v818 = vunpack.c.l.b16 %v426
        %v819 = vunpack.c.l.b16 %v427
        %v820 = vunpack.c.l.b16 %v428
        %v821 = vunpack.c.l.b16 %v429
        %v822 = vunpack.c.l.b16 %v430
        %v823 = vunpack.c.l.b16 %v431
        %v824 = vunpack.c.l.b16 %v432
        %v825 = vunpack.c.l.b16 %v433
        %v826 = vunpack.c.l.b16 %v434
        %v827 = vunpack.c.l.b16 %v435
        %v828 = vunpack.c.l.b16 %v436
        %v829 = vunpack.c.l.b16 %v437
        %v830 = vpack.c.b16 %v799, %v798
        %v831 = vpack.c.b16 %v801, %v800
        %v832 = vpack.c.b16 %v803, %v802
        %v833 = vpack.c.b16 %v805, %v804
        %v834 = vpack.c.b16 %v807, %v806
        %v835 = vpack.c.b16 %v809, %v808
        %v836 = vpack.c.b16 %v811, %v810
        %v837 = vpack.c.b16 %v813, %v812
        %v838 = vpack.c.b16 %v815, %v814
        %v839 = vpack.c.b16 %v817, %v816
        %v840 = vpack.c.b16 %v819, %v818
        %v841 = vpack.c.b16 %v821, %v820
        %v842 = vpack.c.b16 %v823, %v822
        %v843 = vpack.c.b16 %v825, %v824
        %v844 = vpack.c.b16 %v827, %v826
        %v845 = vpack.c.b16 %v829, %v828
        %vm846 = vcmask 64512
        %v848 = vsel %vm846, %v830, 0
        %v851 = vsel %vm846, %v831, 0
        %v854 = vsel %vm846, %v832, 0
        %v857 = vsel %vm846, %v833, 0
        %v860 = vsel %vm846, %v834, 0
        %v863 = vsel %vm846, %v835, 0
        %v866 = vsel %vm846, %v836, 0
        %v869 = vsel %vm846, %v837, 0
        %v872 = vsel %vm846, %v838, 0
        %v875 = vsel %vm846, %v839, 0
        %v878 = vsel %vm846, %v840, 0
        %v881 = vsel %vm846, %v841, 0
        %v884 = vsel %vm846, %v842, 0
        %v887 = vsel %vm846, %v843, 0
        %v890 = vsel %vm846, %v844, 0
        %v893 = vsel %vm846, %v845, 0
        %vm895 = vcmask 1043456
        %v897 = vsel %vm895, %v438, 0
        %899 = vmatprep.subr.bf16.mxu0 0
        %900 = vmatpush1.bf16.msra.mxu0 %v897
        %901 = vmatprep.subr.bf16.mxu0 0
        %902 = vmatpush1.bf16.msra.mxu0 0
        %903 = vmatprep.subr.bf16.mxu0 0
        %904 = vmatpush1.bf16.msra.mxu0 0
        %905 = vmatprep.subr.bf16.mxu0 0
        %906 = vmatpush1.bf16.msra.mxu0 0
        %907 = vmatprep.subr.bf16.mxu0 0
        %908 = vmatpush1.bf16.msra.mxu0 0
        %909 = vmatprep.subr.bf16.mxu0 0
        %910 = vmatpush1.bf16.msra.mxu0 0
        %911 = vmatprep.subr.bf16.mxu0 0
        %912 = vmatpush1.bf16.msra.mxu0 0
        %913 = vmatprep.subr.bf16.mxu0 0
        %914 = vmatpush1.bf16.msra.mxu0 0
        %915 = vmatprep.subr.bf16.mxu0 0
        %916 = vmatpush1.bf16.msra.mxu0 0
        %917 = vmatprep.subr.bf16.mxu0 0
        %918 = vmatpush1.bf16.msra.mxu0 0
        %919 = vmatprep.subr.bf16.mxu0 0
        %920 = vmatpush1.bf16.msra.mxu0 0
        %921 = vmatprep.subr.bf16.mxu0 0
        %922 = vmatpush1.bf16.msra.mxu0 0
        %923 = vmatprep.subr.bf16.mxu0 0
        %924 = vmatpush1.bf16.msra.mxu0 0
        %925 = vmatprep.subr.bf16.mxu0 0
        %926 = vmatpush1.bf16.msra.mxu0 0
        %927 = vmatprep.subr.bf16.mxu0 0
        %928 = vmatpush1.bf16.msra.mxu0 0
        %929 = vmatprep.subr.bf16.mxu0 0
        %930 = vmatpush1.bf16.msra.mxu0 0
        %931 = vmatprep.mubr.bf16.mxu0 0
        %932 = vmatmul.mubr.bf16.gmra.mrb[0].mxu0 %v848
        %v933 = vpop.f32.mrb[0].mxu0
        %v934 = vadd.f32 %v640, %v933
        %v935 = vpop.f32.mrb[0].mxu0
        %v936 = vpop.f32.mrb[0].mxu0
        %v937 = vadd.f32 %v643, %v936
        %v938 = vpop.f32.mrb[0].mxu0
        %939 = vmatprep.mubr.bf16.mxu0 0
        %940 = vmatmul.mubr.bf16.gmra.mrb[0].mxu0 %v851
        %v941 = vpop.f32.mrb[0].mxu0
        %v942 = vadd.f32 %v648, %v941
        %v943 = vpop.f32.mrb[0].mxu0
        %v944 = vpop.f32.mrb[0].mxu0
        %v945 = vadd.f32 %v651, %v944
        %v946 = vpop.f32.mrb[0].mxu0
        %947 = vmatprep.mubr.bf16.mxu0 0
        %948 = vmatmul.mubr.bf16.gmra.mrb[0].mxu0 %v854
        %v949 = vpop.f32.mrb[0].mxu0
        %v950 = vadd.f32 %v656, %v949
        %v951 = vpop.f32.mrb[0].mxu0
        %v952 = vpop.f32.mrb[0].mxu0
        %v953 = vadd.f32 %v659, %v952
        %v954 = vpop.f32.mrb[0].mxu0
        %955 = vmatprep.mubr.bf16.mxu0 0
        %956 = vmatmul.mubr.bf16.gmra.mrb[0].mxu0 %v857
        %v957 = vpop.f32.mrb[0].mxu0
        %v958 = vadd.f32 %v664, %v957
        %v959 = vpop.f32.mrb[0].mxu0
        %v960 = vpop.f32.mrb[0].mxu0
        %v961 = vadd.f32 %v667, %v960
        %v962 = vpop.f32.mrb[0].mxu0
        %963 = vmatprep.mubr.bf16.mxu0 0
        %964 = vmatmul.mubr.bf16.gmra.mrb[0].mxu0 %v860
        %v965 = vpop.f32.mrb[0].mxu0
        %v966 = vadd.f32 %v672, %v965
        %v967 = vpop.f32.mrb[0].mxu0
        %v968 = vpop.f32.mrb[0].mxu0
        %v969 = vadd.f32 %v675, %v968
        %v970 = vpop.f32.mrb[0].mxu0
        %971 = vmatprep.mubr.bf16.mxu0 0
        %972 = vmatmul.mubr.bf16.gmra.mrb[0].mxu0 %v863
        %v973 = vpop.f32.mrb[0].mxu0
        %v974 = vadd.f32 %v680, %v973
        %v975 = vpop.f32.mrb[0].mxu0
        %v976 = vpop.f32.mrb[0].mxu0
        %v977 = vadd.f32 %v683, %v976
        %v978 = vpop.f32.mrb[0].mxu0
        %979 = vmatprep.mubr.bf16.mxu0 0
        %980 = vmatmul.mubr.bf16.gmra.mrb[0].mxu0 %v866
        %v981 = vpop.f32.mrb[0].mxu0
        %v982 = vadd.f32 %v688, %v981
        %v983 = vpop.f32.mrb[0].mxu0
        %v984 = vpop.f32.mrb[0].mxu0
        %v985 = vadd.f32 %v691, %v984
        %v986 = vpop.f32.mrb[0].mxu0
        %987 = vmatprep.mubr.bf16.mxu0 0
        %988 = vmatmul.mubr.bf16.gmra.mrb[0].mxu0 %v869
        %v989 = vpop.f32.mrb[0].mxu0
        %v990 = vadd.f32 %v696, %v989
        %v991 = vpop.f32.mrb[0].mxu0
        %v992 = vpop.f32.mrb[0].mxu0
        %v993 = vadd.f32 %v699, %v992
        %v994 = vpop.f32.mrb[0].mxu0
        %995 = vmatprep.mubr.bf16.mxu0 0
        %996 = vmatmul.mubr.bf16.gmra.mrb[0].mxu0 %v872
        %v997 = vpop.f32.mrb[0].mxu0
        %v998 = vadd.f32 %v704, %v997
        %v999 = vpop.f32.mrb[0].mxu0
        %v1000 = vpop.f32.mrb[0].mxu0
        %v1001 = vadd.f32 %v707, %v1000
        %v1002 = vpop.f32.mrb[0].mxu0
        %1003 = vmatprep.mubr.bf16.mxu0 0
        %1004 = vmatmul.mubr.bf16.gmra.mrb[0].mxu0 %v875
        %v1005 = vpop.f32.mrb[0].mxu0
        %v1006 = vadd.f32 %v712, %v1005
        %v1007 = vpop.f32.mrb[0].mxu0
        %v1008 = vpop.f32.mrb[0].mxu0
        %v1009 = vadd.f32 %v715, %v1008
        %v1010 = vpop.f32.mrb[0].mxu0
        %1011 = vmatprep.mubr.bf16.mxu0 0
        %1012 = vmatmul.mubr.bf16.gmra.mrb[0].mxu0 %v878
        %v1013 = vpop.f32.mrb[0].mxu0
        %v1014 = vadd.f32 %v720, %v1013
        %v1015 = vpop.f32.mrb[0].mxu0
        %v1016 = vpop.f32.mrb[0].mxu0
        %v1017 = vadd.f32 %v723, %v1016
        %v1018 = vpop.f32.mrb[0].mxu0
        %1019 = vmatprep.mubr.bf16.mxu0 0
        %1020 = vmatmul.mubr.bf16.gmra.mrb[0].mxu0 %v881
        %v1021 = vpop.f32.mrb[0].mxu0
        %v1022 = vadd.f32 %v728, %v1021
        %v1023 = vpop.f32.mrb[0].mxu0
        %v1024 = vpop.f32.mrb[0].mxu0
        %v1025 = vadd.f32 %v731, %v1024
        %v1026 = vpop.f32.mrb[0].mxu0
        %1027 = vmatprep.mubr.bf16.mxu0 0
        %1028 = vmatmul.mubr.bf16.gmra.mrb[0].mxu0 %v884
        %v1029 = vpop.f32.mrb[0].mxu0
        %v1030 = vadd.f32 %v736, %v1029
        %v1031 = vpop.f32.mrb[0].mxu0
        %v1032 = vpop.f32.mrb[0].mxu0
        %v1033 = vadd.f32 %v739, %v1032
        %v1034 = vpop.f32.mrb[0].mxu0
        %1035 = vmatprep.mubr.bf16.mxu0 0
        %1036 = vmatmul.mubr.bf16.gmra.mrb[0].mxu0 %v887
        %v1037 = vpop.f32.mrb[0].mxu0
        %v1038 = vadd.f32 %v744, %v1037
        %v1039 = vpop.f32.mrb[0].mxu0
        %v1040 = vpop.f32.mrb[0].mxu0
        %v1041 = vadd.f32 %v747, %v1040
        %v1042 = vpop.f32.mrb[0].mxu0
        %1043 = vmatprep.mubr.bf16.mxu0 0
        %1044 = vmatmul.mubr.bf16.gmra.mrb[0].mxu0 %v890
        %v1045 = vpop.f32.mrb[0].mxu0
        %v1046 = vadd.f32 %v752, %v1045
        %v1047 = vpop.f32.mrb[0].mxu0
        %v1048 = vpop.f32.mrb[0].mxu0
        %v1049 = vadd.f32 %v755, %v1048
        %v1050 = vpop.f32.mrb[0].mxu0
        %1051 = vmatprep.mubr.bf16.mxu0 0
        %1052 = vmatmul.mubr.bf16.gmra.mrb[0].mxu0 %v893
        %v1053 = vpop.f32.mrb[0].mxu0
        %v1054 = vadd.f32 %v760, %v1053
        %v1055 = vpop.f32.mrb[0].mxu0
        %v1056 = vpop.f32.mrb[0].mxu0
        %v1057 = vadd.f32 %v763, %v1056
        %v1058 = vpop.f32.mrb[0].mxu0
        %1059 = vdwg.mxu0
        %v1060 = vld [vmem:[%s347] sm:$0xf]
        %v1061 = vld [vmem:[%s347 + $0x4] sm:$0xf]
        %v1062 = vld [vmem:[%s347 + $0x8] sm:$0xf]
        %v1063 = vld [vmem:[%s347 + $0xc] sm:$0xf]
        %v1064 = vld [vmem:[%s347 + $0x10] sm:$0xf]
        %v1065 = vld [vmem:[%s347 + $0x14] sm:$0xf]
        %v1066 = vld [vmem:[%s347 + $0x18] sm:$0xf]
        %v1067 = vld [vmem:[%s347 + $0x1c] sm:$0xf]
        %v1068 = vld [vmem:[%s347 + $0x20] sm:$0xf]
        %v1069 = vld [vmem:[%s347 + $0x24] sm:$0xf]
        %v1070 = vld [vmem:[%s347 + $0x28] sm:$0xf]
        %v1071 = vld [vmem:[%s347 + $0x2c] sm:$0xf]
        %v1072 = vld [vmem:[%s347 + $0x30] sm:$0xf]
        %v1073 = vld [vmem:[%s347 + $0x34] sm:$0xf]
        %v1074 = vld [vmem:[%s347 + $0x38] sm:$0xf]
        %v1075 = vld [vmem:[%s347 + $0x3c] sm:$0xf]
        %v1076 = vld [vmem:[%s347 + $0x40] sm:$0xf]
        %v1077 = vld [vmem:[%s347 + $0x44] sm:$0xf]
        %v1078 = vld [vmem:[%s347 + $0x48] sm:$0xf]
        %v1079 = vld [vmem:[%s347 + $0x4c] sm:$0xf]
        %v1080 = vld [vmem:[%s347 + $0x50] sm:$0xf]
        %v1081 = vld [vmem:[%s347 + $0x54] sm:$0xf]
        %v1082 = vld [vmem:[%s347 + $0x58] sm:$0xf]
        %v1083 = vld [vmem:[%s347 + $0x5c] sm:$0xf]
        %v1084 = vld [vmem:[%s347 + $0x60] sm:$0xf]
        %v1085 = vld [vmem:[%s347 + $0x64] sm:$0xf]
        %v1086 = vld [vmem:[%s347 + $0x68] sm:$0xf]
        %v1087 = vld [vmem:[%s347 + $0x6c] sm:$0xf]
        %v1088 = vld [vmem:[%s347 + $0x70] sm:$0xf]
        %v1089 = vld [vmem:[%s347 + $0x74] sm:$0xf]
        %v1090 = vld [vmem:[%s347 + $0x78] sm:$0xf]
        %v1091 = vld [vmem:[%s347 + $0x7c] sm:$0xf]
        %v1092 = vld [vmem:[%s5] sm:$0x3]
        %v1125 = vunpack.c.l.b16 %v1060
        %v1126 = vunpack.c.l.b16 %v1061
        %v1127 = vunpack.c.l.b16 %v1062
        %v1128 = vunpack.c.l.b16 %v1063
        %v1129 = vunpack.c.l.b16 %v1064
        %v1130 = vunpack.c.l.b16 %v1065
        %v1131 = vunpack.c.l.b16 %v1066
        %v1132 = vunpack.c.l.b16 %v1067
        %v1133 = vunpack.c.l.b16 %v1068
        %v1134 = vunpack.c.l.b16 %v1069
        %v1135 = vunpack.c.l.b16 %v1070
        %v1136 = vunpack.c.l.b16 %v1071
        %v1137 = vunpack.c.l.b16 %v1072
        %v1138 = vunpack.c.l.b16 %v1073
        %v1139 = vunpack.c.l.b16 %v1074
        %v1140 = vunpack.c.l.b16 %v1075
        %v1141 = vunpack.c.l.b16 %v1076
        %v1142 = vunpack.c.l.b16 %v1077
        %v1143 = vunpack.c.l.b16 %v1078
        %v1144 = vunpack.c.l.b16 %v1079
        %v1145 = vunpack.c.l.b16 %v1080
        %v1146 = vunpack.c.l.b16 %v1081
        %v1147 = vunpack.c.l.b16 %v1082
        %v1148 = vunpack.c.l.b16 %v1083
        %v1149 = vunpack.c.l.b16 %v1084
        %v1150 = vunpack.c.l.b16 %v1085
        %v1151 = vunpack.c.l.b16 %v1086
        %v1152 = vunpack.c.l.b16 %v1087
        %v1153 = vunpack.c.l.b16 %v1088
        %v1154 = vunpack.c.l.b16 %v1089
        %v1155 = vunpack.c.l.b16 %v1090
        %v1156 = vunpack.c.l.b16 %v1091
        %v1157 = vpack.c.b16 %v1126, %v1125
        %v1158 = vpack.c.b16 %v1128, %v1127
        %v1159 = vpack.c.b16 %v1130, %v1129
        %v1160 = vpack.c.b16 %v1132, %v1131
        %v1161 = vpack.c.b16 %v1134, %v1133
        %v1162 = vpack.c.b16 %v1136, %v1135
        %v1163 = vpack.c.b16 %v1138, %v1137
        %v1164 = vpack.c.b16 %v1140, %v1139
        %v1165 = vpack.c.b16 %v1142, %v1141
        %v1166 = vpack.c.b16 %v1144, %v1143
        %v1167 = vpack.c.b16 %v1146, %v1145
        %v1168 = vpack.c.b16 %v1148, %v1147
        %v1169 = vpack.c.b16 %v1150, %v1149
        %v1170 = vpack.c.b16 %v1152, %v1151
        %v1171 = vpack.c.b16 %v1154, %v1153
        %v1172 = vpack.c.b16 %v1156, %v1155
        %v1174 = vsel %vm552, %v1157, 0
        %v1177 = vsel %vm552, %v1158, 0
        %v1180 = vsel %vm552, %v1159, 0
        %v1183 = vsel %vm552, %v1160, 0
        %v1186 = vsel %vm552, %v1161, 0
        %v1189 = vsel %vm552, %v1162, 0
        %v1192 = vsel %vm552, %v1163, 0
        %v1195 = vsel %vm552, %v1164, 0
        %v1198 = vsel %vm552, %v1165, 0
        %v1201 = vsel %vm552, %v1166, 0
        %v1204 = vsel %vm552, %v1167, 0
        %v1207 = vsel %vm552, %v1168, 0
        %v1210 = vsel %vm552, %v1169, 0
        %v1213 = vsel %vm552, %v1170, 0
        %v1216 = vsel %vm552, %v1171, 0
        %v1219 = vsel %vm552, %v1172, 0
        %v1222 = vsel %vm601, %v1092, 0
        %1224 = vmatprep.subr.bf16.mxu0 0
        %1225 = vmatpush1.bf16.msra.mxu0 %v1222
        %1226 = vmatprep.subr.bf16.mxu0 0
        %1227 = vmatpush1.bf16.msra.mxu0 0
        %1228 = vmatprep.subr.bf16.mxu0 0
        %1229 = vmatpush1.bf16.msra.mxu0 0
        %1230 = vmatprep.subr.bf16.mxu0 0
        %1231 = vmatpush1.bf16.msra.mxu0 0
        %1232 = vmatprep.subr.bf16.mxu0 0
        %1233 = vmatpush1.bf16.msra.mxu0 0
        %1234 = vmatprep.subr.bf16.mxu0 0
        %1235 = vmatpush1.bf16.msra.mxu0 0
        %1236 = vmatprep.subr.bf16.mxu0 0
        %1237 = vmatpush1.bf16.msra.mxu0 0
        %1238 = vmatprep.subr.bf16.mxu0 0
        %1239 = vmatpush1.bf16.msra.mxu0 0
        %1240 = vmatprep.subr.bf16.mxu0 0
        %1241 = vmatpush1.bf16.msra.mxu0 0
        %1242 = vmatprep.subr.bf16.mxu0 0
        %1243 = vmatpush1.bf16.msra.mxu0 0
        %1244 = vmatprep.subr.bf16.mxu0 0
        %1245 = vmatpush1.bf16.msra.mxu0 0
        %1246 = vmatprep.subr.bf16.mxu0 0
        %1247 = vmatpush1.bf16.msra.mxu0 0
        %1248 = vmatprep.subr.bf16.mxu0 0
        %1249 = vmatpush1.bf16.msra.mxu0 0
        %1250 = vmatprep.subr.bf16.mxu0 0
        %1251 = vmatpush1.bf16.msra.mxu0 0
        %1252 = vmatprep.subr.bf16.mxu0 0
        %1253 = vmatpush1.bf16.msra.mxu0 0
        %1254 = vmatprep.subr.bf16.mxu0 0
        %1255 = vmatpush1.bf16.msra.mxu0 0
        %1256 = vmatprep.mubr.bf16.mxu0 0
        %1257 = vmatmul.mubr.bf16.gmra.mrb[0].mxu0 %v1174
        %v1258 = vpop.f32.mrb[0].mxu0
        %v1259 = vadd.f32 0.0, %v1258
        %v1260 = vpop.f32.mrb[0].mxu0
        %v1261 = vpop.f32.mrb[0].mxu0
        %v1262 = vadd.f32 0.0, %v1261
        %v1263 = vpop.f32.mrb[0].mxu0
        %1264 = vmatprep.mubr.bf16.mxu0 0
        %1265 = vmatmul.mubr.bf16.gmra.mrb[0].mxu0 %v1177
        %v1266 = vpop.f32.mrb[0].mxu0
        %v1267 = vadd.f32 0.0, %v1266
        %v1268 = vpop.f32.mrb[0].mxu0
        %v1269 = vpop.f32.mrb[0].mxu0
        %v1270 = vadd.f32 0.0, %v1269
        %v1271 = vpop.f32.mrb[0].mxu0
        %1272 = vmatprep.mubr.bf16.mxu0 0
        %1273 = vmatmul.mubr.bf16.gmra.mrb[0].mxu0 %v1180
        %v1274 = vpop.f32.mrb[0].mxu0
        %v1275 = vadd.f32 0.0, %v1274
        %v1276 = vpop.f32.mrb[0].mxu0
        %v1277 = vpop.f32.mrb[0].mxu0
        %v1278 = vadd.f32 0.0, %v1277
        %v1279 = vpop.f32.mrb[0].mxu0
        %1280 = vmatprep.mubr.bf16.mxu0 0
        %1281 = vmatmul.mubr.bf16.gmra.mrb[0].mxu0 %v1183
        %v1282 = vpop.f32.mrb[0].mxu0
        %v1283 = vadd.f32 0.0, %v1282
        %v1284 = vpop.f32.mrb[0].mxu0
        %v1285 = vpop.f32.mrb[0].mxu0
        %v1286 = vadd.f32 0.0, %v1285
        %v1287 = vpop.f32.mrb[0].mxu0
        %1288 = vmatprep.mubr.bf16.mxu0 0
        %1289 = vmatmul.mubr.bf16.gmra.mrb[0].mxu0 %v1186
        %v1290 = vpop.f32.mrb[0].mxu0
        %v1291 = vadd.f32 0.0, %v1290
        %v1292 = vpop.f32.mrb[0].mxu0
        %v1293 = vpop.f32.mrb[0].mxu0
        %v1294 = vadd.f32 0.0, %v1293
        %v1295 = vpop.f32.mrb[0].mxu0
        %1296 = vmatprep.mubr.bf16.mxu0 0
        %1297 = vmatmul.mubr.bf16.gmra.mrb[0].mxu0 %v1189
        %v1298 = vpop.f32.mrb[0].mxu0
        %v1299 = vadd.f32 0.0, %v1298
        %v1300 = vpop.f32.mrb[0].mxu0
        %v1301 = vpop.f32.mrb[0].mxu0
        %v1302 = vadd.f32 0.0, %v1301
        %v1303 = vpop.f32.mrb[0].mxu0
        %1304 = vmatprep.mubr.bf16.mxu0 0
        %1305 = vmatmul.mubr.bf16.gmra.mrb[0].mxu0 %v1192
        %v1306 = vpop.f32.mrb[0].mxu0
        %v1307 = vadd.f32 0.0, %v1306
        %v1308 = vpop.f32.mrb[0].mxu0
        %v1309 = vpop.f32.mrb[0].mxu0
        %v1310 = vadd.f32 0.0, %v1309
        %v1311 = vpop.f32.mrb[0].mxu0
        %1312 = vmatprep.mubr.bf16.mxu0 0
        %1313 = vmatmul.mubr.bf16.gmra.mrb[0].mxu0 %v1195
        %v1314 = vpop.f32.mrb[0].mxu0
        %v1315 = vadd.f32 0.0, %v1314
        %v1316 = vpop.f32.mrb[0].mxu0
        %v1317 = vpop.f32.mrb[0].mxu0
        %v1318 = vadd.f32 0.0, %v1317
        %v1319 = vpop.f32.mrb[0].mxu0
        %1320 = vmatprep.mubr.bf16.mxu0 0
        %1321 = vmatmul.mubr.bf16.gmra.mrb[0].mxu0 %v1198
        %v1322 = vpop.f32.mrb[0].mxu0
        %v1323 = vadd.f32 0.0, %v1322
        %v1324 = vpop.f32.mrb[0].mxu0
        %v1325 = vpop.f32.mrb[0].mxu0
        %v1326 = vadd.f32 0.0, %v1325
        %v1327 = vpop.f32.mrb[0].mxu0
        %1328 = vmatprep.mubr.bf16.mxu0 0
        %1329 = vmatmul.mubr.bf16.gmra.mrb[0].mxu0 %v1201
        %v1330 = vpop.f32.mrb[0].mxu0
        %v1331 = vadd.f32 0.0, %v1330
        %v1332 = vpop.f32.mrb[0].mxu0
        %v1333 = vpop.f32.mrb[0].mxu0
        %v1334 = vadd.f32 0.0, %v1333
        %v1335 = vpop.f32.mrb[0].mxu0
        %1336 = vmatprep.mubr.bf16.mxu0 0
        %1337 = vmatmul.mubr.bf16.gmra.mrb[0].mxu0 %v1204
        %v1338 = vpop.f32.mrb[0].mxu0
        %v1339 = vadd.f32 0.0, %v1338
        %v1340 = vpop.f32.mrb[0].mxu0
        %v1341 = vpop.f32.mrb[0].mxu0
        %v1342 = vadd.f32 0.0, %v1341
        %v1343 = vpop.f32.mrb[0].mxu0
        %1344 = vmatprep.mubr.bf16.mxu0 0
        %1345 = vmatmul.mubr.bf16.gmra.mrb[0].mxu0 %v1207
        %v1346 = vpop.f32.mrb[0].mxu0
        %v1347 = vadd.f32 0.0, %v1346
        %v1348 = vpop.f32.mrb[0].mxu0
        %v1349 = vpop.f32.mrb[0].mxu0
        %v1350 = vadd.f32 0.0, %v1349
        %v1351 = vpop.f32.mrb[0].mxu0
        %1352 = vmatprep.mubr.bf16.mxu0 0
        %1353 = vmatmul.mubr.bf16.gmra.mrb[0].mxu0 %v1210
        %v1354 = vpop.f32.mrb[0].mxu0
        %v1355 = vadd.f32 0.0, %v1354
        %v1356 = vpop.f32.mrb[0].mxu0
        %v1357 = vpop.f32.mrb[0].mxu0
        %v1358 = vadd.f32 0.0, %v1357
        %v1359 = vpop.f32.mrb[0].mxu0
        %1360 = vmatprep.mubr.bf16.mxu0 0
        %1361 = vmatmul.mubr.bf16.gmra.mrb[0].mxu0 %v1213
        %v1362 = vpop.f32.mrb[0].mxu0
        %v1363 = vadd.f32 0.0, %v1362
        %v1364 = vpop.f32.mrb[0].mxu0
        %v1365 = vpop.f32.mrb[0].mxu0
        %v1366 = vadd.f32 0.0, %v1365
        %v1367 = vpop.f32.mrb[0].mxu0
        %1368 = vmatprep.mubr.bf16.mxu0 0
        %1369 = vmatmul.mubr.bf16.gmra.mrb[0].mxu0 %v1216
        %v1370 = vpop.f32.mrb[0].mxu0
        %v1371 = vadd.f32 0.0, %v1370
        %v1372 = vpop.f32.mrb[0].mxu0
        %v1373 = vpop.f32.mrb[0].mxu0
        %v1374 = vadd.f32 0.0, %v1373
        %v1375 = vpop.f32.mrb[0].mxu0
        %1376 = vmatprep.mubr.bf16.mxu0 0
        %1377 = vmatmul.mubr.bf16.gmra.mrb[0].mxu0 %v1219
        %v1378 = vpop.f32.mrb[0].mxu0
        %v1379 = vadd.f32 0.0, %v1378
        %v1380 = vpop.f32.mrb[0].mxu0
        %v1381 = vpop.f32.mrb[0].mxu0
        %v1382 = vadd.f32 0.0, %v1381
        %v1383 = vpop.f32.mrb[0].mxu0
        %1384 = vdwg.mxu0
        %v1385 = vadd.f32 %v934, %v1259
        %v1386 = vadd.f32 %v937, %v1262
        %v1387 = vadd.f32 %v942, %v1267
        %v1388 = vadd.f32 %v945, %v1270
        %v1389 = vadd.f32 %v950, %v1275
        %v1390 = vadd.f32 %v953, %v1278
        %v1391 = vadd.f32 %v958, %v1283
        %v1392 = vadd.f32 %v961, %v1286
        %v1393 = vadd.f32 %v966, %v1291
        %v1394 = vadd.f32 %v969, %v1294
        %v1395 = vadd.f32 %v974, %v1299
        %v1396 = vadd.f32 %v977, %v1302
        %v1397 = vadd.f32 %v982, %v1307
        %v1398 = vadd.f32 %v985, %v1310
        %v1399 = vadd.f32 %v990, %v1315
        %v1400 = vadd.f32 %v993, %v1318
        %v1401 = vadd.f32 %v998, %v1323
        %v1402 = vadd.f32 %v1001, %v1326
        %v1403 = vadd.f32 %v1006, %v1331
        %v1404 = vadd.f32 %v1009, %v1334
        %v1405 = vadd.f32 %v1014, %v1339
        %v1406 = vadd.f32 %v1017, %v1342
        %v1407 = vadd.f32 %v1022, %v1347
        %v1408 = vadd.f32 %v1025, %v1350
        %v1409 = vadd.f32 %v1030, %v1355
        %v1410 = vadd.f32 %v1033, %v1358
        %v1411 = vadd.f32 %v1038, %v1363
        %v1412 = vadd.f32 %v1041, %v1366
        %v1413 = vadd.f32 %v1046, %v1371
        %v1414 = vadd.f32 %v1049, %v1374
        %v1415 = vadd.f32 %v1054, %v1379
        %v1416 = vadd.f32 %v1057, %v1382
        %v1417 = vld [vmem:[%s6] sm:$0x1]
        %v1419 = vlaneseq
        %v1420 = vshrl.u32 %v1419, 7
        %v1421 = vsub.s32 0, %v1420
        %v1422 = vrot.slane %v1417, %v1421
        %v1424 = vadd.f32 %v1385, %v1422
        %v1425 = vadd.f32 %v1386, %v1422
        %v1426 = vadd.f32 %v1387, %v1422
        %v1427 = vadd.f32 %v1388, %v1422
        %v1428 = vadd.f32 %v1389, %v1422
        %v1429 = vadd.f32 %v1390, %v1422
        %v1430 = vadd.f32 %v1391, %v1422
        %v1431 = vadd.f32 %v1392, %v1422
        %v1432 = vadd.f32 %v1393, %v1422
        %v1433 = vadd.f32 %v1394, %v1422
        %v1434 = vadd.f32 %v1395, %v1422
        %v1435 = vadd.f32 %v1396, %v1422
        %v1436 = vadd.f32 %v1397, %v1422
        %v1437 = vadd.f32 %v1398, %v1422
        %v1438 = vadd.f32 %v1399, %v1422
        %v1439 = vadd.f32 %v1400, %v1422
        %v1440 = vadd.f32 %v1401, %v1422
        %v1441 = vadd.f32 %v1402, %v1422
        %v1442 = vadd.f32 %v1403, %v1422
        %v1443 = vadd.f32 %v1404, %v1422
        %v1444 = vadd.f32 %v1405, %v1422
        %v1445 = vadd.f32 %v1406, %v1422
        %v1446 = vadd.f32 %v1407, %v1422
        %v1447 = vadd.f32 %v1408, %v1422
        %v1448 = vadd.f32 %v1409, %v1422
        %v1449 = vadd.f32 %v1410, %v1422
        %v1450 = vadd.f32 %v1411, %v1422
        %v1451 = vadd.f32 %v1412, %v1422
        %v1452 = vadd.f32 %v1413, %v1422
        %v1453 = vadd.f32 %v1414, %v1422
        %v1454 = vadd.f32 %v1415, %v1422
        %v1455 = vadd.f32 %v1416, %v1422
        %v1456 = vsub.f32 0.0, %v1424
        %v1457 = vsub.f32 0.0, %v1425
        %v1458 = vsub.f32 0.0, %v1426
        %v1459 = vsub.f32 0.0, %v1427
        %v1460 = vsub.f32 0.0, %v1428
        %v1461 = vsub.f32 0.0, %v1429
        %v1462 = vsub.f32 0.0, %v1430
        %v1463 = vsub.f32 0.0, %v1431
        %v1464 = vsub.f32 0.0, %v1432
        %v1465 = vsub.f32 0.0, %v1433
        %v1466 = vsub.f32 0.0, %v1434
        %v1467 = vsub.f32 0.0, %v1435
        %v1468 = vsub.f32 0.0, %v1436
        %v1469 = vsub.f32 0.0, %v1437
        %v1470 = vsub.f32 0.0, %v1438
        %v1471 = vsub.f32 0.0, %v1439
        %v1472 = vsub.f32 0.0, %v1440
        %v1473 = vsub.f32 0.0, %v1441
        %v1474 = vsub.f32 0.0, %v1442
        %v1475 = vsub.f32 0.0, %v1443
        %v1476 = vsub.f32 0.0, %v1444
        %v1477 = vsub.f32 0.0, %v1445
        %v1478 = vsub.f32 0.0, %v1446
        %v1479 = vsub.f32 0.0, %v1447
        %v1480 = vsub.f32 0.0, %v1448
        %v1481 = vsub.f32 0.0, %v1449
        %v1482 = vsub.f32 0.0, %v1450
        %v1483 = vsub.f32 0.0, %v1451
        %v1484 = vsub.f32 0.0, %v1452
        %v1485 = vsub.f32 0.0, %v1453
        %v1486 = vsub.f32 0.0, %v1454
        %v1487 = vsub.f32 0.0, %v1455
        %v1488 = vmul.f32 %v1456, 1.442695
        %v1489 = vpow.pop %v1488
        %v1490 = vmul.f32 %v1457, 1.442695
        %v1491 = vpow.pop %v1490
        %v1492 = vmul.f32 %v1458, 1.442695
        %v1493 = vpow.pop %v1492
        %v1494 = vmul.f32 %v1459, 1.442695
        %v1495 = vpow.pop %v1494
        %v1496 = vmul.f32 %v1460, 1.442695
        %v1497 = vpow.pop %v1496
        %v1498 = vmul.f32 %v1461, 1.442695
        %v1499 = vpow.pop %v1498
        %v1500 = vmul.f32 %v1462, 1.442695
        %v1501 = vpow.pop %v1500
        %v1502 = vmul.f32 %v1463, 1.442695
        %v1503 = vpow.pop %v1502
        %v1504 = vmul.f32 %v1464, 1.442695
        %v1505 = vpow.pop %v1504
        %v1506 = vmul.f32 %v1465, 1.442695
        %v1507 = vpow.pop %v1506
        %v1508 = vmul.f32 %v1466, 1.442695
        %v1509 = vpow.pop %v1508
        %v1510 = vmul.f32 %v1467, 1.442695
        %v1511 = vpow.pop %v1510
        %v1512 = vmul.f32 %v1468, 1.442695
        %v1513 = vpow.pop %v1512
        %v1514 = vmul.f32 %v1469, 1.442695
        %v1515 = vpow.pop %v1514
        %v1516 = vmul.f32 %v1470, 1.442695
        %v1517 = vpow.pop %v1516
        %v1518 = vmul.f32 %v1471, 1.442695
        %v1519 = vpow.pop %v1518
        %v1520 = vmul.f32 %v1472, 1.442695
        %v1521 = vpow.pop %v1520
        %v1522 = vmul.f32 %v1473, 1.442695
        %v1523 = vpow.pop %v1522
        %v1524 = vmul.f32 %v1474, 1.442695
        %v1525 = vpow.pop %v1524
        %v1526 = vmul.f32 %v1475, 1.442695
        %v1527 = vpow.pop %v1526
        %v1528 = vmul.f32 %v1476, 1.442695
        %v1529 = vpow.pop %v1528
        %v1530 = vmul.f32 %v1477, 1.442695
        %v1531 = vpow.pop %v1530
        %v1532 = vmul.f32 %v1478, 1.442695
        %v1533 = vpow.pop %v1532
        %v1534 = vmul.f32 %v1479, 1.442695
        %v1535 = vpow.pop %v1534
        %v1536 = vmul.f32 %v1480, 1.442695
        %v1537 = vpow.pop %v1536
        %v1538 = vmul.f32 %v1481, 1.442695
        %v1539 = vpow.pop %v1538
        %v1540 = vmul.f32 %v1482, 1.442695
        %v1541 = vpow.pop %v1540
        %v1542 = vmul.f32 %v1483, 1.442695
        %v1543 = vpow.pop %v1542
        %v1544 = vmul.f32 %v1484, 1.442695
        %v1545 = vpow.pop %v1544
        %v1546 = vmul.f32 %v1485, 1.442695
        %v1547 = vpow.pop %v1546
        %v1548 = vmul.f32 %v1486, 1.442695
        %v1549 = vpow.pop %v1548
        %v1550 = vmul.f32 %v1487, 1.442695
        %v1551 = vpow.pop %v1550
        %v1552 = vadd.f32 %v1489, 1.0
        %v1553 = vadd.f32 %v1491, 1.0
        %v1554 = vadd.f32 %v1493, 1.0
        %v1555 = vadd.f32 %v1495, 1.0
        %v1556 = vadd.f32 %v1497, 1.0
        %v1557 = vadd.f32 %v1499, 1.0
        %v1558 = vadd.f32 %v1501, 1.0
        %v1559 = vadd.f32 %v1503, 1.0
        %v1560 = vadd.f32 %v1505, 1.0
        %v1561 = vadd.f32 %v1507, 1.0
        %v1562 = vadd.f32 %v1509, 1.0
        %v1563 = vadd.f32 %v1511, 1.0
        %v1564 = vadd.f32 %v1513, 1.0
        %v1565 = vadd.f32 %v1515, 1.0
        %v1566 = vadd.f32 %v1517, 1.0
        %v1567 = vadd.f32 %v1519, 1.0
        %v1568 = vadd.f32 %v1521, 1.0
        %v1569 = vadd.f32 %v1523, 1.0
        %v1570 = vadd.f32 %v1525, 1.0
        %v1571 = vadd.f32 %v1527, 1.0
        %v1572 = vadd.f32 %v1529, 1.0
        %v1573 = vadd.f32 %v1531, 1.0
        %v1574 = vadd.f32 %v1533, 1.0
        %v1575 = vadd.f32 %v1535, 1.0
        %v1576 = vadd.f32 %v1537, 1.0
        %v1577 = vadd.f32 %v1539, 1.0
        %v1578 = vadd.f32 %v1541, 1.0
        %v1579 = vadd.f32 %v1543, 1.0
        %v1580 = vadd.f32 %v1545, 1.0
        %v1581 = vadd.f32 %v1547, 1.0
        %v1582 = vadd.f32 %v1549, 1.0
        %v1583 = vadd.f32 %v1551, 1.0
        %v1584 = vrcp.pop %v1552
        %v1585 = vrcp.pop %v1553
        %v1586 = vrcp.pop %v1554
        %v1587 = vrcp.pop %v1555
        %v1588 = vrcp.pop %v1556
        %v1589 = vrcp.pop %v1557
        %v1590 = vrcp.pop %v1558
        %v1591 = vrcp.pop %v1559
        %v1592 = vrcp.pop %v1560
        %v1593 = vrcp.pop %v1561
        %v1594 = vrcp.pop %v1562
        %v1595 = vrcp.pop %v1563
        %v1596 = vrcp.pop %v1564
        %v1597 = vrcp.pop %v1565
        %v1598 = vrcp.pop %v1566
        %v1599 = vrcp.pop %v1567
        %v1600 = vrcp.pop %v1568
        %v1601 = vrcp.pop %v1569
        %v1602 = vrcp.pop %v1570
        %v1603 = vrcp.pop %v1571
        %v1604 = vrcp.pop %v1572
        %v1605 = vrcp.pop %v1573
        %v1606 = vrcp.pop %v1574
        %v1607 = vrcp.pop %v1575
        %v1608 = vrcp.pop %v1576
        %v1609 = vrcp.pop %v1577
        %v1610 = vrcp.pop %v1578
        %v1611 = vrcp.pop %v1579
        %v1612 = vrcp.pop %v1580
        %v1613 = vrcp.pop %v1581
        %v1614 = vrcp.pop %v1582
        %v1615 = vrcp.pop %v1583
        %v1616 = vmul.f32 %v1424, %v1584
        %v1617 = vmul.f32 %v1425, %v1585
        %v1618 = vmul.f32 %v1426, %v1586
        %v1619 = vmul.f32 %v1427, %v1587
        %v1620 = vmul.f32 %v1428, %v1588
        %v1621 = vmul.f32 %v1429, %v1589
        %v1622 = vmul.f32 %v1430, %v1590
        %v1623 = vmul.f32 %v1431, %v1591
        %v1624 = vmul.f32 %v1432, %v1592
        %v1625 = vmul.f32 %v1433, %v1593
        %v1626 = vmul.f32 %v1434, %v1594
        %v1627 = vmul.f32 %v1435, %v1595
        %v1628 = vmul.f32 %v1436, %v1596
        %v1629 = vmul.f32 %v1437, %v1597
        %v1630 = vmul.f32 %v1438, %v1598
        %v1631 = vmul.f32 %v1439, %v1599
        %v1632 = vmul.f32 %v1440, %v1600
        %v1633 = vmul.f32 %v1441, %v1601
        %v1634 = vmul.f32 %v1442, %v1602
        %v1635 = vmul.f32 %v1443, %v1603
        %v1636 = vmul.f32 %v1444, %v1604
        %v1637 = vmul.f32 %v1445, %v1605
        %v1638 = vmul.f32 %v1446, %v1606
        %v1639 = vmul.f32 %v1447, %v1607
        %v1640 = vmul.f32 %v1448, %v1608
        %v1641 = vmul.f32 %v1449, %v1609
        %v1642 = vmul.f32 %v1450, %v1610
        %v1643 = vmul.f32 %v1451, %v1611
        %v1644 = vmul.f32 %v1452, %v1612
        %v1645 = vmul.f32 %v1453, %v1613
        %v1646 = vmul.f32 %v1454, %v1614
        %v1647 = vmul.f32 %v1455, %v1615
        %v1648 = vpack.c.bf16 %v1617, %v1616
        %v1649 = vpack.c.bf16 %v1619, %v1618
        %v1650 = vpack.c.bf16 %v1621, %v1620
        %v1651 = vpack.c.bf16 %v1623, %v1622
        %v1652 = vpack.c.bf16 %v1625, %v1624
        %v1653 = vpack.c.bf16 %v1627, %v1626
        %v1654 = vpack.c.bf16 %v1629, %v1628
        %v1655 = vpack.c.bf16 %v1631, %v1630
        %v1656 = vpack.c.bf16 %v1633, %v1632
        %v1657 = vpack.c.bf16 %v1635, %v1634
        %v1658 = vpack.c.bf16 %v1637, %v1636
        %v1659 = vpack.c.bf16 %v1639, %v1638
        %v1660 = vpack.c.bf16 %v1641, %v1640
        %v1661 = vpack.c.bf16 %v1643, %v1642
        %v1662 = vpack.c.bf16 %v1645, %v1644
        %v1663 = vpack.c.bf16 %v1647, %v1646
        %v1680 = vunpack.c.l.b16 %v1648
        %v1681 = vunpack.c.h.b16 %v1648
        %v1682 = vunpack.c.l.b16 %v1649
        %v1683 = vunpack.c.h.b16 %v1649
        %v1684 = vunpack.c.l.b16 %v1650
        %v1685 = vunpack.c.h.b16 %v1650
        %v1686 = vunpack.c.l.b16 %v1651
        %v1687 = vunpack.c.h.b16 %v1651
        %v1688 = vunpack.c.l.b16 %v1652
        %v1689 = vunpack.c.h.b16 %v1652
        %v1690 = vunpack.c.l.b16 %v1653
        %v1691 = vunpack.c.h.b16 %v1653
        %v1692 = vunpack.c.l.b16 %v1654
        %v1693 = vunpack.c.h.b16 %v1654
        %v1694 = vunpack.c.l.b16 %v1655
        %v1695 = vunpack.c.h.b16 %v1655
        %v1696 = vunpack.c.l.b16 %v1656
        %v1697 = vunpack.c.h.b16 %v1656
        %v1698 = vunpack.c.l.b16 %v1657
        %v1699 = vunpack.c.h.b16 %v1657
        %v1700 = vunpack.c.l.b16 %v1658
        %v1701 = vunpack.c.h.b16 %v1658
        %v1702 = vunpack.c.l.b16 %v1659
        %v1703 = vunpack.c.h.b16 %v1659
        %v1704 = vunpack.c.l.b16 %v1660
        %v1705 = vunpack.c.h.b16 %v1660
        %v1706 = vunpack.c.l.b16 %v1661
        %v1707 = vunpack.c.h.b16 %v1661
        %v1708 = vunpack.c.l.b16 %v1662
        %v1709 = vunpack.c.h.b16 %v1662
        %v1710 = vunpack.c.l.b16 %v1663
        %v1711 = vunpack.c.h.b16 %v1663
        %v1712 = vpack.c.b16 %v1680, %v1680
        %v1713 = vpack.c.b16 %v1681, %v1681
        %v1714 = vpack.c.b16 %v1682, %v1682
        %v1715 = vpack.c.b16 %v1683, %v1683
        %v1716 = vpack.c.b16 %v1684, %v1684
        %v1717 = vpack.c.b16 %v1685, %v1685
        %v1718 = vpack.c.b16 %v1686, %v1686
        %v1719 = vpack.c.b16 %v1687, %v1687
        %v1720 = vpack.c.b16 %v1688, %v1688
        %v1721 = vpack.c.b16 %v1689, %v1689
        %v1722 = vpack.c.b16 %v1690, %v1690
        %v1723 = vpack.c.b16 %v1691, %v1691
        %v1724 = vpack.c.b16 %v1692, %v1692
        %v1725 = vpack.c.b16 %v1693, %v1693
        %v1726 = vpack.c.b16 %v1694, %v1694
        %v1727 = vpack.c.b16 %v1695, %v1695
        %v1728 = vpack.c.b16 %v1696, %v1696
        %v1729 = vpack.c.b16 %v1697, %v1697
        %v1730 = vpack.c.b16 %v1698, %v1698
        %v1731 = vpack.c.b16 %v1699, %v1699
        %v1732 = vpack.c.b16 %v1700, %v1700
        %v1733 = vpack.c.b16 %v1701, %v1701
        %v1734 = vpack.c.b16 %v1702, %v1702
        %v1735 = vpack.c.b16 %v1703, %v1703
        %v1736 = vpack.c.b16 %v1704, %v1704
        %v1737 = vpack.c.b16 %v1705, %v1705
        %v1738 = vpack.c.b16 %v1706, %v1706
        %v1739 = vpack.c.b16 %v1707, %v1707
        %v1740 = vpack.c.b16 %v1708, %v1708
        %v1741 = vpack.c.b16 %v1709, %v1709
        %v1742 = vpack.c.b16 %v1710, %v1710
        %v1743 = vpack.c.b16 %v1711, %v1711
        %vm1776 = vcmask 60416
        %1777 = vst.msk [vmem:[%s403] sm:$0xf] %vm1776, %v1712
        %1778 = vst.msk [vmem:[%s403 + $0x4] sm:$0xf] %vm1776, %v1713
        %1779 = vst.msk [vmem:[%s403 + $0x8] sm:$0xf] %vm1776, %v1714
        %1780 = vst.msk [vmem:[%s403 + $0xc] sm:$0xf] %vm1776, %v1715
        %1781 = vst.msk [vmem:[%s403 + $0x10] sm:$0xf] %vm1776, %v1716
        %1782 = vst.msk [vmem:[%s403 + $0x14] sm:$0xf] %vm1776, %v1717
        %1783 = vst.msk [vmem:[%s403 + $0x18] sm:$0xf] %vm1776, %v1718
        %1784 = vst.msk [vmem:[%s403 + $0x1c] sm:$0xf] %vm1776, %v1719
        %1785 = vst.msk [vmem:[%s403 + $0x20] sm:$0xf] %vm1776, %v1720
        %1786 = vst.msk [vmem:[%s403 + $0x24] sm:$0xf] %vm1776, %v1721
        %1787 = vst.msk [vmem:[%s403 + $0x28] sm:$0xf] %vm1776, %v1722
        %1788 = vst.msk [vmem:[%s403 + $0x2c] sm:$0xf] %vm1776, %v1723
        %1789 = vst.msk [vmem:[%s403 + $0x30] sm:$0xf] %vm1776, %v1724
        %1790 = vst.msk [vmem:[%s403 + $0x34] sm:$0xf] %vm1776, %v1725
        %1791 = vst.msk [vmem:[%s403 + $0x38] sm:$0xf] %vm1776, %v1726
        %1792 = vst.msk [vmem:[%s403 + $0x3c] sm:$0xf] %vm1776, %v1727
        %1793 = vst.msk [vmem:[%s403 + $0x40] sm:$0xf] %vm1776, %v1728
        %1794 = vst.msk [vmem:[%s403 + $0x44] sm:$0xf] %vm1776, %v1729
        %1795 = vst.msk [vmem:[%s403 + $0x48] sm:$0xf] %vm1776, %v1730
        %1796 = vst.msk [vmem:[%s403 + $0x4c] sm:$0xf] %vm1776, %v1731
        %1797 = vst.msk [vmem:[%s403 + $0x50] sm:$0xf] %vm1776, %v1732
        %1798 = vst.msk [vmem:[%s403 + $0x54] sm:$0xf] %vm1776, %v1733
        %1799 = vst.msk [vmem:[%s403 + $0x58] sm:$0xf] %vm1776, %v1734
        %1800 = vst.msk [vmem:[%s403 + $0x5c] sm:$0xf] %vm1776, %v1735
        %1801 = vst.msk [vmem:[%s403 + $0x60] sm:$0xf] %vm1776, %v1736
        %1802 = vst.msk [vmem:[%s403 + $0x64] sm:$0xf] %vm1776, %v1737
        %1803 = vst.msk [vmem:[%s403 + $0x68] sm:$0xf] %vm1776, %v1738
        %1804 = vst.msk [vmem:[%s403 + $0x6c] sm:$0xf] %vm1776, %v1739
        %1805 = vst.msk [vmem:[%s403 + $0x70] sm:$0xf] %vm1776, %v1740
        %1806 = vst.msk [vmem:[%s403 + $0x74] sm:$0xf] %vm1776, %v1741
        %1807 = vst.msk [vmem:[%s403 + $0x78] sm:$0xf] %vm1776, %v1742
        %1808 = vst.msk [vmem:[%s403 + $0x7c] sm:$0xf] %vm1776, %v1743
        %s1809 = smul.u32 32, %s25
        %p1810 = scmp.lt.s32.totalorder %s1809, 63
        %s1811 = scalar_select %p1810, %s1809, 63
        %s1812 = smul.addr %s1811, 4
        %s1813 = scalar_lea.vmem %s7, %s1812
        // Predicated region
        $region69: #{c2f_forward_pallas.7} parent=47 // pred_check
          %p1814 = pneg %p205
        $region70: #{c2f_forward_pallas.7} parent=47 // pred_check_branch
          %1816 = sbr.rel (%p1814) target = $region72
        $region71: #{c2f_forward_pallas.7} parent=47 // pred_region
          %s1817 = smul.u32 32, %s25
        $region72: #{c2f_forward_pallas.7} parent=47 // pred_fallthru
          _
      $region48: #{c2f_forward_pallas.7} parent=5 // pred_fallthru
        _
      %p1818 = scmp.le.s32.totalorder 2, %s20
      // Predicated region
      $region73: #{c2f_forward_pallas.7} parent=5 // pred_check
        %p1819 = pneg %p1818
      $region74: #{c2f_forward_pallas.7} parent=5 // pred_check_branch
        %1821 = sbr.rel (%p1819) target = $region76
      $region75: #{c2f_forward_pallas.7} parent=5 // pred_region
        %s1822 = ssub.s32 %s20, 2
        // Predicated region
        $region77: #{c2f_forward_pallas.7} parent=75 // pred_check
          %p1823 = pneg %p211
        $region78: #{c2f_forward_pallas.7} parent=75 // pred_check_branch
          %1825 = sbr.rel (%p1823) target = $region80
        $region79: #{c2f_forward_pallas.7} parent=75 // pred_region
          %s1826 = smul.u32 32, %s26
          %p1827 = scmp.lt.s32.totalorder %s1826, 63
          %s1828 = scalar_select %p1827, %s1826, 63
          %s1829 = smul.addr %s1828, 4
          %s1830 = scalar_lea.vmem %s7, %s1829
        $region80: #{c2f_forward_pallas.7} parent=75 // pred_fallthru
          _
      $region76: #{c2f_forward_pallas.7} parent=5 // pred_fallthru
        _
    $region6: #{c2f_forward_pallas.7} parent=1 // loop_footer
      %s24 = sadd.s32 1, %s20
    $region7: #{c2f_forward_pallas.7} parent=1 // loop_footer_branch
      %19 = sbr.rel target = $region3
    $region8: #{c2f_forward_pallas.7} parent=1 // loop_exit
      _
    %1831 = vsyncpa [#allocation3], 1
    %s1832 = scalar_lea.sflag [#allocation3], 1
    %1833 = vsyncpa %s1832, 1
    %1834 = vsyncpa [#allocation5], 1
    %s1835 = scalar_lea.sflag [#allocation5], 1
    %1836 = vsyncpa %s1835, 1
    %1837 = vsyncpa [#allocation8], 1

// kernel: c2f_forward_pallas.5
$region0: #{c2f_forward_pallas.5}
  #allocation0 [shape = 'u32[]', space=smem, size = 0x4, offset = 0x4, fixed_abs, tag = 'smem constant byte address 0x4 - core index']
  #allocation1 [shape = 'u32[144,128]{1,0:T(1,128)}', space=vmem, size = 0x12000, scoped, tag = 'internal scratch']
  #allocation2 [shape = 'bf16[18,18,4]{2,1,0:T(8,128)(2,1)}', space=vmem, size = 0x1b000, scoped, tag = 'scratch operand']
  %s0 = inlined_call_operand.hbm [shape: bf16[2,16,16,4], index: 0, kind: input, shape index: {}]
  %s1 = inlined_call_operand.hbm [shape: bf16[36,4], index: 1, kind: input, shape index: {}]
  %s2 = inlined_call_operand.hbm [shape: f32[1,4], index: 2, kind: input, shape index: {}]
  %s3 = inlined_call_operand.hbm [shape: bf16[36,4], index: 3, kind: input, shape index: {}]
  %s4 = inlined_call_operand.hbm [shape: f32[1,4], index: 4, kind: input, shape index: {}]
  %s5 = inlined_call_operand.hbm [shape: bf16[2,16,16,4], index: 5, kind: output, shape index: {}]
  %s6 = sld [smem:[#allocation0]]
  $region73: #{c2f_forward_pallas.5} parent=0
    _
  %s8 = ssub.s32 1, %s6
  %s9 = scalar_select 0, %s8, %s6
  $region1: #{c2f_forward_pallas.5} parent=0
    #allocation3 [shape = 'u8[131072]{0}', space=vmem, size = 0x20000, scoped, tag = 'input window, operand 0']
    #allocation4 [shape = 's32[2]{0}', space=sflag, size = 0x8, scoped, tag = 'scoped memory for c2f_forward_pallas.5']
    #allocation5 [shape = 's32[2]{0}', space=sflag, size = 0x8, scoped, tag = 'scoped memory for c2f_forward_pallas.5']
    #allocation6 [shape = 'u8[10240]{0}', space=vmem, size = 0x2800, scoped, tag = 'input window, operand 1, single buffered']
    #allocation7 [shape = 's32[1]{0}', space=sflag, size = 0x4, scoped, tag = 'scoped memory for c2f_forward_pallas.5']
    #allocation8 [shape = 'u8[512]{0}', space=vmem, size = 0x400, scoped, tag = 'input window, operand 2, single buffered']
    #allocation9 [shape = 'u8[10240]{0}', space=vmem, size = 0x2800, scoped, tag = 'input window, operand 3, single buffered']
    #allocation10 [shape = 's32[1]{0}', space=sflag, size = 0x4, scoped, tag = 'scoped memory for c2f_forward_pallas.5']
    #allocation11 [shape = 'u8[512]{0}', space=vmem, size = 0x400, scoped, tag = 'input window, operand 4, single buffered']
    #allocation12 [shape = 'u8[131072]{0}', space=vmem, size = 0x20000, scoped, tag = 'output window, operand 0']
    %10 = vsyncpa [#allocation4], 0
    %s11 = scalar_lea.sflag [#allocation4], 1
    %12 = vsyncpa %s11, 0
    %13 = vsyncpa [#allocation7], 0
    %14 = vsyncpa [#allocation10], 0
    %15 = vsyncpa [#allocation5], 0
    %s16 = scalar_lea.sflag [#allocation5], 1
    %17 = vsyncpa %s16, 0
    loop: start=0, step=1, limit=4
    $region2: #{c2f_forward_pallas.5} parent=1 // loop_pre_header
      _
    $region3: #{c2f_forward_pallas.5} parent=1 // loop_header
      %s19 = sphi 0, %s23
      %p20 = scmp.ge.s32.totalorder %s19, 4
      %s29 = sphi 0, %s31
      %s32 = sphi 0, %s29
      %s33 = sphi 0, %s32
      %s49 = sphi 0, %s33
      %s53 = sphi 0, %s53
      %s55 = sphi 0, %s53
      %s56 = sphi 0, %s55
      %s70 = sphi 0, %s56
      %s74 = sphi 0, %s74
      %s76 = sphi 0, %s74
      %s77 = sphi 0, %s76
      %s91 = sphi 0, %s77
      %s95 = sphi 0, %s95
      %s97 = sphi 0, %s95
      %s98 = sphi 0, %s97
      %s112 = sphi 0, %s98
      %s116 = sphi 0, %s116
      %s118 = sphi 0, %s116
      %s119 = sphi 0, %s118
      %s133 = sphi 0, %s119
      %s139 = sphi 0, %s141
      %s142 = sphi 0, %s139
      %s143 = sphi 0, %s142
      %s159 = sphi 0, %s143
    $region4: #{c2f_forward_pallas.5} parent=1 // loop_header_branch
      %22 = sbr.rel (%p20) target = $region8
    $region5: #{c2f_forward_pallas.5} parent=1 // loop_body
      %s24 = ssub.s32 %s19, 1
      %s25 = ssub.s32 %s19, 2
      %s26 = sadd.s32 %s19, 1
      %s27 = ssub.s32 %s19, %s26
      %p28 = scmp.eq.s32.totalorder %s27, 0
      %s30 = sadd.s32 %s29, 1
      %s31 = scalar_select %p28, %s29, %s30
      %p34 = pneg %p28
      %p35 = scmp.eq.s32.totalorder %s19, 1
      %p36 = por %p34, %p35
      %p37 = scmp.ne.s32.totalorder %s29, %s32
      %p38 = scmp.eq.s32.totalorder %s19, 0
      %p39 = por %p37, %p38
      %p40 = scmp.ne.s32.totalorder %s29, %s32
      %p41 = scmp.eq.s32.totalorder %s24, 1
      %p42 = por %p40, %p41
      %p43 = scmp.ne.s32.totalorder %s32, %s33
      %p44 = scmp.eq.s32.totalorder %s24, 0
      %p45 = por %p43, %p44
      %p46 = scmp.ne.s32.totalorder %s32, %s33
      %p47 = scmp.eq.s32.totalorder %s25, 1
      %p48 = por %p46, %p47
      %p50 = scmp.ne.s32.totalorder %s33, %s49
      %p51 = scmp.eq.s32.totalorder %s25, 0
      %p52 = por %p50, %p51
      %s54 = sadd.s32 %s53, 1
      %p57 = scmp.eq.s32.totalorder %s19, 1
      %p58 = scmp.ne.s32.totalorder %s53, %s55
      %p59 = scmp.eq.s32.totalorder %s19, 0
      %p60 = por %p58, %p59
      %p61 = scmp.ne.s32.totalorder %s53, %s55
      %p62 = scmp.eq.s32.totalorder %s24, 1
      %p63 = por %p61, %p62
      %p64 = scmp.ne.s32.totalorder %s55, %s56
      %p65 = scmp.eq.s32.totalorder %s24, 0
      %p66 = por %p64, %p65
      %p67 = scmp.ne.s32.totalorder %s55, %s56
      %p68 = scmp.eq.s32.totalorder %s25, 1
      %p69 = por %p67, %p68
      %p71 = scmp.ne.s32.totalorder %s56, %s70
      %p72 = scmp.eq.s32.totalorder %s25, 0
      %p73 = por %p71, %p72
      %s75 = sadd.s32 %s74, 1
      %p78 = scmp.eq.s32.totalorder %s19, 1
      %p79 = scmp.ne.s32.totalorder %s74, %s76
      %p80 = scmp.eq.s32.totalorder %s19, 0
      %p81 = por %p79, %p80
      %p82 = scmp.ne.s32.totalorder %s74, %s76
      %p83 = scmp.eq.s32.totalorder %s24, 1
      %p84 = por %p82, %p83
      %p85 = scmp.ne.s32.totalorder %s76, %s77
      %p86 = scmp.eq.s32.totalorder %s24, 0
      %p87 = por %p85, %p86
      %p88 = scmp.ne.s32.totalorder %s76, %s77
      %p89 = scmp.eq.s32.totalorder %s25, 1
      %p90 = por %p88, %p89
      %p92 = scmp.ne.s32.totalorder %s77, %s91
      %p93 = scmp.eq.s32.totalorder %s25, 0
      %p94 = por %p92, %p93
      %s96 = sadd.s32 %s95, 1
      %p99 = scmp.eq.s32.totalorder %s19, 1
      %p100 = scmp.ne.s32.totalorder %s95, %s97
      %p101 = scmp.eq.s32.totalorder %s19, 0
      %p102 = por %p100, %p101
      %p103 = scmp.ne.s32.totalorder %s95, %s97
      %p104 = scmp.eq.s32.totalorder %s24, 1
      %p105 = por %p103, %p104
      %p106 = scmp.ne.s32.totalorder %s97, %s98
      %p107 = scmp.eq.s32.totalorder %s24, 0
      %p108 = por %p106, %p107
      %p109 = scmp.ne.s32.totalorder %s97, %s98
      %p110 = scmp.eq.s32.totalorder %s25, 1
      %p111 = por %p109, %p110
      %p113 = scmp.ne.s32.totalorder %s98, %s112
      %p114 = scmp.eq.s32.totalorder %s25, 0
      %p115 = por %p113, %p114
      %s117 = sadd.s32 %s116, 1
      %p120 = scmp.eq.s32.totalorder %s19, 1
      %p121 = scmp.ne.s32.totalorder %s116, %s118
      %p122 = scmp.eq.s32.totalorder %s19, 0
      %p123 = por %p121, %p122
      %p124 = scmp.ne.s32.totalorder %s116, %s118
      %p125 = scmp.eq.s32.totalorder %s24, 1
      %p126 = por %p124, %p125
      %p127 = scmp.ne.s32.totalorder %s118, %s119
      %p128 = scmp.eq.s32.totalorder %s24, 0
      %p129 = por %p127, %p128
      %p130 = scmp.ne.s32.totalorder %s118, %s119
      %p131 = scmp.eq.s32.totalorder %s25, 1
      %p132 = por %p130, %p131
      %p134 = scmp.ne.s32.totalorder %s119, %s133
      %p135 = scmp.eq.s32.totalorder %s25, 0
      %p136 = por %p134, %p135
      %s137 = ssub.s32 %s19, %s26
      %p138 = scmp.eq.s32.totalorder %s137, 0
      %s140 = sadd.s32 %s139, 1
      %s141 = scalar_select %p138, %s139, %s140
      %p144 = pneg %p138
      %p145 = scmp.eq.s32.totalorder %s19, 1
      %p146 = por %p144, %p145
      %p147 = scmp.ne.s32.totalorder %s139, %s142
      %p148 = scmp.eq.s32.totalorder %s19, 0
      %p149 = por %p147, %p148
      %p150 = scmp.ne.s32.totalorder %s139, %s142
      %p151 = scmp.eq.s32.totalorder %s24, 1
      %p152 = por %p150, %p151
      %p153 = scmp.ne.s32.totalorder %s142, %s143
      %p154 = scmp.eq.s32.totalorder %s24, 0
      %p155 = por %p153, %p154
      %p156 = scmp.ne.s32.totalorder %s142, %s143
      %p157 = scmp.eq.s32.totalorder %s25, 1
      %p158 = por %p156, %p157
      %p160 = scmp.ne.s32.totalorder %s143, %s159
      %p161 = scmp.eq.s32.totalorder %s25, 0
      %p162 = por %p160, %p161
      %p163 = scmp.le.s32.totalorder 1, %s19
      %p164 = scmp.lt.s32.totalorder %s19, 3
      %p165 = pnand %p163, %p164
      %p166 = pneg %p165
      // Predicated region
      $region9: #{c2f_forward_pallas.5} parent=5 // pred_check
        _
      $region10: #{c2f_forward_pallas.5} parent=5 // pred_check_branch
        %168 = sbr.rel (%p165) target = $region12
      $region11: #{c2f_forward_pallas.5} parent=5 // pred_region
        %s169 = ssub.s32 %s19, 1
        // Predicated region
        $region13: #{c2f_forward_pallas.5} parent=11 // pred_check
          %p170 = pneg %p66
        $region14: #{c2f_forward_pallas.5} parent=11 // pred_check_branch
          %172 = sbr.rel (%p170) target = $region16
        $region15: #{c2f_forward_pallas.5} parent=11 // pred_region
          %s174 = ssub.s32 320, 320
          %175 = vsyncadd [#allocation7], %s174
          %s176 = sshll.u32 [#allocation6], 4
          %s177 = int_to_ptr.vmem [resolvable:$true] %s176
          %182 = dma.hbm_to_vmem [thread:$0]  %s1, 320, %s177, [#allocation7], 64, 64, 4
        $region16: #{c2f_forward_pallas.5} parent=11 // pred_fallthru
          _
        // Predicated region
        $region17: #{c2f_forward_pallas.5} parent=11 // pred_check
          %p183 = pneg %p87
        $region18: #{c2f_forward_pallas.5} parent=11 // pred_check_branch
          %185 = sbr.rel (%p183) target = $region20
        $region19: #{c2f_forward_pallas.5} parent=11 // pred_region
          %s187 = ssub.s32 16, 16
          %188 = vsyncadd [#allocation7], %s187
          %s190 = sshll.u32 [#allocation8], 4
          %s191 = int_to_ptr.vmem [resolvable:$true] %s190
          %193 = dma.hbm_to_vmem [thread:$0]  %s2, 16, %s191, [#allocation7]
        $region20: #{c2f_forward_pallas.5} parent=11 // pred_fallthru
          _
        // Predicated region
        $region21: #{c2f_forward_pallas.5} parent=11 // pred_check
          %p194 = pneg %p108
        $region22: #{c2f_forward_pallas.5} parent=11 // pred_check_branch
          %196 = sbr.rel (%p194) target = $region24
        $region23: #{c2f_forward_pallas.5} parent=11 // pred_region
          %s198 = ssub.s32 320, 320
          %199 = vsyncadd [#allocation10], %s198
          %s200 = sshll.u32 [#allocation9], 4
          %s201 = int_to_ptr.vmem [resolvable:$true] %s200
          %206 = dma.hbm_to_vmem [thread:$0]  %s3, 320, %s201, [#allocation10], 64, 64, 4
        $region24: #{c2f_forward_pallas.5} parent=11 // pred_fallthru
          _
        // Predicated region
        $region25: #{c2f_forward_pallas.5} parent=11 // pred_check
          %p207 = pneg %p129
        $region26: #{c2f_forward_pallas.5} parent=11 // pred_check_branch
          %209 = sbr.rel (%p207) target = $region28
        $region27: #{c2f_forward_pallas.5} parent=11 // pred_region
          %s211 = ssub.s32 16, 16
          %212 = vsyncadd [#allocation10], %s211
          %s214 = sshll.u32 [#allocation11], 4
          %s215 = int_to_ptr.vmem [resolvable:$true] %s214
          %217 = dma.hbm_to_vmem [thread:$0]  %s4, 16, %s215, [#allocation10]
        $region28: #{c2f_forward_pallas.5} parent=11 // pred_fallthru
          _
      $region12: #{c2f_forward_pallas.5} parent=5 // pred_fallthru
        _
      %p218 = scmp.lt.s32.totalorder %s19, 2
      // Predicated region
      $region29: #{c2f_forward_pallas.5} parent=5 // pred_check
        %p219 = pneg %p218
      $region30: #{c2f_forward_pallas.5} parent=5 // pred_check_branch
        %221 = sbr.rel (%p219) target = $region32
      $region31: #{c2f_forward_pallas.5} parent=5 // pred_region
        // Predicated region
        $region33: #{c2f_forward_pallas.5} parent=31 // pred_check
          %p222 = pneg %p39
        $region34: #{c2f_forward_pallas.5} parent=31 // pred_check_branch
          %224 = sbr.rel (%p222) target = $region36
        $region35: #{c2f_forward_pallas.5} parent=31 // pred_region
          %s225 = sand.u32 %s29, 1
          %s226 = scalar_lea.sflag [#allocation4], %s225
          %s227 = sand.u32 %s29, 1
          %s228 = smul.addr %s227, 128
          %s229 = scalar_lea.vmem [#allocation3], %s228
          %s231 = ssub.s32 2048, 2048
          %232 = vsyncadd %s226, %s231
          %s233 = smul.addr %s19, 32
          %s234 = smul.addr %s233, 64
          %s235 = scalar_lea.hbm %s0, %s234
          %s236 = sshll.u32 %s229, 4
          %s237 = int_to_ptr.vmem [resolvable:$true] %s236
          %242 = dma.hbm_to_vmem [thread:$0]  %s235, 2048, %s237, %s226, 64, 64, 4
        $region36: #{c2f_forward_pallas.5} parent=31 // pred_fallthru
          _
      $region32: #{c2f_forward_pallas.5} parent=5 // pred_fallthru
        _
      %p243 = scmp.le.s32.totalorder 1, %s19
      %p244 = scmp.lt.s32.totalorder %s19, 3
      %p245 = pnand %p243, %p244
      %p246 = pneg %p245
      // Predicated region
      $region37: #{c2f_forward_pallas.5} parent=5 // pred_check
        _
      $region38: #{c2f_forward_pallas.5} parent=5 // pred_check_branch
        %248 = sbr.rel (%p245) target = $region40
      $region39: #{c2f_forward_pallas.5} parent=5 // pred_region
        %s249 = ssub.s32 %s19, 1
        %s250 = sand.u32 %s32, 1
        %s251 = scalar_lea.sflag [#allocation4], %s250
        %s252 = sand.u32 %s32, 1
        %s253 = smul.addr %s252, 128
        %s254 = scalar_lea.vmem [#allocation3], %s253
        // Predicated region
        $region41: #{c2f_forward_pallas.5} parent=39 // pred_check
          %p255 = pneg %p45
        $region42: #{c2f_forward_pallas.5} parent=39 // pred_check_branch
          %257 = sbr.rel (%p255) target = $region44
        $region43: #{c2f_forward_pallas.5} parent=39 // pred_region
          %258 = dma.done %s251, 2048
        $region44: #{c2f_forward_pallas.5} parent=39 // pred_fallthru
          _
        // Predicated region
        $region45: #{c2f_forward_pallas.5} parent=39 // pred_check
          %p259 = pneg %p66
        $region46: #{c2f_forward_pallas.5} parent=39 // pred_check_branch
          %261 = sbr.rel (%p259) target = $region48
        $region47: #{c2f_forward_pallas.5} parent=39 // pred_region
          %262 = dma.done [#allocation7], 320
        $region48: #{c2f_forward_pallas.5} parent=39 // pred_fallthru
          _
        // Predicated region
        $region49: #{c2f_forward_pallas.5} parent=39 // pred_check
          %p263 = pneg %p87
        $region50: #{c2f_forward_pallas.5} parent=39 // pred_check_branch
          %265 = sbr.rel (%p263) target = $region52
        $region51: #{c2f_forward_pallas.5} parent=39 // pred_region
          %266 = dma.done [#allocation7], 16
        $region52: #{c2f_forward_pallas.5} parent=39 // pred_fallthru
          _
        // Predicated region
        $region53: #{c2f_forward_pallas.5} parent=39 // pred_check
          %p267 = pneg %p108
        $region54: #{c2f_forward_pallas.5} parent=39 // pred_check_branch
          %269 = sbr.rel (%p267) target = $region56
        $region55: #{c2f_forward_pallas.5} parent=39 // pred_region
          %270 = dma.done [#allocation10], 320
        $region56: #{c2f_forward_pallas.5} parent=39 // pred_fallthru
          _
        // Predicated region
        $region57: #{c2f_forward_pallas.5} parent=39 // pred_check
          %p271 = pneg %p129
        $region58: #{c2f_forward_pallas.5} parent=39 // pred_check_branch
          %273 = sbr.rel (%p271) target = $region60
        $region59: #{c2f_forward_pallas.5} parent=39 // pred_region
          %274 = dma.done [#allocation10], 16
        $region60: #{c2f_forward_pallas.5} parent=39 // pred_fallthru
          _
        %s275 = sand.u32 %s32, 1
        %s276 = scalar_lea.sflag [#allocation4], %s275
        %s277 = sand.u32 %s32, 1
        %s278 = smul.addr %s277, 128
        %s279 = scalar_lea.vmem [#allocation3], %s278
        %p280 = pneg %p45
        %p281 = pneg %p42
        %p282 = pneg %p66
        %p283 = pneg %p63
        %p284 = pneg %p87
        %p285 = pneg %p84
        %p286 = pneg %p108
        %p287 = pneg %p105
        %p288 = pneg %p129
        %p289 = pneg %p126
        %p290 = pneg %p155
        %p291 = pneg %p152
        %s292 = sand.u32 %s142, 1
        %s293 = scalar_lea.sflag [#allocation5], %s292
        %s294 = sand.u32 %s142, 1
        %s295 = smul.addr %s294, 128
        %s296 = scalar_lea.vmem [#allocation12], %s295
        %v298 = vld [vmem:[%s254] sm:$0xf]
        %v299 = vld [vmem:[%s254 + $0x4] sm:$0xf]
        %v300 = vld [vmem:[%s254 + $0x8] sm:$0xf]
        %v301 = vld [vmem:[%s254 + $0xc] sm:$0xf]
        %v302 = vld [vmem:[%s254 + $0x10] sm:$0xf]
        %v303 = vld [vmem:[%s254 + $0x14] sm:$0xf]
        %v304 = vld [vmem:[%s254 + $0x18] sm:$0xf]
        %v305 = vld [vmem:[%s254 + $0x1c] sm:$0xf]
        %v306 = vld [vmem:[%s254 + $0x20] sm:$0xf]
        %v307 = vld [vmem:[%s254 + $0x24] sm:$0xf]
        %v308 = vld [vmem:[%s254 + $0x28] sm:$0xf]
        %v309 = vld [vmem:[%s254 + $0x2c] sm:$0xf]
        %v310 = vld [vmem:[%s254 + $0x30] sm:$0xf]
        %v311 = vld [vmem:[%s254 + $0x34] sm:$0xf]
        %v312 = vld [vmem:[%s254 + $0x38] sm:$0xf]
        %v313 = vld [vmem:[%s254 + $0x3c] sm:$0xf]
        %v314 = vld [vmem:[%s254 + $0x40] sm:$0xf]
        %v315 = vld [vmem:[%s254 + $0x44] sm:$0xf]
        %v316 = vld [vmem:[%s254 + $0x48] sm:$0xf]
        %v317 = vld [vmem:[%s254 + $0x4c] sm:$0xf]
        %v318 = vld [vmem:[%s254 + $0x50] sm:$0xf]
        %v319 = vld [vmem:[%s254 + $0x54] sm:$0xf]
        %v320 = vld [vmem:[%s254 + $0x58] sm:$0xf]
        %v321 = vld [vmem:[%s254 + $0x5c] sm:$0xf]
        %v322 = vld [vmem:[%s254 + $0x60] sm:$0xf]
        %v323 = vld [vmem:[%s254 + $0x64] sm:$0xf]
        %v324 = vld [vmem:[%s254 + $0x68] sm:$0xf]
        %v325 = vld [vmem:[%s254 + $0x6c] sm:$0xf]
        %v326 = vld [vmem:[%s254 + $0x70] sm:$0xf]
        %v327 = vld [vmem:[%s254 + $0x74] sm:$0xf]
        %v328 = vld [vmem:[%s254 + $0x78] sm:$0xf]
        %v329 = vld [vmem:[%s254 + $0x7c] sm:$0xf]
        %vm330 = vcmask 27648
        %331 = vst.msk [vmem:[#allocation2] sm:$0xf] %vm330, 0
        %332 = vst.msk [vmem:[#allocation2 + $0x4] sm:$0xf] %vm330, 0
        %vm333 = vcmask 24576
        %334 = vst.msk [vmem:[#allocation2 + $0x8] sm:$0x1] %vm333, 0
        %s335 = scalar_lea.vmem [#allocation2], 204
        %336 = vst.msk [vmem:[%s335] sm:$0xf] %vm330, 0
        %337 = vst.msk [vmem:[%s335 + $0x4] sm:$0xf] %vm330, 0
        %338 = vst.msk [vmem:[%s335 + $0x8] sm:$0x1] %vm333, 0
        %v371 = vunpack.c.l.b16 %v298
        %v372 = vunpack.c.l.b16 %v299
        %v373 = vunpack.c.l.b16 %v300
        %v374 = vunpack.c.l.b16 %v301
        %v375 = vunpack.c.l.b16 %v302
        %v376 = vunpack.c.l.b16 %v303
        %v377 = vunpack.c.l.b16 %v304
        %v378 = vunpack.c.l.b16 %v305
        %v379 = vunpack.c.l.b16 %v306
        %v380 = vunpack.c.l.b16 %v307
        %v381 = vunpack.c.l.b16 %v308
        %v382 = vunpack.c.l.b16 %v309
        %v383 = vunpack.c.l.b16 %v310
        %v384 = vunpack.c.l.b16 %v311
        %v385 = vunpack.c.l.b16 %v312
        %v386 = vunpack.c.l.b16 %v313
        %v387 = vunpack.c.l.b16 %v314
        %v388 = vunpack.c.l.b16 %v315
        %v389 = vunpack.c.l.b16 %v316
        %v390 = vunpack.c.l.b16 %v317
        %v391 = vunpack.c.l.b16 %v318
        %v392 = vunpack.c.l.b16 %v319
        %v393 = vunpack.c.l.b16 %v320
        %v394 = vunpack.c.l.b16 %v321
        %v395 = vunpack.c.l.b16 %v322
        %v396 = vunpack.c.l.b16 %v323
        %v397 = vunpack.c.l.b16 %v324
        %v398 = vunpack.c.l.b16 %v325
        %v399 = vunpack.c.l.b16 %v326
        %v400 = vunpack.c.l.b16 %v327
        %v401 = vunpack.c.l.b16 %v328
        %v402 = vunpack.c.l.b16 %v329
        %v403 = vpack.c.b16 %v372, %v371
        %v404 = vpack.c.b16 %v374, %v373
        %v405 = vpack.c.b16 %v376, %v375
        %v406 = vpack.c.b16 %v378, %v377
        %v407 = vpack.c.b16 %v380, %v379
        %v408 = vpack.c.b16 %v382, %v381
        %v409 = vpack.c.b16 %v384, %v383
        %v410 = vpack.c.b16 %v386, %v385
        %v411 = vpack.c.b16 %v388, %v387
        %v412 = vpack.c.b16 %v390, %v389
        %v413 = vpack.c.b16 %v392, %v391
        %v414 = vpack.c.b16 %v394, %v393
        %v415 = vpack.c.b16 %v396, %v395
        %v416 = vpack.c.b16 %v398, %v397
        %v417 = vpack.c.b16 %v400, %v399
        %v418 = vpack.c.b16 %v402, %v401
        %v420 = vshrl.u32 %v403, 16
        %v422 = vrot.slane %v420, 7
        %v423 = vshll.u32 %v403, 16
        %v425 = vor.u32 %v422, %v423
        %v427 = vshrl.u32 %v404, 16
        %v429 = vrot.slane %v427, 7
        %v430 = vshll.u32 %v404, 16
        %v432 = vor.u32 %v429, %v430
        %v434 = vshrl.u32 %v405, 16
        %v436 = vrot.slane %v434, 7
        %v437 = vshll.u32 %v405, 16
        %v439 = vor.u32 %v436, %v437
        %v441 = vshrl.u32 %v406, 16
        %v443 = vrot.slane %v441, 7
        %v444 = vshll.u32 %v406, 16
        %v446 = vor.u32 %v443, %v444
        %v448 = vshrl.u32 %v407, 16
        %v450 = vrot.slane %v448, 7
        %v451 = vshll.u32 %v407, 16
        %v453 = vor.u32 %v450, %v451
        %v455 = vshrl.u32 %v408, 16
        %v457 = vrot.slane %v455, 7
        %v458 = vshll.u32 %v408, 16
        %v460 = vor.u32 %v457, %v458
        %v462 = vshrl.u32 %v409, 16
        %v464 = vrot.slane %v462, 7
        %v465 = vshll.u32 %v409, 16
        %v467 = vor.u32 %v464, %v465
        %v469 = vshrl.u32 %v410, 16
        %v471 = vrot.slane %v469, 7
        %v472 = vshll.u32 %v410, 16
        %v474 = vor.u32 %v471, %v472
        %v476 = vshrl.u32 %v411, 16
        %v478 = vrot.slane %v476, 7
        %v479 = vshll.u32 %v411, 16
        %v481 = vor.u32 %v478, %v479
        %v483 = vshrl.u32 %v412, 16
        %v485 = vrot.slane %v483, 7
        %v486 = vshll.u32 %v412, 16
        %v488 = vor.u32 %v485, %v486
        %v490 = vshrl.u32 %v413, 16
        %v492 = vrot.slane %v490, 7
        %v493 = vshll.u32 %v413, 16
        %v495 = vor.u32 %v492, %v493
        %v497 = vshrl.u32 %v414, 16
        %v499 = vrot.slane %v497, 7
        %v500 = vshll.u32 %v414, 16
        %v502 = vor.u32 %v499, %v500
        %v504 = vshrl.u32 %v415, 16
        %v506 = vrot.slane %v504, 7
        %v507 = vshll.u32 %v415, 16
        %v509 = vor.u32 %v506, %v507
        %v511 = vshrl.u32 %v416, 16
        %v513 = vrot.slane %v511, 7
        %v514 = vshll.u32 %v416, 16
        %v516 = vor.u32 %v513, %v514
        %v518 = vshrl.u32 %v417, 16
        %v520 = vrot.slane %v518, 7
        %v521 = vshll.u32 %v417, 16
        %v523 = vor.u32 %v520, %v521
        %v525 = vshrl.u32 %v418, 16
        %v527 = vrot.slane %v525, 7
        %v528 = vshll.u32 %v418, 16
        %v530 = vor.u32 %v527, %v528
        %vm563 = vcmask 1040384
        %vm564 = vsmask.f32 256
        %vm565 = vmand %vm563, %vm564
        %v566 = vsel %vm565, 0, %v425
        %v567 = vsel %vm565, 0, %v432
        %v568 = vsel %vm565, 0, %v439
        %v569 = vsel %vm565, 0, %v446
        %v570 = vsel %vm565, 0, %v453
        %v571 = vsel %vm565, 0, %v460
        %v572 = vsel %vm565, 0, %v467
        %v573 = vsel %vm565, 0, %v474
        %v574 = vsel %vm565, 0, %v481
        %v575 = vsel %vm565, 0, %v488
        %v576 = vsel %vm565, 0, %v495
        %v577 = vsel %vm565, 0, %v502
        %v578 = vsel %vm565, 0, %v509
        %v579 = vsel %vm565, 0, %v516
        %v580 = vsel %vm565, 0, %v523
        %v581 = vsel %vm565, 0, %v530
        %v582 = vsel %vm565, %v422, 0
        %v583 = vsel %vm565, %v429, 0
        %v584 = vsel %vm565, %v436, 0
        %v585 = vsel %vm565, %v443, 0
        %v586 = vsel %vm565, %v450, 0
        %v587 = vsel %vm565, %v457, 0
        %v588 = vsel %vm565, %v464, 0
        %v589 = vsel %vm565, %v471, 0
        %v590 = vsel %vm565, %v478, 0
        %v591 = vsel %vm565, %v485, 0
        %v592 = vsel %vm565, %v492, 0
        %v593 = vsel %vm565, %v499, 0
        %v594 = vsel %vm565, %v506, 0
        %v595 = vsel %vm565, %v513, 0
        %v596 = vsel %vm565, %v520, 0
        %v597 = vsel %vm565, %v527, 0
        %v630 = vunpack.c.l.b16 %v566
        %v631 = vunpack.c.h.b16 %v566
        %v632 = vunpack.c.l.b16 %v582
        %v633 = vunpack.c.l.b16 %v567
        %v634 = vunpack.c.h.b16 %v567
        %v635 = vunpack.c.l.b16 %v583
        %v636 = vunpack.c.l.b16 %v568
        %v637 = vunpack.c.h.b16 %v568
        %v638 = vunpack.c.l.b16 %v584
        %v639 = vunpack.c.l.b16 %v569
        %v640 = vunpack.c.h.b16 %v569
        %v641 = vunpack.c.l.b16 %v585
        %v642 = vunpack.c.l.b16 %v570
        %v643 = vunpack.c.h.b16 %v570
        %v644 = vunpack.c.l.b16 %v586
        %v645 = vunpack.c.l.b16 %v571
        %v646 = vunpack.c.h.b16 %v571
        %v647 = vunpack.c.l.b16 %v587
        %v648 = vunpack.c.l.b16 %v572
        %v649 = vunpack.c.h.b16 %v572
        %v650 = vunpack.c.l.b16 %v588
        %v651 = vunpack.c.l.b16 %v573
        %v652 = vunpack.c.h.b16 %v573
        %v653 = vunpack.c.l.b16 %v589
        %v654 = vunpack.c.l.b16 %v574
        %v655 = vunpack.c.h.b16 %v574
        %v656 = vunpack.c.l.b16 %v590
        %v657 = vunpack.c.l.b16 %v575
        %v658 = vunpack.c.h.b16 %v575
        %v659 = vunpack.c.l.b16 %v591
        %v660 = vunpack.c.l.b16 %v576
        %v661 = vunpack.c.h.b16 %v576
        %v662 = vunpack.c.l.b16 %v592
        %v663 = vunpack.c.l.b16 %v577
        %v664 = vunpack.c.h.b16 %v577
        %v665 = vunpack.c.l.b16 %v593
        %v666 = vunpack.c.l.b16 %v578
        %v667 = vunpack.c.h.b16 %v578
        %v668 = vunpack.c.l.b16 %v594
        %v669 = vunpack.c.l.b16 %v579
        %v670 = vunpack.c.h.b16 %v579
        %v671 = vunpack.c.l.b16 %v595
        %v672 = vunpack.c.l.b16 %v580
        %v673 = vunpack.c.h.b16 %v580
        %v674 = vunpack.c.l.b16 %v596
        %v675 = vunpack.c.l.b16 %v581
        %v676 = vunpack.c.h.b16 %v581
        %v677 = vunpack.c.l.b16 %v597
        %v678 = vpack.c.b16 %v630, %v630
        %v679 = vpack.c.b16 %v631, %v631
        %v680 = vpack.c.b16 %v632, %v632
        %v681 = vpack.c.b16 %v633, %v633
        %v682 = vpack.c.b16 %v634, %v634
        %v683 = vpack.c.b16 %v635, %v635
        %v684 = vpack.c.b16 %v636, %v636
        %v685 = vpack.c.b16 %v637, %v637
        %v686 = vpack.c.b16 %v638, %v638
        %v687 = vpack.c.b16 %v639, %v639
        %v688 = vpack.c.b16 %v640, %v640
        %v689 = vpack.c.b16 %v641, %v641
        %v690 = vpack.c.b16 %v642, %v642
        %v691 = vpack.c.b16 %v643, %v643
        %v692 = vpack.c.b16 %v644, %v644
        %v693 = vpack.c.b16 %v645, %v645
        %v694 = vpack.c.b16 %v646, %v646
        %v695 = vpack.c.b16 %v647, %v647
        %v696 = vpack.c.b16 %v648, %v648
        %v697 = vpack.c.b16 %v649, %v649
        %v698 = vpack.c.b16 %v650, %v650
        %v699 = vpack.c.b16 %v651, %v651
        %v700 = vpack.c.b16 %v652, %v652
        %v701 = vpack.c.b16 %v653, %v653
        %v702 = vpack.c.b16 %v654, %v654
        %v703 = vpack.c.b16 %v655, %v655
        %v704 = vpack.c.b16 %v656, %v656
        %v705 = vpack.c.b16 %v657, %v657
        %v706 = vpack.c.b16 %v658, %v658
        %v707 = vpack.c.b16 %v659, %v659
        %v708 = vpack.c.b16 %v660, %v660
        %v709 = vpack.c.b16 %v661, %v661
        %v710 = vpack.c.b16 %v662, %v662
        %v711 = vpack.c.b16 %v663, %v663
        %v712 = vpack.c.b16 %v664, %v664
        %v713 = vpack.c.b16 %v665, %v665
        %v714 = vpack.c.b16 %v666, %v666
        %v715 = vpack.c.b16 %v667, %v667
        %v716 = vpack.c.b16 %v668, %v668
        %v717 = vpack.c.b16 %v669, %v669
        %v718 = vpack.c.b16 %v670, %v670
        %v719 = vpack.c.b16 %v671, %v671
        %v720 = vpack.c.b16 %v672, %v672
        %v721 = vpack.c.b16 %v673, %v673
        %v722 = vpack.c.b16 %v674, %v674
        %v723 = vpack.c.b16 %v675, %v675
        %v724 = vpack.c.b16 %v676, %v676
        %v725 = vpack.c.b16 %v677, %v677
        %s774 = scalar_lea.vmem [#allocation2], 12
        %775 = vst.msk [vmem:[%s774] sm:$0xf] %vm330, %v678
        %776 = vst.msk [vmem:[%s774 + $0x4] sm:$0xf] %vm330, %v679
        %777 = vst.msk [vmem:[%s774 + $0x8] sm:$0x1] %vm333, %v680
        %778 = vst.msk [vmem:[%s774 + $0xc] sm:$0xf] %vm330, %v681
        %779 = vst.msk [vmem:[%s774 + $0x10] sm:$0xf] %vm330, %v682
        %780 = vst.msk [vmem:[%s774 + $0x14] sm:$0x1] %vm333, %v683
        %781 = vst.msk [vmem:[%s774 + $0x18] sm:$0xf] %vm330, %v684
        %782 = vst.msk [vmem:[%s774 + $0x1c] sm:$0xf] %vm330, %v685
        %783 = vst.msk [vmem:[%s774 + $0x20] sm:$0x1] %vm333, %v686
        %784 = vst.msk [vmem:[%s774 + $0x24] sm:$0xf] %vm330, %v687
        %785 = vst.msk [vmem:[%s774 + $0x28] sm:$0xf] %vm330, %v688
        %786 = vst.msk [vmem:[%s774 + $0x2c] sm:$0x1] %vm333, %v689
        %787 = vst.msk [vmem:[%s774 + $0x30] sm:$0xf] %vm330, %v690
        %788 = vst.msk [vmem:[%s774 + $0x34] sm:$0xf] %vm330, %v691
        %789 = vst.msk [vmem:[%s774 + $0x38] sm:$0x1] %vm333, %v692
        %790 = vst.msk [vmem:[%s774 + $0x3c] sm:$0xf] %vm330, %v693
        %791 = vst.msk [vmem:[%s774 + $0x40] sm:$0xf] %vm330, %v694
        %792 = vst.msk [vmem:[%s774 + $0x44] sm:$0x1] %vm333, %v695
        %793 = vst.msk [vmem:[%s774 + $0x48] sm:$0xf] %vm330, %v696
        %794 = vst.msk [vmem:[%s774 + $0x4c] sm:$0xf] %vm330, %v697
        %795 = vst.msk [vmem:[%s774 + $0x50] sm:$0x1] %vm333, %v698
        %796 = vst.msk [vmem:[%s774 + $0x54] sm:$0xf] %vm330, %v699
        %797 = vst.msk [vmem:[%s774 + $0x58] sm:$0xf] %vm330, %v700
        %798 = vst.msk [vmem:[%s774 + $0x5c] sm:$0x1] %vm333, %v701
        %799 = vst.msk [vmem:[%s774 + $0x60] sm:$0xf] %vm330, %v702
        %800 = vst.msk [vmem:[%s774 + $0x64] sm:$0xf] %vm330, %v703
        %801 = vst.msk [vmem:[%s774 + $0x68] sm:$0x1] %vm333, %v704
        %802 = vst.msk [vmem:[%s774 + $0x6c] sm:$0xf] %vm330, %v705
        %803 = vst.msk [vmem:[%s774 + $0x70] sm:$0xf] %vm330, %v706
        %804 = vst.msk [vmem:[%s774 + $0x74] sm:$0x1] %vm333, %v707
        %805 = vst.msk [vmem:[%s774 + $0x78] sm:$0xf] %vm330, %v708
        %806 = vst.msk [vmem:[%s774 + $0x7c] sm:$0xf] %vm330, %v709
        %807 = vst.msk [vmem:[%s774 + $0x80] sm:$0x1] %vm333, %v710
        %808 = vst.msk [vmem:[%s774 + $0x84] sm:$0xf] %vm330, %v711
        %809 = vst.msk [vmem:[%s774 + $0x88] sm:$0xf] %vm330, %v712
        %810 = vst.msk [vmem:[%s774 + $0x8c] sm:$0x1] %vm333, %v713
        %811 = vst.msk [vmem:[%s774 + $0x90] sm:$0xf] %vm330, %v714
        %812 = vst.msk [vmem:[%s774 + $0x94] sm:$0xf] %vm330, %v715
        %813 = vst.msk [vmem:[%s774 + $0x98] sm:$0x1] %vm333, %v716
        %814 = vst.msk [vmem:[%s774 + $0x9c] sm:$0xf] %vm330, %v717
        %815 = vst.msk [vmem:[%s774 + $0xa0] sm:$0xf] %vm330, %v718
        %816 = vst.msk [vmem:[%s774 + $0xa4] sm:$0x1] %vm333, %v719
        %817 = vst.msk [vmem:[%s774 + $0xa8] sm:$0xf] %vm330, %v720
        %818 = vst.msk [vmem:[%s774 + $0xac] sm:$0xf] %vm330, %v721
        %819 = vst.msk [vmem:[%s774 + $0xb0] sm:$0x1] %vm333, %v722
        %820 = vst.msk [vmem:[%s774 + $0xb4] sm:$0xf] %vm330, %v723
        %821 = vst.msk [vmem:[%s774 + $0xb8] sm:$0xf] %vm330, %v724
        %822 = vst.msk [vmem:[%s774 + $0xbc] sm:$0x1] %vm333, %v725
        %v823 = vld [vmem:[#allocation2] sm:$0xf]
        %v824 = vld [vmem:[#allocation2 + $0x4] sm:$0xf]
        %v825 = vld [vmem:[#allocation2 + $0x8] sm:$0x1]
        %v826 = vld [vmem:[#allocation2 + $0xc] sm:$0xf]
        %v827 = vld [vmem:[#allocation2 + $0x10] sm:$0xf]
        %v828 = vld [vmem:[#allocation2 + $0x14] sm:$0x1]
        %v829 = vld [vmem:[#allocation2 + $0x18] sm:$0xf]
        %v830 = vld [vmem:[#allocation2 + $0x1c] sm:$0xf]
        %v831 = vld [vmem:[#allocation2 + $0x20] sm:$0x1]
        %v832 = vld [vmem:[#allocation2 + $0x24] sm:$0xf]
        %v833 = vld [vmem:[#allocation2 + $0x28] sm:$0xf]
        %v834 = vld [vmem:[#allocation2 + $0x2c] sm:$0x1]
        %v835 = vld [vmem:[#allocation2 + $0x30] sm:$0xf]
        %v836 = vld [vmem:[#allocation2 + $0x34] sm:$0xf]
        %v837 = vld [vmem:[#allocation2 + $0x38] sm:$0x1]
        %v838 = vld [vmem:[#allocation2 + $0x3c] sm:$0xf]
        %v839 = vld [vmem:[#allocation2 + $0x40] sm:$0xf]
        %v840 = vld [vmem:[#allocation2 + $0x44] sm:$0x1]
        %v841 = vld [vmem:[#allocation2 + $0x48] sm:$0xf]
        %v842 = vld [vmem:[#allocation2 + $0x4c] sm:$0xf]
        %v843 = vld [vmem:[#allocation2 + $0x50] sm:$0x1]
        %v844 = vld [vmem:[#allocation2 + $0x54] sm:$0xf]
        %v845 = vld [vmem:[#allocation2 + $0x58] sm:$0xf]
        %v846 = vld [vmem:[#allocation2 + $0x5c] sm:$0x1]
        %v847 = vld [vmem:[#allocation2 + $0x60] sm:$0xf]
        %v848 = vld [vmem:[#allocation2 + $0x64] sm:$0xf]
        %v849 = vld [vmem:[#allocation2 + $0x68] sm:$0x1]
        %v850 = vld [vmem:[#allocation2 + $0x6c] sm:$0xf]
        %v851 = vld [vmem:[#allocation2 + $0x70] sm:$0xf]
        %v852 = vld [vmem:[#allocation2 + $0x74] sm:$0x1]
        %v853 = vld [vmem:[#allocation2 + $0x78] sm:$0xf]
        %v854 = vld [vmem:[#allocation2 + $0x7c] sm:$0xf]
        %v855 = vld [vmem:[#allocation2 + $0x80] sm:$0x1]
        %v856 = vld [vmem:[#allocation2 + $0x84] sm:$0xf]
        %v857 = vld [vmem:[#allocation2 + $0x88] sm:$0xf]
        %v858 = vld [vmem:[#allocation2 + $0x8c] sm:$0x1]
        %v859 = vld [vmem:[#allocation2 + $0x90] sm:$0xf]
        %v860 = vld [vmem:[#allocation2 + $0x94] sm:$0xf]
        %v861 = vld [vmem:[#allocation2 + $0x98] sm:$0x1]
        %v862 = vld [vmem:[#allocation2 + $0x9c] sm:$0xf]
        %v863 = vld [vmem:[#allocation2 + $0xa0] sm:$0xf]
        %v864 = vld [vmem:[#allocation2 + $0xa4] sm:$0x1]
        %v865 = vld [vmem:[#allocation2 + $0xa8] sm:$0xf]
        %v866 = vld [vmem:[#allocation2 + $0xac] sm:$0xf]
        %v867 = vld [vmem:[#allocation2 + $0xb0] sm:$0x1]
        %v868 = vld [vmem:[#allocation2 + $0xb4] sm:$0xf]
        %v869 = vld [vmem:[#allocation2 + $0xb8] sm:$0xf]
        %v870 = vld [vmem:[#allocation2 + $0xbc] sm:$0x1]
        %v871 = vld [vmem:[#allocation2 + $0xc0] sm:$0xf]
        %v872 = vld [vmem:[#allocation2 + $0xc4] sm:$0xf]
        %v873 = vld [vmem:[#allocation2 + $0xc8] sm:$0x1]
        %v874 = vld [vmem:[#allocation2 + $0xcc] sm:$0xf]
        %v875 = vld [vmem:[#allocation2 + $0xd0] sm:$0xf]
        %v876 = vld [vmem:[#allocation2 + $0xd4] sm:$0x1]
        %vm877 = vsmask.f32 3328
        %vm878 = vsmask.f32 7440
        %vm879 = vmor %vm877, %vm878
        %v881 = vshrl.u32 %v823, 16
        %v883 = vrot.slane %v881, 4
        %v884 = vshll.u32 %v823, 16
        %v886 = vrot.slane %v884, 5
        %v887 = vor.u32 %v883, %v886
        %v888 = vrot.slane %v887, 4
        %v890 = vshll.u32 %v824, 16
        %v892 = vrot.slane %v890, 5
        %v893 = vsel %vm879, %v888, %v892
        %v894 = vshrl.u32 %v824, 16
        %v896 = vrot.slane %v894, 4
        %v897 = vor.u32 %v896, %v892
        %v898 = vrot.slane %v897, 4
        %v900 = vshll.u32 %v825, 16
        %v902 = vrot.slane %v900, 5
        %v903 = vsel %vm879, %v898, %v902
        %v905 = vshrl.u32 %v826, 16
        %v907 = vrot.slane %v905, 4
        %v908 = vshll.u32 %v826, 16
        %v910 = vrot.slane %v908, 5
        %v911 = vor.u32 %v907, %v910
        %v912 = vrot.slane %v911, 4
        %v914 = vshll.u32 %v827, 16
        %v916 = vrot.slane %v914, 5
        %v917 = vsel %vm879, %v912, %v916
        %v918 = vshrl.u32 %v827, 16
        %v920 = vrot.slane %v918, 4
        %v921 = vor.u32 %v920, %v916
        %v922 = vrot.slane %v921, 4
        %v924 = vshll.u32 %v828, 16
        %v926 = vrot.slane %v924, 5
        %v927 = vsel %vm879, %v922, %v926
        %v929 = vshrl.u32 %v829, 16
        %v931 = vrot.slane %v929, 4
        %v932 = vshll.u32 %v829, 16
        %v934 = vrot.slane %v932, 5
        %v935 = vor.u32 %v931, %v934
        %v936 = vrot.slane %v935, 4
        %v938 = vshll.u32 %v830, 16
        %v940 = vrot.slane %v938, 5
        %v941 = vsel %vm879, %v936, %v940
        %v942 = vshrl.u32 %v830, 16
        %v944 = vrot.slane %v942, 4
        %v945 = vor.u32 %v944, %v940
        %v946 = vrot.slane %v945, 4
        %v948 = vshll.u32 %v831, 16
        %v950 = vrot.slane %v948, 5
        %v951 = vsel %vm879, %v946, %v950
        %v953 = vshrl.u32 %v832, 16
        %v955 = vrot.slane %v953, 4
        %v956 = vshll.u32 %v832, 16
        %v958 = vrot.slane %v956, 5
        %v959 = vor.u32 %v955, %v958
        %v960 = vrot.slane %v959, 4
        %v962 = vshll.u32 %v833, 16
        %v964 = vrot.slane %v962, 5
        %v965 = vsel %vm879, %v960, %v964
        %v966 = vshrl.u32 %v833, 16
        %v968 = vrot.slane %v966, 4
        %v969 = vor.u32 %v968, %v964
        %v970 = vrot.slane %v969, 4
        %v972 = vshll.u32 %v834, 16
        %v974 = vrot.slane %v972, 5
        %v975 = vsel %vm879, %v970, %v974
        %v977 = vshrl.u32 %v835, 16
        %v979 = vrot.slane %v977, 4
        %v980 = vshll.u32 %v835, 16
        %v982 = vrot.slane %v980, 5
        %v983 = vor.u32 %v979, %v982
        %v984 = vrot.slane %v983, 4
        %v986 = vshll.u32 %v836, 16
        %v988 = vrot.slane %v986, 5
        %v989 = vsel %vm879, %v984, %v988
        %v990 = vshrl.u32 %v836, 16
        %v992 = vrot.slane %v990, 4
        %v993 = vor.u32 %v992, %v988
        %v994 = vrot.slane %v993, 4
        %v996 = vshll.u32 %v837, 16
        %v998 = vrot.slane %v996, 5
        %v999 = vsel %vm879, %v994, %v998
        %v1001 = vshrl.u32 %v838, 16
        %v1003 = vrot.slane %v1001, 4
        %v1004 = vshll.u32 %v838, 16
        %v1006 = vrot.slane %v1004, 5
        %v1007 = vor.u32 %v1003, %v1006
        %v1008 = vrot.slane %v1007, 4
        %v1010 = vshll.u32 %v839, 16
        %v1012 = vrot.slane %v1010, 5
        %v1013 = vsel %vm879, %v1008, %v1012
        %v1014 = vshrl.u32 %v839, 16
        %v1016 = vrot.slane %v1014, 4
        %v1017 = vor.u32 %v1016, %v1012
        %v1018 = vrot.slane %v1017, 4
        %v1020 = vshll.u32 %v840, 16
        %v1022 = vrot.slane %v1020, 5
        %v1023 = vsel %vm879, %v1018, %v1022
        %v1025 = vshrl.u32 %v841, 16
        %v1027 = vrot.slane %v1025, 4
        %v1028 = vshll.u32 %v841, 16
        %v1030 = vrot.slane %v1028, 5
        %v1031 = vor.u32 %v1027, %v1030
        %v1032 = vrot.slane %v1031, 4
        %v1034 = vshll.u32 %v842, 16
        %v1036 = vrot.slane %v1034, 5
        %v1037 = vsel %vm879, %v1032, %v1036
        %v1038 = vshrl.u32 %v842, 16
        %v1040 = vrot.slane %v1038, 4
        %v1041 = vor.u32 %v1040, %v1036
        %v1042 = vrot.slane %v1041, 4
        %v1044 = vshll.u32 %v843, 16
        %v1046 = vrot.slane %v1044, 5
        %v1047 = vsel %vm879, %v1042, %v1046
        %v1049 = vshrl.u32 %v844, 16
        %v1051 = vrot.slane %v1049, 4
        %v1052 = vshll.u32 %v844, 16
        %v1054 = vrot.slane %v1052, 5
        %v1055 = vor.u32 %v1051, %v1054
        %v1056 = vrot.slane %v1055, 4
        %v1058 = vshll.u32 %v845, 16
        %v1060 = vrot.slane %v1058, 5
        %v1061 = vsel %vm879, %v1056, %v1060
        %v1062 = vshrl.u32 %v845, 16
        %v1064 = vrot.slane %v1062, 4
        %v1065 = vor.u32 %v1064, %v1060
        %v1066 = vrot.slane %v1065, 4
        %v1068 = vshll.u32 %v846, 16
        %v1070 = vrot.slane %v1068, 5
        %v1071 = vsel %vm879, %v1066, %v1070
        %v1073 = vshrl.u32 %v847, 16
        %v1075 = vrot.slane %v1073, 4
        %v1076 = vshll.u32 %v847, 16
        %v1078 = vrot.slane %v1076, 5
        %v1079 = vor.u32 %v1075, %v1078
        %v1080 = vrot.slane %v1079, 4
        %v1082 = vshll.u32 %v848, 16
        %v1084 = vrot.slane %v1082, 5
        %v1085 = vsel %vm879, %v1080, %v1084
        %v1086 = vshrl.u32 %v848, 16
        %v1088 = vrot.slane %v1086, 4
        %v1089 = vor.u32 %v1088, %v1084
        %v1090 = vrot.slane %v1089, 4
        %v1092 = vshll.u32 %v849, 16
        %v1094 = vrot.slane %v1092, 5
        %v1095 = vsel %vm879, %v1090, %v1094
        %v1097 = vshrl.u32 %v850, 16
        %v1099 = vrot.slane %v1097, 4
        %v1100 = vshll.u32 %v850, 16
        %v1102 = vrot.slane %v1100, 5
        %v1103 = vor.u32 %v1099, %v1102
        %v1104 = vrot.slane %v1103, 4
        %v1106 = vshll.u32 %v851, 16
        %v1108 = vrot.slane %v1106, 5
        %v1109 = vsel %vm879, %v1104, %v1108
        %v1110 = vshrl.u32 %v851, 16
        %v1112 = vrot.slane %v1110, 4
        %v1113 = vor.u32 %v1112, %v1108
        %v1114 = vrot.slane %v1113, 4
        %v1116 = vshll.u32 %v852, 16
        %v1118 = vrot.slane %v1116, 5
        %v1119 = vsel %vm879, %v1114, %v1118
        %v1121 = vshrl.u32 %v853, 16
        %v1123 = vrot.slane %v1121, 4
        %v1124 = vshll.u32 %v853, 16
        %v1126 = vrot.slane %v1124, 5
        %v1127 = vor.u32 %v1123, %v1126
        %v1128 = vrot.slane %v1127, 4
        %v1130 = vshll.u32 %v854, 16
        %v1132 = vrot.slane %v1130, 5
        %v1133 = vsel %vm879, %v1128, %v1132
        %v1134 = vshrl.u32 %v854, 16
        %v1136 = vrot.slane %v1134, 4
        %v1137 = vor.u32 %v1136, %v1132
        %v1138 = vrot.slane %v1137, 4
        %v1140 = vshll.u32 %v855, 16
        %v1142 = vrot.slane %v1140, 5
        %v1143 = vsel %vm879, %v1138, %v1142
        %v1145 = vshrl.u32 %v856, 16
        %v1147 = vrot.slane %v1145, 4
        %v1148 = vshll.u32 %v856, 16
        %v1150 = vrot.slane %v1148, 5
        %v1151 = vor.u32 %v1147, %v1150
        %v1152 = vrot.slane %v1151, 4
        %v1154 = vshll.u32 %v857, 16
        %v1156 = vrot.slane %v1154, 5
        %v1157 = vsel %vm879, %v1152, %v1156
        %v1158 = vshrl.u32 %v857, 16
        %v1160 = vrot.slane %v1158, 4
        %v1161 = vor.u32 %v1160, %v1156
        %v1162 = vrot.slane %v1161, 4
        %v1164 = vshll.u32 %v858, 16
        %v1166 = vrot.slane %v1164, 5
        %v1167 = vsel %vm879, %v1162, %v1166
        %v1169 = vshrl.u32 %v859, 16
        %v1171 = vrot.slane %v1169, 4
        %v1172 = vshll.u32 %v859, 16
        %v1174 = vrot.slane %v1172, 5
        %v1175 = vor.u32 %v1171, %v1174
        %v1176 = vrot.slane %v1175, 4
        %v1178 = vshll.u32 %v860, 16
        %v1180 = vrot.slane %v1178, 5
        %v1181 = vsel %vm879, %v1176, %v1180
        %v1182 = vshrl.u32 %v860, 16
        %v1184 = vrot.slane %v1182, 4
        %v1185 = vor.u32 %v1184, %v1180
        %v1186 = vrot.slane %v1185, 4
        %v1188 = vshll.u32 %v861, 16
        %v1190 = vrot.slane %v1188, 5
        %v1191 = vsel %vm879, %v1186, %v1190
        %v1193 = vshrl.u32 %v862, 16
        %v1195 = vrot.slane %v1193, 4
        %v1196 = vshll.u32 %v862, 16
        %v1198 = vrot.slane %v1196, 5
        %v1199 = vor.u32 %v1195, %v1198
        %v1200 = vrot.slane %v1199, 4
        %v1202 = vshll.u32 %v863, 16
        %v1204 = vrot.slane %v1202, 5
        %v1205 = vsel %vm879, %v1200, %v1204
        %v1206 = vshrl.u32 %v863, 16
        %v1208 = vrot.slane %v1206, 4
        %v1209 = vor.u32 %v1208, %v1204
        %v1210 = vrot.slane %v1209, 4
        %v1212 = vshll.u32 %v864, 16
        %v1214 = vrot.slane %v1212, 5
        %v1215 = vsel %vm879, %v1210, %v1214
        %v1217 = vshrl.u32 %v865, 16
        %v1219 = vrot.slane %v1217, 4
        %v1220 = vshll.u32 %v865, 16
        %v1222 = vrot.slane %v1220, 5
        %v1223 = vor.u32 %v1219, %v1222
        %v1224 = vrot.slane %v1223, 4
        %v1226 = vshll.u32 %v866, 16
        %v1228 = vrot.slane %v1226, 5
        %v1229 = vsel %vm879, %v1224, %v1228
        %v1230 = vshrl.u32 %v866, 16
        %v1232 = vrot.slane %v1230, 4
        %v1233 = vor.u32 %v1232, %v1228
        %v1234 = vrot.slane %v1233, 4
        %v1236 = vshll.u32 %v867, 16
        %v1238 = vrot.slane %v1236, 5
        %v1239 = vsel %vm879, %v1234, %v1238
        %v1241 = vshrl.u32 %v868, 16
        %v1243 = vrot.slane %v1241, 4
        %v1244 = vshll.u32 %v868, 16
        %v1246 = vrot.slane %v1244, 5
        %v1247 = vor.u32 %v1243, %v1246
        %v1248 = vrot.slane %v1247, 4
        %v1250 = vshll.u32 %v869, 16
        %v1252 = vrot.slane %v1250, 5
        %v1253 = vsel %vm879, %v1248, %v1252
        %v1254 = vshrl.u32 %v869, 16
        %v1256 = vrot.slane %v1254, 4
        %v1257 = vor.u32 %v1256, %v1252
        %v1258 = vrot.slane %v1257, 4
        %v1260 = vshll.u32 %v870, 16
        %v1262 = vrot.slane %v1260, 5
        %v1263 = vsel %vm879, %v1258, %v1262
        %vm1312 = vcmask 1042432
        %vm1313 = vcmask 1046532
        %vm1314 = vmor %vm1312, %vm1313
        %v1315 = vrot.slane %v823, 5
        %v1316 = vrot.slane %v1315, 4
        %v1317 = vrot.slane %v824, 5
        %v1318 = vsel %vm1314, %v1316, %v1317
        %v1319 = vrot.slane %v1317, 4
        %v1320 = vrot.slane %v825, 5
        %v1321 = vsel %vm1314, %v1319, %v1320
        %v1322 = vrot.slane %v826, 5
        %v1323 = vrot.slane %v1322, 4
        %v1324 = vrot.slane %v827, 5
        %v1325 = vsel %vm1314, %v1323, %v1324
        %v1326 = vrot.slane %v1324, 4
        %v1327 = vrot.slane %v828, 5
        %v1328 = vsel %vm1314, %v1326, %v1327
        %v1329 = vrot.slane %v829, 5
        %v1330 = vrot.slane %v1329, 4
        %v1331 = vrot.slane %v830, 5
        %v1332 = vsel %vm1314, %v1330, %v1331
        %v1333 = vrot.slane %v1331, 4
        %v1334 = vrot.slane %v831, 5
        %v1335 = vsel %vm1314, %v1333, %v1334
        %v1336 = vrot.slane %v832, 5
        %v1337 = vrot.slane %v1336, 4
        %v1338 = vrot.slane %v833, 5
        %v1339 = vsel %vm1314, %v1337, %v1338
        %v1340 = vrot.slane %v1338, 4
        %v1341 = vrot.slane %v834, 5
        %v1342 = vsel %vm1314, %v1340, %v1341
        %v1343 = vrot.slane %v835, 5
        %v1344 = vrot.slane %v1343, 4
        %v1345 = vrot.slane %v836, 5
        %v1346 = vsel %vm1314, %v1344, %v1345
        %v1347 = vrot.slane %v1345, 4
        %v1348 = vrot.slane %v837, 5
        %v1349 = vsel %vm1314, %v1347, %v1348
        %v1350 = vrot.slane %v838, 5
        %v1351 = vrot.slane %v1350, 4
        %v1352 = vrot.slane %v839, 5
        %v1353 = vsel %vm1314, %v1351, %v1352
        %v1354 = vrot.slane %v1352, 4
        %v1355 = vrot.slane %v840, 5
        %v1356 = vsel %vm1314, %v1354, %v1355
        %v1357 = vrot.slane %v841, 5
        %v1358 = vrot.slane %v1357, 4
        %v1359 = vrot.slane %v842, 5
        %v1360 = vsel %vm1314, %v1358, %v1359
        %v1361 = vrot.slane %v1359, 4
        %v1362 = vrot.slane %v843, 5
        %v1363 = vsel %vm1314, %v1361, %v1362
        %v1364 = vrot.slane %v844, 5
        %v1365 = vrot.slane %v1364, 4
        %v1366 = vrot.slane %v845, 5
        %v1367 = vsel %vm1314, %v1365, %v1366
        %v1368 = vrot.slane %v1366, 4
        %v1369 = vrot.slane %v846, 5
        %v1370 = vsel %vm1314, %v1368, %v1369
        %v1371 = vrot.slane %v847, 5
        %v1372 = vrot.slane %v1371, 4
        %v1373 = vrot.slane %v848, 5
        %v1374 = vsel %vm1314, %v1372, %v1373
        %v1375 = vrot.slane %v1373, 4
        %v1376 = vrot.slane %v849, 5
        %v1377 = vsel %vm1314, %v1375, %v1376
        %v1378 = vrot.slane %v850, 5
        %v1379 = vrot.slane %v1378, 4
        %v1380 = vrot.slane %v851, 5
        %v1381 = vsel %vm1314, %v1379, %v1380
        %v1382 = vrot.slane %v1380, 4
        %v1383 = vrot.slane %v852, 5
        %v1384 = vsel %vm1314, %v1382, %v1383
        %v1385 = vrot.slane %v853, 5
        %v1386 = vrot.slane %v1385, 4
        %v1387 = vrot.slane %v854, 5
        %v1388 = vsel %vm1314, %v1386, %v1387
        %v1389 = vrot.slane %v1387, 4
        %v1390 = vrot.slane %v855, 5
        %v1391 = vsel %vm1314, %v1389, %v1390
        %v1392 = vrot.slane %v856, 5
        %v1393 = vrot.slane %v1392, 4
        %v1394 = vrot.slane %v857, 5
        %v1395 = vsel %vm1314, %v1393, %v1394
        %v1396 = vrot.slane %v1394, 4
        %v1397 = vrot.slane %v858, 5
        %v1398 = vsel %vm1314, %v1396, %v1397
        %v1399 = vrot.slane %v859, 5
        %v1400 = vrot.slane %v1399, 4
        %v1401 = vrot.slane %v860, 5
        %v1402 = vsel %vm1314, %v1400, %v1401
        %v1403 = vrot.slane %v1401, 4
        %v1404 = vrot.slane %v861, 5
        %v1405 = vsel %vm1314, %v1403, %v1404
        %v1406 = vrot.slane %v862, 5
        %v1407 = vrot.slane %v1406, 4
        %v1408 = vrot.slane %v863, 5
        %v1409 = vsel %vm1314, %v1407, %v1408
        %v1410 = vrot.slane %v1408, 4
        %v1411 = vrot.slane %v864, 5
        %v1412 = vsel %vm1314, %v1410, %v1411
        %v1413 = vrot.slane %v865, 5
        %v1414 = vrot.slane %v1413, 4
        %v1415 = vrot.slane %v866, 5
        %v1416 = vsel %vm1314, %v1414, %v1415
        %v1417 = vrot.slane %v1415, 4
        %v1418 = vrot.slane %v867, 5
        %v1419 = vsel %vm1314, %v1417, %v1418
        %v1420 = vrot.slane %v868, 5
        %v1421 = vrot.slane %v1420, 4
        %v1422 = vrot.slane %v869, 5
        %v1423 = vsel %vm1314, %v1421, %v1422
        %v1424 = vrot.slane %v1422, 4
        %v1425 = vrot.slane %v870, 5
        %v1426 = vsel %vm1314, %v1424, %v1425
        %v1428 = vshrl.u32 %v871, 16
        %v1430 = vrot.slane %v1428, 4
        %v1431 = vshll.u32 %v871, 16
        %v1433 = vrot.slane %v1431, 5
        %v1434 = vor.u32 %v1430, %v1433
        %v1435 = vrot.slane %v1434, 4
        %v1437 = vshll.u32 %v872, 16
        %v1439 = vrot.slane %v1437, 5
        %v1440 = vsel %vm879, %v1435, %v1439
        %v1441 = vshrl.u32 %v872, 16
        %v1443 = vrot.slane %v1441, 4
        %v1444 = vor.u32 %v1443, %v1439
        %v1445 = vrot.slane %v1444, 4
        %v1447 = vshll.u32 %v873, 16
        %v1449 = vrot.slane %v1447, 5
        %v1450 = vsel %vm879, %v1445, %v1449
        %v1454 = vrot.slane %v871, 5
        %v1455 = vrot.slane %v1454, 4
        %v1456 = vrot.slane %v872, 5
        %v1457 = vsel %vm1314, %v1455, %v1456
        %v1458 = vrot.slane %v1456, 4
        %v1459 = vrot.slane %v873, 5
        %v1460 = vsel %vm1314, %v1458, %v1459
        %v1462 = vshrl.u32 %v874, 16
        %v1464 = vrot.slane %v1462, 4
        %v1465 = vshll.u32 %v874, 16
        %v1467 = vrot.slane %v1465, 5
        %v1468 = vor.u32 %v1464, %v1467
        %v1469 = vrot.slane %v1468, 4
        %v1471 = vshll.u32 %v875, 16
        %v1473 = vrot.slane %v1471, 5
        %v1474 = vsel %vm879, %v1469, %v1473
        %v1475 = vshrl.u32 %v875, 16
        %v1477 = vrot.slane %v1475, 4
        %v1478 = vor.u32 %v1477, %v1473
        %v1479 = vrot.slane %v1478, 4
        %v1481 = vshll.u32 %v876, 16
        %v1483 = vrot.slane %v1481, 5
        %v1484 = vsel %vm879, %v1479, %v1483
        %v1488 = vrot.slane %v874, 5
        %v1489 = vrot.slane %v1488, 4
        %v1490 = vrot.slane %v875, 5
        %v1491 = vsel %vm1314, %v1489, %v1490
        %v1492 = vrot.slane %v1490, 4
        %v1493 = vrot.slane %v876, 5
        %v1494 = vsel %vm1314, %v1492, %v1493
        %v1495 = vunpack.c.l.b16 %v823
        %v1496 = vunpack.c.l.b16 %v824
        %v1497 = vunpack.c.l.b16 %v826
        %v1498 = vunpack.c.l.b16 %v827
        %v1499 = vunpack.c.l.b16 %v829
        %v1500 = vunpack.c.l.b16 %v830
        %v1501 = vunpack.c.l.b16 %v832
        %v1502 = vunpack.c.l.b16 %v833
        %v1503 = vunpack.c.l.b16 %v835
        %v1504 = vunpack.c.l.b16 %v836
        %v1505 = vunpack.c.l.b16 %v838
        %v1506 = vunpack.c.l.b16 %v839
        %v1507 = vunpack.c.l.b16 %v841
        %v1508 = vunpack.c.l.b16 %v842
        %v1509 = vunpack.c.l.b16 %v844
        %v1510 = vunpack.c.l.b16 %v845
        %v1511 = vunpack.c.l.b16 %v847
        %v1512 = vunpack.c.l.b16 %v848
        %v1513 = vunpack.c.l.b16 %v850
        %v1514 = vunpack.c.l.b16 %v851
        %v1515 = vunpack.c.l.b16 %v853
        %v1516 = vunpack.c.l.b16 %v854
        %v1517 = vunpack.c.l.b16 %v856
        %v1518 = vunpack.c.l.b16 %v857
        %v1519 = vunpack.c.l.b16 %v859
        %v1520 = vunpack.c.l.b16 %v860
        %v1521 = vunpack.c.l.b16 %v862
        %v1522 = vunpack.c.l.b16 %v863
        %v1523 = vunpack.c.l.b16 %v865
        %v1524 = vunpack.c.l.b16 %v866
        %v1525 = vunpack.c.l.b16 %v868
        %v1526 = vunpack.c.l.b16 %v869
        %v1527 = vpack.c.b16 %v1496, %v1495
        %v1528 = vpack.c.b16 %v1498, %v1497
        %v1529 = vpack.c.b16 %v1500, %v1499
        %v1530 = vpack.c.b16 %v1502, %v1501
        %v1531 = vpack.c.b16 %v1504, %v1503
        %v1532 = vpack.c.b16 %v1506, %v1505
        %v1533 = vpack.c.b16 %v1508, %v1507
        %v1534 = vpack.c.b16 %v1510, %v1509
        %v1535 = vpack.c.b16 %v1512, %v1511
        %v1536 = vpack.c.b16 %v1514, %v1513
        %v1537 = vpack.c.b16 %v1516, %v1515
        %v1538 = vpack.c.b16 %v1518, %v1517
        %v1539 = vpack.c.b16 %v1520, %v1519
        %v1540 = vpack.c.b16 %v1522, %v1521
        %v1541 = vpack.c.b16 %v1524, %v1523
        %v1542 = vpack.c.b16 %v1526, %v1525
        %v1543 = vunpack.c.l.b16 %v893
        %v1544 = vunpack.c.l.b16 %v903
        %v1545 = vunpack.c.l.b16 %v917
        %v1546 = vunpack.c.l.b16 %v927
        %v1547 = vunpack.c.l.b16 %v941
        %v1548 = vunpack.c.l.b16 %v951
        %v1549 = vunpack.c.l.b16 %v965
        %v1550 = vunpack.c.l.b16 %v975
        %v1551 = vunpack.c.l.b16 %v989
        %v1552 = vunpack.c.l.b16 %v999
        %v1553 = vunpack.c.l.b16 %v1013
        %v1554 = vunpack.c.l.b16 %v1023
        %v1555 = vunpack.c.l.b16 %v1037
        %v1556 = vunpack.c.l.b16 %v1047
        %v1557 = vunpack.c.l.b16 %v1061
        %v1558 = vunpack.c.l.b16 %v1071
        %v1559 = vunpack.c.l.b16 %v1085
        %v1560 = vunpack.c.l.b16 %v1095
        %v1561 = vunpack.c.l.b16 %v1109
        %v1562 = vunpack.c.l.b16 %v1119
        %v1563 = vunpack.c.l.b16 %v1133
        %v1564 = vunpack.c.l.b16 %v1143
        %v1565 = vunpack.c.l.b16 %v1157
        %v1566 = vunpack.c.l.b16 %v1167
        %v1567 = vunpack.c.l.b16 %v1181
        %v1568 = vunpack.c.l.b16 %v1191
        %v1569 = vunpack.c.l.b16 %v1205
        %v1570 = vunpack.c.l.b16 %v1215
        %v1571 = vunpack.c.l.b16 %v1229
        %v1572 = vunpack.c.l.b16 %v1239
        %v1573 = vunpack.c.l.b16 %v1253
        %v1574 = vunpack.c.l.b16 %v1263
        %v1575 = vpack.c.b16 %v1544, %v1543
        %v1576 = vpack.c.b16 %v1546, %v1545
        %v1577 = vpack.c.b16 %v1548, %v1547
        %v1578 = vpack.c.b16 %v1550, %v1549
        %v1579 = vpack.c.b16 %v1552, %v1551
        %v1580 = vpack.c.b16 %v1554, %v1553
        %v1581 = vpack.c.b16 %v1556, %v1555
        %v1582 = vpack.c.b16 %v1558, %v1557
        %v1583 = vpack.c.b16 %v1560, %v1559
        %v1584 = vpack.c.b16 %v1562, %v1561
        %v1585 = vpack.c.b16 %v1564, %v1563
        %v1586 = vpack.c.b16 %v1566, %v1565
        %v1587 = vpack.c.b16 %v1568, %v1567
        %v1588 = vpack.c.b16 %v1570, %v1569
        %v1589 = vpack.c.b16 %v1572, %v1571
        %v1590 = vpack.c.b16 %v1574, %v1573
        %1591 = vrot.lane.b32.xlu0 %v1575, 4
        %v1592 = vpop.permute.xlu0 %1591
        %1593 = vrot.lane.b32.xlu0 %v1576, 4
        %v1594 = vpop.permute.xlu0 %1593
        %1595 = vrot.lane.b32.xlu0 %v1577, 4
        %v1596 = vpop.permute.xlu0 %1595
        %1597 = vrot.lane.b32.xlu0 %v1578, 4
        %v1598 = vpop.permute.xlu0 %1597
        %1599 = vrot.lane.b32.xlu0 %v1579, 4
        %v1600 = vpop.permute.xlu0 %1599
        %1601 = vrot.lane.b32.xlu0 %v1580, 4
        %v1602 = vpop.permute.xlu0 %1601
        %1603 = vrot.lane.b32.xlu0 %v1581, 4
        %v1604 = vpop.permute.xlu0 %1603
        %1605 = vrot.lane.b32.xlu0 %v1582, 4
        %v1606 = vpop.permute.xlu0 %1605
        %1607 = vrot.lane.b32.xlu0 %v1583, 4
        %v1608 = vpop.permute.xlu0 %1607
        %1609 = vrot.lane.b32.xlu0 %v1584, 4
        %v1610 = vpop.permute.xlu0 %1609
        %1611 = vrot.lane.b32.xlu0 %v1585, 4
        %v1612 = vpop.permute.xlu0 %1611
        %1613 = vrot.lane.b32.xlu0 %v1586, 4
        %v1614 = vpop.permute.xlu0 %1613
        %1615 = vrot.lane.b32.xlu0 %v1587, 4
        %v1616 = vpop.permute.xlu0 %1615
        %1617 = vrot.lane.b32.xlu0 %v1588, 4
        %v1618 = vpop.permute.xlu0 %1617
        %1619 = vrot.lane.b32.xlu0 %v1589, 4
        %v1620 = vpop.permute.xlu0 %1619
        %1621 = vrot.lane.b32.xlu0 %v1590, 4
        %v1622 = vpop.permute.xlu0 %1621
        %v1623 = vunpack.c.l.b16 %v1318
        %v1624 = vunpack.c.l.b16 %v1321
        %v1625 = vunpack.c.l.b16 %v1325
        %v1626 = vunpack.c.l.b16 %v1328
        %v1627 = vunpack.c.l.b16 %v1332
        %v1628 = vunpack.c.l.b16 %v1335
        %v1629 = vunpack.c.l.b16 %v1339
        %v1630 = vunpack.c.l.b16 %v1342
        %v1631 = vunpack.c.l.b16 %v1346
        %v1632 = vunpack.c.l.b16 %v1349
        %v1633 = vunpack.c.l.b16 %v1353
        %v1634 = vunpack.c.l.b16 %v1356
        %v1635 = vunpack.c.l.b16 %v1360
        %v1636 = vunpack.c.l.b16 %v1363
        %v1637 = vunpack.c.l.b16 %v1367
        %v1638 = vunpack.c.l.b16 %v1370
        %v1639 = vunpack.c.l.b16 %v1374
        %v1640 = vunpack.c.l.b16 %v1377
        %v1641 = vunpack.c.l.b16 %v1381
        %v1642 = vunpack.c.l.b16 %v1384
        %v1643 = vunpack.c.l.b16 %v1388
        %v1644 = vunpack.c.l.b16 %v1391
        %v1645 = vunpack.c.l.b16 %v1395
        %v1646 = vunpack.c.l.b16 %v1398
        %v1647 = vunpack.c.l.b16 %v1402
        %v1648 = vunpack.c.l.b16 %v1405
        %v1649 = vunpack.c.l.b16 %v1409
        %v1650 = vunpack.c.l.b16 %v1412
        %v1651 = vunpack.c.l.b16 %v1416
        %v1652 = vunpack.c.l.b16 %v1419
        %v1653 = vunpack.c.l.b16 %v1423
        %v1654 = vunpack.c.l.b16 %v1426
        %v1655 = vpack.c.b16 %v1624, %v1623
        %v1656 = vpack.c.b16 %v1626, %v1625
        %v1657 = vpack.c.b16 %v1628, %v1627
        %v1658 = vpack.c.b16 %v1630, %v1629
        %v1659 = vpack.c.b16 %v1632, %v1631
        %v1660 = vpack.c.b16 %v1634, %v1633
        %v1661 = vpack.c.b16 %v1636, %v1635
        %v1662 = vpack.c.b16 %v1638, %v1637
        %v1663 = vpack.c.b16 %v1640, %v1639
        %v1664 = vpack.c.b16 %v1642, %v1641
        %v1665 = vpack.c.b16 %v1644, %v1643
        %v1666 = vpack.c.b16 %v1646, %v1645
        %v1667 = vpack.c.b16 %v1648, %v1647
        %v1668 = vpack.c.b16 %v1650, %v1649
        %v1669 = vpack.c.b16 %v1652, %v1651
        %v1670 = vpack.c.b16 %v1654, %v1653
        %1671 = vrot.lane.b32.xlu0 %v1655, 8
        %v1672 = vpop.permute.xlu0 %1671
        %1673 = vrot.lane.b32.xlu0 %v1656, 8
        %v1674 = vpop.permute.xlu0 %1673
        %1675 = vrot.lane.b32.xlu0 %v1657, 8
        %v1676 = vpop.permute.xlu0 %1675
        %1677 = vrot.lane.b32.xlu0 %v1658, 8
        %v1678 = vpop.permute.xlu0 %1677
        %1679 = vrot.lane.b32.xlu0 %v1659, 8
        %v1680 = vpop.permute.xlu0 %1679
        %1681 = vrot.lane.b32.xlu0 %v1660, 8
        %v1682 = vpop.permute.xlu0 %1681
        %1683 = vrot.lane.b32.xlu0 %v1661, 8
        %v1684 = vpop.permute.xlu0 %1683
        %1685 = vrot.lane.b32.xlu0 %v1662, 8
        %v1686 = vpop.permute.xlu0 %1685
        %1687 = vrot.lane.b32.xlu0 %v1663, 8
        %v1688 = vpop.permute.xlu0 %1687
        %1689 = vrot.lane.b32.xlu0 %v1664, 8
        %v1690 = vpop.permute.xlu0 %1689
        %1691 = vrot.lane.b32.xlu0 %v1665, 8
        %v1692 = vpop.permute.xlu0 %1691
        %1693 = vrot.lane.b32.xlu0 %v1666, 8
        %v1694 = vpop.permute.xlu0 %1693
        %1695 = vrot.lane.b32.xlu0 %v1667, 8
        %v1696 = vpop.permute.xlu0 %1695
        %1697 = vrot.lane.b32.xlu0 %v1668, 8
        %v1698 = vpop.permute.xlu0 %1697
        %1699 = vrot.lane.b32.xlu0 %v1669, 8
        %v1700 = vpop.permute.xlu0 %1699
        %1701 = vrot.lane.b32.xlu0 %v1670, 8
        %v1702 = vpop.permute.xlu0 %1701
        %v1703 = vunpack.c.l.b16 %v871
        %v1704 = vunpack.c.l.b16 %v872
        %v1705 = vpack.c.b16 %v1704, %v1703
        %1706 = vrot.lane.b32.xlu0 %v1528, 12
        %v1707 = vpop.permute.xlu0 %1706
        %1708 = vrot.lane.b32.xlu0 %v1529, 12
        %v1709 = vpop.permute.xlu0 %1708
        %1710 = vrot.lane.b32.xlu0 %v1530, 12
        %v1711 = vpop.permute.xlu0 %1710
        %1712 = vrot.lane.b32.xlu0 %v1531, 12
        %v1713 = vpop.permute.xlu0 %1712
        %1714 = vrot.lane.b32.xlu0 %v1532, 12
        %v1715 = vpop.permute.xlu0 %1714
        %1716 = vrot.lane.b32.xlu0 %v1533, 12
        %v1717 = vpop.permute.xlu0 %1716
        %1718 = vrot.lane.b32.xlu0 %v1534, 12
        %v1719 = vpop.permute.xlu0 %1718
        %1720 = vrot.lane.b32.xlu0 %v1535, 12
        %v1721 = vpop.permute.xlu0 %1720
        %1722 = vrot.lane.b32.xlu0 %v1536, 12
        %v1723 = vpop.permute.xlu0 %1722
        %1724 = vrot.lane.b32.xlu0 %v1537, 12
        %v1725 = vpop.permute.xlu0 %1724
        %1726 = vrot.lane.b32.xlu0 %v1538, 12
        %v1727 = vpop.permute.xlu0 %1726
        %1728 = vrot.lane.b32.xlu0 %v1539, 12
        %v1729 = vpop.permute.xlu0 %1728
        %1730 = vrot.lane.b32.xlu0 %v1540, 12
        %v1731 = vpop.permute.xlu0 %1730
        %1732 = vrot.lane.b32.xlu0 %v1541, 12
        %v1733 = vpop.permute.xlu0 %1732
        %1734 = vrot.lane.b32.xlu0 %v1542, 12
        %v1735 = vpop.permute.xlu0 %1734
        %1736 = vrot.lane.b32.xlu0 %v1705, 12
        %v1737 = vpop.permute.xlu0 %1736
        %v1738 = vunpack.c.l.b16 %v1440
        %v1739 = vunpack.c.l.b16 %v1450
        %v1740 = vpack.c.b16 %v1739, %v1738
        %1741 = vrot.lane.b32.xlu0 %v1576, 16
        %v1742 = vpop.permute.xlu0 %1741
        %1743 = vrot.lane.b32.xlu0 %v1577, 16
        %v1744 = vpop.permute.xlu0 %1743
        %1745 = vrot.lane.b32.xlu0 %v1578, 16
        %v1746 = vpop.permute.xlu0 %1745
        %1747 = vrot.lane.b32.xlu0 %v1579, 16
        %v1748 = vpop.permute.xlu0 %1747
        %1749 = vrot.lane.b32.xlu0 %v1580, 16
        %v1750 = vpop.permute.xlu0 %1749
        %1751 = vrot.lane.b32.xlu0 %v1581, 16
        %v1752 = vpop.permute.xlu0 %1751
        %1753 = vrot.lane.b32.xlu0 %v1582, 16
        %v1754 = vpop.permute.xlu0 %1753
        %1755 = vrot.lane.b32.xlu0 %v1583, 16
        %v1756 = vpop.permute.xlu0 %1755
        %1757 = vrot.lane.b32.xlu0 %v1584, 16
        %v1758 = vpop.permute.xlu0 %1757
        %1759 = vrot.lane.b32.xlu0 %v1585, 16
        %v1760 = vpop.permute.xlu0 %1759
        %1761 = vrot.lane.b32.xlu0 %v1586, 16
        %v1762 = vpop.permute.xlu0 %1761
        %1763 = vrot.lane.b32.xlu0 %v1587, 16
        %v1764 = vpop.permute.xlu0 %1763
        %1765 = vrot.lane.b32.xlu0 %v1588, 16
        %v1766 = vpop.permute.xlu0 %1765
        %1767 = vrot.lane.b32.xlu0 %v1589, 16
        %v1768 = vpop.permute.xlu0 %1767
        %1769 = vrot.lane.b32.xlu0 %v1590, 16
        %v1770 = vpop.permute.xlu0 %1769
        %1771 = vrot.lane.b32.xlu0 %v1740, 16
        %v1772 = vpop.permute.xlu0 %1771
        %v1773 = vunpack.c.l.b16 %v1457
        %v1774 = vunpack.c.l.b16 %v1460
        %v1775 = vpack.c.b16 %v1774, %v1773
        %1776 = vrot.lane.b32.xlu0 %v1656, 20
        %v1777 = vpop.permute.xlu0 %1776
        %1778 = vrot.lane.b32.xlu0 %v1657, 20
        %v1779 = vpop.permute.xlu0 %1778
        %1780 = vrot.lane.b32.xlu0 %v1658, 20
        %v1781 = vpop.permute.xlu0 %1780
        %1782 = vrot.lane.b32.xlu0 %v1659, 20
        %v1783 = vpop.permute.xlu0 %1782
        %1784 = vrot.lane.b32.xlu0 %v1660, 20
        %v1785 = vpop.permute.xlu0 %1784
        %1786 = vrot.lane.b32.xlu0 %v1661, 20
        %v1787 = vpop.permute.xlu0 %1786
        %1788 = vrot.lane.b32.xlu0 %v1662, 20
        %v1789 = vpop.permute.xlu0 %1788
        %1790 = vrot.lane.b32.xlu0 %v1663, 20
        %v1791 = vpop.permute.xlu0 %1790
        %1792 = vrot.lane.b32.xlu0 %v1664, 20
        %v1793 = vpop.permute.xlu0 %1792
        %1794 = vrot.lane.b32.xlu0 %v1665, 20
        %v1795 = vpop.permute.xlu0 %1794
        %1796 = vrot.lane.b32.xlu0 %v1666, 20
        %v1797 = vpop.permute.xlu0 %1796
        %1798 = vrot.lane.b32.xlu0 %v1667, 20
        %v1799 = vpop.permute.xlu0 %1798
        %1800 = vrot.lane.b32.xlu0 %v1668, 20
        %v1801 = vpop.permute.xlu0 %1800
        %1802 = vrot.lane.b32.xlu0 %v1669, 20
        %v1803 = vpop.permute.xlu0 %1802
        %1804 = vrot.lane.b32.xlu0 %v1670, 20
        %v1805 = vpop.permute.xlu0 %1804
        %1806 = vrot.lane.b32.xlu0 %v1775, 20
        %v1807 = vpop.permute.xlu0 %1806
        %v1808 = vunpack.c.l.b16 %v874
        %v1809 = vunpack.c.l.b16 %v875
        %v1810 = vpack.c.b16 %v1809, %v1808
        %1811 = vrot.lane.b32.xlu0 %v1529, 24
        %v1812 = vpop.permute.xlu0 %1811
        %1813 = vrot.lane.b32.xlu0 %v1530, 24
        %v1814 = vpop.permute.xlu0 %1813
        %1815 = vrot.lane.b32.xlu0 %v1531, 24
        %v1816 = vpop.permute.xlu0 %1815
        %1817 = vrot.lane.b32.xlu0 %v1532, 24
        %v1818 = vpop.permute.xlu0 %1817
        %1819 = vrot.lane.b32.xlu0 %v1533, 24
        %v1820 = vpop.permute.xlu0 %1819
        %1821 = vrot.lane.b32.xlu0 %v1534, 24
        %v1822 = vpop.permute.xlu0 %1821
        %1823 = vrot.lane.b32.xlu0 %v1535, 24
        %v1824 = vpop.permute.xlu0 %1823
        %1825 = vrot.lane.b32.xlu0 %v1536, 24
        %v1826 = vpop.permute.xlu0 %1825
        %1827 = vrot.lane.b32.xlu0 %v1537, 24
        %v1828 = vpop.permute.xlu0 %1827
        %1829 = vrot.lane.b32.xlu0 %v1538, 24
        %v1830 = vpop.permute.xlu0 %1829
        %1831 = vrot.lane.b32.xlu0 %v1539, 24
        %v1832 = vpop.permute.xlu0 %1831
        %1833 = vrot.lane.b32.xlu0 %v1540, 24
        %v1834 = vpop.permute.xlu0 %1833
        %1835 = vrot.lane.b32.xlu0 %v1541, 24
        %v1836 = vpop.permute.xlu0 %1835
        %1837 = vrot.lane.b32.xlu0 %v1542, 24
        %v1838 = vpop.permute.xlu0 %1837
        %1839 = vrot.lane.b32.xlu0 %v1705, 24
        %v1840 = vpop.permute.xlu0 %1839
        %1841 = vrot.lane.b32.xlu0 %v1810, 24
        %v1842 = vpop.permute.xlu0 %1841
        %v1843 = vunpack.c.l.b16 %v1474
        %v1844 = vunpack.c.l.b16 %v1484
        %v1845 = vpack.c.b16 %v1844, %v1843
        %1846 = vrot.lane.b32.xlu0 %v1577, 28
        %v1847 = vpop.permute.xlu0 %1846
        %1848 = vrot.lane.b32.xlu0 %v1578, 28
        %v1849 = vpop.permute.xlu0 %1848
        %1850 = vrot.lane.b32.xlu0 %v1579, 28
        %v1851 = vpop.permute.xlu0 %1850
        %1852 = vrot.lane.b32.xlu0 %v1580, 28
        %v1853 = vpop.permute.xlu0 %1852
        %1854 = vrot.lane.b32.xlu0 %v1581, 28
        %v1855 = vpop.permute.xlu0 %1854
        %1856 = vrot.lane.b32.xlu0 %v1582, 28
        %v1857 = vpop.permute.xlu0 %1856
        %1858 = vrot.lane.b32.xlu0 %v1583, 28
        %v1859 = vpop.permute.xlu0 %1858
        %1860 = vrot.lane.b32.xlu0 %v1584, 28
        %v1861 = vpop.permute.xlu0 %1860
        %1862 = vrot.lane.b32.xlu0 %v1585, 28
        %v1863 = vpop.permute.xlu0 %1862
        %1864 = vrot.lane.b32.xlu0 %v1586, 28
        %v1865 = vpop.permute.xlu0 %1864
        %1866 = vrot.lane.b32.xlu0 %v1587, 28
        %v1867 = vpop.permute.xlu0 %1866
        %1868 = vrot.lane.b32.xlu0 %v1588, 28
        %v1869 = vpop.permute.xlu0 %1868
        %1870 = vrot.lane.b32.xlu0 %v1589, 28
        %v1871 = vpop.permute.xlu0 %1870
        %1872 = vrot.lane.b32.xlu0 %v1590, 28
        %v1873 = vpop.permute.xlu0 %1872
        %1874 = vrot.lane.b32.xlu0 %v1740, 28
        %v1875 = vpop.permute.xlu0 %1874
        %1876 = vrot.lane.b32.xlu0 %v1845, 28
        %v1877 = vpop.permute.xlu0 %1876
        %v1878 = vunpack.c.l.b16 %v1491
        %v1879 = vunpack.c.l.b16 %v1494
        %v1880 = vpack.c.b16 %v1879, %v1878
        %1881 = vrot.lane.b32.xlu0 %v1657, 32
        %v1882 = vpop.permute.xlu0 %1881
        %1883 = vrot.lane.b32.xlu0 %v1658, 32
        %v1884 = vpop.permute.xlu0 %1883
        %1885 = vrot.lane.b32.xlu0 %v1659, 32
        %v1886 = vpop.permute.xlu0 %1885
        %1887 = vrot.lane.b32.xlu0 %v1660, 32
        %v1888 = vpop.permute.xlu0 %1887
        %1889 = vrot.lane.b32.xlu0 %v1661, 32
        %v1890 = vpop.permute.xlu0 %1889
        %1891 = vrot.lane.b32.xlu0 %v1662, 32
        %v1892 = vpop.permute.xlu0 %1891
        %1893 = vrot.lane.b32.xlu0 %v1663, 32
        %v1894 = vpop.permute.xlu0 %1893
        %1895 = vrot.lane.b32.xlu0 %v1664, 32
        %v1896 = vpop.permute.xlu0 %1895
        %1897 = vrot.lane.b32.xlu0 %v1665, 32
        %v1898 = vpop.permute.xlu0 %1897
        %1899 = vrot.lane.b32.xlu0 %v1666, 32
        %v1900 = vpop.permute.xlu0 %1899
        %1901 = vrot.lane.b32.xlu0 %v1667, 32
        %v1902 = vpop.permute.xlu0 %1901
        %1903 = vrot.lane.b32.xlu0 %v1668, 32
        %v1904 = vpop.permute.xlu0 %1903
        %1905 = vrot.lane.b32.xlu0 %v1669, 32
        %v1906 = vpop.permute.xlu0 %1905
        %1907 = vrot.lane.b32.xlu0 %v1670, 32
        %v1908 = vpop.permute.xlu0 %1907
        %1909 = vrot.lane.b32.xlu0 %v1775, 32
        %v1910 = vpop.permute.xlu0 %1909
        %1911 = vrot.lane.b32.xlu0 %v1880, 32
        %v1912 = vpop.permute.xlu0 %1911
        %vm1913 = vcmask 31744
        %v1916 = vsel %vm1913, %v1527, %v1592
        %v1919 = vsel %vm1913, %v1528, %v1594
        %v1922 = vsel %vm1913, %v1529, %v1596
        %v1925 = vsel %vm1913, %v1530, %v1598
        %v1928 = vsel %vm1913, %v1531, %v1600
        %v1931 = vsel %vm1913, %v1532, %v1602
        %v1934 = vsel %vm1913, %v1533, %v1604
        %v1937 = vsel %vm1913, %v1534, %v1606
        %v1940 = vsel %vm1913, %v1535, %v1608
        %v1943 = vsel %vm1913, %v1536, %v1610
        %v1946 = vsel %vm1913, %v1537, %v1612
        %v1949 = vsel %vm1913, %v1538, %v1614
        %v1952 = vsel %vm1913, %v1539, %v1616
        %v1955 = vsel %vm1913, %v1540, %v1618
        %v1958 = vsel %vm1913, %v1541, %v1620
        %v1961 = vsel %vm1913, %v1542, %v1622
        %vm1962 = vcmask 64512
        %v1964 = vsel %vm1962, %v1916, %v1672
        %v1966 = vsel %vm1962, %v1919, %v1674
        %v1968 = vsel %vm1962, %v1922, %v1676
        %v1970 = vsel %vm1962, %v1925, %v1678
        %v1972 = vsel %vm1962, %v1928, %v1680
        %v1974 = vsel %vm1962, %v1931, %v1682
        %v1976 = vsel %vm1962, %v1934, %v1684
        %v1978 = vsel %vm1962, %v1937, %v1686
        %v1980 = vsel %vm1962, %v1940, %v1688
        %v1982 = vsel %vm1962, %v1943, %v1690
        %v1984 = vsel %vm1962, %v1946, %v1692
        %v1986 = vsel %vm1962, %v1949, %v1694
        %v1988 = vsel %vm1962, %v1952, %v1696
        %v1990 = vsel %vm1962, %v1955, %v1698
        %v1992 = vsel %vm1962, %v1958, %v1700
        %v1994 = vsel %vm1962, %v1961, %v1702
        %vm1995 = vcmask 97280
        %v1997 = vsel %vm1995, %v1964, %v1707
        %v1999 = vsel %vm1995, %v1966, %v1709
        %v2001 = vsel %vm1995, %v1968, %v1711
        %v2003 = vsel %vm1995, %v1970, %v1713
        %v2005 = vsel %vm1995, %v1972, %v1715
        %v2007 = vsel %vm1995, %v1974, %v1717
        %v2009 = vsel %vm1995, %v1976, %v1719
        %v2011 = vsel %vm1995, %v1978, %v1721
        %v2013 = vsel %vm1995, %v1980, %v1723
        %v2015 = vsel %vm1995, %v1982, %v1725
        %v2017 = vsel %vm1995, %v1984, %v1727
        %v2019 = vsel %vm1995, %v1986, %v1729
        %v2021 = vsel %vm1995, %v1988, %v1731
        %v2023 = vsel %vm1995, %v1990, %v1733
        %v2025 = vsel %vm1995, %v1992, %v1735
        %v2027 = vsel %vm1995, %v1994, %v1737
        %vm2028 = vcmask 130048
        %v2030 = vsel %vm2028, %v1997, %v1742
        %v2032 = vsel %vm2028, %v1999, %v1744
        %v2034 = vsel %vm2028, %v2001, %v1746
        %v2036 = vsel %vm2028, %v2003, %v1748
        %v2038 = vsel %vm2028, %v2005, %v1750
        %v2040 = vsel %vm2028, %v2007, %v1752
        %v2042 = vsel %vm2028, %v2009, %v1754
        %v2044 = vsel %vm2028, %v2011, %v1756
        %v2046 = vsel %vm2028, %v2013, %v1758
        %v2048 = vsel %vm2028, %v2015, %v1760
        %v2050 = vsel %vm2028, %v2017, %v1762
        %v2052 = vsel %vm2028, %v2019, %v1764
        %v2054 = vsel %vm2028, %v2021, %v1766
        %v2056 = vsel %vm2028, %v2023, %v1768
        %v2058 = vsel %vm2028, %v2025, %v1770
        %v2060 = vsel %vm2028, %v2027, %v1772
        %vm2061 = vcmask 162816
        %v2063 = vsel %vm2061, %v2030, %v1777
        %v2065 = vsel %vm2061, %v2032, %v1779
        %v2067 = vsel %vm2061, %v2034, %v1781
        %v2069 = vsel %vm2061, %v2036, %v1783
        %v2071 = vsel %vm2061, %v2038, %v1785
        %v2073 = vsel %vm2061, %v2040, %v1787
        %v2075 = vsel %vm2061, %v2042, %v1789
        %v2077 = vsel %vm2061, %v2044, %v1791
        %v2079 = vsel %vm2061, %v2046, %v1793
        %v2081 = vsel %vm2061, %v2048, %v1795
        %v2083 = vsel %vm2061, %v2050, %v1797
        %v2085 = vsel %vm2061, %v2052, %v1799
        %v2087 = vsel %vm2061, %v2054, %v1801
        %v2089 = vsel %vm2061, %v2056, %v1803
        %v2091 = vsel %vm2061, %v2058, %v1805
        %v2093 = vsel %vm2061, %v2060, %v1807
        %vm2094 = vcmask 195584
        %v2096 = vsel %vm2094, %v2063, %v1812
        %v2098 = vsel %vm2094, %v2065, %v1814
        %v2100 = vsel %vm2094, %v2067, %v1816
        %v2102 = vsel %vm2094, %v2069, %v1818
        %v2104 = vsel %vm2094, %v2071, %v1820
        %v2106 = vsel %vm2094, %v2073, %v1822
        %v2108 = vsel %vm2094, %v2075, %v1824
        %v2110 = vsel %vm2094, %v2077, %v1826
        %v2112 = vsel %vm2094, %v2079, %v1828
        %v2114 = vsel %vm2094, %v2081, %v1830
        %v2116 = vsel %vm2094, %v2083, %v1832
        %v2118 = vsel %vm2094, %v2085, %v1834
        %v2120 = vsel %vm2094, %v2087, %v1836
        %v2122 = vsel %vm2094, %v2089, %v1838
        %v2124 = vsel %vm2094, %v2091, %v1840
        %v2126 = vsel %vm2094, %v2093, %v1842
        %vm2127 = vcmask 228352
        %v2129 = vsel %vm2127, %v2096, %v1847
        %v2131 = vsel %vm2127, %v2098, %v1849
        %v2133 = vsel %vm2127, %v2100, %v1851
        %v2135 = vsel %vm2127, %v2102, %v1853
        %v2137 = vsel %vm2127, %v2104, %v1855
        %v2139 = vsel %vm2127, %v2106, %v1857
        %v2141 = vsel %vm2127, %v2108, %v1859
        %v2143 = vsel %vm2127, %v2110, %v1861
        %v2145 = vsel %vm2127, %v2112, %v1863
        %v2147 = vsel %vm2127, %v2114, %v1865
        %v2149 = vsel %vm2127, %v2116, %v1867
        %v2151 = vsel %vm2127, %v2118, %v1869
        %v2153 = vsel %vm2127, %v2120, %v1871
        %v2155 = vsel %vm2127, %v2122, %v1873
        %v2157 = vsel %vm2127, %v2124, %v1875
        %v2159 = vsel %vm2127, %v2126, %v1877
        %vm2160 = vcmask 261120
        %v2162 = vsel %vm2160, %v2129, %v1882
        %v2164 = vsel %vm2160, %v2131, %v1884
        %v2166 = vsel %vm2160, %v2133, %v1886
        %v2168 = vsel %vm2160, %v2135, %v1888
        %v2170 = vsel %vm2160, %v2137, %v1890
        %v2172 = vsel %vm2160, %v2139, %v1892
        %v2174 = vsel %vm2160, %v2141, %v1894
        %v2176 = vsel %vm2160, %v2143, %v1896
        %v2178 = vsel %vm2160, %v2145, %v1898
        %v2180 = vsel %vm2160, %v2147, %v1900
        %v2182 = vsel %vm2160, %v2149, %v1902
        %v2184 = vsel %vm2160, %v2151, %v1904
        %v2186 = vsel %vm2160, %v2153, %v1906
        %v2188 = vsel %vm2160, %v2155, %v1908
        %v2190 = vsel %vm2160, %v2157, %v1910
        %v2192 = vsel %vm2160, %v2159, %v1912
        %v2193 = vld [vmem:[#allocation6] sm:$0xf]
        %v2194 = vld [vmem:[#allocation6 + $0x4] sm:$0xf]
        %v2195 = vld [vmem:[#allocation6 + $0x8] sm:$0xf]
        %v2196 = vld [vmem:[#allocation6 + $0xc] sm:$0xf]
        %v2197 = vld [vmem:[#allocation6 + $0x10] sm:$0x3]
        %v2198 = vld [vmem:[#allocation8] sm:$0x1]
        %v2200 = vlaneseq
        %v2201 = vshrl.u32 %v2200, 7
        %v2202 = vsub.s32 0, %v2201
        %v2203 = vrot.slane %v2198, %v2202
        %v2210 = vunpack.c.l.b16 %v2193
        %v2211 = vunpack.c.l.b16 %v2194
        %v2212 = vunpack.c.l.b16 %v2195
        %v2213 = vunpack.c.l.b16 %v2196
        %v2214 = vunpack.c.l.b16 %v2197
        %v2215 = vpack.c.b16 %v2211, %v2210
        %v2216 = vpack.c.b16 %v2213, %v2212
        %v2217 = vpack.c.b16 %v2214, %v2214
        %vm2220 = vcmask 293888
        %v2221 = vsel %vm2220, %v2162, 0
        %v2223 = vsel %vm2220, %v2164, 0
        %v2225 = vsel %vm2220, %v2166, 0
        %v2227 = vsel %vm2220, %v2168, 0
        %v2229 = vsel %vm2220, %v2170, 0
        %v2231 = vsel %vm2220, %v2172, 0
        %v2233 = vsel %vm2220, %v2174, 0
        %v2235 = vsel %vm2220, %v2176, 0
        %v2237 = vsel %vm2220, %v2178, 0
        %v2239 = vsel %vm2220, %v2180, 0
        %v2241 = vsel %vm2220, %v2182, 0
        %v2243 = vsel %vm2220, %v2184, 0
        %v2245 = vsel %vm2220, %v2186, 0
        %v2247 = vsel %vm2220, %v2188, 0
        %v2249 = vsel %vm2220, %v2190, 0
        %v2251 = vsel %vm2220, %v2192, 0
        %vm2253 = vcmask 1041408
        %v2255 = vsel %vm2253, %v2217, 0
        %2257 = vmatprep.subr.bf16.mxu0 0
        %2258 = vmatpush1.bf16.msra.mxu0 %v2215
        %2259 = vmatprep.subr.bf16.mxu0 0
        %2260 = vmatpush1.bf16.msra.mxu0 %v2216
        %2261 = vmatprep.subr.bf16.mxu0 0
        %2262 = vmatpush1.bf16.msra.mxu0 %v2255
        %2263 = vmatprep.subr.bf16.mxu0 0
        %2264 = vmatpush1.bf16.msra.mxu0 0
        %2265 = vmatprep.subr.bf16.mxu0 0
        %2266 = vmatpush1.bf16.msra.mxu0 0
        %2267 = vmatprep.subr.bf16.mxu0 0
        %2268 = vmatpush1.bf16.msra.mxu0 0
        %2269 = vmatprep.subr.bf16.mxu0 0
        %2270 = vmatpush1.bf16.msra.mxu0 0
        %2271 = vmatprep.subr.bf16.mxu0 0
        %2272 = vmatpush1.bf16.msra.mxu0 0
        %2273 = vmatprep.subr.bf16.mxu0 0
        %2274 = vmatpush1.bf16.msra.mxu0 0
        %2275 = vmatprep.subr.bf16.mxu0 0
        %2276 = vmatpush1.bf16.msra.mxu0 0
        %2277 = vmatprep.subr.bf16.mxu0 0
        %2278 = vmatpush1.bf16.msra.mxu0 0
        %2279 = vmatprep.subr.bf16.mxu0 0
        %2280 = vmatpush1.bf16.msra.mxu0 0
        %2281 = vmatprep.subr.bf16.mxu0 0
        %2282 = vmatpush1.bf16.msra.mxu0 0
        %2283 = vmatprep.subr.bf16.mxu0 0
        %2284 = vmatpush1.bf16.msra.mxu0 0
        %2285 = vmatprep.subr.bf16.mxu0 0
        %2286 = vmatpush1.bf16.msra.mxu0 0
        %2287 = vmatprep.subr.bf16.mxu0 0
        %2288 = vmatpush1.bf16.msra.mxu0 0
        %2289 = vmatprep.mubr.bf16.mxu0 0
        %2290 = vmatmul.mubr.bf16.gmra.mrb[0].mxu0 %v2221
        %v2291 = vpop.f32.mrb[0].mxu0
        %v2292 = vadd.f32 %v2203, %v2291
        %v2293 = vpop.f32.mrb[0].mxu0
        %v2294 = vpop.f32.mrb[0].mxu0
        %v2295 = vadd.f32 %v2203, %v2294
        %v2296 = vpop.f32.mrb[0].mxu0
        %2297 = vmatprep.mubr.bf16.mxu0 0
        %2298 = vmatmul.mubr.bf16.gmra.mrb[0].mxu0 %v2223
        %v2299 = vpop.f32.mrb[0].mxu0
        %v2300 = vadd.f32 %v2203, %v2299
        %v2301 = vpop.f32.mrb[0].mxu0
        %v2302 = vpop.f32.mrb[0].mxu0
        %v2303 = vadd.f32 %v2203, %v2302
        %v2304 = vpop.f32.mrb[0].mxu0
        %2305 = vmatprep.mubr.bf16.mxu0 0
        %2306 = vmatmul.mubr.bf16.gmra.mrb[0].mxu0 %v2225
        %v2307 = vpop.f32.mrb[0].mxu0
        %v2308 = vadd.f32 %v2203, %v2307
        %v2309 = vpop.f32.mrb[0].mxu0
        %v2310 = vpop.f32.mrb[0].mxu0
        %v2311 = vadd.f32 %v2203, %v2310
        %v2312 = vpop.f32.mrb[0].mxu0
        %2313 = vmatprep.mubr.bf16.mxu0 0
        %2314 = vmatmul.mubr.bf16.gmra.mrb[0].mxu0 %v2227
        %v2315 = vpop.f32.mrb[0].mxu0
        %v2316 = vadd.f32 %v2203, %v2315
        %v2317 = vpop.f32.mrb[0].mxu0
        %v2318 = vpop.f32.mrb[0].mxu0
        %v2319 = vadd.f32 %v2203, %v2318
        %v2320 = vpop.f32.mrb[0].mxu0
        %2321 = vmatprep.mubr.bf16.mxu0 0
        %2322 = vmatmul.mubr.bf16.gmra.mrb[0].mxu0 %v2229
        %v2323 = vpop.f32.mrb[0].mxu0
        %v2324 = vadd.f32 %v2203, %v2323
        %v2325 = vpop.f32.mrb[0].mxu0
        %v2326 = vpop.f32.mrb[0].mxu0
        %v2327 = vadd.f32 %v2203, %v2326
        %v2328 = vpop.f32.mrb[0].mxu0
        %2329 = vmatprep.mubr.bf16.mxu0 0
        %2330 = vmatmul.mubr.bf16.gmra.mrb[0].mxu0 %v2231
        %v2331 = vpop.f32.mrb[0].mxu0
        %v2332 = vadd.f32 %v2203, %v2331
        %v2333 = vpop.f32.mrb[0].mxu0
        %v2334 = vpop.f32.mrb[0].mxu0
        %v2335 = vadd.f32 %v2203, %v2334
        %v2336 = vpop.f32.mrb[0].mxu0
        %2337 = vmatprep.mubr.bf16.mxu0 0
        %2338 = vmatmul.mubr.bf16.gmra.mrb[0].mxu0 %v2233
        %v2339 = vpop.f32.mrb[0].mxu0
        %v2340 = vadd.f32 %v2203, %v2339
        %v2341 = vpop.f32.mrb[0].mxu0
        %v2342 = vpop.f32.mrb[0].mxu0
        %v2343 = vadd.f32 %v2203, %v2342
        %v2344 = vpop.f32.mrb[0].mxu0
        %2345 = vmatprep.mubr.bf16.mxu0 0
        %2346 = vmatmul.mubr.bf16.gmra.mrb[0].mxu0 %v2235
        %v2347 = vpop.f32.mrb[0].mxu0
        %v2348 = vadd.f32 %v2203, %v2347
        %v2349 = vpop.f32.mrb[0].mxu0
        %v2350 = vpop.f32.mrb[0].mxu0
        %v2351 = vadd.f32 %v2203, %v2350
        %v2352 = vpop.f32.mrb[0].mxu0
        %2353 = vmatprep.mubr.bf16.mxu0 0
        %2354 = vmatmul.mubr.bf16.gmra.mrb[0].mxu0 %v2237
        %v2355 = vpop.f32.mrb[0].mxu0
        %v2356 = vadd.f32 %v2203, %v2355
        %v2357 = vpop.f32.mrb[0].mxu0
        %v2358 = vpop.f32.mrb[0].mxu0
        %v2359 = vadd.f32 %v2203, %v2358
        %v2360 = vpop.f32.mrb[0].mxu0
        %2361 = vmatprep.mubr.bf16.mxu0 0
        %2362 = vmatmul.mubr.bf16.gmra.mrb[0].mxu0 %v2239
        %v2363 = vpop.f32.mrb[0].mxu0
        %v2364 = vadd.f32 %v2203, %v2363
        %v2365 = vpop.f32.mrb[0].mxu0
        %v2366 = vpop.f32.mrb[0].mxu0
        %v2367 = vadd.f32 %v2203, %v2366
        %v2368 = vpop.f32.mrb[0].mxu0
        %2369 = vmatprep.mubr.bf16.mxu0 0
        %2370 = vmatmul.mubr.bf16.gmra.mrb[0].mxu0 %v2241
        %v2371 = vpop.f32.mrb[0].mxu0
        %v2372 = vadd.f32 %v2203, %v2371
        %v2373 = vpop.f32.mrb[0].mxu0
        %v2374 = vpop.f32.mrb[0].mxu0
        %v2375 = vadd.f32 %v2203, %v2374
        %v2376 = vpop.f32.mrb[0].mxu0
        %2377 = vmatprep.mubr.bf16.mxu0 0
        %2378 = vmatmul.mubr.bf16.gmra.mrb[0].mxu0 %v2243
        %v2379 = vpop.f32.mrb[0].mxu0
        %v2380 = vadd.f32 %v2203, %v2379
        %v2381 = vpop.f32.mrb[0].mxu0
        %v2382 = vpop.f32.mrb[0].mxu0
        %v2383 = vadd.f32 %v2203, %v2382
        %v2384 = vpop.f32.mrb[0].mxu0
        %2385 = vmatprep.mubr.bf16.mxu0 0
        %2386 = vmatmul.mubr.bf16.gmra.mrb[0].mxu0 %v2245
        %v2387 = vpop.f32.mrb[0].mxu0
        %v2388 = vadd.f32 %v2203, %v2387
        %v2389 = vpop.f32.mrb[0].mxu0
        %v2390 = vpop.f32.mrb[0].mxu0
        %v2391 = vadd.f32 %v2203, %v2390
        %v2392 = vpop.f32.mrb[0].mxu0
        %2393 = vmatprep.mubr.bf16.mxu0 0
        %2394 = vmatmul.mubr.bf16.gmra.mrb[0].mxu0 %v2247
        %v2395 = vpop.f32.mrb[0].mxu0
        %v2396 = vadd.f32 %v2203, %v2395
        %v2397 = vpop.f32.mrb[0].mxu0
        %v2398 = vpop.f32.mrb[0].mxu0
        %v2399 = vadd.f32 %v2203, %v2398
        %v2400 = vpop.f32.mrb[0].mxu0
        %2401 = vmatprep.mubr.bf16.mxu0 0
        %2402 = vmatmul.mubr.bf16.gmra.mrb[0].mxu0 %v2249
        %v2403 = vpop.f32.mrb[0].mxu0
        %v2404 = vadd.f32 %v2203, %v2403
        %v2405 = vpop.f32.mrb[0].mxu0
        %v2406 = vpop.f32.mrb[0].mxu0
        %v2407 = vadd.f32 %v2203, %v2406
        %v2408 = vpop.f32.mrb[0].mxu0
        %2409 = vmatprep.mubr.bf16.mxu0 0
        %2410 = vmatmul.mubr.bf16.gmra.mrb[0].mxu0 %v2251
        %v2411 = vpop.f32.mrb[0].mxu0
        %v2412 = vadd.f32 %v2203, %v2411
        %v2413 = vpop.f32.mrb[0].mxu0
        %v2414 = vpop.f32.mrb[0].mxu0
        %v2415 = vadd.f32 %v2203, %v2414
        %v2416 = vpop.f32.mrb[0].mxu0
        %2417 = vdwg.mxu0
        %v2418 = vsub.f32 0.0, %v2292
        %v2419 = vsub.f32 0.0, %v2295
        %v2420 = vsub.f32 0.0, %v2300
        %v2421 = vsub.f32 0.0, %v2303
        %v2422 = vsub.f32 0.0, %v2308
        %v2423 = vsub.f32 0.0, %v2311
        %v2424 = vsub.f32 0.0, %v2316
        %v2425 = vsub.f32 0.0, %v2319
        %v2426 = vsub.f32 0.0, %v2324
        %v2427 = vsub.f32 0.0, %v2327
        %v2428 = vsub.f32 0.0, %v2332
        %v2429 = vsub.f32 0.0, %v2335
        %v2430 = vsub.f32 0.0, %v2340
        %v2431 = vsub.f32 0.0, %v2343
        %v2432 = vsub.f32 0.0, %v2348
        %v2433 = vsub.f32 0.0, %v2351
        %v2434 = vsub.f32 0.0, %v2356
        %v2435 = vsub.f32 0.0, %v2359
        %v2436 = vsub.f32 0.0, %v2364
        %v2437 = vsub.f32 0.0, %v2367
        %v2438 = vsub.f32 0.0, %v2372
        %v2439 = vsub.f32 0.0, %v2375
        %v2440 = vsub.f32 0.0, %v2380
        %v2441 = vsub.f32 0.0, %v2383
        %v2442 = vsub.f32 0.0, %v2388
        %v2443 = vsub.f32 0.0, %v2391
        %v2444 = vsub.f32 0.0, %v2396
        %v2445 = vsub.f32 0.0, %v2399
        %v2446 = vsub.f32 0.0, %v2404
        %v2447 = vsub.f32 0.0, %v2407
        %v2448 = vsub.f32 0.0, %v2412
        %v2449 = vsub.f32 0.0, %v2415
        %v2450 = vmul.f32 %v2418, 1.442695
        %v2451 = vpow.pop %v2450
        %v2452 = vmul.f32 %v2419, 1.442695
        %v2453 = vpow.pop %v2452
        %v2454 = vmul.f32 %v2420, 1.442695
        %v2455 = vpow.pop %v2454
        %v2456 = vmul.f32 %v2421, 1.442695
        %v2457 = vpow.pop %v2456
        %v2458 = vmul.f32 %v2422, 1.442695
        %v2459 = vpow.pop %v2458
        %v2460 = vmul.f32 %v2423, 1.442695
        %v2461 = vpow.pop %v2460
        %v2462 = vmul.f32 %v2424, 1.442695
        %v2463 = vpow.pop %v2462
        %v2464 = vmul.f32 %v2425, 1.442695
        %v2465 = vpow.pop %v2464
        %v2466 = vmul.f32 %v2426, 1.442695
        %v2467 = vpow.pop %v2466
        %v2468 = vmul.f32 %v2427, 1.442695
        %v2469 = vpow.pop %v2468
        %v2470 = vmul.f32 %v2428, 1.442695
        %v2471 = vpow.pop %v2470
        %v2472 = vmul.f32 %v2429, 1.442695
        %v2473 = vpow.pop %v2472
        %v2474 = vmul.f32 %v2430, 1.442695
        %v2475 = vpow.pop %v2474
        %v2476 = vmul.f32 %v2431, 1.442695
        %v2477 = vpow.pop %v2476
        %v2478 = vmul.f32 %v2432, 1.442695
        %v2479 = vpow.pop %v2478
        %v2480 = vmul.f32 %v2433, 1.442695
        %v2481 = vpow.pop %v2480
        %v2482 = vmul.f32 %v2434, 1.442695
        %v2483 = vpow.pop %v2482
        %v2484 = vmul.f32 %v2435, 1.442695
        %v2485 = vpow.pop %v2484
        %v2486 = vmul.f32 %v2436, 1.442695
        %v2487 = vpow.pop %v2486
        %v2488 = vmul.f32 %v2437, 1.442695
        %v2489 = vpow.pop %v2488
        %v2490 = vmul.f32 %v2438, 1.442695
        %v2491 = vpow.pop %v2490
        %v2492 = vmul.f32 %v2439, 1.442695
        %v2493 = vpow.pop %v2492
        %v2494 = vmul.f32 %v2440, 1.442695
        %v2495 = vpow.pop %v2494
        %v2496 = vmul.f32 %v2441, 1.442695
        %v2497 = vpow.pop %v2496
        %v2498 = vmul.f32 %v2442, 1.442695
        %v2499 = vpow.pop %v2498
        %v2500 = vmul.f32 %v2443, 1.442695
        %v2501 = vpow.pop %v2500
        %v2502 = vmul.f32 %v2444, 1.442695
        %v2503 = vpow.pop %v2502
        %v2504 = vmul.f32 %v2445, 1.442695
        %v2505 = vpow.pop %v2504
        %v2506 = vmul.f32 %v2446, 1.442695
        %v2507 = vpow.pop %v2506
        %v2508 = vmul.f32 %v2447, 1.442695
        %v2509 = vpow.pop %v2508
        %v2510 = vmul.f32 %v2448, 1.442695
        %v2511 = vpow.pop %v2510
        %v2512 = vmul.f32 %v2449, 1.442695
        %v2513 = vpow.pop %v2512
        %v2514 = vadd.f32 %v2451, 1.0
        %v2515 = vadd.f32 %v2453, 1.0
        %v2516 = vadd.f32 %v2455, 1.0
        %v2517 = vadd.f32 %v2457, 1.0
        %v2518 = vadd.f32 %v2459, 1.0
        %v2519 = vadd.f32 %v2461, 1.0
        %v2520 = vadd.f32 %v2463, 1.0
        %v2521 = vadd.f32 %v2465, 1.0
        %v2522 = vadd.f32 %v2467, 1.0
        %v2523 = vadd.f32 %v2469, 1.0
        %v2524 = vadd.f32 %v2471, 1.0
        %v2525 = vadd.f32 %v2473, 1.0
        %v2526 = vadd.f32 %v2475, 1.0
        %v2527 = vadd.f32 %v2477, 1.0
        %v2528 = vadd.f32 %v2479, 1.0
        %v2529 = vadd.f32 %v2481, 1.0
        %v2530 = vadd.f32 %v2483, 1.0
        %v2531 = vadd.f32 %v2485, 1.0
        %v2532 = vadd.f32 %v2487, 1.0
        %v2533 = vadd.f32 %v2489, 1.0
        %v2534 = vadd.f32 %v2491, 1.0
        %v2535 = vadd.f32 %v2493, 1.0
        %v2536 = vadd.f32 %v2495, 1.0
        %v2537 = vadd.f32 %v2497, 1.0
        %v2538 = vadd.f32 %v2499, 1.0
        %v2539 = vadd.f32 %v2501, 1.0
        %v2540 = vadd.f32 %v2503, 1.0
        %v2541 = vadd.f32 %v2505, 1.0
        %v2542 = vadd.f32 %v2507, 1.0
        %v2543 = vadd.f32 %v2509, 1.0
        %v2544 = vadd.f32 %v2511, 1.0
        %v2545 = vadd.f32 %v2513, 1.0
        %v2546 = vrcp.pop %v2514
        %v2547 = vrcp.pop %v2515
        %v2548 = vrcp.pop %v2516
        %v2549 = vrcp.pop %v2517
        %v2550 = vrcp.pop %v2518
        %v2551 = vrcp.pop %v2519
        %v2552 = vrcp.pop %v2520
        %v2553 = vrcp.pop %v2521
        %v2554 = vrcp.pop %v2522
        %v2555 = vrcp.pop %v2523
        %v2556 = vrcp.pop %v2524
        %v2557 = vrcp.pop %v2525
        %v2558 = vrcp.pop %v2526
        %v2559 = vrcp.pop %v2527
        %v2560 = vrcp.pop %v2528
        %v2561 = vrcp.pop %v2529
        %v2562 = vrcp.pop %v2530
        %v2563 = vrcp.pop %v2531
        %v2564 = vrcp.pop %v2532
        %v2565 = vrcp.pop %v2533
        %v2566 = vrcp.pop %v2534
        %v2567 = vrcp.pop %v2535
        %v2568 = vrcp.pop %v2536
        %v2569 = vrcp.pop %v2537
        %v2570 = vrcp.pop %v2538
        %v2571 = vrcp.pop %v2539
        %v2572 = vrcp.pop %v2540
        %v2573 = vrcp.pop %v2541
        %v2574 = vrcp.pop %v2542
        %v2575 = vrcp.pop %v2543
        %v2576 = vrcp.pop %v2544
        %v2577 = vrcp.pop %v2545
        %v2578 = vmul.f32 %v2292, %v2546
        %v2579 = vmul.f32 %v2295, %v2547
        %v2580 = vmul.f32 %v2300, %v2548
        %v2581 = vmul.f32 %v2303, %v2549
        %v2582 = vmul.f32 %v2308, %v2550
        %v2583 = vmul.f32 %v2311, %v2551
        %v2584 = vmul.f32 %v2316, %v2552
        %v2585 = vmul.f32 %v2319, %v2553
        %v2586 = vmul.f32 %v2324, %v2554
        %v2587 = vmul.f32 %v2327, %v2555
        %v2588 = vmul.f32 %v2332, %v2556
        %v2589 = vmul.f32 %v2335, %v2557
        %v2590 = vmul.f32 %v2340, %v2558
        %v2591 = vmul.f32 %v2343, %v2559
        %v2592 = vmul.f32 %v2348, %v2560
        %v2593 = vmul.f32 %v2351, %v2561
        %v2594 = vmul.f32 %v2356, %v2562
        %v2595 = vmul.f32 %v2359, %v2563
        %v2596 = vmul.f32 %v2364, %v2564
        %v2597 = vmul.f32 %v2367, %v2565
        %v2598 = vmul.f32 %v2372, %v2566
        %v2599 = vmul.f32 %v2375, %v2567
        %v2600 = vmul.f32 %v2380, %v2568
        %v2601 = vmul.f32 %v2383, %v2569
        %v2602 = vmul.f32 %v2388, %v2570
        %v2603 = vmul.f32 %v2391, %v2571
        %v2604 = vmul.f32 %v2396, %v2572
        %v2605 = vmul.f32 %v2399, %v2573
        %v2606 = vmul.f32 %v2404, %v2574
        %v2607 = vmul.f32 %v2407, %v2575
        %v2608 = vmul.f32 %v2412, %v2576
        %v2609 = vmul.f32 %v2415, %v2577
        %v2610 = vpack.c.bf16 %v2579, %v2578
        %v2611 = vpack.c.bf16 %v2581, %v2580
        %v2612 = vpack.c.bf16 %v2583, %v2582
        %v2613 = vpack.c.bf16 %v2585, %v2584
        %v2614 = vpack.c.bf16 %v2587, %v2586
        %v2615 = vpack.c.bf16 %v2589, %v2588
        %v2616 = vpack.c.bf16 %v2591, %v2590
        %v2617 = vpack.c.bf16 %v2593, %v2592
        %v2618 = vpack.c.bf16 %v2595, %v2594
        %v2619 = vpack.c.bf16 %v2597, %v2596
        %v2620 = vpack.c.bf16 %v2599, %v2598
        %v2621 = vpack.c.bf16 %v2601, %v2600
        %v2622 = vpack.c.bf16 %v2603, %v2602
        %v2623 = vpack.c.bf16 %v2605, %v2604
        %v2624 = vpack.c.bf16 %v2607, %v2606
        %v2625 = vpack.c.bf16 %v2609, %v2608
        %v2627 = vshrl.u32 %v2610, 16
        %v2629 = vrot.slane %v2627, 7
        %v2630 = vshll.u32 %v2610, 16
        %v2632 = vor.u32 %v2629, %v2630
        %v2634 = vshrl.u32 %v2611, 16
        %v2636 = vrot.slane %v2634, 7
        %v2637 = vshll.u32 %v2611, 16
        %v2639 = vor.u32 %v2636, %v2637
        %v2641 = vshrl.u32 %v2612, 16
        %v2643 = vrot.slane %v2641, 7
        %v2644 = vshll.u32 %v2612, 16
        %v2646 = vor.u32 %v2643, %v2644
        %v2648 = vshrl.u32 %v2613, 16
        %v2650 = vrot.slane %v2648, 7
        %v2651 = vshll.u32 %v2613, 16
        %v2653 = vor.u32 %v2650, %v2651
        %v2655 = vshrl.u32 %v2614, 16
        %v2657 = vrot.slane %v2655, 7
        %v2658 = vshll.u32 %v2614, 16
        %v2660 = vor.u32 %v2657, %v2658
        %v2662 = vshrl.u32 %v2615, 16
        %v2664 = vrot.slane %v2662, 7
        %v2665 = vshll.u32 %v2615, 16
        %v2667 = vor.u32 %v2664, %v2665
        %v2669 = vshrl.u32 %v2616, 16
        %v2671 = vrot.slane %v2669, 7
        %v2672 = vshll.u32 %v2616, 16
        %v2674 = vor.u32 %v2671, %v2672
        %v2676 = vshrl.u32 %v2617, 16
        %v2678 = vrot.slane %v2676, 7
        %v2679 = vshll.u32 %v2617, 16
        %v2681 = vor.u32 %v2678, %v2679
        %v2683 = vshrl.u32 %v2618, 16
        %v2685 = vrot.slane %v2683, 7
        %v2686 = vshll.u32 %v2618, 16
        %v2688 = vor.u32 %v2685, %v2686
        %v2690 = vshrl.u32 %v2619, 16
        %v2692 = vrot.slane %v2690, 7
        %v2693 = vshll.u32 %v2619, 16
        %v2695 = vor.u32 %v2692, %v2693
        %v2697 = vshrl.u32 %v2620, 16
        %v2699 = vrot.slane %v2697, 7
        %v2700 = vshll.u32 %v2620, 16
        %v2702 = vor.u32 %v2699, %v2700
        %v2704 = vshrl.u32 %v2621, 16
        %v2706 = vrot.slane %v2704, 7
        %v2707 = vshll.u32 %v2621, 16
        %v2709 = vor.u32 %v2706, %v2707
        %v2711 = vshrl.u32 %v2622, 16
        %v2713 = vrot.slane %v2711, 7
        %v2714 = vshll.u32 %v2622, 16
        %v2716 = vor.u32 %v2713, %v2714
        %v2718 = vshrl.u32 %v2623, 16
        %v2720 = vrot.slane %v2718, 7
        %v2721 = vshll.u32 %v2623, 16
        %v2723 = vor.u32 %v2720, %v2721
        %v2725 = vshrl.u32 %v2624, 16
        %v2727 = vrot.slane %v2725, 7
        %v2728 = vshll.u32 %v2624, 16
        %v2730 = vor.u32 %v2727, %v2728
        %v2732 = vshrl.u32 %v2625, 16
        %v2734 = vrot.slane %v2732, 7
        %v2735 = vshll.u32 %v2625, 16
        %v2737 = vor.u32 %v2734, %v2735
        %v2770 = vsel %vm565, 0, %v2632
        %v2771 = vsel %vm565, 0, %v2639
        %v2772 = vsel %vm565, 0, %v2646
        %v2773 = vsel %vm565, 0, %v2653
        %v2774 = vsel %vm565, 0, %v2660
        %v2775 = vsel %vm565, 0, %v2667
        %v2776 = vsel %vm565, 0, %v2674
        %v2777 = vsel %vm565, 0, %v2681
        %v2778 = vsel %vm565, 0, %v2688
        %v2779 = vsel %vm565, 0, %v2695
        %v2780 = vsel %vm565, 0, %v2702
        %v2781 = vsel %vm565, 0, %v2709
        %v2782 = vsel %vm565, 0, %v2716
        %v2783 = vsel %vm565, 0, %v2723
        %v2784 = vsel %vm565, 0, %v2730
        %v2785 = vsel %vm565, 0, %v2737
        %v2786 = vsel %vm565, %v2629, 0
        %v2787 = vsel %vm565, %v2636, 0
        %v2788 = vsel %vm565, %v2643, 0
        %v2789 = vsel %vm565, %v2650, 0
        %v2790 = vsel %vm565, %v2657, 0
        %v2791 = vsel %vm565, %v2664, 0
        %v2792 = vsel %vm565, %v2671, 0
        %v2793 = vsel %vm565, %v2678, 0
        %v2794 = vsel %vm565, %v2685, 0
        %v2795 = vsel %vm565, %v2692, 0
        %v2796 = vsel %vm565, %v2699, 0
        %v2797 = vsel %vm565, %v2706, 0
        %v2798 = vsel %vm565, %v2713, 0
        %v2799 = vsel %vm565, %v2720, 0
        %v2800 = vsel %vm565, %v2727, 0
        %v2801 = vsel %vm565, %v2734, 0
        %v2834 = vunpack.c.l.b16 %v2770
        %v2835 = vunpack.c.h.b16 %v2770
        %v2836 = vunpack.c.l.b16 %v2786
        %v2837 = vunpack.c.l.b16 %v2771
        %v2838 = vunpack.c.h.b16 %v2771
        %v2839 = vunpack.c.l.b16 %v2787
        %v2840 = vunpack.c.l.b16 %v2772
        %v2841 = vunpack.c.h.b16 %v2772
        %v2842 = vunpack.c.l.b16 %v2788
        %v2843 = vunpack.c.l.b16 %v2773
        %v2844 = vunpack.c.h.b16 %v2773
        %v2845 = vunpack.c.l.b16 %v2789
        %v2846 = vunpack.c.l.b16 %v2774
        %v2847 = vunpack.c.h.b16 %v2774
        %v2848 = vunpack.c.l.b16 %v2790
        %v2849 = vunpack.c.l.b16 %v2775
        %v2850 = vunpack.c.h.b16 %v2775
        %v2851 = vunpack.c.l.b16 %v2791
        %v2852 = vunpack.c.l.b16 %v2776
        %v2853 = vunpack.c.h.b16 %v2776
        %v2854 = vunpack.c.l.b16 %v2792
        %v2855 = vunpack.c.l.b16 %v2777
        %v2856 = vunpack.c.h.b16 %v2777
        %v2857 = vunpack.c.l.b16 %v2793
        %v2858 = vunpack.c.l.b16 %v2778
        %v2859 = vunpack.c.h.b16 %v2778
        %v2860 = vunpack.c.l.b16 %v2794
        %v2861 = vunpack.c.l.b16 %v2779
        %v2862 = vunpack.c.h.b16 %v2779
        %v2863 = vunpack.c.l.b16 %v2795
        %v2864 = vunpack.c.l.b16 %v2780
        %v2865 = vunpack.c.h.b16 %v2780
        %v2866 = vunpack.c.l.b16 %v2796
        %v2867 = vunpack.c.l.b16 %v2781
        %v2868 = vunpack.c.h.b16 %v2781
        %v2869 = vunpack.c.l.b16 %v2797
        %v2870 = vunpack.c.l.b16 %v2782
        %v2871 = vunpack.c.h.b16 %v2782
        %v2872 = vunpack.c.l.b16 %v2798
        %v2873 = vunpack.c.l.b16 %v2783
        %v2874 = vunpack.c.h.b16 %v2783
        %v2875 = vunpack.c.l.b16 %v2799
        %v2876 = vunpack.c.l.b16 %v2784
        %v2877 = vunpack.c.h.b16 %v2784
        %v2878 = vunpack.c.l.b16 %v2800
        %v2879 = vunpack.c.l.b16 %v2785
        %v2880 = vunpack.c.h.b16 %v2785
        %v2881 = vunpack.c.l.b16 %v2801
        %v2882 = vpack.c.b16 %v2834, %v2834
        %v2883 = vpack.c.b16 %v2835, %v2835
        %v2884 = vpack.c.b16 %v2836, %v2836
        %v2885 = vpack.c.b16 %v2837, %v2837
        %v2886 = vpack.c.b16 %v2838, %v2838
        %v2887 = vpack.c.b16 %v2839, %v2839
        %v2888 = vpack.c.b16 %v2840, %v2840
        %v2889 = vpack.c.b16 %v2841, %v2841
        %v2890 = vpack.c.b16 %v2842, %v2842
        %v2891 = vpack.c.b16 %v2843, %v2843
        %v2892 = vpack.c.b16 %v2844, %v2844
        %v2893 = vpack.c.b16 %v2845, %v2845
        %v2894 = vpack.c.b16 %v2846, %v2846
        %v2895 = vpack.c.b16 %v2847, %v2847
        %v2896 = vpack.c.b16 %v2848, %v2848
        %v2897 = vpack.c.b16 %v2849, %v2849
        %v2898 = vpack.c.b16 %v2850, %v2850
        %v2899 = vpack.c.b16 %v2851, %v2851
        %v2900 = vpack.c.b16 %v2852, %v2852
        %v2901 = vpack.c.b16 %v2853, %v2853
        %v2902 = vpack.c.b16 %v2854, %v2854
        %v2903 = vpack.c.b16 %v2855, %v2855
        %v2904 = vpack.c.b16 %v2856, %v2856
        %v2905 = vpack.c.b16 %v2857, %v2857
        %v2906 = vpack.c.b16 %v2858, %v2858
        %v2907 = vpack.c.b16 %v2859, %v2859
        %v2908 = vpack.c.b16 %v2860, %v2860
        %v2909 = vpack.c.b16 %v2861, %v2861
        %v2910 = vpack.c.b16 %v2862, %v2862
        %v2911 = vpack.c.b16 %v2863, %v2863
        %v2912 = vpack.c.b16 %v2864, %v2864
        %v2913 = vpack.c.b16 %v2865, %v2865
        %v2914 = vpack.c.b16 %v2866, %v2866
        %v2915 = vpack.c.b16 %v2867, %v2867
        %v2916 = vpack.c.b16 %v2868, %v2868
        %v2917 = vpack.c.b16 %v2869, %v2869
        %v2918 = vpack.c.b16 %v2870, %v2870
        %v2919 = vpack.c.b16 %v2871, %v2871
        %v2920 = vpack.c.b16 %v2872, %v2872
        %v2921 = vpack.c.b16 %v2873, %v2873
        %v2922 = vpack.c.b16 %v2874, %v2874
        %v2923 = vpack.c.b16 %v2875, %v2875
        %v2924 = vpack.c.b16 %v2876, %v2876
        %v2925 = vpack.c.b16 %v2877, %v2877
        %v2926 = vpack.c.b16 %v2878, %v2878
        %v2927 = vpack.c.b16 %v2879, %v2879
        %v2928 = vpack.c.b16 %v2880, %v2880
        %v2929 = vpack.c.b16 %v2881, %v2881
        %2978 = vst.msk [vmem:[%s774] sm:$0xf] %vm330, %v2882
        %2979 = vst.msk [vmem:[%s774 + $0x4] sm:$0xf] %vm330, %v2883
        %2980 = vst.msk [vmem:[%s774 + $0x8] sm:$0x1] %vm333, %v2884
        %2981 = vst.msk [vmem:[%s774 + $0xc] sm:$0xf] %vm330, %v2885
        %2982 = vst.msk [vmem:[%s774 + $0x10] sm:$0xf] %vm330, %v2886
        %2983 = vst.msk [vmem:[%s774 + $0x14] sm:$0x1] %vm333, %v2887
        %2984 = vst.msk [vmem:[%s774 + $0x18] sm:$0xf] %vm330, %v2888
        %2985 = vst.msk [vmem:[%s774 + $0x1c] sm:$0xf] %vm330, %v2889
        %2986 = vst.msk [vmem:[%s774 + $0x20] sm:$0x1] %vm333, %v2890
        %2987 = vst.msk [vmem:[%s774 + $0x24] sm:$0xf] %vm330, %v2891
        %2988 = vst.msk [vmem:[%s774 + $0x28] sm:$0xf] %vm330, %v2892
        %2989 = vst.msk [vmem:[%s774 + $0x2c] sm:$0x1] %vm333, %v2893
        %2990 = vst.msk [vmem:[%s774 + $0x30] sm:$0xf] %vm330, %v2894
        %2991 = vst.msk [vmem:[%s774 + $0x34] sm:$0xf] %vm330, %v2895
        %2992 = vst.msk [vmem:[%s774 + $0x38] sm:$0x1] %vm333, %v2896
        %2993 = vst.msk [vmem:[%s774 + $0x3c] sm:$0xf] %vm330, %v2897
        %2994 = vst.msk [vmem:[%s774 + $0x40] sm:$0xf] %vm330, %v2898
        %2995 = vst.msk [vmem:[%s774 + $0x44] sm:$0x1] %vm333, %v2899
        %2996 = vst.msk [vmem:[%s774 + $0x48] sm:$0xf] %vm330, %v2900
        %2997 = vst.msk [vmem:[%s774 + $0x4c] sm:$0xf] %vm330, %v2901
        %2998 = vst.msk [vmem:[%s774 + $0x50] sm:$0x1] %vm333, %v2902
        %2999 = vst.msk [vmem:[%s774 + $0x54] sm:$0xf] %vm330, %v2903
        %3000 = vst.msk [vmem:[%s774 + $0x58] sm:$0xf] %vm330, %v2904
        %3001 = vst.msk [vmem:[%s774 + $0x5c] sm:$0x1] %vm333, %v2905
        %3002 = vst.msk [vmem:[%s774 + $0x60] sm:$0xf] %vm330, %v2906
        %3003 = vst.msk [vmem:[%s774 + $0x64] sm:$0xf] %vm330, %v2907
        %3004 = vst.msk [vmem:[%s774 + $0x68] sm:$0x1] %vm333, %v2908
        %3005 = vst.msk [vmem:[%s774 + $0x6c] sm:$0xf] %vm330, %v2909
        %3006 = vst.msk [vmem:[%s774 + $0x70] sm:$0xf] %vm330, %v2910
        %3007 = vst.msk [vmem:[%s774 + $0x74] sm:$0x1] %vm333, %v2911
        %3008 = vst.msk [vmem:[%s774 + $0x78] sm:$0xf] %vm330, %v2912
        %3009 = vst.msk [vmem:[%s774 + $0x7c] sm:$0xf] %vm330, %v2913
        %3010 = vst.msk [vmem:[%s774 + $0x80] sm:$0x1] %vm333, %v2914
        %3011 = vst.msk [vmem:[%s774 + $0x84] sm:$0xf] %vm330, %v2915
        %3012 = vst.msk [vmem:[%s774 + $0x88] sm:$0xf] %vm330, %v2916
        %3013 = vst.msk [vmem:[%s774 + $0x8c] sm:$0x1] %vm333, %v2917
        %3014 = vst.msk [vmem:[%s774 + $0x90] sm:$0xf] %vm330, %v2918
        %3015 = vst.msk [vmem:[%s774 + $0x94] sm:$0xf] %vm330, %v2919
        %3016 = vst.msk [vmem:[%s774 + $0x98] sm:$0x1] %vm333, %v2920
        %3017 = vst.msk [vmem:[%s774 + $0x9c] sm:$0xf] %vm330, %v2921
        %3018 = vst.msk [vmem:[%s774 + $0xa0] sm:$0xf] %vm330, %v2922
        %3019 = vst.msk [vmem:[%s774 + $0xa4] sm:$0x1] %vm333, %v2923
        %3020 = vst.msk [vmem:[%s774 + $0xa8] sm:$0xf] %vm330, %v2924
        %3021 = vst.msk [vmem:[%s774 + $0xac] sm:$0xf] %vm330, %v2925
        %3022 = vst.msk [vmem:[%s774 + $0xb0] sm:$0x1] %vm333, %v2926
        %3023 = vst.msk [vmem:[%s774 + $0xb4] sm:$0xf] %vm330, %v2927
        %3024 = vst.msk [vmem:[%s774 + $0xb8] sm:$0xf] %vm330, %v2928
        %3025 = vst.msk [vmem:[%s774 + $0xbc] sm:$0x1] %vm333, %v2929
        %v3026 = vld [vmem:[#allocation2] sm:$0xf]
        %v3027 = vld [vmem:[#allocation2 + $0x4] sm:$0xf]
        %v3028 = vld [vmem:[#allocation2 + $0x8] sm:$0x1]
        %v3029 = vld [vmem:[#allocation2 + $0xc] sm:$0xf]
        %v3030 = vld [vmem:[#allocation2 + $0x10] sm:$0xf]
        %v3031 = vld [vmem:[#allocation2 + $0x14] sm:$0x1]
        %v3032 = vld [vmem:[#allocation2 + $0x18] sm:$0xf]
        %v3033 = vld [vmem:[#allocation2 + $0x1c] sm:$0xf]
        %v3034 = vld [vmem:[#allocation2 + $0x20] sm:$0x1]
        %v3035 = vld [vmem:[#allocation2 + $0x24] sm:$0xf]
        %v3036 = vld [vmem:[#allocation2 + $0x28] sm:$0xf]
        %v3037 = vld [vmem:[#allocation2 + $0x2c] sm:$0x1]
        %v3038 = vld [vmem:[#allocation2 + $0x30] sm:$0xf]
        %v3039 = vld [vmem:[#allocation2 + $0x34] sm:$0xf]
        %v3040 = vld [vmem:[#allocation2 + $0x38] sm:$0x1]
        %v3041 = vld [vmem:[#allocation2 + $0x3c] sm:$0xf]
        %v3042 = vld [vmem:[#allocation2 + $0x40] sm:$0xf]
        %v3043 = vld [vmem:[#allocation2 + $0x44] sm:$0x1]
        %v3044 = vld [vmem:[#allocation2 + $0x48] sm:$0xf]
        %v3045 = vld [vmem:[#allocation2 + $0x4c] sm:$0xf]
        %v3046 = vld [vmem:[#allocation2 + $0x50] sm:$0x1]
        %v3047 = vld [vmem:[#allocation2 + $0x54] sm:$0xf]
        %v3048 = vld [vmem:[#allocation2 + $0x58] sm:$0xf]
        %v3049 = vld [vmem:[#allocation2 + $0x5c] sm:$0x1]
        %v3050 = vld [vmem:[#allocation2 + $0x60] sm:$0xf]
        %v3051 = vld [vmem:[#allocation2 + $0x64] sm:$0xf]
        %v3052 = vld [vmem:[#allocation2 + $0x68] sm:$0x1]
        %v3053 = vld [vmem:[#allocation2 + $0x6c] sm:$0xf]
        %v3054 = vld [vmem:[#allocation2 + $0x70] sm:$0xf]
        %v3055 = vld [vmem:[#allocation2 + $0x74] sm:$0x1]
        %v3056 = vld [vmem:[#allocation2 + $0x78] sm:$0xf]
        %v3057 = vld [vmem:[#allocation2 + $0x7c] sm:$0xf]
        %v3058 = vld [vmem:[#allocation2 + $0x80] sm:$0x1]
        %v3059 = vld [vmem:[#allocation2 + $0x84] sm:$0xf]
        %v3060 = vld [vmem:[#allocation2 + $0x88] sm:$0xf]
        %v3061 = vld [vmem:[#allocation2 + $0x8c] sm:$0x1]
        %v3062 = vld [vmem:[#allocation2 + $0x90] sm:$0xf]
        %v3063 = vld [vmem:[#allocation2 + $0x94] sm:$0xf]
        %v3064 = vld [vmem:[#allocation2 + $0x98] sm:$0x1]
        %v3065 = vld [vmem:[#allocation2 + $0x9c] sm:$0xf]
        %v3066 = vld [vmem:[#allocation2 + $0xa0] sm:$0xf]
        %v3067 = vld [vmem:[#allocation2 + $0xa4] sm:$0x1]
        %v3068 = vld [vmem:[#allocation2 + $0xa8] sm:$0xf]
        %v3069 = vld [vmem:[#allocation2 + $0xac] sm:$0xf]
        %v3070 = vld [vmem:[#allocation2 + $0xb0] sm:$0x1]
        %v3071 = vld [vmem:[#allocation2 + $0xb4] sm:$0xf]
        %v3072 = vld [vmem:[#allocation2 + $0xb8] sm:$0xf]
        %v3073 = vld [vmem:[#allocation2 + $0xbc] sm:$0x1]
        %v3074 = vld [vmem:[#allocation2 + $0xc0] sm:$0xf]
        %v3075 = vld [vmem:[#allocation2 + $0xc4] sm:$0xf]
        %v3076 = vld [vmem:[#allocation2 + $0xc8] sm:$0x1]
        %v3077 = vld [vmem:[#allocation2 + $0xcc] sm:$0xf]
        %v3078 = vld [vmem:[#allocation2 + $0xd0] sm:$0xf]
        %v3079 = vld [vmem:[#allocation2 + $0xd4] sm:$0x1]
        %v3081 = vshrl.u32 %v3026, 16
        %v3083 = vrot.slane %v3081, 4
        %v3084 = vshll.u32 %v3026, 16
        %v3086 = vrot.slane %v3084, 5
        %v3087 = vor.u32 %v3083, %v3086
        %v3088 = vrot.slane %v3087, 4
        %v3090 = vshll.u32 %v3027, 16
        %v3092 = vrot.slane %v3090, 5
        %v3093 = vsel %vm879, %v3088, %v3092
        %v3094 = vshrl.u32 %v3027, 16
        %v3096 = vrot.slane %v3094, 4
        %v3097 = vor.u32 %v3096, %v3092
        %v3098 = vrot.slane %v3097, 4
        %v3100 = vshll.u32 %v3028, 16
        %v3102 = vrot.slane %v3100, 5
        %v3103 = vsel %vm879, %v3098, %v3102
        %v3105 = vshrl.u32 %v3029, 16
        %v3107 = vrot.slane %v3105, 4
        %v3108 = vshll.u32 %v3029, 16
        %v3110 = vrot.slane %v3108, 5
        %v3111 = vor.u32 %v3107, %v3110
        %v3112 = vrot.slane %v3111, 4
        %v3114 = vshll.u32 %v3030, 16
        %v3116 = vrot.slane %v3114, 5
        %v3117 = vsel %vm879, %v3112, %v3116
        %v3118 = vshrl.u32 %v3030, 16
        %v3120 = vrot.slane %v3118, 4
        %v3121 = vor.u32 %v3120, %v3116
        %v3122 = vrot.slane %v3121, 4
        %v3124 = vshll.u32 %v3031, 16
        %v3126 = vrot.slane %v3124, 5
        %v3127 = vsel %vm879, %v3122, %v3126
        %v3129 = vshrl.u32 %v3032, 16
        %v3131 = vrot.slane %v3129, 4
        %v3132 = vshll.u32 %v3032, 16
        %v3134 = vrot.slane %v3132, 5
        %v3135 = vor.u32 %v3131, %v3134
        %v3136 = vrot.slane %v3135, 4
        %v3138 = vshll.u32 %v3033, 16
        %v3140 = vrot.slane %v3138, 5
        %v3141 = vsel %vm879, %v3136, %v3140
        %v3142 = vshrl.u32 %v3033, 16
        %v3144 = vrot.slane %v3142, 4
        %v3145 = vor.u32 %v3144, %v3140
        %v3146 = vrot.slane %v3145, 4
        %v3148 = vshll.u32 %v3034, 16
        %v3150 = vrot.slane %v3148, 5
        %v3151 = vsel %vm879, %v3146, %v3150
        %v3153 = vshrl.u32 %v3035, 16
        %v3155 = vrot.slane %v3153, 4
        %v3156 = vshll.u32 %v3035, 16
        %v3158 = vrot.slane %v3156, 5
        %v3159 = vor.u32 %v3155, %v3158
        %v3160 = vrot.slane %v3159, 4
        %v3162 = vshll.u32 %v3036, 16
        %v3164 = vrot.slane %v3162, 5
        %v3165 = vsel %vm879, %v3160, %v3164
        %v3166 = vshrl.u32 %v3036, 16
        %v3168 = vrot.slane %v3166, 4
        %v3169 = vor.u32 %v3168, %v3164
        %v3170 = vrot.slane %v3169, 4
        %v3172 = vshll.u32 %v3037, 16
        %v3174 = vrot.slane %v3172, 5
        %v3175 = vsel %vm879, %v3170, %v3174
        %v3177 = vshrl.u32 %v3038, 16
        %v3179 = vrot.slane %v3177, 4
        %v3180 = vshll.u32 %v3038, 16
        %v3182 = vrot.slane %v3180, 5
        %v3183 = vor.u32 %v3179, %v3182
        %v3184 = vrot.slane %v3183, 4
        %v3186 = vshll.u32 %v3039, 16
        %v3188 = vrot.slane %v3186, 5
        %v3189 = vsel %vm879, %v3184, %v3188
        %v3190 = vshrl.u32 %v3039, 16
        %v3192 = vrot.slane %v3190, 4
        %v3193 = vor.u32 %v3192, %v3188
        %v3194 = vrot.slane %v3193, 4
        %v3196 = vshll.u32 %v3040, 16
        %v3198 = vrot.slane %v3196, 5
        %v3199 = vsel %vm879, %v3194, %v3198
        %v3201 = vshrl.u32 %v3041, 16
        %v3203 = vrot.slane %v3201, 4
        %v3204 = vshll.u32 %v3041, 16
        %v3206 = vrot.slane %v3204, 5
        %v3207 = vor.u32 %v3203, %v3206
        %v3208 = vrot.slane %v3207, 4
        %v3210 = vshll.u32 %v3042, 16
        %v3212 = vrot.slane %v3210, 5
        %v3213 = vsel %vm879, %v3208, %v3212
        %v3214 = vshrl.u32 %v3042, 16
        %v3216 = vrot.slane %v3214, 4
        %v3217 = vor.u32 %v3216, %v3212
        %v3218 = vrot.slane %v3217, 4
        %v3220 = vshll.u32 %v3043, 16
        %v3222 = vrot.slane %v3220, 5
        %v3223 = vsel %vm879, %v3218, %v3222
        %v3225 = vshrl.u32 %v3044, 16
        %v3227 = vrot.slane %v3225, 4
        %v3228 = vshll.u32 %v3044, 16
        %v3230 = vrot.slane %v3228, 5
        %v3231 = vor.u32 %v3227, %v3230
        %v3232 = vrot.slane %v3231, 4
        %v3234 = vshll.u32 %v3045, 16
        %v3236 = vrot.slane %v3234, 5
        %v3237 = vsel %vm879, %v3232, %v3236
        %v3238 = vshrl.u32 %v3045, 16
        %v3240 = vrot.slane %v3238, 4
        %v3241 = vor.u32 %v3240, %v3236
        %v3242 = vrot.slane %v3241, 4
        %v3244 = vshll.u32 %v3046, 16
        %v3246 = vrot.slane %v3244, 5
        %v3247 = vsel %vm879, %v3242, %v3246
        %v3249 = vshrl.u32 %v3047, 16
        %v3251 = vrot.slane %v3249, 4
        %v3252 = vshll.u32 %v3047, 16
        %v3254 = vrot.slane %v3252, 5
        %v3255 = vor.u32 %v3251, %v3254
        %v3256 = vrot.slane %v3255, 4
        %v3258 = vshll.u32 %v3048, 16
        %v3260 = vrot.slane %v3258, 5
        %v3261 = vsel %vm879, %v3256, %v3260
        %v3262 = vshrl.u32 %v3048, 16
        %v3264 = vrot.slane %v3262, 4
        %v3265 = vor.u32 %v3264, %v3260
        %v3266 = vrot.slane %v3265, 4
        %v3268 = vshll.u32 %v3049, 16
        %v3270 = vrot.slane %v3268, 5
        %v3271 = vsel %vm879, %v3266, %v3270
        %v3273 = vshrl.u32 %v3050, 16
        %v3275 = vrot.slane %v3273, 4
        %v3276 = vshll.u32 %v3050, 16
        %v3278 = vrot.slane %v3276, 5
        %v3279 = vor.u32 %v3275, %v3278
        %v3280 = vrot.slane %v3279, 4
        %v3282 = vshll.u32 %v3051, 16
        %v3284 = vrot.slane %v3282, 5
        %v3285 = vsel %vm879, %v3280, %v3284
        %v3286 = vshrl.u32 %v3051, 16
        %v3288 = vrot.slane %v3286, 4
        %v3289 = vor.u32 %v3288, %v3284
        %v3290 = vrot.slane %v3289, 4
        %v3292 = vshll.u32 %v3052, 16
        %v3294 = vrot.slane %v3292, 5
        %v3295 = vsel %vm879, %v3290, %v3294
        %v3297 = vshrl.u32 %v3053, 16
        %v3299 = vrot.slane %v3297, 4
        %v3300 = vshll.u32 %v3053, 16
        %v3302 = vrot.slane %v3300, 5
        %v3303 = vor.u32 %v3299, %v3302
        %v3304 = vrot.slane %v3303, 4
        %v3306 = vshll.u32 %v3054, 16
        %v3308 = vrot.slane %v3306, 5
        %v3309 = vsel %vm879, %v3304, %v3308
        %v3310 = vshrl.u32 %v3054, 16
        %v3312 = vrot.slane %v3310, 4
        %v3313 = vor.u32 %v3312, %v3308
        %v3314 = vrot.slane %v3313, 4
        %v3316 = vshll.u32 %v3055, 16
        %v3318 = vrot.slane %v3316, 5
        %v3319 = vsel %vm879, %v3314, %v3318
        %v3321 = vshrl.u32 %v3056, 16
        %v3323 = vrot.slane %v3321, 4
        %v3324 = vshll.u32 %v3056, 16
        %v3326 = vrot.slane %v3324, 5
        %v3327 = vor.u32 %v3323, %v3326
        %v3328 = vrot.slane %v3327, 4
        %v3330 = vshll.u32 %v3057, 16
        %v3332 = vrot.slane %v3330, 5
        %v3333 = vsel %vm879, %v3328, %v3332
        %v3334 = vshrl.u32 %v3057, 16
        %v3336 = vrot.slane %v3334, 4
        %v3337 = vor.u32 %v3336, %v3332
        %v3338 = vrot.slane %v3337, 4
        %v3340 = vshll.u32 %v3058, 16
        %v3342 = vrot.slane %v3340, 5
        %v3343 = vsel %vm879, %v3338, %v3342
        %v3345 = vshrl.u32 %v3059, 16
        %v3347 = vrot.slane %v3345, 4
        %v3348 = vshll.u32 %v3059, 16
        %v3350 = vrot.slane %v3348, 5
        %v3351 = vor.u32 %v3347, %v3350
        %v3352 = vrot.slane %v3351, 4
        %v3354 = vshll.u32 %v3060, 16
        %v3356 = vrot.slane %v3354, 5
        %v3357 = vsel %vm879, %v3352, %v3356
        %v3358 = vshrl.u32 %v3060, 16
        %v3360 = vrot.slane %v3358, 4
        %v3361 = vor.u32 %v3360, %v3356
        %v3362 = vrot.slane %v3361, 4
        %v3364 = vshll.u32 %v3061, 16
        %v3366 = vrot.slane %v3364, 5
        %v3367 = vsel %vm879, %v3362, %v3366
        %v3369 = vshrl.u32 %v3062, 16
        %v3371 = vrot.slane %v3369, 4
        %v3372 = vshll.u32 %v3062, 16
        %v3374 = vrot.slane %v3372, 5
        %v3375 = vor.u32 %v3371, %v3374
        %v3376 = vrot.slane %v3375, 4
        %v3378 = vshll.u32 %v3063, 16
        %v3380 = vrot.slane %v3378, 5
        %v3381 = vsel %vm879, %v3376, %v3380
        %v3382 = vshrl.u32 %v3063, 16
        %v3384 = vrot.slane %v3382, 4
        %v3385 = vor.u32 %v3384, %v3380
        %v3386 = vrot.slane %v3385, 4
        %v3388 = vshll.u32 %v3064, 16
        %v3390 = vrot.slane %v3388, 5
        %v3391 = vsel %vm879, %v3386, %v3390
        %v3393 = vshrl.u32 %v3065, 16
        %v3395 = vrot.slane %v3393, 4
        %v3396 = vshll.u32 %v3065, 16
        %v3398 = vrot.slane %v3396, 5
        %v3399 = vor.u32 %v3395, %v3398
        %v3400 = vrot.slane %v3399, 4
        %v3402 = vshll.u32 %v3066, 16
        %v3404 = vrot.slane %v3402, 5
        %v3405 = vsel %vm879, %v3400, %v3404
        %v3406 = vshrl.u32 %v3066, 16
        %v3408 = vrot.slane %v3406, 4
        %v3409 = vor.u32 %v3408, %v3404
        %v3410 = vrot.slane %v3409, 4
        %v3412 = vshll.u32 %v3067, 16
        %v3414 = vrot.slane %v3412, 5
        %v3415 = vsel %vm879, %v3410, %v3414
        %v3417 = vshrl.u32 %v3068, 16
        %v3419 = vrot.slane %v3417, 4
        %v3420 = vshll.u32 %v3068, 16
        %v3422 = vrot.slane %v3420, 5
        %v3423 = vor.u32 %v3419, %v3422
        %v3424 = vrot.slane %v3423, 4
        %v3426 = vshll.u32 %v3069, 16
        %v3428 = vrot.slane %v3426, 5
        %v3429 = vsel %vm879, %v3424, %v3428
        %v3430 = vshrl.u32 %v3069, 16
        %v3432 = vrot.slane %v3430, 4
        %v3433 = vor.u32 %v3432, %v3428
        %v3434 = vrot.slane %v3433, 4
        %v3436 = vshll.u32 %v3070, 16
        %v3438 = vrot.slane %v3436, 5
        %v3439 = vsel %vm879, %v3434, %v3438
        %v3441 = vshrl.u32 %v3071, 16
        %v3443 = vrot.slane %v3441, 4
        %v3444 = vshll.u32 %v3071, 16
        %v3446 = vrot.slane %v3444, 5
        %v3447 = vor.u32 %v3443, %v3446
        %v3448 = vrot.slane %v3447, 4
        %v3450 = vshll.u32 %v3072, 16
        %v3452 = vrot.slane %v3450, 5
        %v3453 = vsel %vm879, %v3448, %v3452
        %v3454 = vshrl.u32 %v3072, 16
        %v3456 = vrot.slane %v3454, 4
        %v3457 = vor.u32 %v3456, %v3452
        %v3458 = vrot.slane %v3457, 4
        %v3460 = vshll.u32 %v3073, 16
        %v3462 = vrot.slane %v3460, 5
        %v3463 = vsel %vm879, %v3458, %v3462
        %v3512 = vrot.slane %v3026, 5
        %v3513 = vrot.slane %v3512, 4
        %v3514 = vrot.slane %v3027, 5
        %v3515 = vsel %vm1314, %v3513, %v3514
        %v3516 = vrot.slane %v3514, 4
        %v3517 = vrot.slane %v3028, 5
        %v3518 = vsel %vm1314, %v3516, %v3517
        %v3519 = vrot.slane %v3029, 5
        %v3520 = vrot.slane %v3519, 4
        %v3521 = vrot.slane %v3030, 5
        %v3522 = vsel %vm1314, %v3520, %v3521
        %v3523 = vrot.slane %v3521, 4
        %v3524 = vrot.slane %v3031, 5
        %v3525 = vsel %vm1314, %v3523, %v3524
        %v3526 = vrot.slane %v3032, 5
        %v3527 = vrot.slane %v3526, 4
        %v3528 = vrot.slane %v3033, 5
        %v3529 = vsel %vm1314, %v3527, %v3528
        %v3530 = vrot.slane %v3528, 4
        %v3531 = vrot.slane %v3034, 5
        %v3532 = vsel %vm1314, %v3530, %v3531
        %v3533 = vrot.slane %v3035, 5
        %v3534 = vrot.slane %v3533, 4
        %v3535 = vrot.slane %v3036, 5
        %v3536 = vsel %vm1314, %v3534, %v3535
        %v3537 = vrot.slane %v3535, 4
        %v3538 = vrot.slane %v3037, 5
        %v3539 = vsel %vm1314, %v3537, %v3538
        %v3540 = vrot.slane %v3038, 5
        %v3541 = vrot.slane %v3540, 4
        %v3542 = vrot.slane %v3039, 5
        %v3543 = vsel %vm1314, %v3541, %v3542
        %v3544 = vrot.slane %v3542, 4
        %v3545 = vrot.slane %v3040, 5
        %v3546 = vsel %vm1314, %v3544, %v3545
        %v3547 = vrot.slane %v3041, 5
        %v3548 = vrot.slane %v3547, 4
        %v3549 = vrot.slane %v3042, 5
        %v3550 = vsel %vm1314, %v3548, %v3549
        %v3551 = vrot.slane %v3549, 4
        %v3552 = vrot.slane %v3043, 5
        %v3553 = vsel %vm1314, %v3551, %v3552
        %v3554 = vrot.slane %v3044, 5
        %v3555 = vrot.slane %v3554, 4
        %v3556 = vrot.slane %v3045, 5
        %v3557 = vsel %vm1314, %v3555, %v3556
        %v3558 = vrot.slane %v3556, 4
        %v3559 = vrot.slane %v3046, 5
        %v3560 = vsel %vm1314, %v3558, %v3559
        %v3561 = vrot.slane %v3047, 5
        %v3562 = vrot.slane %v3561, 4
        %v3563 = vrot.slane %v3048, 5
        %v3564 = vsel %vm1314, %v3562, %v3563
        %v3565 = vrot.slane %v3563, 4
        %v3566 = vrot.slane %v3049, 5
        %v3567 = vsel %vm1314, %v3565, %v3566
        %v3568 = vrot.slane %v3050, 5
        %v3569 = vrot.slane %v3568, 4
        %v3570 = vrot.slane %v3051, 5
        %v3571 = vsel %vm1314, %v3569, %v3570
        %v3572 = vrot.slane %v3570, 4
        %v3573 = vrot.slane %v3052, 5
        %v3574 = vsel %vm1314, %v3572, %v3573
        %v3575 = vrot.slane %v3053, 5
        %v3576 = vrot.slane %v3575, 4
        %v3577 = vrot.slane %v3054, 5
        %v3578 = vsel %vm1314, %v3576, %v3577
        %v3579 = vrot.slane %v3577, 4
        %v3580 = vrot.slane %v3055, 5
        %v3581 = vsel %vm1314, %v3579, %v3580
        %v3582 = vrot.slane %v3056, 5
        %v3583 = vrot.slane %v3582, 4
        %v3584 = vrot.slane %v3057, 5
        %v3585 = vsel %vm1314, %v3583, %v3584
        %v3586 = vrot.slane %v3584, 4
        %v3587 = vrot.slane %v3058, 5
        %v3588 = vsel %vm1314, %v3586, %v3587
        %v3589 = vrot.slane %v3059, 5
        %v3590 = vrot.slane %v3589, 4
        %v3591 = vrot.slane %v3060, 5
        %v3592 = vsel %vm1314, %v3590, %v3591
        %v3593 = vrot.slane %v3591, 4
        %v3594 = vrot.slane %v3061, 5
        %v3595 = vsel %vm1314, %v3593, %v3594
        %v3596 = vrot.slane %v3062, 5
        %v3597 = vrot.slane %v3596, 4
        %v3598 = vrot.slane %v3063, 5
        %v3599 = vsel %vm1314, %v3597, %v3598
        %v3600 = vrot.slane %v3598, 4
        %v3601 = vrot.slane %v3064, 5
        %v3602 = vsel %vm1314, %v3600, %v3601
        %v3603 = vrot.slane %v3065, 5
        %v3604 = vrot.slane %v3603, 4
        %v3605 = vrot.slane %v3066, 5
        %v3606 = vsel %vm1314, %v3604, %v3605
        %v3607 = vrot.slane %v3605, 4
        %v3608 = vrot.slane %v3067, 5
        %v3609 = vsel %vm1314, %v3607, %v3608
        %v3610 = vrot.slane %v3068, 5
        %v3611 = vrot.slane %v3610, 4
        %v3612 = vrot.slane %v3069, 5
        %v3613 = vsel %vm1314, %v3611, %v3612
        %v3614 = vrot.slane %v3612, 4
        %v3615 = vrot.slane %v3070, 5
        %v3616 = vsel %vm1314, %v3614, %v3615
        %v3617 = vrot.slane %v3071, 5
        %v3618 = vrot.slane %v3617, 4
        %v3619 = vrot.slane %v3072, 5
        %v3620 = vsel %vm1314, %v3618, %v3619
        %v3621 = vrot.slane %v3619, 4
        %v3622 = vrot.slane %v3073, 5
        %v3623 = vsel %vm1314, %v3621, %v3622
        %v3625 = vshrl.u32 %v3074, 16
        %v3627 = vrot.slane %v3625, 4
        %v3628 = vshll.u32 %v3074, 16
        %v3630 = vrot.slane %v3628, 5
        %v3631 = vor.u32 %v3627, %v3630
        %v3632 = vrot.slane %v3631, 4
        %v3634 = vshll.u32 %v3075, 16
        %v3636 = vrot.slane %v3634, 5
        %v3637 = vsel %vm879, %v3632, %v3636
        %v3638 = vshrl.u32 %v3075, 16
        %v3640 = vrot.slane %v3638, 4
        %v3641 = vor.u32 %v3640, %v3636
        %v3642 = vrot.slane %v3641, 4
        %v3644 = vshll.u32 %v3076, 16
        %v3646 = vrot.slane %v3644, 5
        %v3647 = vsel %vm879, %v3642, %v3646
        %v3651 = vrot.slane %v3074, 5
        %v3652 = vrot.slane %v3651, 4
        %v3653 = vrot.slane %v3075, 5
        %v3654 = vsel %vm1314, %v3652, %v3653
        %v3655 = vrot.slane %v3653, 4
        %v3656 = vrot.slane %v3076, 5
        %v3657 = vsel %vm1314, %v3655, %v3656
        %v3659 = vshrl.u32 %v3077, 16
        %v3661 = vrot.slane %v3659, 4
        %v3662 = vshll.u32 %v3077, 16
        %v3664 = vrot.slane %v3662, 5
        %v3665 = vor.u32 %v3661, %v3664
        %v3666 = vrot.slane %v3665, 4
        %v3668 = vshll.u32 %v3078, 16
        %v3670 = vrot.slane %v3668, 5
        %v3671 = vsel %vm879, %v3666, %v3670
        %v3672 = vshrl.u32 %v3078, 16
        %v3674 = vrot.slane %v3672, 4
        %v3675 = vor.u32 %v3674, %v3670
        %v3676 = vrot.slane %v3675, 4
        %v3678 = vshll.u32 %v3079, 16
        %v3680 = vrot.slane %v3678, 5
        %v3681 = vsel %vm879, %v3676, %v3680
        %v3685 = vrot.slane %v3077, 5
        %v3686 = vrot.slane %v3685, 4
        %v3687 = vrot.slane %v3078, 5
        %v3688 = vsel %vm1314, %v3686, %v3687
        %v3689 = vrot.slane %v3687, 4
        %v3690 = vrot.slane %v3079, 5
        %v3691 = vsel %vm1314, %v3689, %v3690
        %v3692 = vunpack.c.l.b16 %v3026
        %v3693 = vunpack.c.l.b16 %v3027
        %v3694 = vunpack.c.l.b16 %v3029
        %v3695 = vunpack.c.l.b16 %v3030
        %v3696 = vunpack.c.l.b16 %v3032
        %v3697 = vunpack.c.l.b16 %v3033
        %v3698 = vunpack.c.l.b16 %v3035
        %v3699 = vunpack.c.l.b16 %v3036
        %v3700 = vunpack.c.l.b16 %v3038
        %v3701 = vunpack.c.l.b16 %v3039
        %v3702 = vunpack.c.l.b16 %v3041
        %v3703 = vunpack.c.l.b16 %v3042
        %v3704 = vunpack.c.l.b16 %v3044
        %v3705 = vunpack.c.l.b16 %v3045
        %v3706 = vunpack.c.l.b16 %v3047
        %v3707 = vunpack.c.l.b16 %v3048
        %v3708 = vunpack.c.l.b16 %v3050
        %v3709 = vunpack.c.l.b16 %v3051
        %v3710 = vunpack.c.l.b16 %v3053
        %v3711 = vunpack.c.l.b16 %v3054
        %v3712 = vunpack.c.l.b16 %v3056
        %v3713 = vunpack.c.l.b16 %v3057
        %v3714 = vunpack.c.l.b16 %v3059
        %v3715 = vunpack.c.l.b16 %v3060
        %v3716 = vunpack.c.l.b16 %v3062
        %v3717 = vunpack.c.l.b16 %v3063
        %v3718 = vunpack.c.l.b16 %v3065
        %v3719 = vunpack.c.l.b16 %v3066
        %v3720 = vunpack.c.l.b16 %v3068
        %v3721 = vunpack.c.l.b16 %v3069
        %v3722 = vunpack.c.l.b16 %v3071
        %v3723 = vunpack.c.l.b16 %v3072
        %v3724 = vpack.c.b16 %v3693, %v3692
        %v3725 = vpack.c.b16 %v3695, %v3694
        %v3726 = vpack.c.b16 %v3697, %v3696
        %v3727 = vpack.c.b16 %v3699, %v3698
        %v3728 = vpack.c.b16 %v3701, %v3700
        %v3729 = vpack.c.b16 %v3703, %v3702
        %v3730 = vpack.c.b16 %v3705, %v3704
        %v3731 = vpack.c.b16 %v3707, %v3706
        %v3732 = vpack.c.b16 %v3709, %v3708
        %v3733 = vpack.c.b16 %v3711, %v3710
        %v3734 = vpack.c.b16 %v3713, %v3712
        %v3735 = vpack.c.b16 %v3715, %v3714
        %v3736 = vpack.c.b16 %v3717, %v3716
        %v3737 = vpack.c.b16 %v3719, %v3718
        %v3738 = vpack.c.b16 %v3721, %v3720
        %v3739 = vpack.c.b16 %v3723, %v3722
        %v3740 = vunpack.c.l.b16 %v3093
        %v3741 = vunpack.c.l.b16 %v3103
        %v3742 = vunpack.c.l.b16 %v3117
        %v3743 = vunpack.c.l.b16 %v3127
        %v3744 = vunpack.c.l.b16 %v3141
        %v3745 = vunpack.c.l.b16 %v3151
        %v3746 = vunpack.c.l.b16 %v3165
        %v3747 = vunpack.c.l.b16 %v3175
        %v3748 = vunpack.c.l.b16 %v3189
        %v3749 = vunpack.c.l.b16 %v3199
        %v3750 = vunpack.c.l.b16 %v3213
        %v3751 = vunpack.c.l.b16 %v3223
        %v3752 = vunpack.c.l.b16 %v3237
        %v3753 = vunpack.c.l.b16 %v3247
        %v3754 = vunpack.c.l.b16 %v3261
        %v3755 = vunpack.c.l.b16 %v3271
        %v3756 = vunpack.c.l.b16 %v3285
        %v3757 = vunpack.c.l.b16 %v3295
        %v3758 = vunpack.c.l.b16 %v3309
        %v3759 = vunpack.c.l.b16 %v3319
        %v3760 = vunpack.c.l.b16 %v3333
        %v3761 = vunpack.c.l.b16 %v3343
        %v3762 = vunpack.c.l.b16 %v3357
        %v3763 = vunpack.c.l.b16 %v3367
        %v3764 = vunpack.c.l.b16 %v3381
        %v3765 = vunpack.c.l.b16 %v3391
        %v3766 = vunpack.c.l.b16 %v3405
        %v3767 = vunpack.c.l.b16 %v3415
        %v3768 = vunpack.c.l.b16 %v3429
        %v3769 = vunpack.c.l.b16 %v3439
        %v3770 = vunpack.c.l.b16 %v3453
        %v3771 = vunpack.c.l.b16 %v3463
        %v3772 = vpack.c.b16 %v3741, %v3740
        %v3773 = vpack.c.b16 %v3743, %v3742
        %v3774 = vpack.c.b16 %v3745, %v3744
        %v3775 = vpack.c.b16 %v3747, %v3746
        %v3776 = vpack.c.b16 %v3749, %v3748
        %v3777 = vpack.c.b16 %v3751, %v3750
        %v3778 = vpack.c.b16 %v3753, %v3752
        %v3779 = vpack.c.b16 %v3755, %v3754
        %v3780 = vpack.c.b16 %v3757, %v3756
        %v3781 = vpack.c.b16 %v3759, %v3758
        %v3782 = vpack.c.b16 %v3761, %v3760
        %v3783 = vpack.c.b16 %v3763, %v3762
        %v3784 = vpack.c.b16 %v3765, %v3764
        %v3785 = vpack.c.b16 %v3767, %v3766
        %v3786 = vpack.c.b16 %v3769, %v3768
        %v3787 = vpack.c.b16 %v3771, %v3770
        %3788 = vrot.lane.b32.xlu0 %v3772, 4
        %v3789 = vpop.permute.xlu0 %3788
        %3790 = vrot.lane.b32.xlu0 %v3773, 4
        %v3791 = vpop.permute.xlu0 %3790
        %3792 = vrot.lane.b32.xlu0 %v3774, 4
        %v3793 = vpop.permute.xlu0 %3792
        %3794 = vrot.lane.b32.xlu0 %v3775, 4
        %v3795 = vpop.permute.xlu0 %3794
        %3796 = vrot.lane.b32.xlu0 %v3776, 4
        %v3797 = vpop.permute.xlu0 %3796
        %3798 = vrot.lane.b32.xlu0 %v3777, 4
        %v3799 = vpop.permute.xlu0 %3798
        %3800 = vrot.lane.b32.xlu0 %v3778, 4
        %v3801 = vpop.permute.xlu0 %3800
        %3802 = vrot.lane.b32.xlu0 %v3779, 4
        %v3803 = vpop.permute.xlu0 %3802
        %3804 = vrot.lane.b32.xlu0 %v3780, 4
        %v3805 = vpop.permute.xlu0 %3804
        %3806 = vrot.lane.b32.xlu0 %v3781, 4
        %v3807 = vpop.permute.xlu0 %3806
        %3808 = vrot.lane.b32.xlu0 %v3782, 4
        %v3809 = vpop.permute.xlu0 %3808
        %3810 = vrot.lane.b32.xlu0 %v3783, 4
        %v3811 = vpop.permute.xlu0 %3810
        %3812 = vrot.lane.b32.xlu0 %v3784, 4
        %v3813 = vpop.permute.xlu0 %3812
        %3814 = vrot.lane.b32.xlu0 %v3785, 4
        %v3815 = vpop.permute.xlu0 %3814
        %3816 = vrot.lane.b32.xlu0 %v3786, 4
        %v3817 = vpop.permute.xlu0 %3816
        %3818 = vrot.lane.b32.xlu0 %v3787, 4
        %v3819 = vpop.permute.xlu0 %3818
        %v3820 = vunpack.c.l.b16 %v3515
        %v3821 = vunpack.c.l.b16 %v3518
        %v3822 = vunpack.c.l.b16 %v3522
        %v3823 = vunpack.c.l.b16 %v3525
        %v3824 = vunpack.c.l.b16 %v3529
        %v3825 = vunpack.c.l.b16 %v3532
        %v3826 = vunpack.c.l.b16 %v3536
        %v3827 = vunpack.c.l.b16 %v3539
        %v3828 = vunpack.c.l.b16 %v3543
        %v3829 = vunpack.c.l.b16 %v3546
        %v3830 = vunpack.c.l.b16 %v3550
        %v3831 = vunpack.c.l.b16 %v3553
        %v3832 = vunpack.c.l.b16 %v3557
        %v3833 = vunpack.c.l.b16 %v3560
        %v3834 = vunpack.c.l.b16 %v3564
        %v3835 = vunpack.c.l.b16 %v3567
        %v3836 = vunpack.c.l.b16 %v3571
        %v3837 = vunpack.c.l.b16 %v3574
        %v3838 = vunpack.c.l.b16 %v3578
        %v3839 = vunpack.c.l.b16 %v3581
        %v3840 = vunpack.c.l.b16 %v3585
        %v3841 = vunpack.c.l.b16 %v3588
        %v3842 = vunpack.c.l.b16 %v3592
        %v3843 = vunpack.c.l.b16 %v3595
        %v3844 = vunpack.c.l.b16 %v3599
        %v3845 = vunpack.c.l.b16 %v3602
        %v3846 = vunpack.c.l.b16 %v3606
        %v3847 = vunpack.c.l.b16 %v3609
        %v3848 = vunpack.c.l.b16 %v3613
        %v3849 = vunpack.c.l.b16 %v3616
        %v3850 = vunpack.c.l.b16 %v3620
        %v3851 = vunpack.c.l.b16 %v3623
        %v3852 = vpack.c.b16 %v3821, %v3820
        %v3853 = vpack.c.b16 %v3823, %v3822
        %v3854 = vpack.c.b16 %v3825, %v3824
        %v3855 = vpack.c.b16 %v3827, %v3826
        %v3856 = vpack.c.b16 %v3829, %v3828
        %v3857 = vpack.c.b16 %v3831, %v3830
        %v3858 = vpack.c.b16 %v3833, %v3832
        %v3859 = vpack.c.b16 %v3835, %v3834
        %v3860 = vpack.c.b16 %v3837, %v3836
        %v3861 = vpack.c.b16 %v3839, %v3838
        %v3862 = vpack.c.b16 %v3841, %v3840
        %v3863 = vpack.c.b16 %v3843, %v3842
        %v3864 = vpack.c.b16 %v3845, %v3844
        %v3865 = vpack.c.b16 %v3847, %v3846
        %v3866 = vpack.c.b16 %v3849, %v3848
        %v3867 = vpack.c.b16 %v3851, %v3850
        %3868 = vrot.lane.b32.xlu0 %v3852, 8
        %v3869 = vpop.permute.xlu0 %3868
        %3870 = vrot.lane.b32.xlu0 %v3853, 8
        %v3871 = vpop.permute.xlu0 %3870
        %3872 = vrot.lane.b32.xlu0 %v3854, 8
        %v3873 = vpop.permute.xlu0 %3872
        %3874 = vrot.lane.b32.xlu0 %v3855, 8
        %v3875 = vpop.permute.xlu0 %3874
        %3876 = vrot.lane.b32.xlu0 %v3856, 8
        %v3877 = vpop.permute.xlu0 %3876
        %3878 = vrot.lane.b32.xlu0 %v3857, 8
        %v3879 = vpop.permute.xlu0 %3878
        %3880 = vrot.lane.b32.xlu0 %v3858, 8
        %v3881 = vpop.permute.xlu0 %3880
        %3882 = vrot.lane.b32.xlu0 %v3859, 8
        %v3883 = vpop.permute.xlu0 %3882
        %3884 = vrot.lane.b32.xlu0 %v3860, 8
        %v3885 = vpop.permute.xlu0 %3884
        %3886 = vrot.lane.b32.xlu0 %v3861, 8
        %v3887 = vpop.permute.xlu0 %3886
        %3888 = vrot.lane.b32.xlu0 %v3862, 8
        %v3889 = vpop.permute.xlu0 %3888
        %3890 = vrot.lane.b32.xlu0 %v3863, 8
        %v3891 = vpop.permute.xlu0 %3890
        %3892 = vrot.lane.b32.xlu0 %v3864, 8
        %v3893 = vpop.permute.xlu0 %3892
        %3894 = vrot.lane.b32.xlu0 %v3865, 8
        %v3895 = vpop.permute.xlu0 %3894
        %3896 = vrot.lane.b32.xlu0 %v3866, 8
        %v3897 = vpop.permute.xlu0 %3896
        %3898 = vrot.lane.b32.xlu0 %v3867, 8
        %v3899 = vpop.permute.xlu0 %3898
        %v3900 = vunpack.c.l.b16 %v3074
        %v3901 = vunpack.c.l.b16 %v3075
        %v3902 = vpack.c.b16 %v3901, %v3900
        %3903 = vrot.lane.b32.xlu0 %v3725, 12
        %v3904 = vpop.permute.xlu0 %3903
        %3905 = vrot.lane.b32.xlu0 %v3726, 12
        %v3906 = vpop.permute.xlu0 %3905
        %3907 = vrot.lane.b32.xlu0 %v3727, 12
        %v3908 = vpop.permute.xlu0 %3907
        %3909 = vrot.lane.b32.xlu0 %v3728, 12
        %v3910 = vpop.permute.xlu0 %3909
        %3911 = vrot.lane.b32.xlu0 %v3729, 12
        %v3912 = vpop.permute.xlu0 %3911
        %3913 = vrot.lane.b32.xlu0 %v3730, 12
        %v3914 = vpop.permute.xlu0 %3913
        %3915 = vrot.lane.b32.xlu0 %v3731, 12
        %v3916 = vpop.permute.xlu0 %3915
        %3917 = vrot.lane.b32.xlu0 %v3732, 12
        %v3918 = vpop.permute.xlu0 %3917
        %3919 = vrot.lane.b32.xlu0 %v3733, 12
        %v3920 = vpop.permute.xlu0 %3919
        %3921 = vrot.lane.b32.xlu0 %v3734, 12
        %v3922 = vpop.permute.xlu0 %3921
        %3923 = vrot.lane.b32.xlu0 %v3735, 12
        %v3924 = vpop.permute.xlu0 %3923
        %3925 = vrot.lane.b32.xlu0 %v3736, 12
        %v3926 = vpop.permute.xlu0 %3925
        %3927 = vrot.lane.b32.xlu0 %v3737, 12
        %v3928 = vpop.permute.xlu0 %3927
        %3929 = vrot.lane.b32.xlu0 %v3738, 12
        %v3930 = vpop.permute.xlu0 %3929
        %3931 = vrot.lane.b32.xlu0 %v3739, 12
        %v3932 = vpop.permute.xlu0 %3931
        %3933 = vrot.lane.b32.xlu0 %v3902, 12
        %v3934 = vpop.permute.xlu0 %3933
        %v3935 = vunpack.c.l.b16 %v3637
        %v3936 = vunpack.c.l.b16 %v3647
        %v3937 = vpack.c.b16 %v3936, %v3935
        %3938 = vrot.lane.b32.xlu0 %v3773, 16
        %v3939 = vpop.permute.xlu0 %3938
        %3940 = vrot.lane.b32.xlu0 %v3774, 16
        %v3941 = vpop.permute.xlu0 %3940
        %3942 = vrot.lane.b32.xlu0 %v3775, 16
        %v3943 = vpop.permute.xlu0 %3942
        %3944 = vrot.lane.b32.xlu0 %v3776, 16
        %v3945 = vpop.permute.xlu0 %3944
        %3946 = vrot.lane.b32.xlu0 %v3777, 16
        %v3947 = vpop.permute.xlu0 %3946
        %3948 = vrot.lane.b32.xlu0 %v3778, 16
        %v3949 = vpop.permute.xlu0 %3948
        %3950 = vrot.lane.b32.xlu0 %v3779, 16
        %v3951 = vpop.permute.xlu0 %3950
        %3952 = vrot.lane.b32.xlu0 %v3780, 16
        %v3953 = vpop.permute.xlu0 %3952
        %3954 = vrot.lane.b32.xlu0 %v3781, 16
        %v3955 = vpop.permute.xlu0 %3954
        %3956 = vrot.lane.b32.xlu0 %v3782, 16
        %v3957 = vpop.permute.xlu0 %3956
        %3958 = vrot.lane.b32.xlu0 %v3783, 16
        %v3959 = vpop.permute.xlu0 %3958
        %3960 = vrot.lane.b32.xlu0 %v3784, 16
        %v3961 = vpop.permute.xlu0 %3960
        %3962 = vrot.lane.b32.xlu0 %v3785, 16
        %v3963 = vpop.permute.xlu0 %3962
        %3964 = vrot.lane.b32.xlu0 %v3786, 16
        %v3965 = vpop.permute.xlu0 %3964
        %3966 = vrot.lane.b32.xlu0 %v3787, 16
        %v3967 = vpop.permute.xlu0 %3966
        %3968 = vrot.lane.b32.xlu0 %v3937, 16
        %v3969 = vpop.permute.xlu0 %3968
        %v3970 = vunpack.c.l.b16 %v3654
        %v3971 = vunpack.c.l.b16 %v3657
        %v3972 = vpack.c.b16 %v3971, %v3970
        %3973 = vrot.lane.b32.xlu0 %v3853, 20
        %v3974 = vpop.permute.xlu0 %3973
        %3975 = vrot.lane.b32.xlu0 %v3854, 20
        %v3976 = vpop.permute.xlu0 %3975
        %3977 = vrot.lane.b32.xlu0 %v3855, 20
        %v3978 = vpop.permute.xlu0 %3977
        %3979 = vrot.lane.b32.xlu0 %v3856, 20
        %v3980 = vpop.permute.xlu0 %3979
        %3981 = vrot.lane.b32.xlu0 %v3857, 20
        %v3982 = vpop.permute.xlu0 %3981
        %3983 = vrot.lane.b32.xlu0 %v3858, 20
        %v3984 = vpop.permute.xlu0 %3983
        %3985 = vrot.lane.b32.xlu0 %v3859, 20
        %v3986 = vpop.permute.xlu0 %3985
        %3987 = vrot.lane.b32.xlu0 %v3860, 20
        %v3988 = vpop.permute.xlu0 %3987
        %3989 = vrot.lane.b32.xlu0 %v3861, 20
        %v3990 = vpop.permute.xlu0 %3989
        %3991 = vrot.lane.b32.xlu0 %v3862, 20
        %v3992 = vpop.permute.xlu0 %3991
        %3993 = vrot.lane.b32.xlu0 %v3863, 20
        %v3994 = vpop.permute.xlu0 %3993
        %3995 = vrot.lane.b32.xlu0 %v3864, 20
        %v3996 = vpop.permute.xlu0 %3995
        %3997 = vrot.lane.b32.xlu0 %v3865, 20
        %v3998 = vpop.permute.xlu0 %3997
        %3999 = vrot.lane.b32.xlu0 %v3866, 20
        %v4000 = vpop.permute.xlu0 %3999
        %4001 = vrot.lane.b32.xlu0 %v3867, 20
        %v4002 = vpop.permute.xlu0 %4001
        %4003 = vrot.lane.b32.xlu0 %v3972, 20
        %v4004 = vpop.permute.xlu0 %4003
        %v4005 = vunpack.c.l.b16 %v3077
        %v4006 = vunpack.c.l.b16 %v3078
        %v4007 = vpack.c.b16 %v4006, %v4005
        %4008 = vrot.lane.b32.xlu0 %v3726, 24
        %v4009 = vpop.permute.xlu0 %4008
        %4010 = vrot.lane.b32.xlu0 %v3727, 24
        %v4011 = vpop.permute.xlu0 %4010
        %4012 = vrot.lane.b32.xlu0 %v3728, 24
        %v4013 = vpop.permute.xlu0 %4012
        %4014 = vrot.lane.b32.xlu0 %v3729, 24
        %v4015 = vpop.permute.xlu0 %4014
        %4016 = vrot.lane.b32.xlu0 %v3730, 24
        %v4017 = vpop.permute.xlu0 %4016
        %4018 = vrot.lane.b32.xlu0 %v3731, 24
        %v4019 = vpop.permute.xlu0 %4018
        %4020 = vrot.lane.b32.xlu0 %v3732, 24
        %v4021 = vpop.permute.xlu0 %4020
        %4022 = vrot.lane.b32.xlu0 %v3733, 24
        %v4023 = vpop.permute.xlu0 %4022
        %4024 = vrot.lane.b32.xlu0 %v3734, 24
        %v4025 = vpop.permute.xlu0 %4024
        %4026 = vrot.lane.b32.xlu0 %v3735, 24
        %v4027 = vpop.permute.xlu0 %4026
        %4028 = vrot.lane.b32.xlu0 %v3736, 24
        %v4029 = vpop.permute.xlu0 %4028
        %4030 = vrot.lane.b32.xlu0 %v3737, 24
        %v4031 = vpop.permute.xlu0 %4030
        %4032 = vrot.lane.b32.xlu0 %v3738, 24
        %v4033 = vpop.permute.xlu0 %4032
        %4034 = vrot.lane.b32.xlu0 %v3739, 24
        %v4035 = vpop.permute.xlu0 %4034
        %4036 = vrot.lane.b32.xlu0 %v3902, 24
        %v4037 = vpop.permute.xlu0 %4036
        %4038 = vrot.lane.b32.xlu0 %v4007, 24
        %v4039 = vpop.permute.xlu0 %4038
        %v4040 = vunpack.c.l.b16 %v3671
        %v4041 = vunpack.c.l.b16 %v3681
        %v4042 = vpack.c.b16 %v4041, %v4040
        %4043 = vrot.lane.b32.xlu0 %v3774, 28
        %v4044 = vpop.permute.xlu0 %4043
        %4045 = vrot.lane.b32.xlu0 %v3775, 28
        %v4046 = vpop.permute.xlu0 %4045
        %4047 = vrot.lane.b32.xlu0 %v3776, 28
        %v4048 = vpop.permute.xlu0 %4047
        %4049 = vrot.lane.b32.xlu0 %v3777, 28
        %v4050 = vpop.permute.xlu0 %4049
        %4051 = vrot.lane.b32.xlu0 %v3778, 28
        %v4052 = vpop.permute.xlu0 %4051
        %4053 = vrot.lane.b32.xlu0 %v3779, 28
        %v4054 = vpop.permute.xlu0 %4053
        %4055 = vrot.lane.b32.xlu0 %v3780, 28
        %v4056 = vpop.permute.xlu0 %4055
        %4057 = vrot.lane.b32.xlu0 %v3781, 28
        %v4058 = vpop.permute.xlu0 %4057
        %4059 = vrot.lane.b32.xlu0 %v3782, 28
        %v4060 = vpop.permute.xlu0 %4059
        %4061 = vrot.lane.b32.xlu0 %v3783, 28
        %v4062 = vpop.permute.xlu0 %4061
        %4063 = vrot.lane.b32.xlu0 %v3784, 28
        %v4064 = vpop.permute.xlu0 %4063
        %4065 = vrot.lane.b32.xlu0 %v3785, 28
        %v4066 = vpop.permute.xlu0 %4065
        %4067 = vrot.lane.b32.xlu0 %v3786, 28
        %v4068 = vpop.permute.xlu0 %4067
        %4069 = vrot.lane.b32.xlu0 %v3787, 28
        %v4070 = vpop.permute.xlu0 %4069
        %4071 = vrot.lane.b32.xlu0 %v3937, 28
        %v4072 = vpop.permute.xlu0 %4071
        %4073 = vrot.lane.b32.xlu0 %v4042, 28
        %v4074 = vpop.permute.xlu0 %4073
        %v4075 = vunpack.c.l.b16 %v3688
        %v4076 = vunpack.c.l.b16 %v3691
        %v4077 = vpack.c.b16 %v4076, %v4075
        %4078 = vrot.lane.b32.xlu0 %v3854, 32
        %v4079 = vpop.permute.xlu0 %4078
        %4080 = vrot.lane.b32.xlu0 %v3855, 32
        %v4081 = vpop.permute.xlu0 %4080
        %4082 = vrot.lane.b32.xlu0 %v3856, 32
        %v4083 = vpop.permute.xlu0 %4082
        %4084 = vrot.lane.b32.xlu0 %v3857, 32
        %v4085 = vpop.permute.xlu0 %4084
        %4086 = vrot.lane.b32.xlu0 %v3858, 32
        %v4087 = vpop.permute.xlu0 %4086
        %4088 = vrot.lane.b32.xlu0 %v3859, 32
        %v4089 = vpop.permute.xlu0 %4088
        %4090 = vrot.lane.b32.xlu0 %v3860, 32
        %v4091 = vpop.permute.xlu0 %4090
        %4092 = vrot.lane.b32.xlu0 %v3861, 32
        %v4093 = vpop.permute.xlu0 %4092
        %4094 = vrot.lane.b32.xlu0 %v3862, 32
        %v4095 = vpop.permute.xlu0 %4094
        %4096 = vrot.lane.b32.xlu0 %v3863, 32
        %v4097 = vpop.permute.xlu0 %4096
        %4098 = vrot.lane.b32.xlu0 %v3864, 32
        %v4099 = vpop.permute.xlu0 %4098
        %4100 = vrot.lane.b32.xlu0 %v3865, 32
        %v4101 = vpop.permute.xlu0 %4100
        %4102 = vrot.lane.b32.xlu0 %v3866, 32
        %v4103 = vpop.permute.xlu0 %4102
        %4104 = vrot.lane.b32.xlu0 %v3867, 32
        %v4105 = vpop.permute.xlu0 %4104
        %4106 = vrot.lane.b32.xlu0 %v3972, 32
        %v4107 = vpop.permute.xlu0 %4106
        %4108 = vrot.lane.b32.xlu0 %v4077, 32
        %v4109 = vpop.permute.xlu0 %4108
        %v4112 = vsel %vm1913, %v3724, %v3789
        %v4115 = vsel %vm1913, %v3725, %v3791
        %v4118 = vsel %vm1913, %v3726, %v3793
        %v4121 = vsel %vm1913, %v3727, %v3795
        %v4124 = vsel %vm1913, %v3728, %v3797
        %v4127 = vsel %vm1913, %v3729, %v3799
        %v4130 = vsel %vm1913, %v3730, %v3801
        %v4133 = vsel %vm1913, %v3731, %v3803
        %v4136 = vsel %vm1913, %v3732, %v3805
        %v4139 = vsel %vm1913, %v3733, %v3807
        %v4142 = vsel %vm1913, %v3734, %v3809
        %v4145 = vsel %vm1913, %v3735, %v3811
        %v4148 = vsel %vm1913, %v3736, %v3813
        %v4151 = vsel %vm1913, %v3737, %v3815
        %v4154 = vsel %vm1913, %v3738, %v3817
        %v4157 = vsel %vm1913, %v3739, %v3819
        %v4159 = vsel %vm1962, %v4112, %v3869
        %v4161 = vsel %vm1962, %v4115, %v3871
        %v4163 = vsel %vm1962, %v4118, %v3873
        %v4165 = vsel %vm1962, %v4121, %v3875
        %v4167 = vsel %vm1962, %v4124, %v3877
        %v4169 = vsel %vm1962, %v4127, %v3879
        %v4171 = vsel %vm1962, %v4130, %v3881
        %v4173 = vsel %vm1962, %v4133, %v3883
        %v4175 = vsel %vm1962, %v4136, %v3885
        %v4177 = vsel %vm1962, %v4139, %v3887
        %v4179 = vsel %vm1962, %v4142, %v3889
        %v4181 = vsel %vm1962, %v4145, %v3891
        %v4183 = vsel %vm1962, %v4148, %v3893
        %v4185 = vsel %vm1962, %v4151, %v3895
        %v4187 = vsel %vm1962, %v4154, %v3897
        %v4189 = vsel %vm1962, %v4157, %v3899
        %v4191 = vsel %vm1995, %v4159, %v3904
        %v4193 = vsel %vm1995, %v4161, %v3906
        %v4195 = vsel %vm1995, %v4163, %v3908
        %v4197 = vsel %vm1995, %v4165, %v3910
        %v4199 = vsel %vm1995, %v4167, %v3912
        %v4201 = vsel %vm1995, %v4169, %v3914
        %v4203 = vsel %vm1995, %v4171, %v3916
        %v4205 = vsel %vm1995, %v4173, %v3918
        %v4207 = vsel %vm1995, %v4175, %v3920
        %v4209 = vsel %vm1995, %v4177, %v3922
        %v4211 = vsel %vm1995, %v4179, %v3924
        %v4213 = vsel %vm1995, %v4181, %v3926
        %v4215 = vsel %vm1995, %v4183, %v3928
        %v4217 = vsel %vm1995, %v4185, %v3930
        %v4219 = vsel %vm1995, %v4187, %v3932
        %v4221 = vsel %vm1995, %v4189, %v3934
        %v4223 = vsel %vm2028, %v4191, %v3939
        %v4225 = vsel %vm2028, %v4193, %v3941
        %v4227 = vsel %vm2028, %v4195, %v3943
        %v4229 = vsel %vm2028, %v4197, %v3945
        %v4231 = vsel %vm2028, %v4199, %v3947
        %v4233 = vsel %vm2028, %v4201, %v3949
        %v4235 = vsel %vm2028, %v4203, %v3951
        %v4237 = vsel %vm2028, %v4205, %v3953
        %v4239 = vsel %vm2028, %v4207, %v3955
        %v4241 = vsel %vm2028, %v4209, %v3957
        %v4243 = vsel %vm2028, %v4211, %v3959
        %v4245 = vsel %vm2028, %v4213, %v3961
        %v4247 = vsel %vm2028, %v4215, %v3963
        %v4249 = vsel %vm2028, %v4217, %v3965
        %v4251 = vsel %vm2028, %v4219, %v3967
        %v4253 = vsel %vm2028, %v4221, %v3969
        %v4255 = vsel %vm2061, %v4223, %v3974
        %v4257 = vsel %vm2061, %v4225, %v3976
        %v4259 = vsel %vm2061, %v4227, %v3978
        %v4261 = vsel %vm2061, %v4229, %v3980
        %v4263 = vsel %vm2061, %v4231, %v3982
        %v4265 = vsel %vm2061, %v4233, %v3984
        %v4267 = vsel %vm2061, %v4235, %v3986
        %v4269 = vsel %vm2061, %v4237, %v3988
        %v4271 = vsel %vm2061, %v4239, %v3990
        %v4273 = vsel %vm2061, %v4241, %v3992
        %v4275 = vsel %vm2061, %v4243, %v3994
        %v4277 = vsel %vm2061, %v4245, %v3996
        %v4279 = vsel %vm2061, %v4247, %v3998
        %v4281 = vsel %vm2061, %v4249, %v4000
        %v4283 = vsel %vm2061, %v4251, %v4002
        %v4285 = vsel %vm2061, %v4253, %v4004
        %v4287 = vsel %vm2094, %v4255, %v4009
        %v4289 = vsel %vm2094, %v4257, %v4011
        %v4291 = vsel %vm2094, %v4259, %v4013
        %v4293 = vsel %vm2094, %v4261, %v4015
        %v4295 = vsel %vm2094, %v4263, %v4017
        %v4297 = vsel %vm2094, %v4265, %v4019
        %v4299 = vsel %vm2094, %v4267, %v4021
        %v4301 = vsel %vm2094, %v4269, %v4023
        %v4303 = vsel %vm2094, %v4271, %v4025
        %v4305 = vsel %vm2094, %v4273, %v4027
        %v4307 = vsel %vm2094, %v4275, %v4029
        %v4309 = vsel %vm2094, %v4277, %v4031
        %v4311 = vsel %vm2094, %v4279, %v4033
        %v4313 = vsel %vm2094, %v4281, %v4035
        %v4315 = vsel %vm2094, %v4283, %v4037
        %v4317 = vsel %vm2094, %v4285, %v4039
        %v4319 = vsel %vm2127, %v4287, %v4044
        %v4321 = vsel %vm2127, %v4289, %v4046
        %v4323 = vsel %vm2127, %v4291, %v4048
        %v4325 = vsel %vm2127, %v4293, %v4050
        %v4327 = vsel %vm2127, %v4295, %v4052
        %v4329 = vsel %vm2127, %v4297, %v4054
        %v4331 = vsel %vm2127, %v4299, %v4056
        %v4333 = vsel %vm2127, %v4301, %v4058
        %v4335 = vsel %vm2127, %v4303, %v4060
        %v4337 = vsel %vm2127, %v4305, %v4062
        %v4339 = vsel %vm2127, %v4307, %v4064
        %v4341 = vsel %vm2127, %v4309, %v4066
        %v4343 = vsel %vm2127, %v4311, %v4068
        %v4345 = vsel %vm2127, %v4313, %v4070
        %v4347 = vsel %vm2127, %v4315, %v4072
        %v4349 = vsel %vm2127, %v4317, %v4074
        %v4351 = vsel %vm2160, %v4319, %v4079
        %v4353 = vsel %vm2160, %v4321, %v4081
        %v4355 = vsel %vm2160, %v4323, %v4083
        %v4357 = vsel %vm2160, %v4325, %v4085
        %v4359 = vsel %vm2160, %v4327, %v4087
        %v4361 = vsel %vm2160, %v4329, %v4089
        %v4363 = vsel %vm2160, %v4331, %v4091
        %v4365 = vsel %vm2160, %v4333, %v4093
        %v4367 = vsel %vm2160, %v4335, %v4095
        %v4369 = vsel %vm2160, %v4337, %v4097
        %v4371 = vsel %vm2160, %v4339, %v4099
        %v4373 = vsel %vm2160, %v4341, %v4101
        %v4375 = vsel %vm2160, %v4343, %v4103
        %v4377 = vsel %vm2160, %v4345, %v4105
        %v4379 = vsel %vm2160, %v4347, %v4107
        %v4381 = vsel %vm2160, %v4349, %v4109
        %v4382 = vld [vmem:[#allocation9] sm:$0xf]
        %v4383 = vld [vmem:[#allocation9 + $0x4] sm:$0xf]
        %v4384 = vld [vmem:[#allocation9 + $0x8] sm:$0xf]
        %v4385 = vld [vmem:[#allocation9 + $0xc] sm:$0xf]
        %v4386 = vld [vmem:[#allocation9 + $0x10] sm:$0x3]
        %v4387 = vld [vmem:[#allocation11] sm:$0x1]
        %v4389 = vlaneseq
        %v4390 = vshrl.u32 %v4389, 7
        %v4391 = vsub.s32 0, %v4390
        %v4392 = vrot.slane %v4387, %v4391
        %v4399 = vunpack.c.l.b16 %v4382
        %v4400 = vunpack.c.l.b16 %v4383
        %v4401 = vunpack.c.l.b16 %v4384
        %v4402 = vunpack.c.l.b16 %v4385
        %v4403 = vunpack.c.l.b16 %v4386
        %v4404 = vpack.c.b16 %v4400, %v4399
        %v4405 = vpack.c.b16 %v4402, %v4401
        %v4406 = vpack.c.b16 %v4403, %v4403
        %v4409 = vsel %vm2220, %v4351, 0
        %v4411 = vsel %vm2220, %v4353, 0
        %v4413 = vsel %vm2220, %v4355, 0
        %v4415 = vsel %vm2220, %v4357, 0
        %v4417 = vsel %vm2220, %v4359, 0
        %v4419 = vsel %vm2220, %v4361, 0
        %v4421 = vsel %vm2220, %v4363, 0
        %v4423 = vsel %vm2220, %v4365, 0
        %v4425 = vsel %vm2220, %v4367, 0
        %v4427 = vsel %vm2220, %v4369, 0
        %v4429 = vsel %vm2220, %v4371, 0
        %v4431 = vsel %vm2220, %v4373, 0
        %v4433 = vsel %vm2220, %v4375, 0
        %v4435 = vsel %vm2220, %v4377, 0
        %v4437 = vsel %vm2220, %v4379, 0
        %v4439 = vsel %vm2220, %v4381, 0
        %v4442 = vsel %vm2253, %v4406, 0
        %4444 = vmatprep.subr.bf16.mxu0 0
        %4445 = vmatpush1.bf16.msra.mxu0 %v4404
        %4446 = vmatprep.subr.bf16.mxu0 0
        %4447 = vmatpush1.bf16.msra.mxu0 %v4405
        %4448 = vmatprep.subr.bf16.mxu0 0
        %4449 = vmatpush1.bf16.msra.mxu0 %v4442
        %4450 = vmatprep.subr.bf16.mxu0 0
        %4451 = vmatpush1.bf16.msra.mxu0 0
        %4452 = vmatprep.subr.bf16.mxu0 0
        %4453 = vmatpush1.bf16.msra.mxu0 0
        %4454 = vmatprep.subr.bf16.mxu0 0
        %4455 = vmatpush1.bf16.msra.mxu0 0
        %4456 = vmatprep.subr.bf16.mxu0 0
        %4457 = vmatpush1.bf16.msra.mxu0 0
        %4458 = vmatprep.subr.bf16.mxu0 0
        %4459 = vmatpush1.bf16.msra.mxu0 0
        %4460 = vmatprep.subr.bf16.mxu0 0
        %4461 = vmatpush1.bf16.msra.mxu0 0
        %4462 = vmatprep.subr.bf16.mxu0 0
        %4463 = vmatpush1.bf16.msra.mxu0 0
        %4464 = vmatprep.subr.bf16.mxu0 0
        %4465 = vmatpush1.bf16.msra.mxu0 0
        %4466 = vmatprep.subr.bf16.mxu0 0
        %4467 = vmatpush1.bf16.msra.mxu0 0
        %4468 = vmatprep.subr.bf16.mxu0 0
        %4469 = vmatpush1.bf16.msra.mxu0 0
        %4470 = vmatprep.subr.bf16.mxu0 0
        %4471 = vmatpush1.bf16.msra.mxu0 0
        %4472 = vmatprep.subr.bf16.mxu0 0
        %4473 = vmatpush1.bf16.msra.mxu0 0
        %4474 = vmatprep.subr.bf16.mxu0 0
        %4475 = vmatpush1.bf16.msra.mxu0 0
        %4476 = vmatprep.mubr.bf16.mxu0 0
        %4477 = vmatmul.mubr.bf16.gmra.mrb[0].mxu0 %v4409
        %v4478 = vpop.f32.mrb[0].mxu0
        %v4479 = vadd.f32 %v4392, %v4478
        %v4480 = vpop.f32.mrb[0].mxu0
        %v4481 = vpop.f32.mrb[0].mxu0
        %v4482 = vadd.f32 %v4392, %v4481
        %v4483 = vpop.f32.mrb[0].mxu0
        %4484 = vmatprep.mubr.bf16.mxu0 0
        %4485 = vmatmul.mubr.bf16.gmra.mrb[0].mxu0 %v4411
        %v4486 = vpop.f32.mrb[0].mxu0
        %v4487 = vadd.f32 %v4392, %v4486
        %v4488 = vpop.f32.mrb[0].mxu0
        %v4489 = vpop.f32.mrb[0].mxu0
        %v4490 = vadd.f32 %v4392, %v4489
        %v4491 = vpop.f32.mrb[0].mxu0
        %4492 = vmatprep.mubr.bf16.mxu0 0
        %4493 = vmatmul.mubr.bf16.gmra.mrb[0].mxu0 %v4413
        %v4494 = vpop.f32.mrb[0].mxu0
        %v4495 = vadd.f32 %v4392, %v4494
        %v4496 = vpop.f32.mrb[0].mxu0
        %v4497 = vpop.f32.mrb[0].mxu0
        %v4498 = vadd.f32 %v4392, %v4497
        %v4499 = vpop.f32.mrb[0].mxu0
        %4500 = vmatprep.mubr.bf16.mxu0 0
        %4501 = vmatmul.mubr.bf16.gmra.mrb[0].mxu0 %v4415
        %v4502 = vpop.f32.mrb[0].mxu0
        %v4503 = vadd.f32 %v4392, %v4502
        %v4504 = vpop.f32.mrb[0].mxu0
        %v4505 = vpop.f32.mrb[0].mxu0
        %v4506 = vadd.f32 %v4392, %v4505
        %v4507 = vpop.f32.mrb[0].mxu0
        %4508 = vmatprep.mubr.bf16.mxu0 0
        %4509 = vmatmul.mubr.bf16.gmra.mrb[0].mxu0 %v4417
        %v4510 = vpop.f32.mrb[0].mxu0
        %v4511 = vadd.f32 %v4392, %v4510
        %v4512 = vpop.f32.mrb[0].mxu0
        %v4513 = vpop.f32.mrb[0].mxu0
        %v4514 = vadd.f32 %v4392, %v4513
        %v4515 = vpop.f32.mrb[0].mxu0
        %4516 = vmatprep.mubr.bf16.mxu0 0
        %4517 = vmatmul.mubr.bf16.gmra.mrb[0].mxu0 %v4419
        %v4518 = vpop.f32.mrb[0].mxu0
        %v4519 = vadd.f32 %v4392, %v4518
        %v4520 = vpop.f32.mrb[0].mxu0
        %v4521 = vpop.f32.mrb[0].mxu0
        %v4522 = vadd.f32 %v4392, %v4521
        %v4523 = vpop.f32.mrb[0].mxu0
        %4524 = vmatprep.mubr.bf16.mxu0 0
        %4525 = vmatmul.mubr.bf16.gmra.mrb[0].mxu0 %v4421
        %v4526 = vpop.f32.mrb[0].mxu0
        %v4527 = vadd.f32 %v4392, %v4526
        %v4528 = vpop.f32.mrb[0].mxu0
        %v4529 = vpop.f32.mrb[0].mxu0
        %v4530 = vadd.f32 %v4392, %v4529
        %v4531 = vpop.f32.mrb[0].mxu0
        %4532 = vmatprep.mubr.bf16.mxu0 0
        %4533 = vmatmul.mubr.bf16.gmra.mrb[0].mxu0 %v4423
        %v4534 = vpop.f32.mrb[0].mxu0
        %v4535 = vadd.f32 %v4392, %v4534
        %v4536 = vpop.f32.mrb[0].mxu0
        %v4537 = vpop.f32.mrb[0].mxu0
        %v4538 = vadd.f32 %v4392, %v4537
        %v4539 = vpop.f32.mrb[0].mxu0
        %4540 = vmatprep.mubr.bf16.mxu0 0
        %4541 = vmatmul.mubr.bf16.gmra.mrb[0].mxu0 %v4425
        %v4542 = vpop.f32.mrb[0].mxu0
        %v4543 = vadd.f32 %v4392, %v4542
        %v4544 = vpop.f32.mrb[0].mxu0
        %v4545 = vpop.f32.mrb[0].mxu0
        %v4546 = vadd.f32 %v4392, %v4545
        %v4547 = vpop.f32.mrb[0].mxu0
        %4548 = vmatprep.mubr.bf16.mxu0 0
        %4549 = vmatmul.mubr.bf16.gmra.mrb[0].mxu0 %v4427
        %v4550 = vpop.f32.mrb[0].mxu0
        %v4551 = vadd.f32 %v4392, %v4550
        %v4552 = vpop.f32.mrb[0].mxu0
        %v4553 = vpop.f32.mrb[0].mxu0
        %v4554 = vadd.f32 %v4392, %v4553
        %v4555 = vpop.f32.mrb[0].mxu0
        %4556 = vmatprep.mubr.bf16.mxu0 0
        %4557 = vmatmul.mubr.bf16.gmra.mrb[0].mxu0 %v4429
        %v4558 = vpop.f32.mrb[0].mxu0
        %v4559 = vadd.f32 %v4392, %v4558
        %v4560 = vpop.f32.mrb[0].mxu0
        %v4561 = vpop.f32.mrb[0].mxu0
        %v4562 = vadd.f32 %v4392, %v4561
        %v4563 = vpop.f32.mrb[0].mxu0
        %4564 = vmatprep.mubr.bf16.mxu0 0
        %4565 = vmatmul.mubr.bf16.gmra.mrb[0].mxu0 %v4431
        %v4566 = vpop.f32.mrb[0].mxu0
        %v4567 = vadd.f32 %v4392, %v4566
        %v4568 = vpop.f32.mrb[0].mxu0
        %v4569 = vpop.f32.mrb[0].mxu0
        %v4570 = vadd.f32 %v4392, %v4569
        %v4571 = vpop.f32.mrb[0].mxu0
        %4572 = vmatprep.mubr.bf16.mxu0 0
        %4573 = vmatmul.mubr.bf16.gmra.mrb[0].mxu0 %v4433
        %v4574 = vpop.f32.mrb[0].mxu0
        %v4575 = vadd.f32 %v4392, %v4574
        %v4576 = vpop.f32.mrb[0].mxu0
        %v4577 = vpop.f32.mrb[0].mxu0
        %v4578 = vadd.f32 %v4392, %v4577
        %v4579 = vpop.f32.mrb[0].mxu0
        %4580 = vmatprep.mubr.bf16.mxu0 0
        %4581 = vmatmul.mubr.bf16.gmra.mrb[0].mxu0 %v4435
        %v4582 = vpop.f32.mrb[0].mxu0
        %v4583 = vadd.f32 %v4392, %v4582
        %v4584 = vpop.f32.mrb[0].mxu0
        %v4585 = vpop.f32.mrb[0].mxu0
        %v4586 = vadd.f32 %v4392, %v4585
        %v4587 = vpop.f32.mrb[0].mxu0
        %4588 = vmatprep.mubr.bf16.mxu0 0
        %4589 = vmatmul.mubr.bf16.gmra.mrb[0].mxu0 %v4437
        %v4590 = vpop.f32.mrb[0].mxu0
        %v4591 = vadd.f32 %v4392, %v4590
        %v4592 = vpop.f32.mrb[0].mxu0
        %v4593 = vpop.f32.mrb[0].mxu0
        %v4594 = vadd.f32 %v4392, %v4593
        %v4595 = vpop.f32.mrb[0].mxu0
        %4596 = vmatprep.mubr.bf16.mxu0 0
        %4597 = vmatmul.mubr.bf16.gmra.mrb[0].mxu0 %v4439
        %v4598 = vpop.f32.mrb[0].mxu0
        %v4599 = vadd.f32 %v4392, %v4598
        %v4600 = vpop.f32.mrb[0].mxu0
        %v4601 = vpop.f32.mrb[0].mxu0
        %v4602 = vadd.f32 %v4392, %v4601
        %v4603 = vpop.f32.mrb[0].mxu0
        %4604 = vdwg.mxu0
        %v4605 = vsub.f32 0.0, %v4479
        %v4606 = vsub.f32 0.0, %v4482
        %v4607 = vsub.f32 0.0, %v4487
        %v4608 = vsub.f32 0.0, %v4490
        %v4609 = vsub.f32 0.0, %v4495
        %v4610 = vsub.f32 0.0, %v4498
        %v4611 = vsub.f32 0.0, %v4503
        %v4612 = vsub.f32 0.0, %v4506
        %v4613 = vsub.f32 0.0, %v4511
        %v4614 = vsub.f32 0.0, %v4514
        %v4615 = vsub.f32 0.0, %v4519
        %v4616 = vsub.f32 0.0, %v4522
        %v4617 = vsub.f32 0.0, %v4527
        %v4618 = vsub.f32 0.0, %v4530
        %v4619 = vsub.f32 0.0, %v4535
        %v4620 = vsub.f32 0.0, %v4538
        %v4621 = vsub.f32 0.0, %v4543
        %v4622 = vsub.f32 0.0, %v4546
        %v4623 = vsub.f32 0.0, %v4551
        %v4624 = vsub.f32 0.0, %v4554
        %v4625 = vsub.f32 0.0, %v4559
        %v4626 = vsub.f32 0.0, %v4562
        %v4627 = vsub.f32 0.0, %v4567
        %v4628 = vsub.f32 0.0, %v4570
        %v4629 = vsub.f32 0.0, %v4575
        %v4630 = vsub.f32 0.0, %v4578
        %v4631 = vsub.f32 0.0, %v4583
        %v4632 = vsub.f32 0.0, %v4586
        %v4633 = vsub.f32 0.0, %v4591
        %v4634 = vsub.f32 0.0, %v4594
        %v4635 = vsub.f32 0.0, %v4599
        %v4636 = vsub.f32 0.0, %v4602
        %v4637 = vmul.f32 %v4605, 1.442695
        %v4638 = vpow.pop %v4637
        %v4639 = vmul.f32 %v4606, 1.442695
        %v4640 = vpow.pop %v4639
        %v4641 = vmul.f32 %v4607, 1.442695
        %v4642 = vpow.pop %v4641
        %v4643 = vmul.f32 %v4608, 1.442695
        %v4644 = vpow.pop %v4643
        %v4645 = vmul.f32 %v4609, 1.442695
        %v4646 = vpow.pop %v4645
        %v4647 = vmul.f32 %v4610, 1.442695
        %v4648 = vpow.pop %v4647
        %v4649 = vmul.f32 %v4611, 1.442695
        %v4650 = vpow.pop %v4649
        %v4651 = vmul.f32 %v4612, 1.442695
        %v4652 = vpow.pop %v4651
        %v4653 = vmul.f32 %v4613, 1.442695
        %v4654 = vpow.pop %v4653
        %v4655 = vmul.f32 %v4614, 1.442695
        %v4656 = vpow.pop %v4655
        %v4657 = vmul.f32 %v4615, 1.442695
        %v4658 = vpow.pop %v4657
        %v4659 = vmul.f32 %v4616, 1.442695
        %v4660 = vpow.pop %v4659
        %v4661 = vmul.f32 %v4617, 1.442695
        %v4662 = vpow.pop %v4661
        %v4663 = vmul.f32 %v4618, 1.442695
        %v4664 = vpow.pop %v4663
        %v4665 = vmul.f32 %v4619, 1.442695
        %v4666 = vpow.pop %v4665
        %v4667 = vmul.f32 %v4620, 1.442695
        %v4668 = vpow.pop %v4667
        %v4669 = vmul.f32 %v4621, 1.442695
        %v4670 = vpow.pop %v4669
        %v4671 = vmul.f32 %v4622, 1.442695
        %v4672 = vpow.pop %v4671
        %v4673 = vmul.f32 %v4623, 1.442695
        %v4674 = vpow.pop %v4673
        %v4675 = vmul.f32 %v4624, 1.442695
        %v4676 = vpow.pop %v4675
        %v4677 = vmul.f32 %v4625, 1.442695
        %v4678 = vpow.pop %v4677
        %v4679 = vmul.f32 %v4626, 1.442695
        %v4680 = vpow.pop %v4679
        %v4681 = vmul.f32 %v4627, 1.442695
        %v4682 = vpow.pop %v4681
        %v4683 = vmul.f32 %v4628, 1.442695
        %v4684 = vpow.pop %v4683
        %v4685 = vmul.f32 %v4629, 1.442695
        %v4686 = vpow.pop %v4685
        %v4687 = vmul.f32 %v4630, 1.442695
        %v4688 = vpow.pop %v4687
        %v4689 = vmul.f32 %v4631, 1.442695
        %v4690 = vpow.pop %v4689
        %v4691 = vmul.f32 %v4632, 1.442695
        %v4692 = vpow.pop %v4691
        %v4693 = vmul.f32 %v4633, 1.442695
        %v4694 = vpow.pop %v4693
        %v4695 = vmul.f32 %v4634, 1.442695
        %v4696 = vpow.pop %v4695
        %v4697 = vmul.f32 %v4635, 1.442695
        %v4698 = vpow.pop %v4697
        %v4699 = vmul.f32 %v4636, 1.442695
        %v4700 = vpow.pop %v4699
        %v4701 = vadd.f32 %v4638, 1.0
        %v4702 = vadd.f32 %v4640, 1.0
        %v4703 = vadd.f32 %v4642, 1.0
        %v4704 = vadd.f32 %v4644, 1.0
        %v4705 = vadd.f32 %v4646, 1.0
        %v4706 = vadd.f32 %v4648, 1.0
        %v4707 = vadd.f32 %v4650, 1.0
        %v4708 = vadd.f32 %v4652, 1.0
        %v4709 = vadd.f32 %v4654, 1.0
        %v4710 = vadd.f32 %v4656, 1.0
        %v4711 = vadd.f32 %v4658, 1.0
        %v4712 = vadd.f32 %v4660, 1.0
        %v4713 = vadd.f32 %v4662, 1.0
        %v4714 = vadd.f32 %v4664, 1.0
        %v4715 = vadd.f32 %v4666, 1.0
        %v4716 = vadd.f32 %v4668, 1.0
        %v4717 = vadd.f32 %v4670, 1.0
        %v4718 = vadd.f32 %v4672, 1.0
        %v4719 = vadd.f32 %v4674, 1.0
        %v4720 = vadd.f32 %v4676, 1.0
        %v4721 = vadd.f32 %v4678, 1.0
        %v4722 = vadd.f32 %v4680, 1.0
        %v4723 = vadd.f32 %v4682, 1.0
        %v4724 = vadd.f32 %v4684, 1.0
        %v4725 = vadd.f32 %v4686, 1.0
        %v4726 = vadd.f32 %v4688, 1.0
        %v4727 = vadd.f32 %v4690, 1.0
        %v4728 = vadd.f32 %v4692, 1.0
        %v4729 = vadd.f32 %v4694, 1.0
        %v4730 = vadd.f32 %v4696, 1.0
        %v4731 = vadd.f32 %v4698, 1.0
        %v4732 = vadd.f32 %v4700, 1.0
        %v4733 = vrcp.pop %v4701
        %v4734 = vrcp.pop %v4702
        %v4735 = vrcp.pop %v4703
        %v4736 = vrcp.pop %v4704
        %v4737 = vrcp.pop %v4705
        %v4738 = vrcp.pop %v4706
        %v4739 = vrcp.pop %v4707
        %v4740 = vrcp.pop %v4708
        %v4741 = vrcp.pop %v4709
        %v4742 = vrcp.pop %v4710
        %v4743 = vrcp.pop %v4711
        %v4744 = vrcp.pop %v4712
        %v4745 = vrcp.pop %v4713
        %v4746 = vrcp.pop %v4714
        %v4747 = vrcp.pop %v4715
        %v4748 = vrcp.pop %v4716
        %v4749 = vrcp.pop %v4717
        %v4750 = vrcp.pop %v4718
        %v4751 = vrcp.pop %v4719
        %v4752 = vrcp.pop %v4720
        %v4753 = vrcp.pop %v4721
        %v4754 = vrcp.pop %v4722
        %v4755 = vrcp.pop %v4723
        %v4756 = vrcp.pop %v4724
        %v4757 = vrcp.pop %v4725
        %v4758 = vrcp.pop %v4726
        %v4759 = vrcp.pop %v4727
        %v4760 = vrcp.pop %v4728
        %v4761 = vrcp.pop %v4729
        %v4762 = vrcp.pop %v4730
        %v4763 = vrcp.pop %v4731
        %v4764 = vrcp.pop %v4732
        %v4765 = vmul.f32 %v4479, %v4733
        %v4766 = vmul.f32 %v4482, %v4734
        %v4767 = vmul.f32 %v4487, %v4735
        %v4768 = vmul.f32 %v4490, %v4736
        %v4769 = vmul.f32 %v4495, %v4737
        %v4770 = vmul.f32 %v4498, %v4738
        %v4771 = vmul.f32 %v4503, %v4739
        %v4772 = vmul.f32 %v4506, %v4740
        %v4773 = vmul.f32 %v4511, %v4741
        %v4774 = vmul.f32 %v4514, %v4742
        %v4775 = vmul.f32 %v4519, %v4743
        %v4776 = vmul.f32 %v4522, %v4744
        %v4777 = vmul.f32 %v4527, %v4745
        %v4778 = vmul.f32 %v4530, %v4746
        %v4779 = vmul.f32 %v4535, %v4747
        %v4780 = vmul.f32 %v4538, %v4748
        %v4781 = vmul.f32 %v4543, %v4749
        %v4782 = vmul.f32 %v4546, %v4750
        %v4783 = vmul.f32 %v4551, %v4751
        %v4784 = vmul.f32 %v4554, %v4752
        %v4785 = vmul.f32 %v4559, %v4753
        %v4786 = vmul.f32 %v4562, %v4754
        %v4787 = vmul.f32 %v4567, %v4755
        %v4788 = vmul.f32 %v4570, %v4756
        %v4789 = vmul.f32 %v4575, %v4757
        %v4790 = vmul.f32 %v4578, %v4758
        %v4791 = vmul.f32 %v4583, %v4759
        %v4792 = vmul.f32 %v4586, %v4760
        %v4793 = vmul.f32 %v4591, %v4761
        %v4794 = vmul.f32 %v4594, %v4762
        %v4795 = vmul.f32 %v4599, %v4763
        %v4796 = vmul.f32 %v4602, %v4764
        %v4797 = vpack.c.bf16 %v4766, %v4765
        %v4798 = vpack.c.bf16 %v4768, %v4767
        %v4799 = vpack.c.bf16 %v4770, %v4769
        %v4800 = vpack.c.bf16 %v4772, %v4771
        %v4801 = vpack.c.bf16 %v4774, %v4773
        %v4802 = vpack.c.bf16 %v4776, %v4775
        %v4803 = vpack.c.bf16 %v4778, %v4777
        %v4804 = vpack.c.bf16 %v4780, %v4779
        %v4805 = vpack.c.bf16 %v4782, %v4781
        %v4806 = vpack.c.bf16 %v4784, %v4783
        %v4807 = vpack.c.bf16 %v4786, %v4785
        %v4808 = vpack.c.bf16 %v4788, %v4787
        %v4809 = vpack.c.bf16 %v4790, %v4789
        %v4810 = vpack.c.bf16 %v4792, %v4791
        %v4811 = vpack.c.bf16 %v4794, %v4793
        %v4812 = vpack.c.bf16 %v4796, %v4795
        %v4829 = vunpack.c.l.b16 %v4797
        %v4830 = vunpack.c.h.b16 %v4797
        %v4831 = vunpack.c.l.b16 %v4798
        %v4832 = vunpack.c.h.b16 %v4798
        %v4833 = vunpack.c.l.b16 %v4799
        %v4834 = vunpack.c.h.b16 %v4799
        %v4835 = vunpack.c.l.b16 %v4800
        %v4836 = vunpack.c.h.b16 %v4800
        %v4837 = vunpack.c.l.b16 %v4801
        %v4838 = vunpack.c.h.b16 %v4801
        %v4839 = vunpack.c.l.b16 %v4802
        %v4840 = vunpack.c.h.b16 %v4802
        %v4841 = vunpack.c.l.b16 %v4803
        %v4842 = vunpack.c.h.b16 %v4803
        %v4843 = vunpack.c.l.b16 %v4804
        %v4844 = vunpack.c.h.b16 %v4804
        %v4845 = vunpack.c.l.b16 %v4805
        %v4846 = vunpack.c.h.b16 %v4805
        %v4847 = vunpack.c.l.b16 %v4806
        %v4848 = vunpack.c.h.b16 %v4806
        %v4849 = vunpack.c.l.b16 %v4807
        %v4850 = vunpack.c.h.b16 %v4807
        %v4851 = vunpack.c.l.b16 %v4808
        %v4852 = vunpack.c.h.b16 %v4808
        %v4853 = vunpack.c.l.b16 %v4809
        %v4854 = vunpack.c.h.b16 %v4809
        %v4855 = vunpack.c.l.b16 %v4810
        %v4856 = vunpack.c.h.b16 %v4810
        %v4857 = vunpack.c.l.b16 %v4811
        %v4858 = vunpack.c.h.b16 %v4811
        %v4859 = vunpack.c.l.b16 %v4812
        %v4860 = vunpack.c.h.b16 %v4812
        %v4861 = vpack.c.b16 %v4829, %v4829
        %v4862 = vpack.c.b16 %v4830, %v4830
        %v4863 = vpack.c.b16 %v4831, %v4831
        %v4864 = vpack.c.b16 %v4832, %v4832
        %v4865 = vpack.c.b16 %v4833, %v4833
        %v4866 = vpack.c.b16 %v4834, %v4834
        %v4867 = vpack.c.b16 %v4835, %v4835
        %v4868 = vpack.c.b16 %v4836, %v4836
        %v4869 = vpack.c.b16 %v4837, %v4837
        %v4870 = vpack.c.b16 %v4838, %v4838
        %v4871 = vpack.c.b16 %v4839, %v4839
        %v4872 = vpack.c.b16 %v4840, %v4840
        %v4873 = vpack.c.b16 %v4841, %v4841
        %v4874 = vpack.c.b16 %v4842, %v4842
        %v4875 = vpack.c.b16 %v4843, %v4843
        %v4876 = vpack.c.b16 %v4844, %v4844
        %v4877 = vpack.c.b16 %v4845, %v4845
        %v4878 = vpack.c.b16 %v4846, %v4846
        %v4879 = vpack.c.b16 %v4847, %v4847
        %v4880 = vpack.c.b16 %v4848, %v4848
        %v4881 = vpack.c.b16 %v4849, %v4849
        %v4882 = vpack.c.b16 %v4850, %v4850
        %v4883 = vpack.c.b16 %v4851, %v4851
        %v4884 = vpack.c.b16 %v4852, %v4852
        %v4885 = vpack.c.b16 %v4853, %v4853
        %v4886 = vpack.c.b16 %v4854, %v4854
        %v4887 = vpack.c.b16 %v4855, %v4855
        %v4888 = vpack.c.b16 %v4856, %v4856
        %v4889 = vpack.c.b16 %v4857, %v4857
        %v4890 = vpack.c.b16 %v4858, %v4858
        %v4891 = vpack.c.b16 %v4859, %v4859
        %v4892 = vpack.c.b16 %v4860, %v4860
        %4925 = vst.msk [vmem:[%s296] sm:$0xf] %vm330, %v4861
        %4926 = vst.msk [vmem:[%s296 + $0x4] sm:$0xf] %vm330, %v4862
        %4927 = vst.msk [vmem:[%s296 + $0x8] sm:$0xf] %vm330, %v4863
        %4928 = vst.msk [vmem:[%s296 + $0xc] sm:$0xf] %vm330, %v4864
        %4929 = vst.msk [vmem:[%s296 + $0x10] sm:$0xf] %vm330, %v4865
        %4930 = vst.msk [vmem:[%s296 + $0x14] sm:$0xf] %vm330, %v4866
        %4931 = vst.msk [vmem:[%s296 + $0x18] sm:$0xf] %vm330, %v4867
        %4932 = vst.msk [vmem:[%s296 + $0x1c] sm:$0xf] %vm330, %v4868
        %4933 = vst.msk [vmem:[%s296 + $0x20] sm:$0xf] %vm330, %v4869
        %4934 = vst.msk [vmem:[%s296 + $0x24] sm:$0xf] %vm330, %v4870
        %4935 = vst.msk [vmem:[%s296 + $0x28] sm:$0xf] %vm330, %v4871
        %4936 = vst.msk [vmem:[%s296 + $0x2c] sm:$0xf] %vm330, %v4872
        %4937 = vst.msk [vmem:[%s296 + $0x30] sm:$0xf] %vm330, %v4873
        %4938 = vst.msk [vmem:[%s296 + $0x34] sm:$0xf] %vm330, %v4874
        %4939 = vst.msk [vmem:[%s296 + $0x38] sm:$0xf] %vm330, %v4875
        %4940 = vst.msk [vmem:[%s296 + $0x3c] sm:$0xf] %vm330, %v4876
        %4941 = vst.msk [vmem:[%s296 + $0x40] sm:$0xf] %vm330, %v4877
        %4942 = vst.msk [vmem:[%s296 + $0x44] sm:$0xf] %vm330, %v4878
        %4943 = vst.msk [vmem:[%s296 + $0x48] sm:$0xf] %vm330, %v4879
        %4944 = vst.msk [vmem:[%s296 + $0x4c] sm:$0xf] %vm330, %v4880
        %4945 = vst.msk [vmem:[%s296 + $0x50] sm:$0xf] %vm330, %v4881
        %4946 = vst.msk [vmem:[%s296 + $0x54] sm:$0xf] %vm330, %v4882
        %4947 = vst.msk [vmem:[%s296 + $0x58] sm:$0xf] %vm330, %v4883
        %4948 = vst.msk [vmem:[%s296 + $0x5c] sm:$0xf] %vm330, %v4884
        %4949 = vst.msk [vmem:[%s296 + $0x60] sm:$0xf] %vm330, %v4885
        %4950 = vst.msk [vmem:[%s296 + $0x64] sm:$0xf] %vm330, %v4886
        %4951 = vst.msk [vmem:[%s296 + $0x68] sm:$0xf] %vm330, %v4887
        %4952 = vst.msk [vmem:[%s296 + $0x6c] sm:$0xf] %vm330, %v4888
        %4953 = vst.msk [vmem:[%s296 + $0x70] sm:$0xf] %vm330, %v4889
        %4954 = vst.msk [vmem:[%s296 + $0x74] sm:$0xf] %vm330, %v4890
        %4955 = vst.msk [vmem:[%s296 + $0x78] sm:$0xf] %vm330, %v4891
        %4956 = vst.msk [vmem:[%s296 + $0x7c] sm:$0xf] %vm330, %v4892
        %s4957 = sand.u32 %s142, 1
        %s4958 = scalar_lea.sflag [#allocation5], %s4957
        %s4959 = sand.u32 %s142, 1
        %s4960 = smul.addr %s4959, 128
        %s4961 = scalar_lea.vmem [#allocation12], %s4960
        // Predicated region
        $region61: #{c2f_forward_pallas.5} parent=39 // pred_check
          %p4962 = pneg %p152
        $region62: #{c2f_forward_pallas.5} parent=39 // pred_check_branch
          %4964 = sbr.rel (%p4962) target = $region64
        $region63: #{c2f_forward_pallas.5} parent=39 // pred_region
          %s4966 = ssub.s32 2048, 2048
          %4967 = vsyncadd %s4958, %s4966
          %s4968 = smul.addr %s24, 32
          %s4969 = smul.addr %s4968, 64
          %s4970 = scalar_lea.hbm %s5, %s4969
          %s4971 = sshll.u32 %s4961, 4
          %s4972 = int_to_ptr.vmem [resolvable:$true] %s4971
          %4977 = dma.vmem_to_hbm [thread:$0]  %s4972, 2048, %s4970, %s4958, 64, 64, 4
        $region64: #{c2f_forward_pallas.5} parent=39 // pred_fallthru
          _
      $region40: #{c2f_forward_pallas.5} parent=5 // pred_fallthru
        _
      %p4978 = scmp.le.s32.totalorder 2, %s19
      // Predicated region
      $region65: #{c2f_forward_pallas.5} parent=5 // pred_check
        %p4979 = pneg %p4978
      $region66: #{c2f_forward_pallas.5} parent=5 // pred_check_branch
        %4981 = sbr.rel (%p4979) target = $region68
      $region67: #{c2f_forward_pallas.5} parent=5 // pred_region
        %s4982 = ssub.s32 %s19, 2
        // Predicated region
        $region69: #{c2f_forward_pallas.5} parent=67 // pred_check
          %p4983 = pneg %p158
        $region70: #{c2f_forward_pallas.5} parent=67 // pred_check_branch
          %4985 = sbr.rel (%p4983) target = $region72
        $region71: #{c2f_forward_pallas.5} parent=67 // pred_region
          %s4986 = sand.u32 %s143, 1
          %s4987 = scalar_lea.sflag [#allocation5], %s4986
          %s4988 = sand.u32 %s143, 1
          %s4989 = smul.addr %s4988, 128
          %s4990 = scalar_lea.vmem [#allocation12], %s4989
          %4991 = dma.done %s4987, 2048
        $region72: #{c2f_forward_pallas.5} parent=67 // pred_fallthru
          _
      $region68: #{c2f_forward_pallas.5} parent=5 // pred_fallthru
        _
    $region6: #{c2f_forward_pallas.5} parent=1 // loop_footer
      %s23 = sadd.s32 1, %s19
    $region7: #{c2f_forward_pallas.5} parent=1 // loop_footer_branch
      %18 = sbr.rel target = $region3
    $region8: #{c2f_forward_pallas.5} parent=1 // loop_exit
      _
    %4992 = vsyncpa [#allocation4], 1
    %s4993 = scalar_lea.sflag [#allocation4], 1
    %4994 = vsyncpa %s4993, 1
    %4995 = vsyncpa [#allocation7], 1
    %4996 = vsyncpa [#allocation10], 1
    %4997 = vsyncpa [#allocation5], 1
    %s4998 = scalar_lea.sflag [#allocation5], 1
    %4999 = vsyncpa %s4998, 1

</llo_original>
